<compile_context>
chip_gen: v6e
topology: v6e:2x2x1
jax: 0.10.0
libtpu: 0.0.40
codegen_flags: <defaults>
</compile_context>

<pallas_src>
import jax
import jax.numpy as jnp
from jax.experimental import pallas as pl
from jax.experimental.pallas import tpu as pltpu

IN_FEATURES = 64 * 64 * 26 * 3        # 319488, hard-coded by the module's first Linear
HIDDEN = 128
BN_EPS = 1e-5
LEAKY_SLOPE = 0.2


def _select_config():
    """(NSPLIT, TK, vmem_limit_bytes) per TPU generation (perf-review guidance)."""
    try:
        kind = jax.devices()[0].device_kind.lower()
    except Exception:
        kind = ""
    if "v7" in kind or "7x" in kind:
        # 2 TensorCores: split-K across cores; bf16 W1 tile 13 MiB, 26 MiB double-buffered.
        return 2, 53248, 40 << 20
    if "v6" in kind or "v5" in kind:
        # Single TensorCore: a split would just be a serial loop + extra partial buffer.
        return 1, 53248, 48 << 20
    # Conservative fallback for unknown chips.
    return 1, 12288, 32 << 20


def _xw1_split_kernel(x_ref, w1_ref, partial_ref):
    """One (B, TK)x(TK, 128) bf16 MXU step; f32 accumulation in the resident output block."""
    prod = jnp.dot(x_ref[...], w1_ref[...], preferred_element_type=jnp.float32)

    @pl.when(pl.program_id(1) == 0)
    def _():                              # first K step of this split: write (skip zero-init)
        partial_ref[0] = prod

    @pl.when(pl.program_id(1) > 0)
    def _():                              # remaining K steps: accumulate
        partial_ref[0] += prod


def _xw1_partials(xf_bf16, w1_bf16, nsplit, tk, vmem_limit):
    """HBM-bandwidth-bound streaming matmul: returns (NSPLIT, B, HIDDEN) f32 partials."""
    B = xf_bf16.shape[0]
    k_per_split = IN_FEATURES // (nsplit * tk)

    grid_spec = pltpu.PrefetchScalarGridSpec(
        num_scalar_prefetch=0,
        grid=(nsplit, k_per_split),
        in_specs=[
            pl.BlockSpec((B, tk), lambda s, k: (0, s * k_per_split + k)),       # x tile
            pl.BlockSpec((tk, HIDDEN), lambda s, k: (s * k_per_split + k, 0)),  # W1 tile
        ],
        out_specs=pl.BlockSpec((1, B, HIDDEN), lambda s, k: (s, 0, 0)),          # resident
    )
    return pl.pallas_call(
        _xw1_split_kernel,
        out_shape=jax.ShapeDtypeStruct((nsplit, B, HIDDEN), jnp.float32),
        grid_spec=grid_spec,
        compiler_params=pltpu.CompilerParams(
            dimension_semantics=("parallel", "arbitrary"),
            vmem_limit_bytes=vmem_limit),
        cost_estimate=pl.CostEstimate(
            flops=2 * B * IN_FEATURES * HIDDEN,
            transcendentals=0,
            bytes_accessed=(IN_FEATURES * HIDDEN * 2       # bf16 W1 stream
                            + B * IN_FEATURES * 2          # bf16 x stream
                            + nsplit * B * HIDDEN * 4)),   # f32 partials writeback
    )(xf_bf16, w1_bf16)


def discriminator_forward(x, params):
    B = x.shape[0]
    xf = x.reshape(B, -1)
    assert xf.shape[1] == IN_FEATURES, (
        f"expected {IN_FEATURES} flattened features, got {xf.shape[1]}")
    # TODO(synk): for B > ~64 add a batch grid axis / shrink TK (x double-buffers grow as B*TK).
    assert B <= 64, "tiling is sized for small batches; add a B-tile grid axis for larger B"

    nsplit, tk, vmem_limit = _select_config()
    assert IN_FEATURES % (nsplit * tk) == 0

    w1, b1, gamma, beta, rmean, rvar, w2, b2 = params

    # Fold Linear-1 bias + BatchNorm1d (eval, running stats) into one scale/shift pair.
    scale = (gamma * jax.lax.rsqrt(rvar + BN_EPS)).astype(jnp.float32)
    shift = ((b1 - rmean) * scale + beta).astype(jnp.float32)

    # ---- Pallas kernel: bf16 weight/activation stream, f32 accumulation ----------
    partial = _xw1_partials(xf.astype(jnp.bfloat16), w1.astype(jnp.bfloat16),
                            nsplit, tk, vmem_limit)

    # ---- Tiny epilogue (<100 KB) as plain XLA ops under jit (no 2nd pallas_call) --
    h = jnp.sum(partial, axis=0)                     # combine split-K partials -> (B, 128)
    # Dropout(0.3): identity at inference.  TODO(synk): training-mode dropout RNG.
    h = h * scale + shift                            # Linear-1 bias + BatchNorm(eval) folded
    h = jnp.where(h > 0, h, LEAKY_SLOPE * h)         # LeakyReLU(0.2)
    # Linear(128, 1) as a lane reduction (avoids an N=1 MXU pass), then sigmoid.
    z = jnp.sum(h * w2.reshape(1, HIDDEN).astype(jnp.float32), axis=-1, keepdims=True)
    z = z + b2.astype(jnp.float32)
    return jax.nn.sigmoid(z)


def init_params(key):
    """Deterministic init mimicking PyTorch defaults (uniform +-1/sqrt(fan_in)); W1 stored bf16."""
    k1, k2, k3, k4 = jax.random.split(key, 4)
    bound1 = 1.0 / jnp.sqrt(IN_FEATURES)
    w1 = jax.random.uniform(k1, (IN_FEATURES, HIDDEN), jnp.float32,
                            -bound1, bound1).astype(jnp.bfloat16)
    b1 = jax.random.uniform(k2, (1, HIDDEN), jnp.float32, -bound1, bound1)
    gamma = jnp.ones((1, HIDDEN), jnp.float32)
    beta = jnp.zeros((1, HIDDEN), jnp.float32)
    rmean = jnp.zeros((1, HIDDEN), jnp.float32)
    rvar = jnp.ones((1, HIDDEN), jnp.float32)
    bound2 = 1.0 / jnp.sqrt(HIDDEN)
    w2 = jax.random.uniform(k3, (HIDDEN, 1), jnp.float32, -bound2, bound2)
    b2 = jax.random.uniform(k4, (1, 1), jnp.float32, -bound2, bound2)
    return (w1, b1, gamma, beta, rmean, rvar, w2, b2)


def _reference(x, params):
    """Pure-JAX f32 reference matching the PyTorch module in eval mode."""
    w1, b1, gamma, beta, rmean, rvar, w2, b2 = params
    h = x.reshape(x.shape[0], -1).astype(jnp.float32) @ w1.astype(jnp.float32) + b1
    h = (h - rmean) / jnp.sqrt(rvar + BN_EPS) * gamma + beta
    h = jnp.where(h > 0, h, LEAKY_SLOPE * h)
    return jax.nn.sigmoid(h @ w2 + b2)


if __name__ == "__main__":
    key = jax.random.PRNGKey(0)
    kx, kp = jax.random.split(key)
    # Small batch; the flattened feature extent (319488) is fixed by the first Linear.
    x = jax.random.normal(kx, (2, 3, 64, 64, 26), jnp.float32)
    params = init_params(kp)

    fwd = jax.jit(discriminator_forward)
    out = jax.block_until_ready(fwd(x, params))

    ref = _reference(x, params)
    assert out.shape == (2, 1), out.shape
    # Tolerance loosened vs the pure-f32 check because x is streamed as bf16
    # (W1 is stored bf16 in both paths; accumulation stays f32 on the MXU).
    assert jnp.allclose(out, ref, atol=5e-3, rtol=5e-3), (out, ref)
    print("KERNEL_OK")
</pallas_src>

<mosaic_0001>
module attributes {stable_mosaic.version = 11 : i64} {
  func.func @_xw1_split_kernel(%arg0: i32, %arg1: i32, %arg2: memref<2x12288xbf16, #tpu.memory_space<vmem>>, %arg3: memref<12288x128xbf16, #tpu.memory_space<vmem>>, %arg4: memref<1x2x128xf32, #tpu.memory_space<vmem>>) attributes {dimension_semantics = [#tpu.dimension_semantics<parallel>, #tpu.dimension_semantics<arbitrary>], iteration_bounds = array<i64: 1, 26>, scalar_prefetch = 0 : i64, scratch_operands = 0 : i64, tpu.core_type = #tpu.core_type<tc>, window_params = [{transform_indices = @transform_0, window_bounds = array<i64: 2, 12288>}, {transform_indices = @transform_1, window_bounds = array<i64: 12288, 128>}, {transform_indices = @transform_2, window_bounds = array<i64: 1, 2, 128>}]} {
    %c0 = arith.constant 0 : index
    %c0_0 = arith.constant 0 : index
    %0 = vector.load %arg2[%c0, %c0_0] : memref<2x12288xbf16, #tpu.memory_space<vmem>>, vector<2x12288xbf16>
    %c0_1 = arith.constant 0 : index
    %c0_2 = arith.constant 0 : index
    %1 = vector.load %arg3[%c0_1, %c0_2] : memref<12288x128xbf16, #tpu.memory_space<vmem>>, vector<12288x128xbf16>
    %cst = arith.constant dense<0.000000e+00> : vector<2x128xf32>
    %2 = tpu.matmul %0, %1, %cst {dimension_numbers = #tpu.dot_dimension_numbers<[1], [0], [0], [1], [0, 0, 1, 1], [], []>} : vector<2x12288xbf16>, vector<12288x128xbf16>, vector<2x128xf32> -> vector<2x128xf32>
    %c0_i32 = arith.constant 0 : i32
    %3 = arith.cmpi eq, %arg1, %c0_i32 : i32
    %4 = arith.extui %3 : i1 to i32
    %c0_i32_3 = arith.constant 0 : i32
    %5 = arith.cmpi ne, %4, %c0_i32_3 : i32
    scf.if %5 {
      %c0_6 = arith.constant 0 : index
      %c0_7 = arith.constant 0 : index
      %c0_8 = arith.constant 0 : index
      %9 = vector.load %arg4[%c0_6, %c0_7, %c0_8] : memref<1x2x128xf32, #tpu.memory_space<vmem>>, vector<1x2x128xf32>
      %10 = vector.shape_cast %9 : vector<1x2x128xf32> to vector<2x128xf32>
      %11 = vector.shape_cast %2 : vector<2x128xf32> to vector<1x2x128xf32>
      tpu.vector_store %arg4[%c0_6, %c0_7, %c0_8], %11 {strides = array<i32>} : memref<1x2x128xf32, #tpu.memory_space<vmem>>, vector<1x2x128xf32>,
    } else {
    }
    %c0_i32_4 = arith.constant 0 : i32
    %6 = arith.cmpi sgt, %arg1, %c0_i32_4 : i32
    %7 = arith.extui %6 : i1 to i32
    %c0_i32_5 = arith.constant 0 : i32
    %8 = arith.cmpi ne, %7, %c0_i32_5 : i32
    scf.if %8 {
      %c0_6 = arith.constant 0 : index
      %c0_7 = arith.constant 0 : index
      %c0_8 = arith.constant 0 : index
      %9 = vector.load %arg4[%c0_6, %c0_7, %c0_8] : memref<1x2x128xf32, #tpu.memory_space<vmem>>, vector<1x2x128xf32>
      %10 = vector.shape_cast %9 : vector<1x2x128xf32> to vector<2x128xf32>
      %11 = arith.addf %10, %2 : vector<2x128xf32>
      %c0_9 = arith.constant 0 : index
      %c0_10 = arith.constant 0 : index
      %c0_11 = arith.constant 0 : index
      %12 = vector.load %arg4[%c0_9, %c0_10, %c0_11] : memref<1x2x128xf32, #tpu.memory_space<vmem>>, vector<1x2x128xf32>
      %13 = vector.shape_cast %12 : vector<1x2x128xf32> to vector<2x128xf32>
      %14 = vector.shape_cast %11 : vector<2x128xf32> to vector<1x2x128xf32>
      tpu.vector_store %arg4[%c0_9, %c0_10, %c0_11], %14 {strides = array<i32>} : memref<1x2x128xf32, #tpu.memory_space<vmem>>, vector<1x2x128xf32>,
    } else {
    }
    return
  }
  func.func @transform_0(%arg0: i32, %arg1: i32) -> (i32, i32) {
    %c26_i32 = arith.constant 26 : i32
    %0 = arith.muli %arg0, %c26_i32 : i32
    %1 = arith.addi %0, %arg1 : i32
    %c0_i32 = arith.constant 0 : i32
    %c0_i32_0 = arith.constant 0 : i32
    return %c0_i32, %1 : i32, i32
  }
  func.func @transform_1(%arg0: i32, %arg1: i32) -> (i32, i32) {
    %c26_i32 = arith.constant 26 : i32
    %0 = arith.muli %arg0, %c26_i32 : i32
    %1 = arith.addi %0, %arg1 : i32
    %c0_i32 = arith.constant 0 : i32
    %c0_i32_0 = arith.constant 0 : i32
    return %1, %c0_i32 : i32, i32
  }
  func.func @transform_2(%arg0: i32, %arg1: i32) -> (i32, i32, i32) {
    %c0_i32 = arith.constant 0 : i32
    %c0_i32_0 = arith.constant 0 : i32
    %c0_i32_1 = arith.constant 0 : i32
    return %arg0, %c0_i32, %c0_i32_0 : i32, i32, i32
  }
}

</mosaic_0001>

<llo_original>
// kernel: discriminator_forward.1
$region0: #{discriminator_forward.1}
  #allocation0 [shape = 'u32[]', space=smem, size = 0x4, offset = 0x4, fixed_abs, tag = 'smem constant byte address 0x4 - core index']
  #allocation1 [shape = 'u32[144,128]{1,0:T(1,128)}', space=vmem, size = 0x12000, scoped, tag = 'internal scratch']
  %s0 = inlined_call_operand.vmem [shape: bf16[2,319488], index: 0, kind: input, shape index: {}]
  %s1 = inlined_call_operand.hbm [shape: bf16[319488,128], index: 1, kind: input, shape index: {}]
  %s2 = inlined_call_operand.vmem [shape: f32[1,2,128], index: 2, kind: output, shape index: {}]
  %s3 = sld [smem:[#allocation0]]
  $region53: #{discriminator_forward.1} parent=0
    _
  %s5 = ssub.s32 1, %s3
  %s6 = scalar_select 0, %s5, %s3
  $region1: #{discriminator_forward.1} parent=0
    #allocation2 [shape = 'u8[6291456]{0}', space=vmem, size = 0x600000, scoped, tag = 'input window, operand 1']
    #allocation3 [shape = 's32[2]{0}', space=sflag, size = 0x8, scoped, tag = 'scoped memory for discriminator_forward.1']
    %7 = vsyncpa [#allocation3], 0
    %s8 = scalar_lea.sflag [#allocation3], 1
    %9 = vsyncpa %s8, 0
    loop: start=0, step=1, limit=28
    $region2: #{discriminator_forward.1} parent=1 // loop_pre_header
      _
    $region3: #{discriminator_forward.1} parent=1 // loop_header
      %s11 = sphi 0, %s15
      %p12 = scmp.ge.s32.totalorder %s11, 28
      %s18 = sphi 0, %s30
      %s19 = sphi 0, %s26
      %s20 = sphi 0, %s18
      %s21 = sphi 0, %s19
      %s22 = sphi 0, %s20
      %s23 = sphi 0, %s21
      %s37 = sphi 0, %s39
      %s40 = sphi 0, %s37
      %s41 = sphi 0, %s40
      %s57 = sphi 0, %s41
      %s67 = sphi 0, %s69
      %s70 = sphi 0, %s67
      %s71 = sphi 0, %s70
      %s87 = sphi 0, %s71
      %s93 = sphi 0, %s95
      %s96 = sphi 0, %s93
      %s97 = sphi 0, %s96
      %s113 = sphi 0, %s97
    $region4: #{discriminator_forward.1} parent=1 // loop_header_branch
      %14 = sbr.rel (%p12) target = $region8
    $region5: #{discriminator_forward.1} parent=1 // loop_body
      %s16 = ssub.s32 %s11, 1
      %s17 = ssub.s32 %s11, 2
      %s24 = sadd.s32 1, %s19
      %p25 = scmp.ge.s32.totalorder %s24, 26
      %s26 = scalar_select %p25, 0, %s24
      %s27 = sadd.s32 1, %s18
      %s28 = scalar_select %p25, %s27, %s18
      %p29 = scmp.ge.s32.totalorder %s28, 1
      %s30 = scalar_select %p29, 0, %s28
      %s31 = smul.u32 %s18, 26
      %s32 = sadd.s32 %s31, %s19
      %s33 = smul.u32 %s30, 26
      %s34 = sadd.s32 %s33, %s26
      %s35 = ssub.s32 %s32, %s34
      %p36 = scmp.eq.s32.totalorder %s35, 0
      %s38 = sadd.s32 %s37, 1
      %s39 = scalar_select %p36, %s37, %s38
      %p42 = pneg %p36
      %p43 = scmp.eq.s32.totalorder %s11, 25
      %p44 = por %p42, %p43
      %p45 = scmp.ne.s32.totalorder %s37, %s40
      %p46 = scmp.eq.s32.totalorder %s11, 0
      %p47 = por %p45, %p46
      %p48 = scmp.ne.s32.totalorder %s37, %s40
      %p49 = scmp.eq.s32.totalorder %s16, 25
      %p50 = por %p48, %p49
      %p51 = scmp.ne.s32.totalorder %s40, %s41
      %p52 = scmp.eq.s32.totalorder %s16, 0
      %p53 = por %p51, %p52
      %p54 = scmp.ne.s32.totalorder %s40, %s41
      %p55 = scmp.eq.s32.totalorder %s17, 25
      %p56 = por %p54, %p55
      %p58 = scmp.ne.s32.totalorder %s41, %s57
      %p59 = scmp.eq.s32.totalorder %s17, 0
      %p60 = por %p58, %p59
      %s61 = smul.u32 %s18, 26
      %s62 = sadd.s32 %s61, %s19
      %s63 = smul.u32 %s30, 26
      %s64 = sadd.s32 %s63, %s26
      %s65 = ssub.s32 %s62, %s64
      %p66 = scmp.eq.s32.totalorder %s65, 0
      %s68 = sadd.s32 %s67, 1
      %s69 = scalar_select %p66, %s67, %s68
      %p72 = pneg %p66
      %p73 = scmp.eq.s32.totalorder %s11, 25
      %p74 = por %p72, %p73
      %p75 = scmp.ne.s32.totalorder %s67, %s70
      %p76 = scmp.eq.s32.totalorder %s11, 0
      %p77 = por %p75, %p76
      %p78 = scmp.ne.s32.totalorder %s67, %s70
      %p79 = scmp.eq.s32.totalorder %s16, 25
      %p80 = por %p78, %p79
      %p81 = scmp.ne.s32.totalorder %s70, %s71
      %p82 = scmp.eq.s32.totalorder %s16, 0
      %p83 = por %p81, %p82
      %p84 = scmp.ne.s32.totalorder %s70, %s71
      %p85 = scmp.eq.s32.totalorder %s17, 25
      %p86 = por %p84, %p85
      %p88 = scmp.ne.s32.totalorder %s71, %s87
      %p89 = scmp.eq.s32.totalorder %s17, 0
      %p90 = por %p88, %p89
      %s91 = ssub.s32 %s18, %s30
      %p92 = scmp.eq.s32.totalorder %s91, 0
      %s94 = sadd.s32 %s93, 1
      %s95 = scalar_select %p92, %s93, %s94
      %p98 = pneg %p92
      %p99 = scmp.eq.s32.totalorder %s11, 25
      %p100 = por %p98, %p99
      %p101 = scmp.ne.s32.totalorder %s93, %s96
      %p102 = scmp.eq.s32.totalorder %s11, 0
      %p103 = por %p101, %p102
      %p104 = scmp.ne.s32.totalorder %s93, %s96
      %p105 = scmp.eq.s32.totalorder %s16, 25
      %p106 = por %p104, %p105
      %p107 = scmp.ne.s32.totalorder %s96, %s97
      %p108 = scmp.eq.s32.totalorder %s16, 0
      %p109 = por %p107, %p108
      %p110 = scmp.ne.s32.totalorder %s96, %s97
      %p111 = scmp.eq.s32.totalorder %s17, 25
      %p112 = por %p110, %p111
      %p114 = scmp.ne.s32.totalorder %s97, %s113
      %p115 = scmp.eq.s32.totalorder %s17, 0
      %p116 = por %p114, %p115
      %p117 = scmp.le.s32.totalorder 1, %s11
      %p118 = scmp.lt.s32.totalorder %s11, 27
      %p119 = pnand %p117, %p118
      %p120 = pneg %p119
      // Predicated region
      $region9: #{discriminator_forward.1} parent=5 // pred_check
        _
      $region10: #{discriminator_forward.1} parent=5 // pred_check_branch
        %122 = sbr.rel (%p119) target = $region12
      $region11: #{discriminator_forward.1} parent=5 // pred_region
        %s123 = ssub.s32 %s11, 1
      $region12: #{discriminator_forward.1} parent=5 // pred_fallthru
        _
      %p124 = scmp.lt.s32.totalorder %s11, 26
      // Predicated region
      $region13: #{discriminator_forward.1} parent=5 // pred_check
        %p125 = pneg %p124
      $region14: #{discriminator_forward.1} parent=5 // pred_check_branch
        %127 = sbr.rel (%p125) target = $region16
      $region15: #{discriminator_forward.1} parent=5 // pred_region
        // Predicated region
        $region17: #{discriminator_forward.1} parent=15 // pred_check
          %p128 = pneg %p47
        $region18: #{discriminator_forward.1} parent=15 // pred_check_branch
          %130 = sbr.rel (%p128) target = $region20
        $region19: #{discriminator_forward.1} parent=15 // pred_region
          %s131 = smul.u32 %s18, 26
          %s132 = sadd.s32 %s131, %s19
          %s133 = smul.u32 96, %s132
          %p134 = scmp.lt.s32.totalorder %s133, 2495
          %s135 = scalar_select %p134, %s133, 2495
          %s136 = scalar_lea.vmem %s0, %s135
          %s137 = smul.u32 %s18, 26
          %s138 = sadd.s32 %s137, %s19
          %s139 = smul.u32 96, %s138
        $region20: #{discriminator_forward.1} parent=15 // pred_fallthru
          _
        // Predicated region
        $region21: #{discriminator_forward.1} parent=15 // pred_check
          %p140 = pneg %p77
        $region22: #{discriminator_forward.1} parent=15 // pred_check_branch
          %142 = sbr.rel (%p140) target = $region24
        $region23: #{discriminator_forward.1} parent=15 // pred_region
          %s143 = sand.u32 %s67, 1
          %s144 = scalar_lea.sflag [#allocation3], %s143
          %s145 = sand.u32 %s67, 1
          %s146 = smul.addr %s145, 6144
          %s147 = scalar_lea.vmem [#allocation2], %s146
          %s148 = smul.u32 %s18, 26
          %s149 = sadd.s32 %s148, %s19
          %s150 = smul.u32 1536, %s149
          %s152 = ssub.s32 98304, 98304
          %153 = vsyncadd %s144, %s152
          %s154 = smul.addr %s150, 64
          %s155 = scalar_lea.hbm %s1, %s154
          %s156 = sshll.u32 %s147, 4
          %s157 = int_to_ptr.vmem [resolvable:$true] %s156
          %162 = dma.hbm_to_vmem [thread:$0]  %s155, 98304, %s157, %s144, 64, 64, 4
        $region24: #{discriminator_forward.1} parent=15 // pred_fallthru
          _
      $region16: #{discriminator_forward.1} parent=5 // pred_fallthru
        _
      %p163 = scmp.le.s32.totalorder 1, %s11
      %p164 = scmp.lt.s32.totalorder %s11, 27
      %p165 = pnand %p163, %p164
      %p166 = pneg %p165
      // Predicated region
      $region25: #{discriminator_forward.1} parent=5 // pred_check
        _
      $region26: #{discriminator_forward.1} parent=5 // pred_check_branch
        %168 = sbr.rel (%p165) target = $region28
      $region27: #{discriminator_forward.1} parent=5 // pred_region
        %s169 = ssub.s32 %s11, 1
        %s170 = sand.u32 %s70, 1
        %s171 = scalar_lea.sflag [#allocation3], %s170
        %s172 = sand.u32 %s70, 1
        %s173 = smul.addr %s172, 6144
        %s174 = scalar_lea.vmem [#allocation2], %s173
        // Predicated region
        $region29: #{discriminator_forward.1} parent=27 // pred_check
          %p175 = pneg %p83
        $region30: #{discriminator_forward.1} parent=27 // pred_check_branch
          %177 = sbr.rel (%p175) target = $region32
        $region31: #{discriminator_forward.1} parent=27 // pred_region
          %178 = dma.done %s171, 98304
        $region32: #{discriminator_forward.1} parent=27 // pred_fallthru
          _
        %s179 = smul.u32 %s20, 26
        %s180 = sadd.s32 %s179, %s21
        %s181 = smul.u32 96, %s180
        %p182 = scmp.lt.s32.totalorder %s181, 2495
        %s183 = scalar_select %p182, %s181, 2495
        %s184 = scalar_lea.vmem %s0, %s183
        %p185 = pneg %p53
        %p186 = pneg %p50
        %s187 = sand.u32 %s70, 1
        %s188 = scalar_lea.sflag [#allocation3], %s187
        %s189 = sand.u32 %s70, 1
        %s190 = smul.addr %s189, 6144
        %s191 = scalar_lea.vmem [#allocation2], %s190
        %p192 = pneg %p83
        %p193 = pneg %p80
        %p194 = pneg %p109
        %p195 = pneg %p106
        %p196 = scmp.lt.s32.totalorder %s20, 0
        %s197 = scalar_select %p196, %s20, 0
        %s198 = smul.addr %s197, 2
        %s199 = scalar_lea.vmem %s2, %s198
        %s200 = smul.u32 %s20, 26
        %s201 = sadd.s32 %s200, %s21
        %s202 = smul.u32 96, %s201
        %p203 = scmp.lt.s32.totalorder %s202, 2495
        %s204 = scalar_select %p203, %s202, 2495
        %s205 = scalar_lea.vmem %s0, %s204
        %s206 = smul.u32 %s20, 26
        %s207 = sadd.s32 %s206, %s21
        %s208 = smul.u32 96, %s207
        %s209 = smul.u32 %s20, 26
        %s210 = sadd.s32 %s209, %s21
        %s211 = smul.u32 1536, %s210
        %p212 = scmp.lt.s32.totalorder %s20, 0
        %s213 = scalar_select %p212, %s20, 0
        %s214 = smul.addr %s213, 2
        %s215 = scalar_lea.vmem %s2, %s214
        %v217 = vld [vmem:[%s205] sm:$0xff]
        %v218 = vld [vmem:[%s205 + $0x8] sm:$0xff]
        %v219 = vld [vmem:[%s205 + $0x10] sm:$0xff]
        %v220 = vld [vmem:[%s205 + $0x18] sm:$0xff]
        %v221 = vld [vmem:[%s205 + $0x20] sm:$0xff]
        %v222 = vld [vmem:[%s205 + $0x28] sm:$0xff]
        %v223 = vld [vmem:[%s205 + $0x30] sm:$0xff]
        %v224 = vld [vmem:[%s205 + $0x38] sm:$0xff]
        %v225 = vld [vmem:[%s205 + $0x40] sm:$0xff]
        %v226 = vld [vmem:[%s205 + $0x48] sm:$0xff]
        %v227 = vld [vmem:[%s205 + $0x50] sm:$0xff]
        %v228 = vld [vmem:[%s205 + $0x58] sm:$0xff]
        %v229 = vld [vmem:[%s174] sm:$0xf]
        %v230 = vld [vmem:[%s174 + $0x4] sm:$0xf]
        %v231 = vld [vmem:[%s174 + $0x8] sm:$0xf]
        %v232 = vld [vmem:[%s174 + $0xc] sm:$0xf]
        %v233 = vld [vmem:[%s174 + $0x10] sm:$0xf]
        %v234 = vld [vmem:[%s174 + $0x14] sm:$0xf]
        %v235 = vld [vmem:[%s174 + $0x18] sm:$0xf]
        %v236 = vld [vmem:[%s174 + $0x1c] sm:$0xf]
        %v237 = vld [vmem:[%s174 + $0x20] sm:$0xf]
        %v238 = vld [vmem:[%s174 + $0x24] sm:$0xf]
        %v239 = vld [vmem:[%s174 + $0x28] sm:$0xf]
        %v240 = vld [vmem:[%s174 + $0x2c] sm:$0xf]
        %v241 = vld [vmem:[%s174 + $0x30] sm:$0xf]
        %v242 = vld [vmem:[%s174 + $0x34] sm:$0xf]
        %v243 = vld [vmem:[%s174 + $0x38] sm:$0xf]
        %v244 = vld [vmem:[%s174 + $0x3c] sm:$0xf]
        %v245 = vld [vmem:[%s174 + $0x40] sm:$0xf]
        %v246 = vld [vmem:[%s174 + $0x44] sm:$0xf]
        %v247 = vld [vmem:[%s174 + $0x48] sm:$0xf]
        %v248 = vld [vmem:[%s174 + $0x4c] sm:$0xf]
        %v249 = vld [vmem:[%s174 + $0x50] sm:$0xf]
        %v250 = vld [vmem:[%s174 + $0x54] sm:$0xf]
        %v251 = vld [vmem:[%s174 + $0x58] sm:$0xf]
        %v252 = vld [vmem:[%s174 + $0x5c] sm:$0xf]
        %v253 = vld [vmem:[%s174 + $0x60] sm:$0xf]
        %v254 = vld [vmem:[%s174 + $0x64] sm:$0xf]
        %v255 = vld [vmem:[%s174 + $0x68] sm:$0xf]
        %v256 = vld [vmem:[%s174 + $0x6c] sm:$0xf]
        %v257 = vld [vmem:[%s174 + $0x70] sm:$0xf]
        %v258 = vld [vmem:[%s174 + $0x74] sm:$0xf]
        %v259 = vld [vmem:[%s174 + $0x78] sm:$0xf]
        %v260 = vld [vmem:[%s174 + $0x7c] sm:$0xf]
        %v261 = vld [vmem:[%s174 + $0x80] sm:$0xf]
        %v262 = vld [vmem:[%s174 + $0x84] sm:$0xf]
        %v263 = vld [vmem:[%s174 + $0x88] sm:$0xf]
        %v264 = vld [vmem:[%s174 + $0x8c] sm:$0xf]
        %v265 = vld [vmem:[%s174 + $0x90] sm:$0xf]
        %v266 = vld [vmem:[%s174 + $0x94] sm:$0xf]
        %v267 = vld [vmem:[%s174 + $0x98] sm:$0xf]
        %v268 = vld [vmem:[%s174 + $0x9c] sm:$0xf]
        %v269 = vld [vmem:[%s174 + $0xa0] sm:$0xf]
        %v270 = vld [vmem:[%s174 + $0xa4] sm:$0xf]
        %v271 = vld [vmem:[%s174 + $0xa8] sm:$0xf]
        %v272 = vld [vmem:[%s174 + $0xac] sm:$0xf]
        %v273 = vld [vmem:[%s174 + $0xb0] sm:$0xf]
        %v274 = vld [vmem:[%s174 + $0xb4] sm:$0xf]
        %v275 = vld [vmem:[%s174 + $0xb8] sm:$0xf]
        %v276 = vld [vmem:[%s174 + $0xbc] sm:$0xf]
        %v277 = vld [vmem:[%s174 + $0xc0] sm:$0xf]
        %v278 = vld [vmem:[%s174 + $0xc4] sm:$0xf]
        %v279 = vld [vmem:[%s174 + $0xc8] sm:$0xf]
        %v280 = vld [vmem:[%s174 + $0xcc] sm:$0xf]
        %v281 = vld [vmem:[%s174 + $0xd0] sm:$0xf]
        %v282 = vld [vmem:[%s174 + $0xd4] sm:$0xf]
        %v283 = vld [vmem:[%s174 + $0xd8] sm:$0xf]
        %v284 = vld [vmem:[%s174 + $0xdc] sm:$0xf]
        %v285 = vld [vmem:[%s174 + $0xe0] sm:$0xf]
        %v286 = vld [vmem:[%s174 + $0xe4] sm:$0xf]
        %v287 = vld [vmem:[%s174 + $0xe8] sm:$0xf]
        %v288 = vld [vmem:[%s174 + $0xec] sm:$0xf]
        %v289 = vld [vmem:[%s174 + $0xf0] sm:$0xf]
        %v290 = vld [vmem:[%s174 + $0xf4] sm:$0xf]
        %v291 = vld [vmem:[%s174 + $0xf8] sm:$0xf]
        %v292 = vld [vmem:[%s174 + $0xfc] sm:$0xf]
        %v293 = vld [vmem:[%s174 + $0x100] sm:$0xf]
        %v294 = vld [vmem:[%s174 + $0x104] sm:$0xf]
        %v295 = vld [vmem:[%s174 + $0x108] sm:$0xf]
        %v296 = vld [vmem:[%s174 + $0x10c] sm:$0xf]
        %v297 = vld [vmem:[%s174 + $0x110] sm:$0xf]
        %v298 = vld [vmem:[%s174 + $0x114] sm:$0xf]
        %v299 = vld [vmem:[%s174 + $0x118] sm:$0xf]
        %v300 = vld [vmem:[%s174 + $0x11c] sm:$0xf]
        %v301 = vld [vmem:[%s174 + $0x120] sm:$0xf]
        %v302 = vld [vmem:[%s174 + $0x124] sm:$0xf]
        %v303 = vld [vmem:[%s174 + $0x128] sm:$0xf]
        %v304 = vld [vmem:[%s174 + $0x12c] sm:$0xf]
        %v305 = vld [vmem:[%s174 + $0x130] sm:$0xf]
        %v306 = vld [vmem:[%s174 + $0x134] sm:$0xf]
        %v307 = vld [vmem:[%s174 + $0x138] sm:$0xf]
        %v308 = vld [vmem:[%s174 + $0x13c] sm:$0xf]
        %v309 = vld [vmem:[%s174 + $0x140] sm:$0xf]
        %v310 = vld [vmem:[%s174 + $0x144] sm:$0xf]
        %v311 = vld [vmem:[%s174 + $0x148] sm:$0xf]
        %v312 = vld [vmem:[%s174 + $0x14c] sm:$0xf]
        %v313 = vld [vmem:[%s174 + $0x150] sm:$0xf]
        %v314 = vld [vmem:[%s174 + $0x154] sm:$0xf]
        %v315 = vld [vmem:[%s174 + $0x158] sm:$0xf]
        %v316 = vld [vmem:[%s174 + $0x15c] sm:$0xf]
        %v317 = vld [vmem:[%s174 + $0x160] sm:$0xf]
        %v318 = vld [vmem:[%s174 + $0x164] sm:$0xf]
        %v319 = vld [vmem:[%s174 + $0x168] sm:$0xf]
        %v320 = vld [vmem:[%s174 + $0x16c] sm:$0xf]
        %v321 = vld [vmem:[%s174 + $0x170] sm:$0xf]
        %v322 = vld [vmem:[%s174 + $0x174] sm:$0xf]
        %v323 = vld [vmem:[%s174 + $0x178] sm:$0xf]
        %v324 = vld [vmem:[%s174 + $0x17c] sm:$0xf]
        %v325 = vld [vmem:[%s174 + $0x180] sm:$0xf]
        %v326 = vld [vmem:[%s174 + $0x184] sm:$0xf]
        %v327 = vld [vmem:[%s174 + $0x188] sm:$0xf]
        %v328 = vld [vmem:[%s174 + $0x18c] sm:$0xf]
        %v329 = vld [vmem:[%s174 + $0x190] sm:$0xf]
        %v330 = vld [vmem:[%s174 + $0x194] sm:$0xf]
        %v331 = vld [vmem:[%s174 + $0x198] sm:$0xf]
        %v332 = vld [vmem:[%s174 + $0x19c] sm:$0xf]
        %v333 = vld [vmem:[%s174 + $0x1a0] sm:$0xf]
        %v334 = vld [vmem:[%s174 + $0x1a4] sm:$0xf]
        %v335 = vld [vmem:[%s174 + $0x1a8] sm:$0xf]
        %v336 = vld [vmem:[%s174 + $0x1ac] sm:$0xf]
        %v337 = vld [vmem:[%s174 + $0x1b0] sm:$0xf]
        %v338 = vld [vmem:[%s174 + $0x1b4] sm:$0xf]
        %v339 = vld [vmem:[%s174 + $0x1b8] sm:$0xf]
        %v340 = vld [vmem:[%s174 + $0x1bc] sm:$0xf]
        %v341 = vld [vmem:[%s174 + $0x1c0] sm:$0xf]
        %v342 = vld [vmem:[%s174 + $0x1c4] sm:$0xf]
        %v343 = vld [vmem:[%s174 + $0x1c8] sm:$0xf]
        %v344 = vld [vmem:[%s174 + $0x1cc] sm:$0xf]
        %v345 = vld [vmem:[%s174 + $0x1d0] sm:$0xf]
        %v346 = vld [vmem:[%s174 + $0x1d4] sm:$0xf]
        %v347 = vld [vmem:[%s174 + $0x1d8] sm:$0xf]
        %v348 = vld [vmem:[%s174 + $0x1dc] sm:$0xf]
        %v349 = vld [vmem:[%s174 + $0x1e0] sm:$0xf]
        %v350 = vld [vmem:[%s174 + $0x1e4] sm:$0xf]
        %v351 = vld [vmem:[%s174 + $0x1e8] sm:$0xf]
        %v352 = vld [vmem:[%s174 + $0x1ec] sm:$0xf]
        %v353 = vld [vmem:[%s174 + $0x1f0] sm:$0xf]
        %v354 = vld [vmem:[%s174 + $0x1f4] sm:$0xf]
        %v355 = vld [vmem:[%s174 + $0x1f8] sm:$0xf]
        %v356 = vld [vmem:[%s174 + $0x1fc] sm:$0xf]
        %v357 = vld [vmem:[%s174 + $0x200] sm:$0xf]
        %v358 = vld [vmem:[%s174 + $0x204] sm:$0xf]
        %v359 = vld [vmem:[%s174 + $0x208] sm:$0xf]
        %v360 = vld [vmem:[%s174 + $0x20c] sm:$0xf]
        %v361 = vld [vmem:[%s174 + $0x210] sm:$0xf]
        %v362 = vld [vmem:[%s174 + $0x214] sm:$0xf]
        %v363 = vld [vmem:[%s174 + $0x218] sm:$0xf]
        %v364 = vld [vmem:[%s174 + $0x21c] sm:$0xf]
        %v365 = vld [vmem:[%s174 + $0x220] sm:$0xf]
        %v366 = vld [vmem:[%s174 + $0x224] sm:$0xf]
        %v367 = vld [vmem:[%s174 + $0x228] sm:$0xf]
        %v368 = vld [vmem:[%s174 + $0x22c] sm:$0xf]
        %v369 = vld [vmem:[%s174 + $0x230] sm:$0xf]
        %v370 = vld [vmem:[%s174 + $0x234] sm:$0xf]
        %v371 = vld [vmem:[%s174 + $0x238] sm:$0xf]
        %v372 = vld [vmem:[%s174 + $0x23c] sm:$0xf]
        %v373 = vld [vmem:[%s174 + $0x240] sm:$0xf]
        %v374 = vld [vmem:[%s174 + $0x244] sm:$0xf]
        %v375 = vld [vmem:[%s174 + $0x248] sm:$0xf]
        %v376 = vld [vmem:[%s174 + $0x24c] sm:$0xf]
        %v377 = vld [vmem:[%s174 + $0x250] sm:$0xf]
        %v378 = vld [vmem:[%s174 + $0x254] sm:$0xf]
        %v379 = vld [vmem:[%s174 + $0x258] sm:$0xf]
        %v380 = vld [vmem:[%s174 + $0x25c] sm:$0xf]
        %v381 = vld [vmem:[%s174 + $0x260] sm:$0xf]
        %v382 = vld [vmem:[%s174 + $0x264] sm:$0xf]
        %v383 = vld [vmem:[%s174 + $0x268] sm:$0xf]
        %v384 = vld [vmem:[%s174 + $0x26c] sm:$0xf]
        %v385 = vld [vmem:[%s174 + $0x270] sm:$0xf]
        %v386 = vld [vmem:[%s174 + $0x274] sm:$0xf]
        %v387 = vld [vmem:[%s174 + $0x278] sm:$0xf]
        %v388 = vld [vmem:[%s174 + $0x27c] sm:$0xf]
        %v389 = vld [vmem:[%s174 + $0x280] sm:$0xf]
        %v390 = vld [vmem:[%s174 + $0x284] sm:$0xf]
        %v391 = vld [vmem:[%s174 + $0x288] sm:$0xf]
        %v392 = vld [vmem:[%s174 + $0x28c] sm:$0xf]
        %v393 = vld [vmem:[%s174 + $0x290] sm:$0xf]
        %v394 = vld [vmem:[%s174 + $0x294] sm:$0xf]
        %v395 = vld [vmem:[%s174 + $0x298] sm:$0xf]
        %v396 = vld [vmem:[%s174 + $0x29c] sm:$0xf]
        %v397 = vld [vmem:[%s174 + $0x2a0] sm:$0xf]
        %v398 = vld [vmem:[%s174 + $0x2a4] sm:$0xf]
        %v399 = vld [vmem:[%s174 + $0x2a8] sm:$0xf]
        %v400 = vld [vmem:[%s174 + $0x2ac] sm:$0xf]
        %v401 = vld [vmem:[%s174 + $0x2b0] sm:$0xf]
        %v402 = vld [vmem:[%s174 + $0x2b4] sm:$0xf]
        %v403 = vld [vmem:[%s174 + $0x2b8] sm:$0xf]
        %v404 = vld [vmem:[%s174 + $0x2bc] sm:$0xf]
        %v405 = vld [vmem:[%s174 + $0x2c0] sm:$0xf]
        %v406 = vld [vmem:[%s174 + $0x2c4] sm:$0xf]
        %v407 = vld [vmem:[%s174 + $0x2c8] sm:$0xf]
        %v408 = vld [vmem:[%s174 + $0x2cc] sm:$0xf]
        %v409 = vld [vmem:[%s174 + $0x2d0] sm:$0xf]
        %v410 = vld [vmem:[%s174 + $0x2d4] sm:$0xf]
        %v411 = vld [vmem:[%s174 + $0x2d8] sm:$0xf]
        %v412 = vld [vmem:[%s174 + $0x2dc] sm:$0xf]
        %v413 = vld [vmem:[%s174 + $0x2e0] sm:$0xf]
        %v414 = vld [vmem:[%s174 + $0x2e4] sm:$0xf]
        %v415 = vld [vmem:[%s174 + $0x2e8] sm:$0xf]
        %v416 = vld [vmem:[%s174 + $0x2ec] sm:$0xf]
        %v417 = vld [vmem:[%s174 + $0x2f0] sm:$0xf]
        %v418 = vld [vmem:[%s174 + $0x2f4] sm:$0xf]
        %v419 = vld [vmem:[%s174 + $0x2f8] sm:$0xf]
        %v420 = vld [vmem:[%s174 + $0x2fc] sm:$0xf]
        %v421 = vld [vmem:[%s174 + $0x300] sm:$0xf]
        %v422 = vld [vmem:[%s174 + $0x304] sm:$0xf]
        %v423 = vld [vmem:[%s174 + $0x308] sm:$0xf]
        %v424 = vld [vmem:[%s174 + $0x30c] sm:$0xf]
        %v425 = vld [vmem:[%s174 + $0x310] sm:$0xf]
        %v426 = vld [vmem:[%s174 + $0x314] sm:$0xf]
        %v427 = vld [vmem:[%s174 + $0x318] sm:$0xf]
        %v428 = vld [vmem:[%s174 + $0x31c] sm:$0xf]
        %v429 = vld [vmem:[%s174 + $0x320] sm:$0xf]
        %v430 = vld [vmem:[%s174 + $0x324] sm:$0xf]
        %v431 = vld [vmem:[%s174 + $0x328] sm:$0xf]
        %v432 = vld [vmem:[%s174 + $0x32c] sm:$0xf]
        %v433 = vld [vmem:[%s174 + $0x330] sm:$0xf]
        %v434 = vld [vmem:[%s174 + $0x334] sm:$0xf]
        %v435 = vld [vmem:[%s174 + $0x338] sm:$0xf]
        %v436 = vld [vmem:[%s174 + $0x33c] sm:$0xf]
        %v437 = vld [vmem:[%s174 + $0x340] sm:$0xf]
        %v438 = vld [vmem:[%s174 + $0x344] sm:$0xf]
        %v439 = vld [vmem:[%s174 + $0x348] sm:$0xf]
        %v440 = vld [vmem:[%s174 + $0x34c] sm:$0xf]
        %v441 = vld [vmem:[%s174 + $0x350] sm:$0xf]
        %v442 = vld [vmem:[%s174 + $0x354] sm:$0xf]
        %v443 = vld [vmem:[%s174 + $0x358] sm:$0xf]
        %v444 = vld [vmem:[%s174 + $0x35c] sm:$0xf]
        %v445 = vld [vmem:[%s174 + $0x360] sm:$0xf]
        %v446 = vld [vmem:[%s174 + $0x364] sm:$0xf]
        %v447 = vld [vmem:[%s174 + $0x368] sm:$0xf]
        %v448 = vld [vmem:[%s174 + $0x36c] sm:$0xf]
        %v449 = vld [vmem:[%s174 + $0x370] sm:$0xf]
        %v450 = vld [vmem:[%s174 + $0x374] sm:$0xf]
        %v451 = vld [vmem:[%s174 + $0x378] sm:$0xf]
        %v452 = vld [vmem:[%s174 + $0x37c] sm:$0xf]
        %v453 = vld [vmem:[%s174 + $0x380] sm:$0xf]
        %v454 = vld [vmem:[%s174 + $0x384] sm:$0xf]
        %v455 = vld [vmem:[%s174 + $0x388] sm:$0xf]
        %v456 = vld [vmem:[%s174 + $0x38c] sm:$0xf]
        %v457 = vld [vmem:[%s174 + $0x390] sm:$0xf]
        %v458 = vld [vmem:[%s174 + $0x394] sm:$0xf]
        %v459 = vld [vmem:[%s174 + $0x398] sm:$0xf]
        %v460 = vld [vmem:[%s174 + $0x39c] sm:$0xf]
        %v461 = vld [vmem:[%s174 + $0x3a0] sm:$0xf]
        %v462 = vld [vmem:[%s174 + $0x3a4] sm:$0xf]
        %v463 = vld [vmem:[%s174 + $0x3a8] sm:$0xf]
        %v464 = vld [vmem:[%s174 + $0x3ac] sm:$0xf]
        %v465 = vld [vmem:[%s174 + $0x3b0] sm:$0xf]
        %v466 = vld [vmem:[%s174 + $0x3b4] sm:$0xf]
        %v467 = vld [vmem:[%s174 + $0x3b8] sm:$0xf]
        %v468 = vld [vmem:[%s174 + $0x3bc] sm:$0xf]
        %v469 = vld [vmem:[%s174 + $0x3c0] sm:$0xf]
        %v470 = vld [vmem:[%s174 + $0x3c4] sm:$0xf]
        %v471 = vld [vmem:[%s174 + $0x3c8] sm:$0xf]
        %v472 = vld [vmem:[%s174 + $0x3cc] sm:$0xf]
        %v473 = vld [vmem:[%s174 + $0x3d0] sm:$0xf]
        %v474 = vld [vmem:[%s174 + $0x3d4] sm:$0xf]
        %v475 = vld [vmem:[%s174 + $0x3d8] sm:$0xf]
        %v476 = vld [vmem:[%s174 + $0x3dc] sm:$0xf]
        %v477 = vld [vmem:[%s174 + $0x3e0] sm:$0xf]
        %v478 = vld [vmem:[%s174 + $0x3e4] sm:$0xf]
        %v479 = vld [vmem:[%s174 + $0x3e8] sm:$0xf]
        %v480 = vld [vmem:[%s174 + $0x3ec] sm:$0xf]
        %v481 = vld [vmem:[%s174 + $0x3f0] sm:$0xf]
        %v482 = vld [vmem:[%s174 + $0x3f4] sm:$0xf]
        %v483 = vld [vmem:[%s174 + $0x3f8] sm:$0xf]
        %v484 = vld [vmem:[%s174 + $0x3fc] sm:$0xf]
        %v485 = vld [vmem:[%s174 + $0x400] sm:$0xf]
        %v486 = vld [vmem:[%s174 + $0x404] sm:$0xf]
        %v487 = vld [vmem:[%s174 + $0x408] sm:$0xf]
        %v488 = vld [vmem:[%s174 + $0x40c] sm:$0xf]
        %v489 = vld [vmem:[%s174 + $0x410] sm:$0xf]
        %v490 = vld [vmem:[%s174 + $0x414] sm:$0xf]
        %v491 = vld [vmem:[%s174 + $0x418] sm:$0xf]
        %v492 = vld [vmem:[%s174 + $0x41c] sm:$0xf]
        %v493 = vld [vmem:[%s174 + $0x420] sm:$0xf]
        %v494 = vld [vmem:[%s174 + $0x424] sm:$0xf]
        %v495 = vld [vmem:[%s174 + $0x428] sm:$0xf]
        %v496 = vld [vmem:[%s174 + $0x42c] sm:$0xf]
        %v497 = vld [vmem:[%s174 + $0x430] sm:$0xf]
        %v498 = vld [vmem:[%s174 + $0x434] sm:$0xf]
        %v499 = vld [vmem:[%s174 + $0x438] sm:$0xf]
        %v500 = vld [vmem:[%s174 + $0x43c] sm:$0xf]
        %v501 = vld [vmem:[%s174 + $0x440] sm:$0xf]
        %v502 = vld [vmem:[%s174 + $0x444] sm:$0xf]
        %v503 = vld [vmem:[%s174 + $0x448] sm:$0xf]
        %v504 = vld [vmem:[%s174 + $0x44c] sm:$0xf]
        %v505 = vld [vmem:[%s174 + $0x450] sm:$0xf]
        %v506 = vld [vmem:[%s174 + $0x454] sm:$0xf]
        %v507 = vld [vmem:[%s174 + $0x458] sm:$0xf]
        %v508 = vld [vmem:[%s174 + $0x45c] sm:$0xf]
        %v509 = vld [vmem:[%s174 + $0x460] sm:$0xf]
        %v510 = vld [vmem:[%s174 + $0x464] sm:$0xf]
        %v511 = vld [vmem:[%s174 + $0x468] sm:$0xf]
        %v512 = vld [vmem:[%s174 + $0x46c] sm:$0xf]
        %v513 = vld [vmem:[%s174 + $0x470] sm:$0xf]
        %v514 = vld [vmem:[%s174 + $0x474] sm:$0xf]
        %v515 = vld [vmem:[%s174 + $0x478] sm:$0xf]
        %v516 = vld [vmem:[%s174 + $0x47c] sm:$0xf]
        %v517 = vld [vmem:[%s174 + $0x480] sm:$0xf]
        %v518 = vld [vmem:[%s174 + $0x484] sm:$0xf]
        %v519 = vld [vmem:[%s174 + $0x488] sm:$0xf]
        %v520 = vld [vmem:[%s174 + $0x48c] sm:$0xf]
        %v521 = vld [vmem:[%s174 + $0x490] sm:$0xf]
        %v522 = vld [vmem:[%s174 + $0x494] sm:$0xf]
        %v523 = vld [vmem:[%s174 + $0x498] sm:$0xf]
        %v524 = vld [vmem:[%s174 + $0x49c] sm:$0xf]
        %v525 = vld [vmem:[%s174 + $0x4a0] sm:$0xf]
        %v526 = vld [vmem:[%s174 + $0x4a4] sm:$0xf]
        %v527 = vld [vmem:[%s174 + $0x4a8] sm:$0xf]
        %v528 = vld [vmem:[%s174 + $0x4ac] sm:$0xf]
        %v529 = vld [vmem:[%s174 + $0x4b0] sm:$0xf]
        %v530 = vld [vmem:[%s174 + $0x4b4] sm:$0xf]
        %v531 = vld [vmem:[%s174 + $0x4b8] sm:$0xf]
        %v532 = vld [vmem:[%s174 + $0x4bc] sm:$0xf]
        %v533 = vld [vmem:[%s174 + $0x4c0] sm:$0xf]
        %v534 = vld [vmem:[%s174 + $0x4c4] sm:$0xf]
        %v535 = vld [vmem:[%s174 + $0x4c8] sm:$0xf]
        %v536 = vld [vmem:[%s174 + $0x4cc] sm:$0xf]
        %v537 = vld [vmem:[%s174 + $0x4d0] sm:$0xf]
        %v538 = vld [vmem:[%s174 + $0x4d4] sm:$0xf]
        %v539 = vld [vmem:[%s174 + $0x4d8] sm:$0xf]
        %v540 = vld [vmem:[%s174 + $0x4dc] sm:$0xf]
        %v541 = vld [vmem:[%s174 + $0x4e0] sm:$0xf]
        %v542 = vld [vmem:[%s174 + $0x4e4] sm:$0xf]
        %v543 = vld [vmem:[%s174 + $0x4e8] sm:$0xf]
        %v544 = vld [vmem:[%s174 + $0x4ec] sm:$0xf]
        %v545 = vld [vmem:[%s174 + $0x4f0] sm:$0xf]
        %v546 = vld [vmem:[%s174 + $0x4f4] sm:$0xf]
        %v547 = vld [vmem:[%s174 + $0x4f8] sm:$0xf]
        %v548 = vld [vmem:[%s174 + $0x4fc] sm:$0xf]
        %v549 = vld [vmem:[%s174 + $0x500] sm:$0xf]
        %v550 = vld [vmem:[%s174 + $0x504] sm:$0xf]
        %v551 = vld [vmem:[%s174 + $0x508] sm:$0xf]
        %v552 = vld [vmem:[%s174 + $0x50c] sm:$0xf]
        %v553 = vld [vmem:[%s174 + $0x510] sm:$0xf]
        %v554 = vld [vmem:[%s174 + $0x514] sm:$0xf]
        %v555 = vld [vmem:[%s174 + $0x518] sm:$0xf]
        %v556 = vld [vmem:[%s174 + $0x51c] sm:$0xf]
        %v557 = vld [vmem:[%s174 + $0x520] sm:$0xf]
        %v558 = vld [vmem:[%s174 + $0x524] sm:$0xf]
        %v559 = vld [vmem:[%s174 + $0x528] sm:$0xf]
        %v560 = vld [vmem:[%s174 + $0x52c] sm:$0xf]
        %v561 = vld [vmem:[%s174 + $0x530] sm:$0xf]
        %v562 = vld [vmem:[%s174 + $0x534] sm:$0xf]
        %v563 = vld [vmem:[%s174 + $0x538] sm:$0xf]
        %v564 = vld [vmem:[%s174 + $0x53c] sm:$0xf]
        %v565 = vld [vmem:[%s174 + $0x540] sm:$0xf]
        %v566 = vld [vmem:[%s174 + $0x544] sm:$0xf]
        %v567 = vld [vmem:[%s174 + $0x548] sm:$0xf]
        %v568 = vld [vmem:[%s174 + $0x54c] sm:$0xf]
        %v569 = vld [vmem:[%s174 + $0x550] sm:$0xf]
        %v570 = vld [vmem:[%s174 + $0x554] sm:$0xf]
        %v571 = vld [vmem:[%s174 + $0x558] sm:$0xf]
        %v572 = vld [vmem:[%s174 + $0x55c] sm:$0xf]
        %v573 = vld [vmem:[%s174 + $0x560] sm:$0xf]
        %v574 = vld [vmem:[%s174 + $0x564] sm:$0xf]
        %v575 = vld [vmem:[%s174 + $0x568] sm:$0xf]
        %v576 = vld [vmem:[%s174 + $0x56c] sm:$0xf]
        %v577 = vld [vmem:[%s174 + $0x570] sm:$0xf]
        %v578 = vld [vmem:[%s174 + $0x574] sm:$0xf]
        %v579 = vld [vmem:[%s174 + $0x578] sm:$0xf]
        %v580 = vld [vmem:[%s174 + $0x57c] sm:$0xf]
        %v581 = vld [vmem:[%s174 + $0x580] sm:$0xf]
        %v582 = vld [vmem:[%s174 + $0x584] sm:$0xf]
        %v583 = vld [vmem:[%s174 + $0x588] sm:$0xf]
        %v584 = vld [vmem:[%s174 + $0x58c] sm:$0xf]
        %v585 = vld [vmem:[%s174 + $0x590] sm:$0xf]
        %v586 = vld [vmem:[%s174 + $0x594] sm:$0xf]
        %v587 = vld [vmem:[%s174 + $0x598] sm:$0xf]
        %v588 = vld [vmem:[%s174 + $0x59c] sm:$0xf]
        %v589 = vld [vmem:[%s174 + $0x5a0] sm:$0xf]
        %v590 = vld [vmem:[%s174 + $0x5a4] sm:$0xf]
        %v591 = vld [vmem:[%s174 + $0x5a8] sm:$0xf]
        %v592 = vld [vmem:[%s174 + $0x5ac] sm:$0xf]
        %v593 = vld [vmem:[%s174 + $0x5b0] sm:$0xf]
        %v594 = vld [vmem:[%s174 + $0x5b4] sm:$0xf]
        %v595 = vld [vmem:[%s174 + $0x5b8] sm:$0xf]
        %v596 = vld [vmem:[%s174 + $0x5bc] sm:$0xf]
        %v597 = vld [vmem:[%s174 + $0x5c0] sm:$0xf]
        %v598 = vld [vmem:[%s174 + $0x5c4] sm:$0xf]
        %v599 = vld [vmem:[%s174 + $0x5c8] sm:$0xf]
        %v600 = vld [vmem:[%s174 + $0x5cc] sm:$0xf]
        %v601 = vld [vmem:[%s174 + $0x5d0] sm:$0xf]
        %v602 = vld [vmem:[%s174 + $0x5d4] sm:$0xf]
        %v603 = vld [vmem:[%s174 + $0x5d8] sm:$0xf]
        %v604 = vld [vmem:[%s174 + $0x5dc] sm:$0xf]
        %v605 = vld [vmem:[%s174 + $0x5e0] sm:$0xf]
        %v606 = vld [vmem:[%s174 + $0x5e4] sm:$0xf]
        %v607 = vld [vmem:[%s174 + $0x5e8] sm:$0xf]
        %v608 = vld [vmem:[%s174 + $0x5ec] sm:$0xf]
        %v609 = vld [vmem:[%s174 + $0x5f0] sm:$0xf]
        %v610 = vld [vmem:[%s174 + $0x5f4] sm:$0xf]
        %v611 = vld [vmem:[%s174 + $0x5f8] sm:$0xf]
        %v612 = vld [vmem:[%s174 + $0x5fc] sm:$0xf]
        %v613 = vld [vmem:[%s174 + $0x600] sm:$0xf]
        %v614 = vld [vmem:[%s174 + $0x604] sm:$0xf]
        %v615 = vld [vmem:[%s174 + $0x608] sm:$0xf]
        %v616 = vld [vmem:[%s174 + $0x60c] sm:$0xf]
        %v617 = vld [vmem:[%s174 + $0x610] sm:$0xf]
        %v618 = vld [vmem:[%s174 + $0x614] sm:$0xf]
        %v619 = vld [vmem:[%s174 + $0x618] sm:$0xf]
        %v620 = vld [vmem:[%s174 + $0x61c] sm:$0xf]
        %v621 = vld [vmem:[%s174 + $0x620] sm:$0xf]
        %v622 = vld [vmem:[%s174 + $0x624] sm:$0xf]
        %v623 = vld [vmem:[%s174 + $0x628] sm:$0xf]
        %v624 = vld [vmem:[%s174 + $0x62c] sm:$0xf]
        %v625 = vld [vmem:[%s174 + $0x630] sm:$0xf]
        %v626 = vld [vmem:[%s174 + $0x634] sm:$0xf]
        %v627 = vld [vmem:[%s174 + $0x638] sm:$0xf]
        %v628 = vld [vmem:[%s174 + $0x63c] sm:$0xf]
        %v629 = vld [vmem:[%s174 + $0x640] sm:$0xf]
        %v630 = vld [vmem:[%s174 + $0x644] sm:$0xf]
        %v631 = vld [vmem:[%s174 + $0x648] sm:$0xf]
        %v632 = vld [vmem:[%s174 + $0x64c] sm:$0xf]
        %v633 = vld [vmem:[%s174 + $0x650] sm:$0xf]
        %v634 = vld [vmem:[%s174 + $0x654] sm:$0xf]
        %v635 = vld [vmem:[%s174 + $0x658] sm:$0xf]
        %v636 = vld [vmem:[%s174 + $0x65c] sm:$0xf]
        %v637 = vld [vmem:[%s174 + $0x660] sm:$0xf]
        %v638 = vld [vmem:[%s174 + $0x664] sm:$0xf]
        %v639 = vld [vmem:[%s174 + $0x668] sm:$0xf]
        %v640 = vld [vmem:[%s174 + $0x66c] sm:$0xf]
        %v641 = vld [vmem:[%s174 + $0x670] sm:$0xf]
        %v642 = vld [vmem:[%s174 + $0x674] sm:$0xf]
        %v643 = vld [vmem:[%s174 + $0x678] sm:$0xf]
        %v644 = vld [vmem:[%s174 + $0x67c] sm:$0xf]
        %v645 = vld [vmem:[%s174 + $0x680] sm:$0xf]
        %v646 = vld [vmem:[%s174 + $0x684] sm:$0xf]
        %v647 = vld [vmem:[%s174 + $0x688] sm:$0xf]
        %v648 = vld [vmem:[%s174 + $0x68c] sm:$0xf]
        %v649 = vld [vmem:[%s174 + $0x690] sm:$0xf]
        %v650 = vld [vmem:[%s174 + $0x694] sm:$0xf]
        %v651 = vld [vmem:[%s174 + $0x698] sm:$0xf]
        %v652 = vld [vmem:[%s174 + $0x69c] sm:$0xf]
        %v653 = vld [vmem:[%s174 + $0x6a0] sm:$0xf]
        %v654 = vld [vmem:[%s174 + $0x6a4] sm:$0xf]
        %v655 = vld [vmem:[%s174 + $0x6a8] sm:$0xf]
        %v656 = vld [vmem:[%s174 + $0x6ac] sm:$0xf]
        %v657 = vld [vmem:[%s174 + $0x6b0] sm:$0xf]
        %v658 = vld [vmem:[%s174 + $0x6b4] sm:$0xf]
        %v659 = vld [vmem:[%s174 + $0x6b8] sm:$0xf]
        %v660 = vld [vmem:[%s174 + $0x6bc] sm:$0xf]
        %v661 = vld [vmem:[%s174 + $0x6c0] sm:$0xf]
        %v662 = vld [vmem:[%s174 + $0x6c4] sm:$0xf]
        %v663 = vld [vmem:[%s174 + $0x6c8] sm:$0xf]
        %v664 = vld [vmem:[%s174 + $0x6cc] sm:$0xf]
        %v665 = vld [vmem:[%s174 + $0x6d0] sm:$0xf]
        %v666 = vld [vmem:[%s174 + $0x6d4] sm:$0xf]
        %v667 = vld [vmem:[%s174 + $0x6d8] sm:$0xf]
        %v668 = vld [vmem:[%s174 + $0x6dc] sm:$0xf]
        %v669 = vld [vmem:[%s174 + $0x6e0] sm:$0xf]
        %v670 = vld [vmem:[%s174 + $0x6e4] sm:$0xf]
        %v671 = vld [vmem:[%s174 + $0x6e8] sm:$0xf]
        %v672 = vld [vmem:[%s174 + $0x6ec] sm:$0xf]
        %v673 = vld [vmem:[%s174 + $0x6f0] sm:$0xf]
        %v674 = vld [vmem:[%s174 + $0x6f4] sm:$0xf]
        %v675 = vld [vmem:[%s174 + $0x6f8] sm:$0xf]
        %v676 = vld [vmem:[%s174 + $0x6fc] sm:$0xf]
        %v677 = vld [vmem:[%s174 + $0x700] sm:$0xf]
        %v678 = vld [vmem:[%s174 + $0x704] sm:$0xf]
        %v679 = vld [vmem:[%s174 + $0x708] sm:$0xf]
        %v680 = vld [vmem:[%s174 + $0x70c] sm:$0xf]
        %v681 = vld [vmem:[%s174 + $0x710] sm:$0xf]
        %v682 = vld [vmem:[%s174 + $0x714] sm:$0xf]
        %v683 = vld [vmem:[%s174 + $0x718] sm:$0xf]
        %v684 = vld [vmem:[%s174 + $0x71c] sm:$0xf]
        %v685 = vld [vmem:[%s174 + $0x720] sm:$0xf]
        %v686 = vld [vmem:[%s174 + $0x724] sm:$0xf]
        %v687 = vld [vmem:[%s174 + $0x728] sm:$0xf]
        %v688 = vld [vmem:[%s174 + $0x72c] sm:$0xf]
        %v689 = vld [vmem:[%s174 + $0x730] sm:$0xf]
        %v690 = vld [vmem:[%s174 + $0x734] sm:$0xf]
        %v691 = vld [vmem:[%s174 + $0x738] sm:$0xf]
        %v692 = vld [vmem:[%s174 + $0x73c] sm:$0xf]
        %v693 = vld [vmem:[%s174 + $0x740] sm:$0xf]
        %v694 = vld [vmem:[%s174 + $0x744] sm:$0xf]
        %v695 = vld [vmem:[%s174 + $0x748] sm:$0xf]
        %v696 = vld [vmem:[%s174 + $0x74c] sm:$0xf]
        %v697 = vld [vmem:[%s174 + $0x750] sm:$0xf]
        %v698 = vld [vmem:[%s174 + $0x754] sm:$0xf]
        %v699 = vld [vmem:[%s174 + $0x758] sm:$0xf]
        %v700 = vld [vmem:[%s174 + $0x75c] sm:$0xf]
        %v701 = vld [vmem:[%s174 + $0x760] sm:$0xf]
        %v702 = vld [vmem:[%s174 + $0x764] sm:$0xf]
        %v703 = vld [vmem:[%s174 + $0x768] sm:$0xf]
        %v704 = vld [vmem:[%s174 + $0x76c] sm:$0xf]
        %v705 = vld [vmem:[%s174 + $0x770] sm:$0xf]
        %v706 = vld [vmem:[%s174 + $0x774] sm:$0xf]
        %v707 = vld [vmem:[%s174 + $0x778] sm:$0xf]
        %v708 = vld [vmem:[%s174 + $0x77c] sm:$0xf]
        %v709 = vld [vmem:[%s174 + $0x780] sm:$0xf]
        %v710 = vld [vmem:[%s174 + $0x784] sm:$0xf]
        %v711 = vld [vmem:[%s174 + $0x788] sm:$0xf]
        %v712 = vld [vmem:[%s174 + $0x78c] sm:$0xf]
        %v713 = vld [vmem:[%s174 + $0x790] sm:$0xf]
        %v714 = vld [vmem:[%s174 + $0x794] sm:$0xf]
        %v715 = vld [vmem:[%s174 + $0x798] sm:$0xf]
        %v716 = vld [vmem:[%s174 + $0x79c] sm:$0xf]
        %v717 = vld [vmem:[%s174 + $0x7a0] sm:$0xf]
        %v718 = vld [vmem:[%s174 + $0x7a4] sm:$0xf]
        %v719 = vld [vmem:[%s174 + $0x7a8] sm:$0xf]
        %v720 = vld [vmem:[%s174 + $0x7ac] sm:$0xf]
        %v721 = vld [vmem:[%s174 + $0x7b0] sm:$0xf]
        %v722 = vld [vmem:[%s174 + $0x7b4] sm:$0xf]
        %v723 = vld [vmem:[%s174 + $0x7b8] sm:$0xf]
        %v724 = vld [vmem:[%s174 + $0x7bc] sm:$0xf]
        %v725 = vld [vmem:[%s174 + $0x7c0] sm:$0xf]
        %v726 = vld [vmem:[%s174 + $0x7c4] sm:$0xf]
        %v727 = vld [vmem:[%s174 + $0x7c8] sm:$0xf]
        %v728 = vld [vmem:[%s174 + $0x7cc] sm:$0xf]
        %v729 = vld [vmem:[%s174 + $0x7d0] sm:$0xf]
        %v730 = vld [vmem:[%s174 + $0x7d4] sm:$0xf]
        %v731 = vld [vmem:[%s174 + $0x7d8] sm:$0xf]
        %v732 = vld [vmem:[%s174 + $0x7dc] sm:$0xf]
        %v733 = vld [vmem:[%s174 + $0x7e0] sm:$0xf]
        %v734 = vld [vmem:[%s174 + $0x7e4] sm:$0xf]
        %v735 = vld [vmem:[%s174 + $0x7e8] sm:$0xf]
        %v736 = vld [vmem:[%s174 + $0x7ec] sm:$0xf]
        %v737 = vld [vmem:[%s174 + $0x7f0] sm:$0xf]
        %v738 = vld [vmem:[%s174 + $0x7f4] sm:$0xf]
        %v739 = vld [vmem:[%s174 + $0x7f8] sm:$0xf]
        %v740 = vld [vmem:[%s174 + $0x7fc] sm:$0xf]
        %v741 = vld [vmem:[%s174 + $0x800] sm:$0xf]
        %v742 = vld [vmem:[%s174 + $0x804] sm:$0xf]
        %v743 = vld [vmem:[%s174 + $0x808] sm:$0xf]
        %v744 = vld [vmem:[%s174 + $0x80c] sm:$0xf]
        %v745 = vld [vmem:[%s174 + $0x810] sm:$0xf]
        %v746 = vld [vmem:[%s174 + $0x814] sm:$0xf]
        %v747 = vld [vmem:[%s174 + $0x818] sm:$0xf]
        %v748 = vld [vmem:[%s174 + $0x81c] sm:$0xf]
        %v749 = vld [vmem:[%s174 + $0x820] sm:$0xf]
        %v750 = vld [vmem:[%s174 + $0x824] sm:$0xf]
        %v751 = vld [vmem:[%s174 + $0x828] sm:$0xf]
        %v752 = vld [vmem:[%s174 + $0x82c] sm:$0xf]
        %v753 = vld [vmem:[%s174 + $0x830] sm:$0xf]
        %v754 = vld [vmem:[%s174 + $0x834] sm:$0xf]
        %v755 = vld [vmem:[%s174 + $0x838] sm:$0xf]
        %v756 = vld [vmem:[%s174 + $0x83c] sm:$0xf]
        %v757 = vld [vmem:[%s174 + $0x840] sm:$0xf]
        %v758 = vld [vmem:[%s174 + $0x844] sm:$0xf]
        %v759 = vld [vmem:[%s174 + $0x848] sm:$0xf]
        %v760 = vld [vmem:[%s174 + $0x84c] sm:$0xf]
        %v761 = vld [vmem:[%s174 + $0x850] sm:$0xf]
        %v762 = vld [vmem:[%s174 + $0x854] sm:$0xf]
        %v763 = vld [vmem:[%s174 + $0x858] sm:$0xf]
        %v764 = vld [vmem:[%s174 + $0x85c] sm:$0xf]
        %v765 = vld [vmem:[%s174 + $0x860] sm:$0xf]
        %v766 = vld [vmem:[%s174 + $0x864] sm:$0xf]
        %v767 = vld [vmem:[%s174 + $0x868] sm:$0xf]
        %v768 = vld [vmem:[%s174 + $0x86c] sm:$0xf]
        %v769 = vld [vmem:[%s174 + $0x870] sm:$0xf]
        %v770 = vld [vmem:[%s174 + $0x874] sm:$0xf]
        %v771 = vld [vmem:[%s174 + $0x878] sm:$0xf]
        %v772 = vld [vmem:[%s174 + $0x87c] sm:$0xf]
        %v773 = vld [vmem:[%s174 + $0x880] sm:$0xf]
        %v774 = vld [vmem:[%s174 + $0x884] sm:$0xf]
        %v775 = vld [vmem:[%s174 + $0x888] sm:$0xf]
        %v776 = vld [vmem:[%s174 + $0x88c] sm:$0xf]
        %v777 = vld [vmem:[%s174 + $0x890] sm:$0xf]
        %v778 = vld [vmem:[%s174 + $0x894] sm:$0xf]
        %v779 = vld [vmem:[%s174 + $0x898] sm:$0xf]
        %v780 = vld [vmem:[%s174 + $0x89c] sm:$0xf]
        %v781 = vld [vmem:[%s174 + $0x8a0] sm:$0xf]
        %v782 = vld [vmem:[%s174 + $0x8a4] sm:$0xf]
        %v783 = vld [vmem:[%s174 + $0x8a8] sm:$0xf]
        %v784 = vld [vmem:[%s174 + $0x8ac] sm:$0xf]
        %v785 = vld [vmem:[%s174 + $0x8b0] sm:$0xf]
        %v786 = vld [vmem:[%s174 + $0x8b4] sm:$0xf]
        %v787 = vld [vmem:[%s174 + $0x8b8] sm:$0xf]
        %v788 = vld [vmem:[%s174 + $0x8bc] sm:$0xf]
        %v789 = vld [vmem:[%s174 + $0x8c0] sm:$0xf]
        %v790 = vld [vmem:[%s174 + $0x8c4] sm:$0xf]
        %v791 = vld [vmem:[%s174 + $0x8c8] sm:$0xf]
        %v792 = vld [vmem:[%s174 + $0x8cc] sm:$0xf]
        %v793 = vld [vmem:[%s174 + $0x8d0] sm:$0xf]
        %v794 = vld [vmem:[%s174 + $0x8d4] sm:$0xf]
        %v795 = vld [vmem:[%s174 + $0x8d8] sm:$0xf]
        %v796 = vld [vmem:[%s174 + $0x8dc] sm:$0xf]
        %v797 = vld [vmem:[%s174 + $0x8e0] sm:$0xf]
        %v798 = vld [vmem:[%s174 + $0x8e4] sm:$0xf]
        %v799 = vld [vmem:[%s174 + $0x8e8] sm:$0xf]
        %v800 = vld [vmem:[%s174 + $0x8ec] sm:$0xf]
        %v801 = vld [vmem:[%s174 + $0x8f0] sm:$0xf]
        %v802 = vld [vmem:[%s174 + $0x8f4] sm:$0xf]
        %v803 = vld [vmem:[%s174 + $0x8f8] sm:$0xf]
        %v804 = vld [vmem:[%s174 + $0x8fc] sm:$0xf]
        %v805 = vld [vmem:[%s174 + $0x900] sm:$0xf]
        %v806 = vld [vmem:[%s174 + $0x904] sm:$0xf]
        %v807 = vld [vmem:[%s174 + $0x908] sm:$0xf]
        %v808 = vld [vmem:[%s174 + $0x90c] sm:$0xf]
        %v809 = vld [vmem:[%s174 + $0x910] sm:$0xf]
        %v810 = vld [vmem:[%s174 + $0x914] sm:$0xf]
        %v811 = vld [vmem:[%s174 + $0x918] sm:$0xf]
        %v812 = vld [vmem:[%s174 + $0x91c] sm:$0xf]
        %v813 = vld [vmem:[%s174 + $0x920] sm:$0xf]
        %v814 = vld [vmem:[%s174 + $0x924] sm:$0xf]
        %v815 = vld [vmem:[%s174 + $0x928] sm:$0xf]
        %v816 = vld [vmem:[%s174 + $0x92c] sm:$0xf]
        %v817 = vld [vmem:[%s174 + $0x930] sm:$0xf]
        %v818 = vld [vmem:[%s174 + $0x934] sm:$0xf]
        %v819 = vld [vmem:[%s174 + $0x938] sm:$0xf]
        %v820 = vld [vmem:[%s174 + $0x93c] sm:$0xf]
        %v821 = vld [vmem:[%s174 + $0x940] sm:$0xf]
        %v822 = vld [vmem:[%s174 + $0x944] sm:$0xf]
        %v823 = vld [vmem:[%s174 + $0x948] sm:$0xf]
        %v824 = vld [vmem:[%s174 + $0x94c] sm:$0xf]
        %v825 = vld [vmem:[%s174 + $0x950] sm:$0xf]
        %v826 = vld [vmem:[%s174 + $0x954] sm:$0xf]
        %v827 = vld [vmem:[%s174 + $0x958] sm:$0xf]
        %v828 = vld [vmem:[%s174 + $0x95c] sm:$0xf]
        %v829 = vld [vmem:[%s174 + $0x960] sm:$0xf]
        %v830 = vld [vmem:[%s174 + $0x964] sm:$0xf]
        %v831 = vld [vmem:[%s174 + $0x968] sm:$0xf]
        %v832 = vld [vmem:[%s174 + $0x96c] sm:$0xf]
        %v833 = vld [vmem:[%s174 + $0x970] sm:$0xf]
        %v834 = vld [vmem:[%s174 + $0x974] sm:$0xf]
        %v835 = vld [vmem:[%s174 + $0x978] sm:$0xf]
        %v836 = vld [vmem:[%s174 + $0x97c] sm:$0xf]
        %v837 = vld [vmem:[%s174 + $0x980] sm:$0xf]
        %v838 = vld [vmem:[%s174 + $0x984] sm:$0xf]
        %v839 = vld [vmem:[%s174 + $0x988] sm:$0xf]
        %v840 = vld [vmem:[%s174 + $0x98c] sm:$0xf]
        %v841 = vld [vmem:[%s174 + $0x990] sm:$0xf]
        %v842 = vld [vmem:[%s174 + $0x994] sm:$0xf]
        %v843 = vld [vmem:[%s174 + $0x998] sm:$0xf]
        %v844 = vld [vmem:[%s174 + $0x99c] sm:$0xf]
        %v845 = vld [vmem:[%s174 + $0x9a0] sm:$0xf]
        %v846 = vld [vmem:[%s174 + $0x9a4] sm:$0xf]
        %v847 = vld [vmem:[%s174 + $0x9a8] sm:$0xf]
        %v848 = vld [vmem:[%s174 + $0x9ac] sm:$0xf]
        %v849 = vld [vmem:[%s174 + $0x9b0] sm:$0xf]
        %v850 = vld [vmem:[%s174 + $0x9b4] sm:$0xf]
        %v851 = vld [vmem:[%s174 + $0x9b8] sm:$0xf]
        %v852 = vld [vmem:[%s174 + $0x9bc] sm:$0xf]
        %v853 = vld [vmem:[%s174 + $0x9c0] sm:$0xf]
        %v854 = vld [vmem:[%s174 + $0x9c4] sm:$0xf]
        %v855 = vld [vmem:[%s174 + $0x9c8] sm:$0xf]
        %v856 = vld [vmem:[%s174 + $0x9cc] sm:$0xf]
        %v857 = vld [vmem:[%s174 + $0x9d0] sm:$0xf]
        %v858 = vld [vmem:[%s174 + $0x9d4] sm:$0xf]
        %v859 = vld [vmem:[%s174 + $0x9d8] sm:$0xf]
        %v860 = vld [vmem:[%s174 + $0x9dc] sm:$0xf]
        %v861 = vld [vmem:[%s174 + $0x9e0] sm:$0xf]
        %v862 = vld [vmem:[%s174 + $0x9e4] sm:$0xf]
        %v863 = vld [vmem:[%s174 + $0x9e8] sm:$0xf]
        %v864 = vld [vmem:[%s174 + $0x9ec] sm:$0xf]
        %v865 = vld [vmem:[%s174 + $0x9f0] sm:$0xf]
        %v866 = vld [vmem:[%s174 + $0x9f4] sm:$0xf]
        %v867 = vld [vmem:[%s174 + $0x9f8] sm:$0xf]
        %v868 = vld [vmem:[%s174 + $0x9fc] sm:$0xf]
        %v869 = vld [vmem:[%s174 + $0xa00] sm:$0xf]
        %v870 = vld [vmem:[%s174 + $0xa04] sm:$0xf]
        %v871 = vld [vmem:[%s174 + $0xa08] sm:$0xf]
        %v872 = vld [vmem:[%s174 + $0xa0c] sm:$0xf]
        %v873 = vld [vmem:[%s174 + $0xa10] sm:$0xf]
        %v874 = vld [vmem:[%s174 + $0xa14] sm:$0xf]
        %v875 = vld [vmem:[%s174 + $0xa18] sm:$0xf]
        %v876 = vld [vmem:[%s174 + $0xa1c] sm:$0xf]
        %v877 = vld [vmem:[%s174 + $0xa20] sm:$0xf]
        %v878 = vld [vmem:[%s174 + $0xa24] sm:$0xf]
        %v879 = vld [vmem:[%s174 + $0xa28] sm:$0xf]
        %v880 = vld [vmem:[%s174 + $0xa2c] sm:$0xf]
        %v881 = vld [vmem:[%s174 + $0xa30] sm:$0xf]
        %v882 = vld [vmem:[%s174 + $0xa34] sm:$0xf]
        %v883 = vld [vmem:[%s174 + $0xa38] sm:$0xf]
        %v884 = vld [vmem:[%s174 + $0xa3c] sm:$0xf]
        %v885 = vld [vmem:[%s174 + $0xa40] sm:$0xf]
        %v886 = vld [vmem:[%s174 + $0xa44] sm:$0xf]
        %v887 = vld [vmem:[%s174 + $0xa48] sm:$0xf]
        %v888 = vld [vmem:[%s174 + $0xa4c] sm:$0xf]
        %v889 = vld [vmem:[%s174 + $0xa50] sm:$0xf]
        %v890 = vld [vmem:[%s174 + $0xa54] sm:$0xf]
        %v891 = vld [vmem:[%s174 + $0xa58] sm:$0xf]
        %v892 = vld [vmem:[%s174 + $0xa5c] sm:$0xf]
        %v893 = vld [vmem:[%s174 + $0xa60] sm:$0xf]
        %v894 = vld [vmem:[%s174 + $0xa64] sm:$0xf]
        %v895 = vld [vmem:[%s174 + $0xa68] sm:$0xf]
        %v896 = vld [vmem:[%s174 + $0xa6c] sm:$0xf]
        %v897 = vld [vmem:[%s174 + $0xa70] sm:$0xf]
        %v898 = vld [vmem:[%s174 + $0xa74] sm:$0xf]
        %v899 = vld [vmem:[%s174 + $0xa78] sm:$0xf]
        %v900 = vld [vmem:[%s174 + $0xa7c] sm:$0xf]
        %v901 = vld [vmem:[%s174 + $0xa80] sm:$0xf]
        %v902 = vld [vmem:[%s174 + $0xa84] sm:$0xf]
        %v903 = vld [vmem:[%s174 + $0xa88] sm:$0xf]
        %v904 = vld [vmem:[%s174 + $0xa8c] sm:$0xf]
        %v905 = vld [vmem:[%s174 + $0xa90] sm:$0xf]
        %v906 = vld [vmem:[%s174 + $0xa94] sm:$0xf]
        %v907 = vld [vmem:[%s174 + $0xa98] sm:$0xf]
        %v908 = vld [vmem:[%s174 + $0xa9c] sm:$0xf]
        %v909 = vld [vmem:[%s174 + $0xaa0] sm:$0xf]
        %v910 = vld [vmem:[%s174 + $0xaa4] sm:$0xf]
        %v911 = vld [vmem:[%s174 + $0xaa8] sm:$0xf]
        %v912 = vld [vmem:[%s174 + $0xaac] sm:$0xf]
        %v913 = vld [vmem:[%s174 + $0xab0] sm:$0xf]
        %v914 = vld [vmem:[%s174 + $0xab4] sm:$0xf]
        %v915 = vld [vmem:[%s174 + $0xab8] sm:$0xf]
        %v916 = vld [vmem:[%s174 + $0xabc] sm:$0xf]
        %v917 = vld [vmem:[%s174 + $0xac0] sm:$0xf]
        %v918 = vld [vmem:[%s174 + $0xac4] sm:$0xf]
        %v919 = vld [vmem:[%s174 + $0xac8] sm:$0xf]
        %v920 = vld [vmem:[%s174 + $0xacc] sm:$0xf]
        %v921 = vld [vmem:[%s174 + $0xad0] sm:$0xf]
        %v922 = vld [vmem:[%s174 + $0xad4] sm:$0xf]
        %v923 = vld [vmem:[%s174 + $0xad8] sm:$0xf]
        %v924 = vld [vmem:[%s174 + $0xadc] sm:$0xf]
        %v925 = vld [vmem:[%s174 + $0xae0] sm:$0xf]
        %v926 = vld [vmem:[%s174 + $0xae4] sm:$0xf]
        %v927 = vld [vmem:[%s174 + $0xae8] sm:$0xf]
        %v928 = vld [vmem:[%s174 + $0xaec] sm:$0xf]
        %v929 = vld [vmem:[%s174 + $0xaf0] sm:$0xf]
        %v930 = vld [vmem:[%s174 + $0xaf4] sm:$0xf]
        %v931 = vld [vmem:[%s174 + $0xaf8] sm:$0xf]
        %v932 = vld [vmem:[%s174 + $0xafc] sm:$0xf]
        %v933 = vld [vmem:[%s174 + $0xb00] sm:$0xf]
        %v934 = vld [vmem:[%s174 + $0xb04] sm:$0xf]
        %v935 = vld [vmem:[%s174 + $0xb08] sm:$0xf]
        %v936 = vld [vmem:[%s174 + $0xb0c] sm:$0xf]
        %v937 = vld [vmem:[%s174 + $0xb10] sm:$0xf]
        %v938 = vld [vmem:[%s174 + $0xb14] sm:$0xf]
        %v939 = vld [vmem:[%s174 + $0xb18] sm:$0xf]
        %v940 = vld [vmem:[%s174 + $0xb1c] sm:$0xf]
        %v941 = vld [vmem:[%s174 + $0xb20] sm:$0xf]
        %v942 = vld [vmem:[%s174 + $0xb24] sm:$0xf]
        %v943 = vld [vmem:[%s174 + $0xb28] sm:$0xf]
        %v944 = vld [vmem:[%s174 + $0xb2c] sm:$0xf]
        %v945 = vld [vmem:[%s174 + $0xb30] sm:$0xf]
        %v946 = vld [vmem:[%s174 + $0xb34] sm:$0xf]
        %v947 = vld [vmem:[%s174 + $0xb38] sm:$0xf]
        %v948 = vld [vmem:[%s174 + $0xb3c] sm:$0xf]
        %v949 = vld [vmem:[%s174 + $0xb40] sm:$0xf]
        %v950 = vld [vmem:[%s174 + $0xb44] sm:$0xf]
        %v951 = vld [vmem:[%s174 + $0xb48] sm:$0xf]
        %v952 = vld [vmem:[%s174 + $0xb4c] sm:$0xf]
        %v953 = vld [vmem:[%s174 + $0xb50] sm:$0xf]
        %v954 = vld [vmem:[%s174 + $0xb54] sm:$0xf]
        %v955 = vld [vmem:[%s174 + $0xb58] sm:$0xf]
        %v956 = vld [vmem:[%s174 + $0xb5c] sm:$0xf]
        %v957 = vld [vmem:[%s174 + $0xb60] sm:$0xf]
        %v958 = vld [vmem:[%s174 + $0xb64] sm:$0xf]
        %v959 = vld [vmem:[%s174 + $0xb68] sm:$0xf]
        %v960 = vld [vmem:[%s174 + $0xb6c] sm:$0xf]
        %v961 = vld [vmem:[%s174 + $0xb70] sm:$0xf]
        %v962 = vld [vmem:[%s174 + $0xb74] sm:$0xf]
        %v963 = vld [vmem:[%s174 + $0xb78] sm:$0xf]
        %v964 = vld [vmem:[%s174 + $0xb7c] sm:$0xf]
        %v965 = vld [vmem:[%s174 + $0xb80] sm:$0xf]
        %v966 = vld [vmem:[%s174 + $0xb84] sm:$0xf]
        %v967 = vld [vmem:[%s174 + $0xb88] sm:$0xf]
        %v968 = vld [vmem:[%s174 + $0xb8c] sm:$0xf]
        %v969 = vld [vmem:[%s174 + $0xb90] sm:$0xf]
        %v970 = vld [vmem:[%s174 + $0xb94] sm:$0xf]
        %v971 = vld [vmem:[%s174 + $0xb98] sm:$0xf]
        %v972 = vld [vmem:[%s174 + $0xb9c] sm:$0xf]
        %v973 = vld [vmem:[%s174 + $0xba0] sm:$0xf]
        %v974 = vld [vmem:[%s174 + $0xba4] sm:$0xf]
        %v975 = vld [vmem:[%s174 + $0xba8] sm:$0xf]
        %v976 = vld [vmem:[%s174 + $0xbac] sm:$0xf]
        %v977 = vld [vmem:[%s174 + $0xbb0] sm:$0xf]
        %v978 = vld [vmem:[%s174 + $0xbb4] sm:$0xf]
        %v979 = vld [vmem:[%s174 + $0xbb8] sm:$0xf]
        %v980 = vld [vmem:[%s174 + $0xbbc] sm:$0xf]
        %v981 = vld [vmem:[%s174 + $0xbc0] sm:$0xf]
        %v982 = vld [vmem:[%s174 + $0xbc4] sm:$0xf]
        %v983 = vld [vmem:[%s174 + $0xbc8] sm:$0xf]
        %v984 = vld [vmem:[%s174 + $0xbcc] sm:$0xf]
        %v985 = vld [vmem:[%s174 + $0xbd0] sm:$0xf]
        %v986 = vld [vmem:[%s174 + $0xbd4] sm:$0xf]
        %v987 = vld [vmem:[%s174 + $0xbd8] sm:$0xf]
        %v988 = vld [vmem:[%s174 + $0xbdc] sm:$0xf]
        %v989 = vld [vmem:[%s174 + $0xbe0] sm:$0xf]
        %v990 = vld [vmem:[%s174 + $0xbe4] sm:$0xf]
        %v991 = vld [vmem:[%s174 + $0xbe8] sm:$0xf]
        %v992 = vld [vmem:[%s174 + $0xbec] sm:$0xf]
        %v993 = vld [vmem:[%s174 + $0xbf0] sm:$0xf]
        %v994 = vld [vmem:[%s174 + $0xbf4] sm:$0xf]
        %v995 = vld [vmem:[%s174 + $0xbf8] sm:$0xf]
        %v996 = vld [vmem:[%s174 + $0xbfc] sm:$0xf]
        %v997 = vld [vmem:[%s174 + $0xc00] sm:$0xf]
        %v998 = vld [vmem:[%s174 + $0xc04] sm:$0xf]
        %v999 = vld [vmem:[%s174 + $0xc08] sm:$0xf]
        %v1000 = vld [vmem:[%s174 + $0xc0c] sm:$0xf]
        %v1001 = vld [vmem:[%s174 + $0xc10] sm:$0xf]
        %v1002 = vld [vmem:[%s174 + $0xc14] sm:$0xf]
        %v1003 = vld [vmem:[%s174 + $0xc18] sm:$0xf]
        %v1004 = vld [vmem:[%s174 + $0xc1c] sm:$0xf]
        %v1005 = vld [vmem:[%s174 + $0xc20] sm:$0xf]
        %v1006 = vld [vmem:[%s174 + $0xc24] sm:$0xf]
        %v1007 = vld [vmem:[%s174 + $0xc28] sm:$0xf]
        %v1008 = vld [vmem:[%s174 + $0xc2c] sm:$0xf]
        %v1009 = vld [vmem:[%s174 + $0xc30] sm:$0xf]
        %v1010 = vld [vmem:[%s174 + $0xc34] sm:$0xf]
        %v1011 = vld [vmem:[%s174 + $0xc38] sm:$0xf]
        %v1012 = vld [vmem:[%s174 + $0xc3c] sm:$0xf]
        %v1013 = vld [vmem:[%s174 + $0xc40] sm:$0xf]
        %v1014 = vld [vmem:[%s174 + $0xc44] sm:$0xf]
        %v1015 = vld [vmem:[%s174 + $0xc48] sm:$0xf]
        %v1016 = vld [vmem:[%s174 + $0xc4c] sm:$0xf]
        %v1017 = vld [vmem:[%s174 + $0xc50] sm:$0xf]
        %v1018 = vld [vmem:[%s174 + $0xc54] sm:$0xf]
        %v1019 = vld [vmem:[%s174 + $0xc58] sm:$0xf]
        %v1020 = vld [vmem:[%s174 + $0xc5c] sm:$0xf]
        %v1021 = vld [vmem:[%s174 + $0xc60] sm:$0xf]
        %v1022 = vld [vmem:[%s174 + $0xc64] sm:$0xf]
        %v1023 = vld [vmem:[%s174 + $0xc68] sm:$0xf]
        %v1024 = vld [vmem:[%s174 + $0xc6c] sm:$0xf]
        %v1025 = vld [vmem:[%s174 + $0xc70] sm:$0xf]
        %v1026 = vld [vmem:[%s174 + $0xc74] sm:$0xf]
        %v1027 = vld [vmem:[%s174 + $0xc78] sm:$0xf]
        %v1028 = vld [vmem:[%s174 + $0xc7c] sm:$0xf]
        %v1029 = vld [vmem:[%s174 + $0xc80] sm:$0xf]
        %v1030 = vld [vmem:[%s174 + $0xc84] sm:$0xf]
        %v1031 = vld [vmem:[%s174 + $0xc88] sm:$0xf]
        %v1032 = vld [vmem:[%s174 + $0xc8c] sm:$0xf]
        %v1033 = vld [vmem:[%s174 + $0xc90] sm:$0xf]
        %v1034 = vld [vmem:[%s174 + $0xc94] sm:$0xf]
        %v1035 = vld [vmem:[%s174 + $0xc98] sm:$0xf]
        %v1036 = vld [vmem:[%s174 + $0xc9c] sm:$0xf]
        %v1037 = vld [vmem:[%s174 + $0xca0] sm:$0xf]
        %v1038 = vld [vmem:[%s174 + $0xca4] sm:$0xf]
        %v1039 = vld [vmem:[%s174 + $0xca8] sm:$0xf]
        %v1040 = vld [vmem:[%s174 + $0xcac] sm:$0xf]
        %v1041 = vld [vmem:[%s174 + $0xcb0] sm:$0xf]
        %v1042 = vld [vmem:[%s174 + $0xcb4] sm:$0xf]
        %v1043 = vld [vmem:[%s174 + $0xcb8] sm:$0xf]
        %v1044 = vld [vmem:[%s174 + $0xcbc] sm:$0xf]
        %v1045 = vld [vmem:[%s174 + $0xcc0] sm:$0xf]
        %v1046 = vld [vmem:[%s174 + $0xcc4] sm:$0xf]
        %v1047 = vld [vmem:[%s174 + $0xcc8] sm:$0xf]
        %v1048 = vld [vmem:[%s174 + $0xccc] sm:$0xf]
        %v1049 = vld [vmem:[%s174 + $0xcd0] sm:$0xf]
        %v1050 = vld [vmem:[%s174 + $0xcd4] sm:$0xf]
        %v1051 = vld [vmem:[%s174 + $0xcd8] sm:$0xf]
        %v1052 = vld [vmem:[%s174 + $0xcdc] sm:$0xf]
        %v1053 = vld [vmem:[%s174 + $0xce0] sm:$0xf]
        %v1054 = vld [vmem:[%s174 + $0xce4] sm:$0xf]
        %v1055 = vld [vmem:[%s174 + $0xce8] sm:$0xf]
        %v1056 = vld [vmem:[%s174 + $0xcec] sm:$0xf]
        %v1057 = vld [vmem:[%s174 + $0xcf0] sm:$0xf]
        %v1058 = vld [vmem:[%s174 + $0xcf4] sm:$0xf]
        %v1059 = vld [vmem:[%s174 + $0xcf8] sm:$0xf]
        %v1060 = vld [vmem:[%s174 + $0xcfc] sm:$0xf]
        %v1061 = vld [vmem:[%s174 + $0xd00] sm:$0xf]
        %v1062 = vld [vmem:[%s174 + $0xd04] sm:$0xf]
        %v1063 = vld [vmem:[%s174 + $0xd08] sm:$0xf]
        %v1064 = vld [vmem:[%s174 + $0xd0c] sm:$0xf]
        %v1065 = vld [vmem:[%s174 + $0xd10] sm:$0xf]
        %v1066 = vld [vmem:[%s174 + $0xd14] sm:$0xf]
        %v1067 = vld [vmem:[%s174 + $0xd18] sm:$0xf]
        %v1068 = vld [vmem:[%s174 + $0xd1c] sm:$0xf]
        %v1069 = vld [vmem:[%s174 + $0xd20] sm:$0xf]
        %v1070 = vld [vmem:[%s174 + $0xd24] sm:$0xf]
        %v1071 = vld [vmem:[%s174 + $0xd28] sm:$0xf]
        %v1072 = vld [vmem:[%s174 + $0xd2c] sm:$0xf]
        %v1073 = vld [vmem:[%s174 + $0xd30] sm:$0xf]
        %v1074 = vld [vmem:[%s174 + $0xd34] sm:$0xf]
        %v1075 = vld [vmem:[%s174 + $0xd38] sm:$0xf]
        %v1076 = vld [vmem:[%s174 + $0xd3c] sm:$0xf]
        %v1077 = vld [vmem:[%s174 + $0xd40] sm:$0xf]
        %v1078 = vld [vmem:[%s174 + $0xd44] sm:$0xf]
        %v1079 = vld [vmem:[%s174 + $0xd48] sm:$0xf]
        %v1080 = vld [vmem:[%s174 + $0xd4c] sm:$0xf]
        %v1081 = vld [vmem:[%s174 + $0xd50] sm:$0xf]
        %v1082 = vld [vmem:[%s174 + $0xd54] sm:$0xf]
        %v1083 = vld [vmem:[%s174 + $0xd58] sm:$0xf]
        %v1084 = vld [vmem:[%s174 + $0xd5c] sm:$0xf]
        %v1085 = vld [vmem:[%s174 + $0xd60] sm:$0xf]
        %v1086 = vld [vmem:[%s174 + $0xd64] sm:$0xf]
        %v1087 = vld [vmem:[%s174 + $0xd68] sm:$0xf]
        %v1088 = vld [vmem:[%s174 + $0xd6c] sm:$0xf]
        %v1089 = vld [vmem:[%s174 + $0xd70] sm:$0xf]
        %v1090 = vld [vmem:[%s174 + $0xd74] sm:$0xf]
        %v1091 = vld [vmem:[%s174 + $0xd78] sm:$0xf]
        %v1092 = vld [vmem:[%s174 + $0xd7c] sm:$0xf]
        %v1093 = vld [vmem:[%s174 + $0xd80] sm:$0xf]
        %v1094 = vld [vmem:[%s174 + $0xd84] sm:$0xf]
        %v1095 = vld [vmem:[%s174 + $0xd88] sm:$0xf]
        %v1096 = vld [vmem:[%s174 + $0xd8c] sm:$0xf]
        %v1097 = vld [vmem:[%s174 + $0xd90] sm:$0xf]
        %v1098 = vld [vmem:[%s174 + $0xd94] sm:$0xf]
        %v1099 = vld [vmem:[%s174 + $0xd98] sm:$0xf]
        %v1100 = vld [vmem:[%s174 + $0xd9c] sm:$0xf]
        %v1101 = vld [vmem:[%s174 + $0xda0] sm:$0xf]
        %v1102 = vld [vmem:[%s174 + $0xda4] sm:$0xf]
        %v1103 = vld [vmem:[%s174 + $0xda8] sm:$0xf]
        %v1104 = vld [vmem:[%s174 + $0xdac] sm:$0xf]
        %v1105 = vld [vmem:[%s174 + $0xdb0] sm:$0xf]
        %v1106 = vld [vmem:[%s174 + $0xdb4] sm:$0xf]
        %v1107 = vld [vmem:[%s174 + $0xdb8] sm:$0xf]
        %v1108 = vld [vmem:[%s174 + $0xdbc] sm:$0xf]
        %v1109 = vld [vmem:[%s174 + $0xdc0] sm:$0xf]
        %v1110 = vld [vmem:[%s174 + $0xdc4] sm:$0xf]
        %v1111 = vld [vmem:[%s174 + $0xdc8] sm:$0xf]
        %v1112 = vld [vmem:[%s174 + $0xdcc] sm:$0xf]
        %v1113 = vld [vmem:[%s174 + $0xdd0] sm:$0xf]
        %v1114 = vld [vmem:[%s174 + $0xdd4] sm:$0xf]
        %v1115 = vld [vmem:[%s174 + $0xdd8] sm:$0xf]
        %v1116 = vld [vmem:[%s174 + $0xddc] sm:$0xf]
        %v1117 = vld [vmem:[%s174 + $0xde0] sm:$0xf]
        %v1118 = vld [vmem:[%s174 + $0xde4] sm:$0xf]
        %v1119 = vld [vmem:[%s174 + $0xde8] sm:$0xf]
        %v1120 = vld [vmem:[%s174 + $0xdec] sm:$0xf]
        %v1121 = vld [vmem:[%s174 + $0xdf0] sm:$0xf]
        %v1122 = vld [vmem:[%s174 + $0xdf4] sm:$0xf]
        %v1123 = vld [vmem:[%s174 + $0xdf8] sm:$0xf]
        %v1124 = vld [vmem:[%s174 + $0xdfc] sm:$0xf]
        %v1125 = vld [vmem:[%s174 + $0xe00] sm:$0xf]
        %v1126 = vld [vmem:[%s174 + $0xe04] sm:$0xf]
        %v1127 = vld [vmem:[%s174 + $0xe08] sm:$0xf]
        %v1128 = vld [vmem:[%s174 + $0xe0c] sm:$0xf]
        %v1129 = vld [vmem:[%s174 + $0xe10] sm:$0xf]
        %v1130 = vld [vmem:[%s174 + $0xe14] sm:$0xf]
        %v1131 = vld [vmem:[%s174 + $0xe18] sm:$0xf]
        %v1132 = vld [vmem:[%s174 + $0xe1c] sm:$0xf]
        %v1133 = vld [vmem:[%s174 + $0xe20] sm:$0xf]
        %v1134 = vld [vmem:[%s174 + $0xe24] sm:$0xf]
        %v1135 = vld [vmem:[%s174 + $0xe28] sm:$0xf]
        %v1136 = vld [vmem:[%s174 + $0xe2c] sm:$0xf]
        %v1137 = vld [vmem:[%s174 + $0xe30] sm:$0xf]
        %v1138 = vld [vmem:[%s174 + $0xe34] sm:$0xf]
        %v1139 = vld [vmem:[%s174 + $0xe38] sm:$0xf]
        %v1140 = vld [vmem:[%s174 + $0xe3c] sm:$0xf]
        %v1141 = vld [vmem:[%s174 + $0xe40] sm:$0xf]
        %v1142 = vld [vmem:[%s174 + $0xe44] sm:$0xf]
        %v1143 = vld [vmem:[%s174 + $0xe48] sm:$0xf]
        %v1144 = vld [vmem:[%s174 + $0xe4c] sm:$0xf]
        %v1145 = vld [vmem:[%s174 + $0xe50] sm:$0xf]
        %v1146 = vld [vmem:[%s174 + $0xe54] sm:$0xf]
        %v1147 = vld [vmem:[%s174 + $0xe58] sm:$0xf]
        %v1148 = vld [vmem:[%s174 + $0xe5c] sm:$0xf]
        %v1149 = vld [vmem:[%s174 + $0xe60] sm:$0xf]
        %v1150 = vld [vmem:[%s174 + $0xe64] sm:$0xf]
        %v1151 = vld [vmem:[%s174 + $0xe68] sm:$0xf]
        %v1152 = vld [vmem:[%s174 + $0xe6c] sm:$0xf]
        %v1153 = vld [vmem:[%s174 + $0xe70] sm:$0xf]
        %v1154 = vld [vmem:[%s174 + $0xe74] sm:$0xf]
        %v1155 = vld [vmem:[%s174 + $0xe78] sm:$0xf]
        %v1156 = vld [vmem:[%s174 + $0xe7c] sm:$0xf]
        %v1157 = vld [vmem:[%s174 + $0xe80] sm:$0xf]
        %v1158 = vld [vmem:[%s174 + $0xe84] sm:$0xf]
        %v1159 = vld [vmem:[%s174 + $0xe88] sm:$0xf]
        %v1160 = vld [vmem:[%s174 + $0xe8c] sm:$0xf]
        %v1161 = vld [vmem:[%s174 + $0xe90] sm:$0xf]
        %v1162 = vld [vmem:[%s174 + $0xe94] sm:$0xf]
        %v1163 = vld [vmem:[%s174 + $0xe98] sm:$0xf]
        %v1164 = vld [vmem:[%s174 + $0xe9c] sm:$0xf]
        %v1165 = vld [vmem:[%s174 + $0xea0] sm:$0xf]
        %v1166 = vld [vmem:[%s174 + $0xea4] sm:$0xf]
        %v1167 = vld [vmem:[%s174 + $0xea8] sm:$0xf]
        %v1168 = vld [vmem:[%s174 + $0xeac] sm:$0xf]
        %v1169 = vld [vmem:[%s174 + $0xeb0] sm:$0xf]
        %v1170 = vld [vmem:[%s174 + $0xeb4] sm:$0xf]
        %v1171 = vld [vmem:[%s174 + $0xeb8] sm:$0xf]
        %v1172 = vld [vmem:[%s174 + $0xebc] sm:$0xf]
        %v1173 = vld [vmem:[%s174 + $0xec0] sm:$0xf]
        %v1174 = vld [vmem:[%s174 + $0xec4] sm:$0xf]
        %v1175 = vld [vmem:[%s174 + $0xec8] sm:$0xf]
        %v1176 = vld [vmem:[%s174 + $0xecc] sm:$0xf]
        %v1177 = vld [vmem:[%s174 + $0xed0] sm:$0xf]
        %v1178 = vld [vmem:[%s174 + $0xed4] sm:$0xf]
        %v1179 = vld [vmem:[%s174 + $0xed8] sm:$0xf]
        %v1180 = vld [vmem:[%s174 + $0xedc] sm:$0xf]
        %v1181 = vld [vmem:[%s174 + $0xee0] sm:$0xf]
        %v1182 = vld [vmem:[%s174 + $0xee4] sm:$0xf]
        %v1183 = vld [vmem:[%s174 + $0xee8] sm:$0xf]
        %v1184 = vld [vmem:[%s174 + $0xeec] sm:$0xf]
        %v1185 = vld [vmem:[%s174 + $0xef0] sm:$0xf]
        %v1186 = vld [vmem:[%s174 + $0xef4] sm:$0xf]
        %v1187 = vld [vmem:[%s174 + $0xef8] sm:$0xf]
        %v1188 = vld [vmem:[%s174 + $0xefc] sm:$0xf]
        %v1189 = vld [vmem:[%s174 + $0xf00] sm:$0xf]
        %v1190 = vld [vmem:[%s174 + $0xf04] sm:$0xf]
        %v1191 = vld [vmem:[%s174 + $0xf08] sm:$0xf]
        %v1192 = vld [vmem:[%s174 + $0xf0c] sm:$0xf]
        %v1193 = vld [vmem:[%s174 + $0xf10] sm:$0xf]
        %v1194 = vld [vmem:[%s174 + $0xf14] sm:$0xf]
        %v1195 = vld [vmem:[%s174 + $0xf18] sm:$0xf]
        %v1196 = vld [vmem:[%s174 + $0xf1c] sm:$0xf]
        %v1197 = vld [vmem:[%s174 + $0xf20] sm:$0xf]
        %v1198 = vld [vmem:[%s174 + $0xf24] sm:$0xf]
        %v1199 = vld [vmem:[%s174 + $0xf28] sm:$0xf]
        %v1200 = vld [vmem:[%s174 + $0xf2c] sm:$0xf]
        %v1201 = vld [vmem:[%s174 + $0xf30] sm:$0xf]
        %v1202 = vld [vmem:[%s174 + $0xf34] sm:$0xf]
        %v1203 = vld [vmem:[%s174 + $0xf38] sm:$0xf]
        %v1204 = vld [vmem:[%s174 + $0xf3c] sm:$0xf]
        %v1205 = vld [vmem:[%s174 + $0xf40] sm:$0xf]
        %v1206 = vld [vmem:[%s174 + $0xf44] sm:$0xf]
        %v1207 = vld [vmem:[%s174 + $0xf48] sm:$0xf]
        %v1208 = vld [vmem:[%s174 + $0xf4c] sm:$0xf]
        %v1209 = vld [vmem:[%s174 + $0xf50] sm:$0xf]
        %v1210 = vld [vmem:[%s174 + $0xf54] sm:$0xf]
        %v1211 = vld [vmem:[%s174 + $0xf58] sm:$0xf]
        %v1212 = vld [vmem:[%s174 + $0xf5c] sm:$0xf]
        %v1213 = vld [vmem:[%s174 + $0xf60] sm:$0xf]
        %v1214 = vld [vmem:[%s174 + $0xf64] sm:$0xf]
        %v1215 = vld [vmem:[%s174 + $0xf68] sm:$0xf]
        %v1216 = vld [vmem:[%s174 + $0xf6c] sm:$0xf]
        %v1217 = vld [vmem:[%s174 + $0xf70] sm:$0xf]
        %v1218 = vld [vmem:[%s174 + $0xf74] sm:$0xf]
        %v1219 = vld [vmem:[%s174 + $0xf78] sm:$0xf]
        %v1220 = vld [vmem:[%s174 + $0xf7c] sm:$0xf]
        %v1221 = vld [vmem:[%s174 + $0xf80] sm:$0xf]
        %v1222 = vld [vmem:[%s174 + $0xf84] sm:$0xf]
        %v1223 = vld [vmem:[%s174 + $0xf88] sm:$0xf]
        %v1224 = vld [vmem:[%s174 + $0xf8c] sm:$0xf]
        %v1225 = vld [vmem:[%s174 + $0xf90] sm:$0xf]
        %v1226 = vld [vmem:[%s174 + $0xf94] sm:$0xf]
        %v1227 = vld [vmem:[%s174 + $0xf98] sm:$0xf]
        %v1228 = vld [vmem:[%s174 + $0xf9c] sm:$0xf]
        %v1229 = vld [vmem:[%s174 + $0xfa0] sm:$0xf]
        %v1230 = vld [vmem:[%s174 + $0xfa4] sm:$0xf]
        %v1231 = vld [vmem:[%s174 + $0xfa8] sm:$0xf]
        %v1232 = vld [vmem:[%s174 + $0xfac] sm:$0xf]
        %v1233 = vld [vmem:[%s174 + $0xfb0] sm:$0xf]
        %v1234 = vld [vmem:[%s174 + $0xfb4] sm:$0xf]
        %v1235 = vld [vmem:[%s174 + $0xfb8] sm:$0xf]
        %v1236 = vld [vmem:[%s174 + $0xfbc] sm:$0xf]
        %v1237 = vld [vmem:[%s174 + $0xfc0] sm:$0xf]
        %v1238 = vld [vmem:[%s174 + $0xfc4] sm:$0xf]
        %v1239 = vld [vmem:[%s174 + $0xfc8] sm:$0xf]
        %v1240 = vld [vmem:[%s174 + $0xfcc] sm:$0xf]
        %v1241 = vld [vmem:[%s174 + $0xfd0] sm:$0xf]
        %v1242 = vld [vmem:[%s174 + $0xfd4] sm:$0xf]
        %v1243 = vld [vmem:[%s174 + $0xfd8] sm:$0xf]
        %v1244 = vld [vmem:[%s174 + $0xfdc] sm:$0xf]
        %v1245 = vld [vmem:[%s174 + $0xfe0] sm:$0xf]
        %v1246 = vld [vmem:[%s174 + $0xfe4] sm:$0xf]
        %v1247 = vld [vmem:[%s174 + $0xfe8] sm:$0xf]
        %v1248 = vld [vmem:[%s174 + $0xfec] sm:$0xf]
        %v1249 = vld [vmem:[%s174 + $0xff0] sm:$0xf]
        %v1250 = vld [vmem:[%s174 + $0xff4] sm:$0xf]
        %v1251 = vld [vmem:[%s174 + $0xff8] sm:$0xf]
        %v1252 = vld [vmem:[%s174 + $0xffc] sm:$0xf]
        %v1253 = vld [vmem:[%s174 + $0x1000] sm:$0xf]
        %v1254 = vld [vmem:[%s174 + $0x1004] sm:$0xf]
        %v1255 = vld [vmem:[%s174 + $0x1008] sm:$0xf]
        %v1256 = vld [vmem:[%s174 + $0x100c] sm:$0xf]
        %v1257 = vld [vmem:[%s174 + $0x1010] sm:$0xf]
        %v1258 = vld [vmem:[%s174 + $0x1014] sm:$0xf]
        %v1259 = vld [vmem:[%s174 + $0x1018] sm:$0xf]
        %v1260 = vld [vmem:[%s174 + $0x101c] sm:$0xf]
        %v1261 = vld [vmem:[%s174 + $0x1020] sm:$0xf]
        %v1262 = vld [vmem:[%s174 + $0x1024] sm:$0xf]
        %v1263 = vld [vmem:[%s174 + $0x1028] sm:$0xf]
        %v1264 = vld [vmem:[%s174 + $0x102c] sm:$0xf]
        %v1265 = vld [vmem:[%s174 + $0x1030] sm:$0xf]
        %v1266 = vld [vmem:[%s174 + $0x1034] sm:$0xf]
        %v1267 = vld [vmem:[%s174 + $0x1038] sm:$0xf]
        %v1268 = vld [vmem:[%s174 + $0x103c] sm:$0xf]
        %v1269 = vld [vmem:[%s174 + $0x1040] sm:$0xf]
        %v1270 = vld [vmem:[%s174 + $0x1044] sm:$0xf]
        %v1271 = vld [vmem:[%s174 + $0x1048] sm:$0xf]
        %v1272 = vld [vmem:[%s174 + $0x104c] sm:$0xf]
        %v1273 = vld [vmem:[%s174 + $0x1050] sm:$0xf]
        %v1274 = vld [vmem:[%s174 + $0x1054] sm:$0xf]
        %v1275 = vld [vmem:[%s174 + $0x1058] sm:$0xf]
        %v1276 = vld [vmem:[%s174 + $0x105c] sm:$0xf]
        %v1277 = vld [vmem:[%s174 + $0x1060] sm:$0xf]
        %v1278 = vld [vmem:[%s174 + $0x1064] sm:$0xf]
        %v1279 = vld [vmem:[%s174 + $0x1068] sm:$0xf]
        %v1280 = vld [vmem:[%s174 + $0x106c] sm:$0xf]
        %v1281 = vld [vmem:[%s174 + $0x1070] sm:$0xf]
        %v1282 = vld [vmem:[%s174 + $0x1074] sm:$0xf]
        %v1283 = vld [vmem:[%s174 + $0x1078] sm:$0xf]
        %v1284 = vld [vmem:[%s174 + $0x107c] sm:$0xf]
        %v1285 = vld [vmem:[%s174 + $0x1080] sm:$0xf]
        %v1286 = vld [vmem:[%s174 + $0x1084] sm:$0xf]
        %v1287 = vld [vmem:[%s174 + $0x1088] sm:$0xf]
        %v1288 = vld [vmem:[%s174 + $0x108c] sm:$0xf]
        %v1289 = vld [vmem:[%s174 + $0x1090] sm:$0xf]
        %v1290 = vld [vmem:[%s174 + $0x1094] sm:$0xf]
        %v1291 = vld [vmem:[%s174 + $0x1098] sm:$0xf]
        %v1292 = vld [vmem:[%s174 + $0x109c] sm:$0xf]
        %v1293 = vld [vmem:[%s174 + $0x10a0] sm:$0xf]
        %v1294 = vld [vmem:[%s174 + $0x10a4] sm:$0xf]
        %v1295 = vld [vmem:[%s174 + $0x10a8] sm:$0xf]
        %v1296 = vld [vmem:[%s174 + $0x10ac] sm:$0xf]
        %v1297 = vld [vmem:[%s174 + $0x10b0] sm:$0xf]
        %v1298 = vld [vmem:[%s174 + $0x10b4] sm:$0xf]
        %v1299 = vld [vmem:[%s174 + $0x10b8] sm:$0xf]
        %v1300 = vld [vmem:[%s174 + $0x10bc] sm:$0xf]
        %v1301 = vld [vmem:[%s174 + $0x10c0] sm:$0xf]
        %v1302 = vld [vmem:[%s174 + $0x10c4] sm:$0xf]
        %v1303 = vld [vmem:[%s174 + $0x10c8] sm:$0xf]
        %v1304 = vld [vmem:[%s174 + $0x10cc] sm:$0xf]
        %v1305 = vld [vmem:[%s174 + $0x10d0] sm:$0xf]
        %v1306 = vld [vmem:[%s174 + $0x10d4] sm:$0xf]
        %v1307 = vld [vmem:[%s174 + $0x10d8] sm:$0xf]
        %v1308 = vld [vmem:[%s174 + $0x10dc] sm:$0xf]
        %v1309 = vld [vmem:[%s174 + $0x10e0] sm:$0xf]
        %v1310 = vld [vmem:[%s174 + $0x10e4] sm:$0xf]
        %v1311 = vld [vmem:[%s174 + $0x10e8] sm:$0xf]
        %v1312 = vld [vmem:[%s174 + $0x10ec] sm:$0xf]
        %v1313 = vld [vmem:[%s174 + $0x10f0] sm:$0xf]
        %v1314 = vld [vmem:[%s174 + $0x10f4] sm:$0xf]
        %v1315 = vld [vmem:[%s174 + $0x10f8] sm:$0xf]
        %v1316 = vld [vmem:[%s174 + $0x10fc] sm:$0xf]
        %v1317 = vld [vmem:[%s174 + $0x1100] sm:$0xf]
        %v1318 = vld [vmem:[%s174 + $0x1104] sm:$0xf]
        %v1319 = vld [vmem:[%s174 + $0x1108] sm:$0xf]
        %v1320 = vld [vmem:[%s174 + $0x110c] sm:$0xf]
        %v1321 = vld [vmem:[%s174 + $0x1110] sm:$0xf]
        %v1322 = vld [vmem:[%s174 + $0x1114] sm:$0xf]
        %v1323 = vld [vmem:[%s174 + $0x1118] sm:$0xf]
        %v1324 = vld [vmem:[%s174 + $0x111c] sm:$0xf]
        %v1325 = vld [vmem:[%s174 + $0x1120] sm:$0xf]
        %v1326 = vld [vmem:[%s174 + $0x1124] sm:$0xf]
        %v1327 = vld [vmem:[%s174 + $0x1128] sm:$0xf]
        %v1328 = vld [vmem:[%s174 + $0x112c] sm:$0xf]
        %v1329 = vld [vmem:[%s174 + $0x1130] sm:$0xf]
        %v1330 = vld [vmem:[%s174 + $0x1134] sm:$0xf]
        %v1331 = vld [vmem:[%s174 + $0x1138] sm:$0xf]
        %v1332 = vld [vmem:[%s174 + $0x113c] sm:$0xf]
        %v1333 = vld [vmem:[%s174 + $0x1140] sm:$0xf]
        %v1334 = vld [vmem:[%s174 + $0x1144] sm:$0xf]
        %v1335 = vld [vmem:[%s174 + $0x1148] sm:$0xf]
        %v1336 = vld [vmem:[%s174 + $0x114c] sm:$0xf]
        %v1337 = vld [vmem:[%s174 + $0x1150] sm:$0xf]
        %v1338 = vld [vmem:[%s174 + $0x1154] sm:$0xf]
        %v1339 = vld [vmem:[%s174 + $0x1158] sm:$0xf]
        %v1340 = vld [vmem:[%s174 + $0x115c] sm:$0xf]
        %v1341 = vld [vmem:[%s174 + $0x1160] sm:$0xf]
        %v1342 = vld [vmem:[%s174 + $0x1164] sm:$0xf]
        %v1343 = vld [vmem:[%s174 + $0x1168] sm:$0xf]
        %v1344 = vld [vmem:[%s174 + $0x116c] sm:$0xf]
        %v1345 = vld [vmem:[%s174 + $0x1170] sm:$0xf]
        %v1346 = vld [vmem:[%s174 + $0x1174] sm:$0xf]
        %v1347 = vld [vmem:[%s174 + $0x1178] sm:$0xf]
        %v1348 = vld [vmem:[%s174 + $0x117c] sm:$0xf]
        %v1349 = vld [vmem:[%s174 + $0x1180] sm:$0xf]
        %v1350 = vld [vmem:[%s174 + $0x1184] sm:$0xf]
        %v1351 = vld [vmem:[%s174 + $0x1188] sm:$0xf]
        %v1352 = vld [vmem:[%s174 + $0x118c] sm:$0xf]
        %v1353 = vld [vmem:[%s174 + $0x1190] sm:$0xf]
        %v1354 = vld [vmem:[%s174 + $0x1194] sm:$0xf]
        %v1355 = vld [vmem:[%s174 + $0x1198] sm:$0xf]
        %v1356 = vld [vmem:[%s174 + $0x119c] sm:$0xf]
        %v1357 = vld [vmem:[%s174 + $0x11a0] sm:$0xf]
        %v1358 = vld [vmem:[%s174 + $0x11a4] sm:$0xf]
        %v1359 = vld [vmem:[%s174 + $0x11a8] sm:$0xf]
        %v1360 = vld [vmem:[%s174 + $0x11ac] sm:$0xf]
        %v1361 = vld [vmem:[%s174 + $0x11b0] sm:$0xf]
        %v1362 = vld [vmem:[%s174 + $0x11b4] sm:$0xf]
        %v1363 = vld [vmem:[%s174 + $0x11b8] sm:$0xf]
        %v1364 = vld [vmem:[%s174 + $0x11bc] sm:$0xf]
        %v1365 = vld [vmem:[%s174 + $0x11c0] sm:$0xf]
        %v1366 = vld [vmem:[%s174 + $0x11c4] sm:$0xf]
        %v1367 = vld [vmem:[%s174 + $0x11c8] sm:$0xf]
        %v1368 = vld [vmem:[%s174 + $0x11cc] sm:$0xf]
        %v1369 = vld [vmem:[%s174 + $0x11d0] sm:$0xf]
        %v1370 = vld [vmem:[%s174 + $0x11d4] sm:$0xf]
        %v1371 = vld [vmem:[%s174 + $0x11d8] sm:$0xf]
        %v1372 = vld [vmem:[%s174 + $0x11dc] sm:$0xf]
        %v1373 = vld [vmem:[%s174 + $0x11e0] sm:$0xf]
        %v1374 = vld [vmem:[%s174 + $0x11e4] sm:$0xf]
        %v1375 = vld [vmem:[%s174 + $0x11e8] sm:$0xf]
        %v1376 = vld [vmem:[%s174 + $0x11ec] sm:$0xf]
        %v1377 = vld [vmem:[%s174 + $0x11f0] sm:$0xf]
        %v1378 = vld [vmem:[%s174 + $0x11f4] sm:$0xf]
        %v1379 = vld [vmem:[%s174 + $0x11f8] sm:$0xf]
        %v1380 = vld [vmem:[%s174 + $0x11fc] sm:$0xf]
        %v1381 = vld [vmem:[%s174 + $0x1200] sm:$0xf]
        %v1382 = vld [vmem:[%s174 + $0x1204] sm:$0xf]
        %v1383 = vld [vmem:[%s174 + $0x1208] sm:$0xf]
        %v1384 = vld [vmem:[%s174 + $0x120c] sm:$0xf]
        %v1385 = vld [vmem:[%s174 + $0x1210] sm:$0xf]
        %v1386 = vld [vmem:[%s174 + $0x1214] sm:$0xf]
        %v1387 = vld [vmem:[%s174 + $0x1218] sm:$0xf]
        %v1388 = vld [vmem:[%s174 + $0x121c] sm:$0xf]
        %v1389 = vld [vmem:[%s174 + $0x1220] sm:$0xf]
        %v1390 = vld [vmem:[%s174 + $0x1224] sm:$0xf]
        %v1391 = vld [vmem:[%s174 + $0x1228] sm:$0xf]
        %v1392 = vld [vmem:[%s174 + $0x122c] sm:$0xf]
        %v1393 = vld [vmem:[%s174 + $0x1230] sm:$0xf]
        %v1394 = vld [vmem:[%s174 + $0x1234] sm:$0xf]
        %v1395 = vld [vmem:[%s174 + $0x1238] sm:$0xf]
        %v1396 = vld [vmem:[%s174 + $0x123c] sm:$0xf]
        %v1397 = vld [vmem:[%s174 + $0x1240] sm:$0xf]
        %v1398 = vld [vmem:[%s174 + $0x1244] sm:$0xf]
        %v1399 = vld [vmem:[%s174 + $0x1248] sm:$0xf]
        %v1400 = vld [vmem:[%s174 + $0x124c] sm:$0xf]
        %v1401 = vld [vmem:[%s174 + $0x1250] sm:$0xf]
        %v1402 = vld [vmem:[%s174 + $0x1254] sm:$0xf]
        %v1403 = vld [vmem:[%s174 + $0x1258] sm:$0xf]
        %v1404 = vld [vmem:[%s174 + $0x125c] sm:$0xf]
        %v1405 = vld [vmem:[%s174 + $0x1260] sm:$0xf]
        %v1406 = vld [vmem:[%s174 + $0x1264] sm:$0xf]
        %v1407 = vld [vmem:[%s174 + $0x1268] sm:$0xf]
        %v1408 = vld [vmem:[%s174 + $0x126c] sm:$0xf]
        %v1409 = vld [vmem:[%s174 + $0x1270] sm:$0xf]
        %v1410 = vld [vmem:[%s174 + $0x1274] sm:$0xf]
        %v1411 = vld [vmem:[%s174 + $0x1278] sm:$0xf]
        %v1412 = vld [vmem:[%s174 + $0x127c] sm:$0xf]
        %v1413 = vld [vmem:[%s174 + $0x1280] sm:$0xf]
        %v1414 = vld [vmem:[%s174 + $0x1284] sm:$0xf]
        %v1415 = vld [vmem:[%s174 + $0x1288] sm:$0xf]
        %v1416 = vld [vmem:[%s174 + $0x128c] sm:$0xf]
        %v1417 = vld [vmem:[%s174 + $0x1290] sm:$0xf]
        %v1418 = vld [vmem:[%s174 + $0x1294] sm:$0xf]
        %v1419 = vld [vmem:[%s174 + $0x1298] sm:$0xf]
        %v1420 = vld [vmem:[%s174 + $0x129c] sm:$0xf]
        %v1421 = vld [vmem:[%s174 + $0x12a0] sm:$0xf]
        %v1422 = vld [vmem:[%s174 + $0x12a4] sm:$0xf]
        %v1423 = vld [vmem:[%s174 + $0x12a8] sm:$0xf]
        %v1424 = vld [vmem:[%s174 + $0x12ac] sm:$0xf]
        %v1425 = vld [vmem:[%s174 + $0x12b0] sm:$0xf]
        %v1426 = vld [vmem:[%s174 + $0x12b4] sm:$0xf]
        %v1427 = vld [vmem:[%s174 + $0x12b8] sm:$0xf]
        %v1428 = vld [vmem:[%s174 + $0x12bc] sm:$0xf]
        %v1429 = vld [vmem:[%s174 + $0x12c0] sm:$0xf]
        %v1430 = vld [vmem:[%s174 + $0x12c4] sm:$0xf]
        %v1431 = vld [vmem:[%s174 + $0x12c8] sm:$0xf]
        %v1432 = vld [vmem:[%s174 + $0x12cc] sm:$0xf]
        %v1433 = vld [vmem:[%s174 + $0x12d0] sm:$0xf]
        %v1434 = vld [vmem:[%s174 + $0x12d4] sm:$0xf]
        %v1435 = vld [vmem:[%s174 + $0x12d8] sm:$0xf]
        %v1436 = vld [vmem:[%s174 + $0x12dc] sm:$0xf]
        %v1437 = vld [vmem:[%s174 + $0x12e0] sm:$0xf]
        %v1438 = vld [vmem:[%s174 + $0x12e4] sm:$0xf]
        %v1439 = vld [vmem:[%s174 + $0x12e8] sm:$0xf]
        %v1440 = vld [vmem:[%s174 + $0x12ec] sm:$0xf]
        %v1441 = vld [vmem:[%s174 + $0x12f0] sm:$0xf]
        %v1442 = vld [vmem:[%s174 + $0x12f4] sm:$0xf]
        %v1443 = vld [vmem:[%s174 + $0x12f8] sm:$0xf]
        %v1444 = vld [vmem:[%s174 + $0x12fc] sm:$0xf]
        %v1445 = vld [vmem:[%s174 + $0x1300] sm:$0xf]
        %v1446 = vld [vmem:[%s174 + $0x1304] sm:$0xf]
        %v1447 = vld [vmem:[%s174 + $0x1308] sm:$0xf]
        %v1448 = vld [vmem:[%s174 + $0x130c] sm:$0xf]
        %v1449 = vld [vmem:[%s174 + $0x1310] sm:$0xf]
        %v1450 = vld [vmem:[%s174 + $0x1314] sm:$0xf]
        %v1451 = vld [vmem:[%s174 + $0x1318] sm:$0xf]
        %v1452 = vld [vmem:[%s174 + $0x131c] sm:$0xf]
        %v1453 = vld [vmem:[%s174 + $0x1320] sm:$0xf]
        %v1454 = vld [vmem:[%s174 + $0x1324] sm:$0xf]
        %v1455 = vld [vmem:[%s174 + $0x1328] sm:$0xf]
        %v1456 = vld [vmem:[%s174 + $0x132c] sm:$0xf]
        %v1457 = vld [vmem:[%s174 + $0x1330] sm:$0xf]
        %v1458 = vld [vmem:[%s174 + $0x1334] sm:$0xf]
        %v1459 = vld [vmem:[%s174 + $0x1338] sm:$0xf]
        %v1460 = vld [vmem:[%s174 + $0x133c] sm:$0xf]
        %v1461 = vld [vmem:[%s174 + $0x1340] sm:$0xf]
        %v1462 = vld [vmem:[%s174 + $0x1344] sm:$0xf]
        %v1463 = vld [vmem:[%s174 + $0x1348] sm:$0xf]
        %v1464 = vld [vmem:[%s174 + $0x134c] sm:$0xf]
        %v1465 = vld [vmem:[%s174 + $0x1350] sm:$0xf]
        %v1466 = vld [vmem:[%s174 + $0x1354] sm:$0xf]
        %v1467 = vld [vmem:[%s174 + $0x1358] sm:$0xf]
        %v1468 = vld [vmem:[%s174 + $0x135c] sm:$0xf]
        %v1469 = vld [vmem:[%s174 + $0x1360] sm:$0xf]
        %v1470 = vld [vmem:[%s174 + $0x1364] sm:$0xf]
        %v1471 = vld [vmem:[%s174 + $0x1368] sm:$0xf]
        %v1472 = vld [vmem:[%s174 + $0x136c] sm:$0xf]
        %v1473 = vld [vmem:[%s174 + $0x1370] sm:$0xf]
        %v1474 = vld [vmem:[%s174 + $0x1374] sm:$0xf]
        %v1475 = vld [vmem:[%s174 + $0x1378] sm:$0xf]
        %v1476 = vld [vmem:[%s174 + $0x137c] sm:$0xf]
        %v1477 = vld [vmem:[%s174 + $0x1380] sm:$0xf]
        %v1478 = vld [vmem:[%s174 + $0x1384] sm:$0xf]
        %v1479 = vld [vmem:[%s174 + $0x1388] sm:$0xf]
        %v1480 = vld [vmem:[%s174 + $0x138c] sm:$0xf]
        %v1481 = vld [vmem:[%s174 + $0x1390] sm:$0xf]
        %v1482 = vld [vmem:[%s174 + $0x1394] sm:$0xf]
        %v1483 = vld [vmem:[%s174 + $0x1398] sm:$0xf]
        %v1484 = vld [vmem:[%s174 + $0x139c] sm:$0xf]
        %v1485 = vld [vmem:[%s174 + $0x13a0] sm:$0xf]
        %v1486 = vld [vmem:[%s174 + $0x13a4] sm:$0xf]
        %v1487 = vld [vmem:[%s174 + $0x13a8] sm:$0xf]
        %v1488 = vld [vmem:[%s174 + $0x13ac] sm:$0xf]
        %v1489 = vld [vmem:[%s174 + $0x13b0] sm:$0xf]
        %v1490 = vld [vmem:[%s174 + $0x13b4] sm:$0xf]
        %v1491 = vld [vmem:[%s174 + $0x13b8] sm:$0xf]
        %v1492 = vld [vmem:[%s174 + $0x13bc] sm:$0xf]
        %v1493 = vld [vmem:[%s174 + $0x13c0] sm:$0xf]
        %v1494 = vld [vmem:[%s174 + $0x13c4] sm:$0xf]
        %v1495 = vld [vmem:[%s174 + $0x13c8] sm:$0xf]
        %v1496 = vld [vmem:[%s174 + $0x13cc] sm:$0xf]
        %v1497 = vld [vmem:[%s174 + $0x13d0] sm:$0xf]
        %v1498 = vld [vmem:[%s174 + $0x13d4] sm:$0xf]
        %v1499 = vld [vmem:[%s174 + $0x13d8] sm:$0xf]
        %v1500 = vld [vmem:[%s174 + $0x13dc] sm:$0xf]
        %v1501 = vld [vmem:[%s174 + $0x13e0] sm:$0xf]
        %v1502 = vld [vmem:[%s174 + $0x13e4] sm:$0xf]
        %v1503 = vld [vmem:[%s174 + $0x13e8] sm:$0xf]
        %v1504 = vld [vmem:[%s174 + $0x13ec] sm:$0xf]
        %v1505 = vld [vmem:[%s174 + $0x13f0] sm:$0xf]
        %v1506 = vld [vmem:[%s174 + $0x13f4] sm:$0xf]
        %v1507 = vld [vmem:[%s174 + $0x13f8] sm:$0xf]
        %v1508 = vld [vmem:[%s174 + $0x13fc] sm:$0xf]
        %v1509 = vld [vmem:[%s174 + $0x1400] sm:$0xf]
        %v1510 = vld [vmem:[%s174 + $0x1404] sm:$0xf]
        %v1511 = vld [vmem:[%s174 + $0x1408] sm:$0xf]
        %v1512 = vld [vmem:[%s174 + $0x140c] sm:$0xf]
        %v1513 = vld [vmem:[%s174 + $0x1410] sm:$0xf]
        %v1514 = vld [vmem:[%s174 + $0x1414] sm:$0xf]
        %v1515 = vld [vmem:[%s174 + $0x1418] sm:$0xf]
        %v1516 = vld [vmem:[%s174 + $0x141c] sm:$0xf]
        %v1517 = vld [vmem:[%s174 + $0x1420] sm:$0xf]
        %v1518 = vld [vmem:[%s174 + $0x1424] sm:$0xf]
        %v1519 = vld [vmem:[%s174 + $0x1428] sm:$0xf]
        %v1520 = vld [vmem:[%s174 + $0x142c] sm:$0xf]
        %v1521 = vld [vmem:[%s174 + $0x1430] sm:$0xf]
        %v1522 = vld [vmem:[%s174 + $0x1434] sm:$0xf]
        %v1523 = vld [vmem:[%s174 + $0x1438] sm:$0xf]
        %v1524 = vld [vmem:[%s174 + $0x143c] sm:$0xf]
        %v1525 = vld [vmem:[%s174 + $0x1440] sm:$0xf]
        %v1526 = vld [vmem:[%s174 + $0x1444] sm:$0xf]
        %v1527 = vld [vmem:[%s174 + $0x1448] sm:$0xf]
        %v1528 = vld [vmem:[%s174 + $0x144c] sm:$0xf]
        %v1529 = vld [vmem:[%s174 + $0x1450] sm:$0xf]
        %v1530 = vld [vmem:[%s174 + $0x1454] sm:$0xf]
        %v1531 = vld [vmem:[%s174 + $0x1458] sm:$0xf]
        %v1532 = vld [vmem:[%s174 + $0x145c] sm:$0xf]
        %v1533 = vld [vmem:[%s174 + $0x1460] sm:$0xf]
        %v1534 = vld [vmem:[%s174 + $0x1464] sm:$0xf]
        %v1535 = vld [vmem:[%s174 + $0x1468] sm:$0xf]
        %v1536 = vld [vmem:[%s174 + $0x146c] sm:$0xf]
        %v1537 = vld [vmem:[%s174 + $0x1470] sm:$0xf]
        %v1538 = vld [vmem:[%s174 + $0x1474] sm:$0xf]
        %v1539 = vld [vmem:[%s174 + $0x1478] sm:$0xf]
        %v1540 = vld [vmem:[%s174 + $0x147c] sm:$0xf]
        %v1541 = vld [vmem:[%s174 + $0x1480] sm:$0xf]
        %v1542 = vld [vmem:[%s174 + $0x1484] sm:$0xf]
        %v1543 = vld [vmem:[%s174 + $0x1488] sm:$0xf]
        %v1544 = vld [vmem:[%s174 + $0x148c] sm:$0xf]
        %v1545 = vld [vmem:[%s174 + $0x1490] sm:$0xf]
        %v1546 = vld [vmem:[%s174 + $0x1494] sm:$0xf]
        %v1547 = vld [vmem:[%s174 + $0x1498] sm:$0xf]
        %v1548 = vld [vmem:[%s174 + $0x149c] sm:$0xf]
        %v1549 = vld [vmem:[%s174 + $0x14a0] sm:$0xf]
        %v1550 = vld [vmem:[%s174 + $0x14a4] sm:$0xf]
        %v1551 = vld [vmem:[%s174 + $0x14a8] sm:$0xf]
        %v1552 = vld [vmem:[%s174 + $0x14ac] sm:$0xf]
        %v1553 = vld [vmem:[%s174 + $0x14b0] sm:$0xf]
        %v1554 = vld [vmem:[%s174 + $0x14b4] sm:$0xf]
        %v1555 = vld [vmem:[%s174 + $0x14b8] sm:$0xf]
        %v1556 = vld [vmem:[%s174 + $0x14bc] sm:$0xf]
        %v1557 = vld [vmem:[%s174 + $0x14c0] sm:$0xf]
        %v1558 = vld [vmem:[%s174 + $0x14c4] sm:$0xf]
        %v1559 = vld [vmem:[%s174 + $0x14c8] sm:$0xf]
        %v1560 = vld [vmem:[%s174 + $0x14cc] sm:$0xf]
        %v1561 = vld [vmem:[%s174 + $0x14d0] sm:$0xf]
        %v1562 = vld [vmem:[%s174 + $0x14d4] sm:$0xf]
        %v1563 = vld [vmem:[%s174 + $0x14d8] sm:$0xf]
        %v1564 = vld [vmem:[%s174 + $0x14dc] sm:$0xf]
        %v1565 = vld [vmem:[%s174 + $0x14e0] sm:$0xf]
        %v1566 = vld [vmem:[%s174 + $0x14e4] sm:$0xf]
        %v1567 = vld [vmem:[%s174 + $0x14e8] sm:$0xf]
        %v1568 = vld [vmem:[%s174 + $0x14ec] sm:$0xf]
        %v1569 = vld [vmem:[%s174 + $0x14f0] sm:$0xf]
        %v1570 = vld [vmem:[%s174 + $0x14f4] sm:$0xf]
        %v1571 = vld [vmem:[%s174 + $0x14f8] sm:$0xf]
        %v1572 = vld [vmem:[%s174 + $0x14fc] sm:$0xf]
        %v1573 = vld [vmem:[%s174 + $0x1500] sm:$0xf]
        %v1574 = vld [vmem:[%s174 + $0x1504] sm:$0xf]
        %v1575 = vld [vmem:[%s174 + $0x1508] sm:$0xf]
        %v1576 = vld [vmem:[%s174 + $0x150c] sm:$0xf]
        %v1577 = vld [vmem:[%s174 + $0x1510] sm:$0xf]
        %v1578 = vld [vmem:[%s174 + $0x1514] sm:$0xf]
        %v1579 = vld [vmem:[%s174 + $0x1518] sm:$0xf]
        %v1580 = vld [vmem:[%s174 + $0x151c] sm:$0xf]
        %v1581 = vld [vmem:[%s174 + $0x1520] sm:$0xf]
        %v1582 = vld [vmem:[%s174 + $0x1524] sm:$0xf]
        %v1583 = vld [vmem:[%s174 + $0x1528] sm:$0xf]
        %v1584 = vld [vmem:[%s174 + $0x152c] sm:$0xf]
        %v1585 = vld [vmem:[%s174 + $0x1530] sm:$0xf]
        %v1586 = vld [vmem:[%s174 + $0x1534] sm:$0xf]
        %v1587 = vld [vmem:[%s174 + $0x1538] sm:$0xf]
        %v1588 = vld [vmem:[%s174 + $0x153c] sm:$0xf]
        %v1589 = vld [vmem:[%s174 + $0x1540] sm:$0xf]
        %v1590 = vld [vmem:[%s174 + $0x1544] sm:$0xf]
        %v1591 = vld [vmem:[%s174 + $0x1548] sm:$0xf]
        %v1592 = vld [vmem:[%s174 + $0x154c] sm:$0xf]
        %v1593 = vld [vmem:[%s174 + $0x1550] sm:$0xf]
        %v1594 = vld [vmem:[%s174 + $0x1554] sm:$0xf]
        %v1595 = vld [vmem:[%s174 + $0x1558] sm:$0xf]
        %v1596 = vld [vmem:[%s174 + $0x155c] sm:$0xf]
        %v1597 = vld [vmem:[%s174 + $0x1560] sm:$0xf]
        %v1598 = vld [vmem:[%s174 + $0x1564] sm:$0xf]
        %v1599 = vld [vmem:[%s174 + $0x1568] sm:$0xf]
        %v1600 = vld [vmem:[%s174 + $0x156c] sm:$0xf]
        %v1601 = vld [vmem:[%s174 + $0x1570] sm:$0xf]
        %v1602 = vld [vmem:[%s174 + $0x1574] sm:$0xf]
        %v1603 = vld [vmem:[%s174 + $0x1578] sm:$0xf]
        %v1604 = vld [vmem:[%s174 + $0x157c] sm:$0xf]
        %v1605 = vld [vmem:[%s174 + $0x1580] sm:$0xf]
        %v1606 = vld [vmem:[%s174 + $0x1584] sm:$0xf]
        %v1607 = vld [vmem:[%s174 + $0x1588] sm:$0xf]
        %v1608 = vld [vmem:[%s174 + $0x158c] sm:$0xf]
        %v1609 = vld [vmem:[%s174 + $0x1590] sm:$0xf]
        %v1610 = vld [vmem:[%s174 + $0x1594] sm:$0xf]
        %v1611 = vld [vmem:[%s174 + $0x1598] sm:$0xf]
        %v1612 = vld [vmem:[%s174 + $0x159c] sm:$0xf]
        %v1613 = vld [vmem:[%s174 + $0x15a0] sm:$0xf]
        %v1614 = vld [vmem:[%s174 + $0x15a4] sm:$0xf]
        %v1615 = vld [vmem:[%s174 + $0x15a8] sm:$0xf]
        %v1616 = vld [vmem:[%s174 + $0x15ac] sm:$0xf]
        %v1617 = vld [vmem:[%s174 + $0x15b0] sm:$0xf]
        %v1618 = vld [vmem:[%s174 + $0x15b4] sm:$0xf]
        %v1619 = vld [vmem:[%s174 + $0x15b8] sm:$0xf]
        %v1620 = vld [vmem:[%s174 + $0x15bc] sm:$0xf]
        %v1621 = vld [vmem:[%s174 + $0x15c0] sm:$0xf]
        %v1622 = vld [vmem:[%s174 + $0x15c4] sm:$0xf]
        %v1623 = vld [vmem:[%s174 + $0x15c8] sm:$0xf]
        %v1624 = vld [vmem:[%s174 + $0x15cc] sm:$0xf]
        %v1625 = vld [vmem:[%s174 + $0x15d0] sm:$0xf]
        %v1626 = vld [vmem:[%s174 + $0x15d4] sm:$0xf]
        %v1627 = vld [vmem:[%s174 + $0x15d8] sm:$0xf]
        %v1628 = vld [vmem:[%s174 + $0x15dc] sm:$0xf]
        %v1629 = vld [vmem:[%s174 + $0x15e0] sm:$0xf]
        %v1630 = vld [vmem:[%s174 + $0x15e4] sm:$0xf]
        %v1631 = vld [vmem:[%s174 + $0x15e8] sm:$0xf]
        %v1632 = vld [vmem:[%s174 + $0x15ec] sm:$0xf]
        %v1633 = vld [vmem:[%s174 + $0x15f0] sm:$0xf]
        %v1634 = vld [vmem:[%s174 + $0x15f4] sm:$0xf]
        %v1635 = vld [vmem:[%s174 + $0x15f8] sm:$0xf]
        %v1636 = vld [vmem:[%s174 + $0x15fc] sm:$0xf]
        %v1637 = vld [vmem:[%s174 + $0x1600] sm:$0xf]
        %v1638 = vld [vmem:[%s174 + $0x1604] sm:$0xf]
        %v1639 = vld [vmem:[%s174 + $0x1608] sm:$0xf]
        %v1640 = vld [vmem:[%s174 + $0x160c] sm:$0xf]
        %v1641 = vld [vmem:[%s174 + $0x1610] sm:$0xf]
        %v1642 = vld [vmem:[%s174 + $0x1614] sm:$0xf]
        %v1643 = vld [vmem:[%s174 + $0x1618] sm:$0xf]
        %v1644 = vld [vmem:[%s174 + $0x161c] sm:$0xf]
        %v1645 = vld [vmem:[%s174 + $0x1620] sm:$0xf]
        %v1646 = vld [vmem:[%s174 + $0x1624] sm:$0xf]
        %v1647 = vld [vmem:[%s174 + $0x1628] sm:$0xf]
        %v1648 = vld [vmem:[%s174 + $0x162c] sm:$0xf]
        %v1649 = vld [vmem:[%s174 + $0x1630] sm:$0xf]
        %v1650 = vld [vmem:[%s174 + $0x1634] sm:$0xf]
        %v1651 = vld [vmem:[%s174 + $0x1638] sm:$0xf]
        %v1652 = vld [vmem:[%s174 + $0x163c] sm:$0xf]
        %v1653 = vld [vmem:[%s174 + $0x1640] sm:$0xf]
        %v1654 = vld [vmem:[%s174 + $0x1644] sm:$0xf]
        %v1655 = vld [vmem:[%s174 + $0x1648] sm:$0xf]
        %v1656 = vld [vmem:[%s174 + $0x164c] sm:$0xf]
        %v1657 = vld [vmem:[%s174 + $0x1650] sm:$0xf]
        %v1658 = vld [vmem:[%s174 + $0x1654] sm:$0xf]
        %v1659 = vld [vmem:[%s174 + $0x1658] sm:$0xf]
        %v1660 = vld [vmem:[%s174 + $0x165c] sm:$0xf]
        %v1661 = vld [vmem:[%s174 + $0x1660] sm:$0xf]
        %v1662 = vld [vmem:[%s174 + $0x1664] sm:$0xf]
        %v1663 = vld [vmem:[%s174 + $0x1668] sm:$0xf]
        %v1664 = vld [vmem:[%s174 + $0x166c] sm:$0xf]
        %v1665 = vld [vmem:[%s174 + $0x1670] sm:$0xf]
        %v1666 = vld [vmem:[%s174 + $0x1674] sm:$0xf]
        %v1667 = vld [vmem:[%s174 + $0x1678] sm:$0xf]
        %v1668 = vld [vmem:[%s174 + $0x167c] sm:$0xf]
        %v1669 = vld [vmem:[%s174 + $0x1680] sm:$0xf]
        %v1670 = vld [vmem:[%s174 + $0x1684] sm:$0xf]
        %v1671 = vld [vmem:[%s174 + $0x1688] sm:$0xf]
        %v1672 = vld [vmem:[%s174 + $0x168c] sm:$0xf]
        %v1673 = vld [vmem:[%s174 + $0x1690] sm:$0xf]
        %v1674 = vld [vmem:[%s174 + $0x1694] sm:$0xf]
        %v1675 = vld [vmem:[%s174 + $0x1698] sm:$0xf]
        %v1676 = vld [vmem:[%s174 + $0x169c] sm:$0xf]
        %v1677 = vld [vmem:[%s174 + $0x16a0] sm:$0xf]
        %v1678 = vld [vmem:[%s174 + $0x16a4] sm:$0xf]
        %v1679 = vld [vmem:[%s174 + $0x16a8] sm:$0xf]
        %v1680 = vld [vmem:[%s174 + $0x16ac] sm:$0xf]
        %v1681 = vld [vmem:[%s174 + $0x16b0] sm:$0xf]
        %v1682 = vld [vmem:[%s174 + $0x16b4] sm:$0xf]
        %v1683 = vld [vmem:[%s174 + $0x16b8] sm:$0xf]
        %v1684 = vld [vmem:[%s174 + $0x16bc] sm:$0xf]
        %v1685 = vld [vmem:[%s174 + $0x16c0] sm:$0xf]
        %v1686 = vld [vmem:[%s174 + $0x16c4] sm:$0xf]
        %v1687 = vld [vmem:[%s174 + $0x16c8] sm:$0xf]
        %v1688 = vld [vmem:[%s174 + $0x16cc] sm:$0xf]
        %v1689 = vld [vmem:[%s174 + $0x16d0] sm:$0xf]
        %v1690 = vld [vmem:[%s174 + $0x16d4] sm:$0xf]
        %v1691 = vld [vmem:[%s174 + $0x16d8] sm:$0xf]
        %v1692 = vld [vmem:[%s174 + $0x16dc] sm:$0xf]
        %v1693 = vld [vmem:[%s174 + $0x16e0] sm:$0xf]
        %v1694 = vld [vmem:[%s174 + $0x16e4] sm:$0xf]
        %v1695 = vld [vmem:[%s174 + $0x16e8] sm:$0xf]
        %v1696 = vld [vmem:[%s174 + $0x16ec] sm:$0xf]
        %v1697 = vld [vmem:[%s174 + $0x16f0] sm:$0xf]
        %v1698 = vld [vmem:[%s174 + $0x16f4] sm:$0xf]
        %v1699 = vld [vmem:[%s174 + $0x16f8] sm:$0xf]
        %v1700 = vld [vmem:[%s174 + $0x16fc] sm:$0xf]
        %v1701 = vld [vmem:[%s174 + $0x1700] sm:$0xf]
        %v1702 = vld [vmem:[%s174 + $0x1704] sm:$0xf]
        %v1703 = vld [vmem:[%s174 + $0x1708] sm:$0xf]
        %v1704 = vld [vmem:[%s174 + $0x170c] sm:$0xf]
        %v1705 = vld [vmem:[%s174 + $0x1710] sm:$0xf]
        %v1706 = vld [vmem:[%s174 + $0x1714] sm:$0xf]
        %v1707 = vld [vmem:[%s174 + $0x1718] sm:$0xf]
        %v1708 = vld [vmem:[%s174 + $0x171c] sm:$0xf]
        %v1709 = vld [vmem:[%s174 + $0x1720] sm:$0xf]
        %v1710 = vld [vmem:[%s174 + $0x1724] sm:$0xf]
        %v1711 = vld [vmem:[%s174 + $0x1728] sm:$0xf]
        %v1712 = vld [vmem:[%s174 + $0x172c] sm:$0xf]
        %v1713 = vld [vmem:[%s174 + $0x1730] sm:$0xf]
        %v1714 = vld [vmem:[%s174 + $0x1734] sm:$0xf]
        %v1715 = vld [vmem:[%s174 + $0x1738] sm:$0xf]
        %v1716 = vld [vmem:[%s174 + $0x173c] sm:$0xf]
        %v1717 = vld [vmem:[%s174 + $0x1740] sm:$0xf]
        %v1718 = vld [vmem:[%s174 + $0x1744] sm:$0xf]
        %v1719 = vld [vmem:[%s174 + $0x1748] sm:$0xf]
        %v1720 = vld [vmem:[%s174 + $0x174c] sm:$0xf]
        %v1721 = vld [vmem:[%s174 + $0x1750] sm:$0xf]
        %v1722 = vld [vmem:[%s174 + $0x1754] sm:$0xf]
        %v1723 = vld [vmem:[%s174 + $0x1758] sm:$0xf]
        %v1724 = vld [vmem:[%s174 + $0x175c] sm:$0xf]
        %v1725 = vld [vmem:[%s174 + $0x1760] sm:$0xf]
        %v1726 = vld [vmem:[%s174 + $0x1764] sm:$0xf]
        %v1727 = vld [vmem:[%s174 + $0x1768] sm:$0xf]
        %v1728 = vld [vmem:[%s174 + $0x176c] sm:$0xf]
        %v1729 = vld [vmem:[%s174 + $0x1770] sm:$0xf]
        %v1730 = vld [vmem:[%s174 + $0x1774] sm:$0xf]
        %v1731 = vld [vmem:[%s174 + $0x1778] sm:$0xf]
        %v1732 = vld [vmem:[%s174 + $0x177c] sm:$0xf]
        %v1733 = vld [vmem:[%s174 + $0x1780] sm:$0xf]
        %v1734 = vld [vmem:[%s174 + $0x1784] sm:$0xf]
        %v1735 = vld [vmem:[%s174 + $0x1788] sm:$0xf]
        %v1736 = vld [vmem:[%s174 + $0x178c] sm:$0xf]
        %v1737 = vld [vmem:[%s174 + $0x1790] sm:$0xf]
        %v1738 = vld [vmem:[%s174 + $0x1794] sm:$0xf]
        %v1739 = vld [vmem:[%s174 + $0x1798] sm:$0xf]
        %v1740 = vld [vmem:[%s174 + $0x179c] sm:$0xf]
        %v1741 = vld [vmem:[%s174 + $0x17a0] sm:$0xf]
        %v1742 = vld [vmem:[%s174 + $0x17a4] sm:$0xf]
        %v1743 = vld [vmem:[%s174 + $0x17a8] sm:$0xf]
        %v1744 = vld [vmem:[%s174 + $0x17ac] sm:$0xf]
        %v1745 = vld [vmem:[%s174 + $0x17b0] sm:$0xf]
        %v1746 = vld [vmem:[%s174 + $0x17b4] sm:$0xf]
        %v1747 = vld [vmem:[%s174 + $0x17b8] sm:$0xf]
        %v1748 = vld [vmem:[%s174 + $0x17bc] sm:$0xf]
        %v1749 = vld [vmem:[%s174 + $0x17c0] sm:$0xf]
        %v1750 = vld [vmem:[%s174 + $0x17c4] sm:$0xf]
        %v1751 = vld [vmem:[%s174 + $0x17c8] sm:$0xf]
        %v1752 = vld [vmem:[%s174 + $0x17cc] sm:$0xf]
        %v1753 = vld [vmem:[%s174 + $0x17d0] sm:$0xf]
        %v1754 = vld [vmem:[%s174 + $0x17d4] sm:$0xf]
        %v1755 = vld [vmem:[%s174 + $0x17d8] sm:$0xf]
        %v1756 = vld [vmem:[%s174 + $0x17dc] sm:$0xf]
        %v1757 = vld [vmem:[%s174 + $0x17e0] sm:$0xf]
        %v1758 = vld [vmem:[%s174 + $0x17e4] sm:$0xf]
        %v1759 = vld [vmem:[%s174 + $0x17e8] sm:$0xf]
        %v1760 = vld [vmem:[%s174 + $0x17ec] sm:$0xf]
        %v1761 = vld [vmem:[%s174 + $0x17f0] sm:$0xf]
        %v1762 = vld [vmem:[%s174 + $0x17f4] sm:$0xf]
        %v1763 = vld [vmem:[%s174 + $0x17f8] sm:$0xf]
        %v1764 = vld [vmem:[%s174 + $0x17fc] sm:$0xf]
        %v1777 = vcombine.high %v217, %v217
        %v1779 = vunpack.c.l.s4 1966171168
        %v1780 = vunpack.c.0.s8 %v1779
        %v1781 = vlaneseq
        %v1782 = vshrl.u32 %v1781, 7
        %v1783 = vsub.s32 %v1780, %v1782
        %v1784 = vrot.slane %v217, %v1783
        %v1786 = vunpack.c.l.s4 1966171168
        %v1787 = vunpack.c.0.s8 %v1786
        %v1788 = vlaneseq
        %v1789 = vshrl.u32 %v1788, 7
        %v1790 = vsub.s32 %v1787, %v1789
        %v1791 = vrot.slane %v1777, %v1790
        %v1792 = vcombine.high %v1784, %v1784
        %v1793 = vcombine.high %v1791, %v1791
        %v1795 = vunpack.c.l.s4 1966171168
        %v1796 = vunpack.c.0.s8 %v1795
        %v1797 = vlaneseq
        %v1798 = vshrl.u32 %v1797, 7
        %v1799 = vsub.s32 %v1796, %v1798
        %v1800 = vrot.slane %v1784, %v1799
        %v1802 = vunpack.c.l.s4 1966171168
        %v1803 = vunpack.c.0.s8 %v1802
        %v1804 = vlaneseq
        %v1805 = vshrl.u32 %v1804, 7
        %v1806 = vsub.s32 %v1803, %v1805
        %v1807 = vrot.slane %v1791, %v1806
        %v1809 = vunpack.c.l.s4 1966171168
        %v1810 = vunpack.c.0.s8 %v1809
        %v1811 = vlaneseq
        %v1812 = vshrl.u32 %v1811, 7
        %v1813 = vsub.s32 %v1810, %v1812
        %v1814 = vrot.slane %v1792, %v1813
        %v1816 = vunpack.c.l.s4 1966171168
        %v1817 = vunpack.c.0.s8 %v1816
        %v1818 = vlaneseq
        %v1819 = vshrl.u32 %v1818, 7
        %v1820 = vsub.s32 %v1817, %v1819
        %v1821 = vrot.slane %v1793, %v1820
        %v1822 = vcombine.high %v1800, %v1800
        %v1823 = vcombine.high %v1807, %v1807
        %v1824 = vcombine.high %v1814, %v1814
        %v1825 = vcombine.high %v1821, %v1821
        %v1826 = vcombine.high %v218, %v218
        %v1828 = vunpack.c.l.s4 1966171168
        %v1829 = vunpack.c.0.s8 %v1828
        %v1830 = vlaneseq
        %v1831 = vshrl.u32 %v1830, 7
        %v1832 = vsub.s32 %v1829, %v1831
        %v1833 = vrot.slane %v218, %v1832
        %v1835 = vunpack.c.l.s4 1966171168
        %v1836 = vunpack.c.0.s8 %v1835
        %v1837 = vlaneseq
        %v1838 = vshrl.u32 %v1837, 7
        %v1839 = vsub.s32 %v1836, %v1838
        %v1840 = vrot.slane %v1826, %v1839
        %v1841 = vcombine.high %v1833, %v1833
        %v1842 = vcombine.high %v1840, %v1840
        %v1844 = vunpack.c.l.s4 1966171168
        %v1845 = vunpack.c.0.s8 %v1844
        %v1846 = vlaneseq
        %v1847 = vshrl.u32 %v1846, 7
        %v1848 = vsub.s32 %v1845, %v1847
        %v1849 = vrot.slane %v1833, %v1848
        %v1851 = vunpack.c.l.s4 1966171168
        %v1852 = vunpack.c.0.s8 %v1851
        %v1853 = vlaneseq
        %v1854 = vshrl.u32 %v1853, 7
        %v1855 = vsub.s32 %v1852, %v1854
        %v1856 = vrot.slane %v1840, %v1855
        %v1858 = vunpack.c.l.s4 1966171168
        %v1859 = vunpack.c.0.s8 %v1858
        %v1860 = vlaneseq
        %v1861 = vshrl.u32 %v1860, 7
        %v1862 = vsub.s32 %v1859, %v1861
        %v1863 = vrot.slane %v1841, %v1862
        %v1865 = vunpack.c.l.s4 1966171168
        %v1866 = vunpack.c.0.s8 %v1865
        %v1867 = vlaneseq
        %v1868 = vshrl.u32 %v1867, 7
        %v1869 = vsub.s32 %v1866, %v1868
        %v1870 = vrot.slane %v1842, %v1869
        %v1871 = vcombine.high %v1849, %v1849
        %v1872 = vcombine.high %v1856, %v1856
        %v1873 = vcombine.high %v1863, %v1863
        %v1874 = vcombine.high %v1870, %v1870
        %v1875 = vcombine.high %v219, %v219
        %v1877 = vunpack.c.l.s4 1966171168
        %v1878 = vunpack.c.0.s8 %v1877
        %v1879 = vlaneseq
        %v1880 = vshrl.u32 %v1879, 7
        %v1881 = vsub.s32 %v1878, %v1880
        %v1882 = vrot.slane %v219, %v1881
        %v1884 = vunpack.c.l.s4 1966171168
        %v1885 = vunpack.c.0.s8 %v1884
        %v1886 = vlaneseq
        %v1887 = vshrl.u32 %v1886, 7
        %v1888 = vsub.s32 %v1885, %v1887
        %v1889 = vrot.slane %v1875, %v1888
        %v1890 = vcombine.high %v1882, %v1882
        %v1891 = vcombine.high %v1889, %v1889
        %v1893 = vunpack.c.l.s4 1966171168
        %v1894 = vunpack.c.0.s8 %v1893
        %v1895 = vlaneseq
        %v1896 = vshrl.u32 %v1895, 7
        %v1897 = vsub.s32 %v1894, %v1896
        %v1898 = vrot.slane %v1882, %v1897
        %v1900 = vunpack.c.l.s4 1966171168
        %v1901 = vunpack.c.0.s8 %v1900
        %v1902 = vlaneseq
        %v1903 = vshrl.u32 %v1902, 7
        %v1904 = vsub.s32 %v1901, %v1903
        %v1905 = vrot.slane %v1889, %v1904
        %v1907 = vunpack.c.l.s4 1966171168
        %v1908 = vunpack.c.0.s8 %v1907
        %v1909 = vlaneseq
        %v1910 = vshrl.u32 %v1909, 7
        %v1911 = vsub.s32 %v1908, %v1910
        %v1912 = vrot.slane %v1890, %v1911
        %v1914 = vunpack.c.l.s4 1966171168
        %v1915 = vunpack.c.0.s8 %v1914
        %v1916 = vlaneseq
        %v1917 = vshrl.u32 %v1916, 7
        %v1918 = vsub.s32 %v1915, %v1917
        %v1919 = vrot.slane %v1891, %v1918
        %v1920 = vcombine.high %v1898, %v1898
        %v1921 = vcombine.high %v1905, %v1905
        %v1922 = vcombine.high %v1912, %v1912
        %v1923 = vcombine.high %v1919, %v1919
        %v1924 = vcombine.high %v220, %v220
        %v1926 = vunpack.c.l.s4 1966171168
        %v1927 = vunpack.c.0.s8 %v1926
        %v1928 = vlaneseq
        %v1929 = vshrl.u32 %v1928, 7
        %v1930 = vsub.s32 %v1927, %v1929
        %v1931 = vrot.slane %v220, %v1930
        %v1933 = vunpack.c.l.s4 1966171168
        %v1934 = vunpack.c.0.s8 %v1933
        %v1935 = vlaneseq
        %v1936 = vshrl.u32 %v1935, 7
        %v1937 = vsub.s32 %v1934, %v1936
        %v1938 = vrot.slane %v1924, %v1937
        %v1939 = vcombine.high %v1931, %v1931
        %v1940 = vcombine.high %v1938, %v1938
        %v1942 = vunpack.c.l.s4 1966171168
        %v1943 = vunpack.c.0.s8 %v1942
        %v1944 = vlaneseq
        %v1945 = vshrl.u32 %v1944, 7
        %v1946 = vsub.s32 %v1943, %v1945
        %v1947 = vrot.slane %v1931, %v1946
        %v1949 = vunpack.c.l.s4 1966171168
        %v1950 = vunpack.c.0.s8 %v1949
        %v1951 = vlaneseq
        %v1952 = vshrl.u32 %v1951, 7
        %v1953 = vsub.s32 %v1950, %v1952
        %v1954 = vrot.slane %v1938, %v1953
        %v1956 = vunpack.c.l.s4 1966171168
        %v1957 = vunpack.c.0.s8 %v1956
        %v1958 = vlaneseq
        %v1959 = vshrl.u32 %v1958, 7
        %v1960 = vsub.s32 %v1957, %v1959
        %v1961 = vrot.slane %v1939, %v1960
        %v1963 = vunpack.c.l.s4 1966171168
        %v1964 = vunpack.c.0.s8 %v1963
        %v1965 = vlaneseq
        %v1966 = vshrl.u32 %v1965, 7
        %v1967 = vsub.s32 %v1964, %v1966
        %v1968 = vrot.slane %v1940, %v1967
        %v1969 = vcombine.high %v1947, %v1947
        %v1970 = vcombine.high %v1954, %v1954
        %v1971 = vcombine.high %v1961, %v1961
        %v1972 = vcombine.high %v1968, %v1968
        %v1973 = vcombine.high %v221, %v221
        %v1975 = vunpack.c.l.s4 1966171168
        %v1976 = vunpack.c.0.s8 %v1975
        %v1977 = vlaneseq
        %v1978 = vshrl.u32 %v1977, 7
        %v1979 = vsub.s32 %v1976, %v1978
        %v1980 = vrot.slane %v221, %v1979
        %v1982 = vunpack.c.l.s4 1966171168
        %v1983 = vunpack.c.0.s8 %v1982
        %v1984 = vlaneseq
        %v1985 = vshrl.u32 %v1984, 7
        %v1986 = vsub.s32 %v1983, %v1985
        %v1987 = vrot.slane %v1973, %v1986
        %v1988 = vcombine.high %v1980, %v1980
        %v1989 = vcombine.high %v1987, %v1987
        %v1991 = vunpack.c.l.s4 1966171168
        %v1992 = vunpack.c.0.s8 %v1991
        %v1993 = vlaneseq
        %v1994 = vshrl.u32 %v1993, 7
        %v1995 = vsub.s32 %v1992, %v1994
        %v1996 = vrot.slane %v1980, %v1995
        %v1998 = vunpack.c.l.s4 1966171168
        %v1999 = vunpack.c.0.s8 %v1998
        %v2000 = vlaneseq
        %v2001 = vshrl.u32 %v2000, 7
        %v2002 = vsub.s32 %v1999, %v2001
        %v2003 = vrot.slane %v1987, %v2002
        %v2005 = vunpack.c.l.s4 1966171168
        %v2006 = vunpack.c.0.s8 %v2005
        %v2007 = vlaneseq
        %v2008 = vshrl.u32 %v2007, 7
        %v2009 = vsub.s32 %v2006, %v2008
        %v2010 = vrot.slane %v1988, %v2009
        %v2012 = vunpack.c.l.s4 1966171168
        %v2013 = vunpack.c.0.s8 %v2012
        %v2014 = vlaneseq
        %v2015 = vshrl.u32 %v2014, 7
        %v2016 = vsub.s32 %v2013, %v2015
        %v2017 = vrot.slane %v1989, %v2016
        %v2018 = vcombine.high %v1996, %v1996
        %v2019 = vcombine.high %v2003, %v2003
        %v2020 = vcombine.high %v2010, %v2010
        %v2021 = vcombine.high %v2017, %v2017
        %v2022 = vcombine.high %v222, %v222
        %v2024 = vunpack.c.l.s4 1966171168
        %v2025 = vunpack.c.0.s8 %v2024
        %v2026 = vlaneseq
        %v2027 = vshrl.u32 %v2026, 7
        %v2028 = vsub.s32 %v2025, %v2027
        %v2029 = vrot.slane %v222, %v2028
        %v2031 = vunpack.c.l.s4 1966171168
        %v2032 = vunpack.c.0.s8 %v2031
        %v2033 = vlaneseq
        %v2034 = vshrl.u32 %v2033, 7
        %v2035 = vsub.s32 %v2032, %v2034
        %v2036 = vrot.slane %v2022, %v2035
        %v2037 = vcombine.high %v2029, %v2029
        %v2038 = vcombine.high %v2036, %v2036
        %v2040 = vunpack.c.l.s4 1966171168
        %v2041 = vunpack.c.0.s8 %v2040
        %v2042 = vlaneseq
        %v2043 = vshrl.u32 %v2042, 7
        %v2044 = vsub.s32 %v2041, %v2043
        %v2045 = vrot.slane %v2029, %v2044
        %v2047 = vunpack.c.l.s4 1966171168
        %v2048 = vunpack.c.0.s8 %v2047
        %v2049 = vlaneseq
        %v2050 = vshrl.u32 %v2049, 7
        %v2051 = vsub.s32 %v2048, %v2050
        %v2052 = vrot.slane %v2036, %v2051
        %v2054 = vunpack.c.l.s4 1966171168
        %v2055 = vunpack.c.0.s8 %v2054
        %v2056 = vlaneseq
        %v2057 = vshrl.u32 %v2056, 7
        %v2058 = vsub.s32 %v2055, %v2057
        %v2059 = vrot.slane %v2037, %v2058
        %v2061 = vunpack.c.l.s4 1966171168
        %v2062 = vunpack.c.0.s8 %v2061
        %v2063 = vlaneseq
        %v2064 = vshrl.u32 %v2063, 7
        %v2065 = vsub.s32 %v2062, %v2064
        %v2066 = vrot.slane %v2038, %v2065
        %v2067 = vcombine.high %v2045, %v2045
        %v2068 = vcombine.high %v2052, %v2052
        %v2069 = vcombine.high %v2059, %v2059
        %v2070 = vcombine.high %v2066, %v2066
        %v2071 = vcombine.high %v223, %v223
        %v2073 = vunpack.c.l.s4 1966171168
        %v2074 = vunpack.c.0.s8 %v2073
        %v2075 = vlaneseq
        %v2076 = vshrl.u32 %v2075, 7
        %v2077 = vsub.s32 %v2074, %v2076
        %v2078 = vrot.slane %v223, %v2077
        %v2080 = vunpack.c.l.s4 1966171168
        %v2081 = vunpack.c.0.s8 %v2080
        %v2082 = vlaneseq
        %v2083 = vshrl.u32 %v2082, 7
        %v2084 = vsub.s32 %v2081, %v2083
        %v2085 = vrot.slane %v2071, %v2084
        %v2086 = vcombine.high %v2078, %v2078
        %v2087 = vcombine.high %v2085, %v2085
        %v2089 = vunpack.c.l.s4 1966171168
        %v2090 = vunpack.c.0.s8 %v2089
        %v2091 = vlaneseq
        %v2092 = vshrl.u32 %v2091, 7
        %v2093 = vsub.s32 %v2090, %v2092
        %v2094 = vrot.slane %v2078, %v2093
        %v2096 = vunpack.c.l.s4 1966171168
        %v2097 = vunpack.c.0.s8 %v2096
        %v2098 = vlaneseq
        %v2099 = vshrl.u32 %v2098, 7
        %v2100 = vsub.s32 %v2097, %v2099
        %v2101 = vrot.slane %v2085, %v2100
        %v2103 = vunpack.c.l.s4 1966171168
        %v2104 = vunpack.c.0.s8 %v2103
        %v2105 = vlaneseq
        %v2106 = vshrl.u32 %v2105, 7
        %v2107 = vsub.s32 %v2104, %v2106
        %v2108 = vrot.slane %v2086, %v2107
        %v2110 = vunpack.c.l.s4 1966171168
        %v2111 = vunpack.c.0.s8 %v2110
        %v2112 = vlaneseq
        %v2113 = vshrl.u32 %v2112, 7
        %v2114 = vsub.s32 %v2111, %v2113
        %v2115 = vrot.slane %v2087, %v2114
        %v2116 = vcombine.high %v2094, %v2094
        %v2117 = vcombine.high %v2101, %v2101
        %v2118 = vcombine.high %v2108, %v2108
        %v2119 = vcombine.high %v2115, %v2115
        %v2120 = vcombine.high %v224, %v224
        %v2122 = vunpack.c.l.s4 1966171168
        %v2123 = vunpack.c.0.s8 %v2122
        %v2124 = vlaneseq
        %v2125 = vshrl.u32 %v2124, 7
        %v2126 = vsub.s32 %v2123, %v2125
        %v2127 = vrot.slane %v224, %v2126
        %v2129 = vunpack.c.l.s4 1966171168
        %v2130 = vunpack.c.0.s8 %v2129
        %v2131 = vlaneseq
        %v2132 = vshrl.u32 %v2131, 7
        %v2133 = vsub.s32 %v2130, %v2132
        %v2134 = vrot.slane %v2120, %v2133
        %v2135 = vcombine.high %v2127, %v2127
        %v2136 = vcombine.high %v2134, %v2134
        %v2138 = vunpack.c.l.s4 1966171168
        %v2139 = vunpack.c.0.s8 %v2138
        %v2140 = vlaneseq
        %v2141 = vshrl.u32 %v2140, 7
        %v2142 = vsub.s32 %v2139, %v2141
        %v2143 = vrot.slane %v2127, %v2142
        %v2145 = vunpack.c.l.s4 1966171168
        %v2146 = vunpack.c.0.s8 %v2145
        %v2147 = vlaneseq
        %v2148 = vshrl.u32 %v2147, 7
        %v2149 = vsub.s32 %v2146, %v2148
        %v2150 = vrot.slane %v2134, %v2149
        %v2152 = vunpack.c.l.s4 1966171168
        %v2153 = vunpack.c.0.s8 %v2152
        %v2154 = vlaneseq
        %v2155 = vshrl.u32 %v2154, 7
        %v2156 = vsub.s32 %v2153, %v2155
        %v2157 = vrot.slane %v2135, %v2156
        %v2159 = vunpack.c.l.s4 1966171168
        %v2160 = vunpack.c.0.s8 %v2159
        %v2161 = vlaneseq
        %v2162 = vshrl.u32 %v2161, 7
        %v2163 = vsub.s32 %v2160, %v2162
        %v2164 = vrot.slane %v2136, %v2163
        %v2165 = vcombine.high %v2143, %v2143
        %v2166 = vcombine.high %v2150, %v2150
        %v2167 = vcombine.high %v2157, %v2157
        %v2168 = vcombine.high %v2164, %v2164
        %v2169 = vcombine.high %v225, %v225
        %v2171 = vunpack.c.l.s4 1966171168
        %v2172 = vunpack.c.0.s8 %v2171
        %v2173 = vlaneseq
        %v2174 = vshrl.u32 %v2173, 7
        %v2175 = vsub.s32 %v2172, %v2174
        %v2176 = vrot.slane %v225, %v2175
        %v2178 = vunpack.c.l.s4 1966171168
        %v2179 = vunpack.c.0.s8 %v2178
        %v2180 = vlaneseq
        %v2181 = vshrl.u32 %v2180, 7
        %v2182 = vsub.s32 %v2179, %v2181
        %v2183 = vrot.slane %v2169, %v2182
        %v2184 = vcombine.high %v2176, %v2176
        %v2185 = vcombine.high %v2183, %v2183
        %v2187 = vunpack.c.l.s4 1966171168
        %v2188 = vunpack.c.0.s8 %v2187
        %v2189 = vlaneseq
        %v2190 = vshrl.u32 %v2189, 7
        %v2191 = vsub.s32 %v2188, %v2190
        %v2192 = vrot.slane %v2176, %v2191
        %v2194 = vunpack.c.l.s4 1966171168
        %v2195 = vunpack.c.0.s8 %v2194
        %v2196 = vlaneseq
        %v2197 = vshrl.u32 %v2196, 7
        %v2198 = vsub.s32 %v2195, %v2197
        %v2199 = vrot.slane %v2183, %v2198
        %v2201 = vunpack.c.l.s4 1966171168
        %v2202 = vunpack.c.0.s8 %v2201
        %v2203 = vlaneseq
        %v2204 = vshrl.u32 %v2203, 7
        %v2205 = vsub.s32 %v2202, %v2204
        %v2206 = vrot.slane %v2184, %v2205
        %v2208 = vunpack.c.l.s4 1966171168
        %v2209 = vunpack.c.0.s8 %v2208
        %v2210 = vlaneseq
        %v2211 = vshrl.u32 %v2210, 7
        %v2212 = vsub.s32 %v2209, %v2211
        %v2213 = vrot.slane %v2185, %v2212
        %v2214 = vcombine.high %v2192, %v2192
        %v2215 = vcombine.high %v2199, %v2199
        %v2216 = vcombine.high %v2206, %v2206
        %v2217 = vcombine.high %v2213, %v2213
        %v2218 = vcombine.high %v226, %v226
        %v2220 = vunpack.c.l.s4 1966171168
        %v2221 = vunpack.c.0.s8 %v2220
        %v2222 = vlaneseq
        %v2223 = vshrl.u32 %v2222, 7
        %v2224 = vsub.s32 %v2221, %v2223
        %v2225 = vrot.slane %v226, %v2224
        %v2227 = vunpack.c.l.s4 1966171168
        %v2228 = vunpack.c.0.s8 %v2227
        %v2229 = vlaneseq
        %v2230 = vshrl.u32 %v2229, 7
        %v2231 = vsub.s32 %v2228, %v2230
        %v2232 = vrot.slane %v2218, %v2231
        %v2233 = vcombine.high %v2225, %v2225
        %v2234 = vcombine.high %v2232, %v2232
        %v2236 = vunpack.c.l.s4 1966171168
        %v2237 = vunpack.c.0.s8 %v2236
        %v2238 = vlaneseq
        %v2239 = vshrl.u32 %v2238, 7
        %v2240 = vsub.s32 %v2237, %v2239
        %v2241 = vrot.slane %v2225, %v2240
        %v2243 = vunpack.c.l.s4 1966171168
        %v2244 = vunpack.c.0.s8 %v2243
        %v2245 = vlaneseq
        %v2246 = vshrl.u32 %v2245, 7
        %v2247 = vsub.s32 %v2244, %v2246
        %v2248 = vrot.slane %v2232, %v2247
        %v2250 = vunpack.c.l.s4 1966171168
        %v2251 = vunpack.c.0.s8 %v2250
        %v2252 = vlaneseq
        %v2253 = vshrl.u32 %v2252, 7
        %v2254 = vsub.s32 %v2251, %v2253
        %v2255 = vrot.slane %v2233, %v2254
        %v2257 = vunpack.c.l.s4 1966171168
        %v2258 = vunpack.c.0.s8 %v2257
        %v2259 = vlaneseq
        %v2260 = vshrl.u32 %v2259, 7
        %v2261 = vsub.s32 %v2258, %v2260
        %v2262 = vrot.slane %v2234, %v2261
        %v2263 = vcombine.high %v2241, %v2241
        %v2264 = vcombine.high %v2248, %v2248
        %v2265 = vcombine.high %v2255, %v2255
        %v2266 = vcombine.high %v2262, %v2262
        %v2267 = vcombine.high %v227, %v227
        %v2269 = vunpack.c.l.s4 1966171168
        %v2270 = vunpack.c.0.s8 %v2269
        %v2271 = vlaneseq
        %v2272 = vshrl.u32 %v2271, 7
        %v2273 = vsub.s32 %v2270, %v2272
        %v2274 = vrot.slane %v227, %v2273
        %v2276 = vunpack.c.l.s4 1966171168
        %v2277 = vunpack.c.0.s8 %v2276
        %v2278 = vlaneseq
        %v2279 = vshrl.u32 %v2278, 7
        %v2280 = vsub.s32 %v2277, %v2279
        %v2281 = vrot.slane %v2267, %v2280
        %v2282 = vcombine.high %v2274, %v2274
        %v2283 = vcombine.high %v2281, %v2281
        %v2285 = vunpack.c.l.s4 1966171168
        %v2286 = vunpack.c.0.s8 %v2285
        %v2287 = vlaneseq
        %v2288 = vshrl.u32 %v2287, 7
        %v2289 = vsub.s32 %v2286, %v2288
        %v2290 = vrot.slane %v2274, %v2289
        %v2292 = vunpack.c.l.s4 1966171168
        %v2293 = vunpack.c.0.s8 %v2292
        %v2294 = vlaneseq
        %v2295 = vshrl.u32 %v2294, 7
        %v2296 = vsub.s32 %v2293, %v2295
        %v2297 = vrot.slane %v2281, %v2296
        %v2299 = vunpack.c.l.s4 1966171168
        %v2300 = vunpack.c.0.s8 %v2299
        %v2301 = vlaneseq
        %v2302 = vshrl.u32 %v2301, 7
        %v2303 = vsub.s32 %v2300, %v2302
        %v2304 = vrot.slane %v2282, %v2303
        %v2306 = vunpack.c.l.s4 1966171168
        %v2307 = vunpack.c.0.s8 %v2306
        %v2308 = vlaneseq
        %v2309 = vshrl.u32 %v2308, 7
        %v2310 = vsub.s32 %v2307, %v2309
        %v2311 = vrot.slane %v2283, %v2310
        %v2312 = vcombine.high %v2290, %v2290
        %v2313 = vcombine.high %v2297, %v2297
        %v2314 = vcombine.high %v2304, %v2304
        %v2315 = vcombine.high %v2311, %v2311
        %v2316 = vcombine.high %v228, %v228
        %v2318 = vunpack.c.l.s4 1966171168
        %v2319 = vunpack.c.0.s8 %v2318
        %v2320 = vlaneseq
        %v2321 = vshrl.u32 %v2320, 7
        %v2322 = vsub.s32 %v2319, %v2321
        %v2323 = vrot.slane %v228, %v2322
        %v2325 = vunpack.c.l.s4 1966171168
        %v2326 = vunpack.c.0.s8 %v2325
        %v2327 = vlaneseq
        %v2328 = vshrl.u32 %v2327, 7
        %v2329 = vsub.s32 %v2326, %v2328
        %v2330 = vrot.slane %v2316, %v2329
        %v2331 = vcombine.high %v2323, %v2323
        %v2332 = vcombine.high %v2330, %v2330
        %v2334 = vunpack.c.l.s4 1966171168
        %v2335 = vunpack.c.0.s8 %v2334
        %v2336 = vlaneseq
        %v2337 = vshrl.u32 %v2336, 7
        %v2338 = vsub.s32 %v2335, %v2337
        %v2339 = vrot.slane %v2323, %v2338
        %v2341 = vunpack.c.l.s4 1966171168
        %v2342 = vunpack.c.0.s8 %v2341
        %v2343 = vlaneseq
        %v2344 = vshrl.u32 %v2343, 7
        %v2345 = vsub.s32 %v2342, %v2344
        %v2346 = vrot.slane %v2330, %v2345
        %v2348 = vunpack.c.l.s4 1966171168
        %v2349 = vunpack.c.0.s8 %v2348
        %v2350 = vlaneseq
        %v2351 = vshrl.u32 %v2350, 7
        %v2352 = vsub.s32 %v2349, %v2351
        %v2353 = vrot.slane %v2331, %v2352
        %v2355 = vunpack.c.l.s4 1966171168
        %v2356 = vunpack.c.0.s8 %v2355
        %v2357 = vlaneseq
        %v2358 = vshrl.u32 %v2357, 7
        %v2359 = vsub.s32 %v2356, %v2358
        %v2360 = vrot.slane %v2332, %v2359
        %v2361 = vcombine.high %v2339, %v2339
        %v2362 = vcombine.high %v2346, %v2346
        %v2363 = vcombine.high %v2353, %v2353
        %v2364 = vcombine.high %v2360, %v2360
        %v3997 = vunpack.c.l.b16 %v229
        %v3998 = vunpack.c.l.b16 %v230
        %v3999 = vunpack.c.l.b16 %v231
        %v4000 = vunpack.c.l.b16 %v232
        %v4001 = vunpack.c.l.b16 %v233
        %v4002 = vunpack.c.l.b16 %v234
        %v4003 = vunpack.c.l.b16 %v235
        %v4004 = vunpack.c.l.b16 %v236
        %v4005 = vunpack.c.l.b16 %v237
        %v4006 = vunpack.c.l.b16 %v238
        %v4007 = vunpack.c.l.b16 %v239
        %v4008 = vunpack.c.l.b16 %v240
        %v4009 = vunpack.c.l.b16 %v241
        %v4010 = vunpack.c.l.b16 %v242
        %v4011 = vunpack.c.l.b16 %v243
        %v4012 = vunpack.c.l.b16 %v244
        %v4013 = vunpack.c.l.b16 %v245
        %v4014 = vunpack.c.l.b16 %v246
        %v4015 = vunpack.c.l.b16 %v247
        %v4016 = vunpack.c.l.b16 %v248
        %v4017 = vunpack.c.l.b16 %v249
        %v4018 = vunpack.c.l.b16 %v250
        %v4019 = vunpack.c.l.b16 %v251
        %v4020 = vunpack.c.l.b16 %v252
        %v4021 = vunpack.c.l.b16 %v253
        %v4022 = vunpack.c.l.b16 %v254
        %v4023 = vunpack.c.l.b16 %v255
        %v4024 = vunpack.c.l.b16 %v256
        %v4025 = vunpack.c.l.b16 %v257
        %v4026 = vunpack.c.l.b16 %v258
        %v4027 = vunpack.c.l.b16 %v259
        %v4028 = vunpack.c.l.b16 %v260
        %v4029 = vunpack.c.l.b16 %v261
        %v4030 = vunpack.c.l.b16 %v262
        %v4031 = vunpack.c.l.b16 %v263
        %v4032 = vunpack.c.l.b16 %v264
        %v4033 = vunpack.c.l.b16 %v265
        %v4034 = vunpack.c.l.b16 %v266
        %v4035 = vunpack.c.l.b16 %v267
        %v4036 = vunpack.c.l.b16 %v268
        %v4037 = vunpack.c.l.b16 %v269
        %v4038 = vunpack.c.l.b16 %v270
        %v4039 = vunpack.c.l.b16 %v271
        %v4040 = vunpack.c.l.b16 %v272
        %v4041 = vunpack.c.l.b16 %v273
        %v4042 = vunpack.c.l.b16 %v274
        %v4043 = vunpack.c.l.b16 %v275
        %v4044 = vunpack.c.l.b16 %v276
        %v4045 = vunpack.c.l.b16 %v277
        %v4046 = vunpack.c.l.b16 %v278
        %v4047 = vunpack.c.l.b16 %v279
        %v4048 = vunpack.c.l.b16 %v280
        %v4049 = vunpack.c.l.b16 %v281
        %v4050 = vunpack.c.l.b16 %v282
        %v4051 = vunpack.c.l.b16 %v283
        %v4052 = vunpack.c.l.b16 %v284
        %v4053 = vunpack.c.l.b16 %v285
        %v4054 = vunpack.c.l.b16 %v286
        %v4055 = vunpack.c.l.b16 %v287
        %v4056 = vunpack.c.l.b16 %v288
        %v4057 = vunpack.c.l.b16 %v289
        %v4058 = vunpack.c.l.b16 %v290
        %v4059 = vunpack.c.l.b16 %v291
        %v4060 = vunpack.c.l.b16 %v292
        %v4061 = vunpack.c.l.b16 %v293
        %v4062 = vunpack.c.l.b16 %v294
        %v4063 = vunpack.c.l.b16 %v295
        %v4064 = vunpack.c.l.b16 %v296
        %v4065 = vunpack.c.l.b16 %v297
        %v4066 = vunpack.c.l.b16 %v298
        %v4067 = vunpack.c.l.b16 %v299
        %v4068 = vunpack.c.l.b16 %v300
        %v4069 = vunpack.c.l.b16 %v301
        %v4070 = vunpack.c.l.b16 %v302
        %v4071 = vunpack.c.l.b16 %v303
        %v4072 = vunpack.c.l.b16 %v304
        %v4073 = vunpack.c.l.b16 %v305
        %v4074 = vunpack.c.l.b16 %v306
        %v4075 = vunpack.c.l.b16 %v307
        %v4076 = vunpack.c.l.b16 %v308
        %v4077 = vunpack.c.l.b16 %v309
        %v4078 = vunpack.c.l.b16 %v310
        %v4079 = vunpack.c.l.b16 %v311
        %v4080 = vunpack.c.l.b16 %v312
        %v4081 = vunpack.c.l.b16 %v313
        %v4082 = vunpack.c.l.b16 %v314
        %v4083 = vunpack.c.l.b16 %v315
        %v4084 = vunpack.c.l.b16 %v316
        %v4085 = vunpack.c.l.b16 %v317
        %v4086 = vunpack.c.l.b16 %v318
        %v4087 = vunpack.c.l.b16 %v319
        %v4088 = vunpack.c.l.b16 %v320
        %v4089 = vunpack.c.l.b16 %v321
        %v4090 = vunpack.c.l.b16 %v322
        %v4091 = vunpack.c.l.b16 %v323
        %v4092 = vunpack.c.l.b16 %v324
        %v4093 = vunpack.c.l.b16 %v325
        %v4094 = vunpack.c.l.b16 %v326
        %v4095 = vunpack.c.l.b16 %v327
        %v4096 = vunpack.c.l.b16 %v328
        %v4097 = vunpack.c.l.b16 %v329
        %v4098 = vunpack.c.l.b16 %v330
        %v4099 = vunpack.c.l.b16 %v331
        %v4100 = vunpack.c.l.b16 %v332
        %v4101 = vunpack.c.l.b16 %v333
        %v4102 = vunpack.c.l.b16 %v334
        %v4103 = vunpack.c.l.b16 %v335
        %v4104 = vunpack.c.l.b16 %v336
        %v4105 = vunpack.c.l.b16 %v337
        %v4106 = vunpack.c.l.b16 %v338
        %v4107 = vunpack.c.l.b16 %v339
        %v4108 = vunpack.c.l.b16 %v340
        %v4109 = vunpack.c.l.b16 %v341
        %v4110 = vunpack.c.l.b16 %v342
        %v4111 = vunpack.c.l.b16 %v343
        %v4112 = vunpack.c.l.b16 %v344
        %v4113 = vunpack.c.l.b16 %v345
        %v4114 = vunpack.c.l.b16 %v346
        %v4115 = vunpack.c.l.b16 %v347
        %v4116 = vunpack.c.l.b16 %v348
        %v4117 = vunpack.c.l.b16 %v349
        %v4118 = vunpack.c.l.b16 %v350
        %v4119 = vunpack.c.l.b16 %v351
        %v4120 = vunpack.c.l.b16 %v352
        %v4121 = vunpack.c.l.b16 %v353
        %v4122 = vunpack.c.l.b16 %v354
        %v4123 = vunpack.c.l.b16 %v355
        %v4124 = vunpack.c.l.b16 %v356
        %v4125 = vunpack.c.l.b16 %v357
        %v4126 = vunpack.c.l.b16 %v358
        %v4127 = vunpack.c.l.b16 %v359
        %v4128 = vunpack.c.l.b16 %v360
        %v4129 = vunpack.c.l.b16 %v361
        %v4130 = vunpack.c.l.b16 %v362
        %v4131 = vunpack.c.l.b16 %v363
        %v4132 = vunpack.c.l.b16 %v364
        %v4133 = vunpack.c.l.b16 %v365
        %v4134 = vunpack.c.l.b16 %v366
        %v4135 = vunpack.c.l.b16 %v367
        %v4136 = vunpack.c.l.b16 %v368
        %v4137 = vunpack.c.l.b16 %v369
        %v4138 = vunpack.c.l.b16 %v370
        %v4139 = vunpack.c.l.b16 %v371
        %v4140 = vunpack.c.l.b16 %v372
        %v4141 = vunpack.c.l.b16 %v373
        %v4142 = vunpack.c.l.b16 %v374
        %v4143 = vunpack.c.l.b16 %v375
        %v4144 = vunpack.c.l.b16 %v376
        %v4145 = vunpack.c.l.b16 %v377
        %v4146 = vunpack.c.l.b16 %v378
        %v4147 = vunpack.c.l.b16 %v379
        %v4148 = vunpack.c.l.b16 %v380
        %v4149 = vunpack.c.l.b16 %v381
        %v4150 = vunpack.c.l.b16 %v382
        %v4151 = vunpack.c.l.b16 %v383
        %v4152 = vunpack.c.l.b16 %v384
        %v4153 = vunpack.c.l.b16 %v385
        %v4154 = vunpack.c.l.b16 %v386
        %v4155 = vunpack.c.l.b16 %v387
        %v4156 = vunpack.c.l.b16 %v388
        %v4157 = vunpack.c.l.b16 %v389
        %v4158 = vunpack.c.l.b16 %v390
        %v4159 = vunpack.c.l.b16 %v391
        %v4160 = vunpack.c.l.b16 %v392
        %v4161 = vunpack.c.l.b16 %v393
        %v4162 = vunpack.c.l.b16 %v394
        %v4163 = vunpack.c.l.b16 %v395
        %v4164 = vunpack.c.l.b16 %v396
        %v4165 = vunpack.c.l.b16 %v397
        %v4166 = vunpack.c.l.b16 %v398
        %v4167 = vunpack.c.l.b16 %v399
        %v4168 = vunpack.c.l.b16 %v400
        %v4169 = vunpack.c.l.b16 %v401
        %v4170 = vunpack.c.l.b16 %v402
        %v4171 = vunpack.c.l.b16 %v403
        %v4172 = vunpack.c.l.b16 %v404
        %v4173 = vunpack.c.l.b16 %v405
        %v4174 = vunpack.c.l.b16 %v406
        %v4175 = vunpack.c.l.b16 %v407
        %v4176 = vunpack.c.l.b16 %v408
        %v4177 = vunpack.c.l.b16 %v409
        %v4178 = vunpack.c.l.b16 %v410
        %v4179 = vunpack.c.l.b16 %v411
        %v4180 = vunpack.c.l.b16 %v412
        %v4181 = vunpack.c.l.b16 %v413
        %v4182 = vunpack.c.l.b16 %v414
        %v4183 = vunpack.c.l.b16 %v415
        %v4184 = vunpack.c.l.b16 %v416
        %v4185 = vunpack.c.l.b16 %v417
        %v4186 = vunpack.c.l.b16 %v418
        %v4187 = vunpack.c.l.b16 %v419
        %v4188 = vunpack.c.l.b16 %v420
        %v4189 = vunpack.c.l.b16 %v421
        %v4190 = vunpack.c.l.b16 %v422
        %v4191 = vunpack.c.l.b16 %v423
        %v4192 = vunpack.c.l.b16 %v424
        %v4193 = vunpack.c.l.b16 %v425
        %v4194 = vunpack.c.l.b16 %v426
        %v4195 = vunpack.c.l.b16 %v427
        %v4196 = vunpack.c.l.b16 %v428
        %v4197 = vunpack.c.l.b16 %v429
        %v4198 = vunpack.c.l.b16 %v430
        %v4199 = vunpack.c.l.b16 %v431
        %v4200 = vunpack.c.l.b16 %v432
        %v4201 = vunpack.c.l.b16 %v433
        %v4202 = vunpack.c.l.b16 %v434
        %v4203 = vunpack.c.l.b16 %v435
        %v4204 = vunpack.c.l.b16 %v436
        %v4205 = vunpack.c.l.b16 %v437
        %v4206 = vunpack.c.l.b16 %v438
        %v4207 = vunpack.c.l.b16 %v439
        %v4208 = vunpack.c.l.b16 %v440
        %v4209 = vunpack.c.l.b16 %v441
        %v4210 = vunpack.c.l.b16 %v442
        %v4211 = vunpack.c.l.b16 %v443
        %v4212 = vunpack.c.l.b16 %v444
        %v4213 = vunpack.c.l.b16 %v445
        %v4214 = vunpack.c.l.b16 %v446
        %v4215 = vunpack.c.l.b16 %v447
        %v4216 = vunpack.c.l.b16 %v448
        %v4217 = vunpack.c.l.b16 %v449
        %v4218 = vunpack.c.l.b16 %v450
        %v4219 = vunpack.c.l.b16 %v451
        %v4220 = vunpack.c.l.b16 %v452
        %v4221 = vunpack.c.l.b16 %v453
        %v4222 = vunpack.c.l.b16 %v454
        %v4223 = vunpack.c.l.b16 %v455
        %v4224 = vunpack.c.l.b16 %v456
        %v4225 = vunpack.c.l.b16 %v457
        %v4226 = vunpack.c.l.b16 %v458
        %v4227 = vunpack.c.l.b16 %v459
        %v4228 = vunpack.c.l.b16 %v460
        %v4229 = vunpack.c.l.b16 %v461
        %v4230 = vunpack.c.l.b16 %v462
        %v4231 = vunpack.c.l.b16 %v463
        %v4232 = vunpack.c.l.b16 %v464
        %v4233 = vunpack.c.l.b16 %v465
        %v4234 = vunpack.c.l.b16 %v466
        %v4235 = vunpack.c.l.b16 %v467
        %v4236 = vunpack.c.l.b16 %v468
        %v4237 = vunpack.c.l.b16 %v469
        %v4238 = vunpack.c.l.b16 %v470
        %v4239 = vunpack.c.l.b16 %v471
        %v4240 = vunpack.c.l.b16 %v472
        %v4241 = vunpack.c.l.b16 %v473
        %v4242 = vunpack.c.l.b16 %v474
        %v4243 = vunpack.c.l.b16 %v475
        %v4244 = vunpack.c.l.b16 %v476
        %v4245 = vunpack.c.l.b16 %v477
        %v4246 = vunpack.c.l.b16 %v478
        %v4247 = vunpack.c.l.b16 %v479
        %v4248 = vunpack.c.l.b16 %v480
        %v4249 = vunpack.c.l.b16 %v481
        %v4250 = vunpack.c.l.b16 %v482
        %v4251 = vunpack.c.l.b16 %v483
        %v4252 = vunpack.c.l.b16 %v484
        %v4253 = vunpack.c.l.b16 %v485
        %v4254 = vunpack.c.l.b16 %v486
        %v4255 = vunpack.c.l.b16 %v487
        %v4256 = vunpack.c.l.b16 %v488
        %v4257 = vunpack.c.l.b16 %v489
        %v4258 = vunpack.c.l.b16 %v490
        %v4259 = vunpack.c.l.b16 %v491
        %v4260 = vunpack.c.l.b16 %v492
        %v4261 = vunpack.c.l.b16 %v493
        %v4262 = vunpack.c.l.b16 %v494
        %v4263 = vunpack.c.l.b16 %v495
        %v4264 = vunpack.c.l.b16 %v496
        %v4265 = vunpack.c.l.b16 %v497
        %v4266 = vunpack.c.l.b16 %v498
        %v4267 = vunpack.c.l.b16 %v499
        %v4268 = vunpack.c.l.b16 %v500
        %v4269 = vunpack.c.l.b16 %v501
        %v4270 = vunpack.c.l.b16 %v502
        %v4271 = vunpack.c.l.b16 %v503
        %v4272 = vunpack.c.l.b16 %v504
        %v4273 = vunpack.c.l.b16 %v505
        %v4274 = vunpack.c.l.b16 %v506
        %v4275 = vunpack.c.l.b16 %v507
        %v4276 = vunpack.c.l.b16 %v508
        %v4277 = vunpack.c.l.b16 %v509
        %v4278 = vunpack.c.l.b16 %v510
        %v4279 = vunpack.c.l.b16 %v511
        %v4280 = vunpack.c.l.b16 %v512
        %v4281 = vunpack.c.l.b16 %v513
        %v4282 = vunpack.c.l.b16 %v514
        %v4283 = vunpack.c.l.b16 %v515
        %v4284 = vunpack.c.l.b16 %v516
        %v4285 = vunpack.c.l.b16 %v517
        %v4286 = vunpack.c.l.b16 %v518
        %v4287 = vunpack.c.l.b16 %v519
        %v4288 = vunpack.c.l.b16 %v520
        %v4289 = vunpack.c.l.b16 %v521
        %v4290 = vunpack.c.l.b16 %v522
        %v4291 = vunpack.c.l.b16 %v523
        %v4292 = vunpack.c.l.b16 %v524
        %v4293 = vunpack.c.l.b16 %v525
        %v4294 = vunpack.c.l.b16 %v526
        %v4295 = vunpack.c.l.b16 %v527
        %v4296 = vunpack.c.l.b16 %v528
        %v4297 = vunpack.c.l.b16 %v529
        %v4298 = vunpack.c.l.b16 %v530
        %v4299 = vunpack.c.l.b16 %v531
        %v4300 = vunpack.c.l.b16 %v532
        %v4301 = vunpack.c.l.b16 %v533
        %v4302 = vunpack.c.l.b16 %v534
        %v4303 = vunpack.c.l.b16 %v535
        %v4304 = vunpack.c.l.b16 %v536
        %v4305 = vunpack.c.l.b16 %v537
        %v4306 = vunpack.c.l.b16 %v538
        %v4307 = vunpack.c.l.b16 %v539
        %v4308 = vunpack.c.l.b16 %v540
        %v4309 = vunpack.c.l.b16 %v541
        %v4310 = vunpack.c.l.b16 %v542
        %v4311 = vunpack.c.l.b16 %v543
        %v4312 = vunpack.c.l.b16 %v544
        %v4313 = vunpack.c.l.b16 %v545
        %v4314 = vunpack.c.l.b16 %v546
        %v4315 = vunpack.c.l.b16 %v547
        %v4316 = vunpack.c.l.b16 %v548
        %v4317 = vunpack.c.l.b16 %v549
        %v4318 = vunpack.c.l.b16 %v550
        %v4319 = vunpack.c.l.b16 %v551
        %v4320 = vunpack.c.l.b16 %v552
        %v4321 = vunpack.c.l.b16 %v553
        %v4322 = vunpack.c.l.b16 %v554
        %v4323 = vunpack.c.l.b16 %v555
        %v4324 = vunpack.c.l.b16 %v556
        %v4325 = vunpack.c.l.b16 %v557
        %v4326 = vunpack.c.l.b16 %v558
        %v4327 = vunpack.c.l.b16 %v559
        %v4328 = vunpack.c.l.b16 %v560
        %v4329 = vunpack.c.l.b16 %v561
        %v4330 = vunpack.c.l.b16 %v562
        %v4331 = vunpack.c.l.b16 %v563
        %v4332 = vunpack.c.l.b16 %v564
        %v4333 = vunpack.c.l.b16 %v565
        %v4334 = vunpack.c.l.b16 %v566
        %v4335 = vunpack.c.l.b16 %v567
        %v4336 = vunpack.c.l.b16 %v568
        %v4337 = vunpack.c.l.b16 %v569
        %v4338 = vunpack.c.l.b16 %v570
        %v4339 = vunpack.c.l.b16 %v571
        %v4340 = vunpack.c.l.b16 %v572
        %v4341 = vunpack.c.l.b16 %v573
        %v4342 = vunpack.c.l.b16 %v574
        %v4343 = vunpack.c.l.b16 %v575
        %v4344 = vunpack.c.l.b16 %v576
        %v4345 = vunpack.c.l.b16 %v577
        %v4346 = vunpack.c.l.b16 %v578
        %v4347 = vunpack.c.l.b16 %v579
        %v4348 = vunpack.c.l.b16 %v580
        %v4349 = vunpack.c.l.b16 %v581
        %v4350 = vunpack.c.l.b16 %v582
        %v4351 = vunpack.c.l.b16 %v583
        %v4352 = vunpack.c.l.b16 %v584
        %v4353 = vunpack.c.l.b16 %v585
        %v4354 = vunpack.c.l.b16 %v586
        %v4355 = vunpack.c.l.b16 %v587
        %v4356 = vunpack.c.l.b16 %v588
        %v4357 = vunpack.c.l.b16 %v589
        %v4358 = vunpack.c.l.b16 %v590
        %v4359 = vunpack.c.l.b16 %v591
        %v4360 = vunpack.c.l.b16 %v592
        %v4361 = vunpack.c.l.b16 %v593
        %v4362 = vunpack.c.l.b16 %v594
        %v4363 = vunpack.c.l.b16 %v595
        %v4364 = vunpack.c.l.b16 %v596
        %v4365 = vunpack.c.l.b16 %v597
        %v4366 = vunpack.c.l.b16 %v598
        %v4367 = vunpack.c.l.b16 %v599
        %v4368 = vunpack.c.l.b16 %v600
        %v4369 = vunpack.c.l.b16 %v601
        %v4370 = vunpack.c.l.b16 %v602
        %v4371 = vunpack.c.l.b16 %v603
        %v4372 = vunpack.c.l.b16 %v604
        %v4373 = vunpack.c.l.b16 %v605
        %v4374 = vunpack.c.l.b16 %v606
        %v4375 = vunpack.c.l.b16 %v607
        %v4376 = vunpack.c.l.b16 %v608
        %v4377 = vunpack.c.l.b16 %v609
        %v4378 = vunpack.c.l.b16 %v610
        %v4379 = vunpack.c.l.b16 %v611
        %v4380 = vunpack.c.l.b16 %v612
        %v4381 = vunpack.c.l.b16 %v613
        %v4382 = vunpack.c.l.b16 %v614
        %v4383 = vunpack.c.l.b16 %v615
        %v4384 = vunpack.c.l.b16 %v616
        %v4385 = vunpack.c.l.b16 %v617
        %v4386 = vunpack.c.l.b16 %v618
        %v4387 = vunpack.c.l.b16 %v619
        %v4388 = vunpack.c.l.b16 %v620
        %v4389 = vunpack.c.l.b16 %v621
        %v4390 = vunpack.c.l.b16 %v622
        %v4391 = vunpack.c.l.b16 %v623
        %v4392 = vunpack.c.l.b16 %v624
        %v4393 = vunpack.c.l.b16 %v625
        %v4394 = vunpack.c.l.b16 %v626
        %v4395 = vunpack.c.l.b16 %v627
        %v4396 = vunpack.c.l.b16 %v628
        %v4397 = vunpack.c.l.b16 %v629
        %v4398 = vunpack.c.l.b16 %v630
        %v4399 = vunpack.c.l.b16 %v631
        %v4400 = vunpack.c.l.b16 %v632
        %v4401 = vunpack.c.l.b16 %v633
        %v4402 = vunpack.c.l.b16 %v634
        %v4403 = vunpack.c.l.b16 %v635
        %v4404 = vunpack.c.l.b16 %v636
        %v4405 = vunpack.c.l.b16 %v637
        %v4406 = vunpack.c.l.b16 %v638
        %v4407 = vunpack.c.l.b16 %v639
        %v4408 = vunpack.c.l.b16 %v640
        %v4409 = vunpack.c.l.b16 %v641
        %v4410 = vunpack.c.l.b16 %v642
        %v4411 = vunpack.c.l.b16 %v643
        %v4412 = vunpack.c.l.b16 %v644
        %v4413 = vunpack.c.l.b16 %v645
        %v4414 = vunpack.c.l.b16 %v646
        %v4415 = vunpack.c.l.b16 %v647
        %v4416 = vunpack.c.l.b16 %v648
        %v4417 = vunpack.c.l.b16 %v649
        %v4418 = vunpack.c.l.b16 %v650
        %v4419 = vunpack.c.l.b16 %v651
        %v4420 = vunpack.c.l.b16 %v652
        %v4421 = vunpack.c.l.b16 %v653
        %v4422 = vunpack.c.l.b16 %v654
        %v4423 = vunpack.c.l.b16 %v655
        %v4424 = vunpack.c.l.b16 %v656
        %v4425 = vunpack.c.l.b16 %v657
        %v4426 = vunpack.c.l.b16 %v658
        %v4427 = vunpack.c.l.b16 %v659
        %v4428 = vunpack.c.l.b16 %v660
        %v4429 = vunpack.c.l.b16 %v661
        %v4430 = vunpack.c.l.b16 %v662
        %v4431 = vunpack.c.l.b16 %v663
        %v4432 = vunpack.c.l.b16 %v664
        %v4433 = vunpack.c.l.b16 %v665
        %v4434 = vunpack.c.l.b16 %v666
        %v4435 = vunpack.c.l.b16 %v667
        %v4436 = vunpack.c.l.b16 %v668
        %v4437 = vunpack.c.l.b16 %v669
        %v4438 = vunpack.c.l.b16 %v670
        %v4439 = vunpack.c.l.b16 %v671
        %v4440 = vunpack.c.l.b16 %v672
        %v4441 = vunpack.c.l.b16 %v673
        %v4442 = vunpack.c.l.b16 %v674
        %v4443 = vunpack.c.l.b16 %v675
        %v4444 = vunpack.c.l.b16 %v676
        %v4445 = vunpack.c.l.b16 %v677
        %v4446 = vunpack.c.l.b16 %v678
        %v4447 = vunpack.c.l.b16 %v679
        %v4448 = vunpack.c.l.b16 %v680
        %v4449 = vunpack.c.l.b16 %v681
        %v4450 = vunpack.c.l.b16 %v682
        %v4451 = vunpack.c.l.b16 %v683
        %v4452 = vunpack.c.l.b16 %v684
        %v4453 = vunpack.c.l.b16 %v685
        %v4454 = vunpack.c.l.b16 %v686
        %v4455 = vunpack.c.l.b16 %v687
        %v4456 = vunpack.c.l.b16 %v688
        %v4457 = vunpack.c.l.b16 %v689
        %v4458 = vunpack.c.l.b16 %v690
        %v4459 = vunpack.c.l.b16 %v691
        %v4460 = vunpack.c.l.b16 %v692
        %v4461 = vunpack.c.l.b16 %v693
        %v4462 = vunpack.c.l.b16 %v694
        %v4463 = vunpack.c.l.b16 %v695
        %v4464 = vunpack.c.l.b16 %v696
        %v4465 = vunpack.c.l.b16 %v697
        %v4466 = vunpack.c.l.b16 %v698
        %v4467 = vunpack.c.l.b16 %v699
        %v4468 = vunpack.c.l.b16 %v700
        %v4469 = vunpack.c.l.b16 %v701
        %v4470 = vunpack.c.l.b16 %v702
        %v4471 = vunpack.c.l.b16 %v703
        %v4472 = vunpack.c.l.b16 %v704
        %v4473 = vunpack.c.l.b16 %v705
        %v4474 = vunpack.c.l.b16 %v706
        %v4475 = vunpack.c.l.b16 %v707
        %v4476 = vunpack.c.l.b16 %v708
        %v4477 = vunpack.c.l.b16 %v709
        %v4478 = vunpack.c.l.b16 %v710
        %v4479 = vunpack.c.l.b16 %v711
        %v4480 = vunpack.c.l.b16 %v712
        %v4481 = vunpack.c.l.b16 %v713
        %v4482 = vunpack.c.l.b16 %v714
        %v4483 = vunpack.c.l.b16 %v715
        %v4484 = vunpack.c.l.b16 %v716
        %v4485 = vunpack.c.l.b16 %v717
        %v4486 = vunpack.c.l.b16 %v718
        %v4487 = vunpack.c.l.b16 %v719
        %v4488 = vunpack.c.l.b16 %v720
        %v4489 = vunpack.c.l.b16 %v721
        %v4490 = vunpack.c.l.b16 %v722
        %v4491 = vunpack.c.l.b16 %v723
        %v4492 = vunpack.c.l.b16 %v724
        %v4493 = vunpack.c.l.b16 %v725
        %v4494 = vunpack.c.l.b16 %v726
        %v4495 = vunpack.c.l.b16 %v727
        %v4496 = vunpack.c.l.b16 %v728
        %v4497 = vunpack.c.l.b16 %v729
        %v4498 = vunpack.c.l.b16 %v730
        %v4499 = vunpack.c.l.b16 %v731
        %v4500 = vunpack.c.l.b16 %v732
        %v4501 = vunpack.c.l.b16 %v733
        %v4502 = vunpack.c.l.b16 %v734
        %v4503 = vunpack.c.l.b16 %v735
        %v4504 = vunpack.c.l.b16 %v736
        %v4505 = vunpack.c.l.b16 %v737
        %v4506 = vunpack.c.l.b16 %v738
        %v4507 = vunpack.c.l.b16 %v739
        %v4508 = vunpack.c.l.b16 %v740
        %v4509 = vunpack.c.l.b16 %v741
        %v4510 = vunpack.c.l.b16 %v742
        %v4511 = vunpack.c.l.b16 %v743
        %v4512 = vunpack.c.l.b16 %v744
        %v4513 = vunpack.c.l.b16 %v745
        %v4514 = vunpack.c.l.b16 %v746
        %v4515 = vunpack.c.l.b16 %v747
        %v4516 = vunpack.c.l.b16 %v748
        %v4517 = vunpack.c.l.b16 %v749
        %v4518 = vunpack.c.l.b16 %v750
        %v4519 = vunpack.c.l.b16 %v751
        %v4520 = vunpack.c.l.b16 %v752
        %v4521 = vunpack.c.l.b16 %v753
        %v4522 = vunpack.c.l.b16 %v754
        %v4523 = vunpack.c.l.b16 %v755
        %v4524 = vunpack.c.l.b16 %v756
        %v4525 = vunpack.c.l.b16 %v757
        %v4526 = vunpack.c.l.b16 %v758
        %v4527 = vunpack.c.l.b16 %v759
        %v4528 = vunpack.c.l.b16 %v760
        %v4529 = vunpack.c.l.b16 %v761
        %v4530 = vunpack.c.l.b16 %v762
        %v4531 = vunpack.c.l.b16 %v763
        %v4532 = vunpack.c.l.b16 %v764
        %v4533 = vunpack.c.l.b16 %v765
        %v4534 = vunpack.c.l.b16 %v766
        %v4535 = vunpack.c.l.b16 %v767
        %v4536 = vunpack.c.l.b16 %v768
        %v4537 = vunpack.c.l.b16 %v769
        %v4538 = vunpack.c.l.b16 %v770
        %v4539 = vunpack.c.l.b16 %v771
        %v4540 = vunpack.c.l.b16 %v772
        %v4541 = vunpack.c.l.b16 %v773
        %v4542 = vunpack.c.l.b16 %v774
        %v4543 = vunpack.c.l.b16 %v775
        %v4544 = vunpack.c.l.b16 %v776
        %v4545 = vunpack.c.l.b16 %v777
        %v4546 = vunpack.c.l.b16 %v778
        %v4547 = vunpack.c.l.b16 %v779
        %v4548 = vunpack.c.l.b16 %v780
        %v4549 = vunpack.c.l.b16 %v781
        %v4550 = vunpack.c.l.b16 %v782
        %v4551 = vunpack.c.l.b16 %v783
        %v4552 = vunpack.c.l.b16 %v784
        %v4553 = vunpack.c.l.b16 %v785
        %v4554 = vunpack.c.l.b16 %v786
        %v4555 = vunpack.c.l.b16 %v787
        %v4556 = vunpack.c.l.b16 %v788
        %v4557 = vunpack.c.l.b16 %v789
        %v4558 = vunpack.c.l.b16 %v790
        %v4559 = vunpack.c.l.b16 %v791
        %v4560 = vunpack.c.l.b16 %v792
        %v4561 = vunpack.c.l.b16 %v793
        %v4562 = vunpack.c.l.b16 %v794
        %v4563 = vunpack.c.l.b16 %v795
        %v4564 = vunpack.c.l.b16 %v796
        %v4565 = vunpack.c.l.b16 %v797
        %v4566 = vunpack.c.l.b16 %v798
        %v4567 = vunpack.c.l.b16 %v799
        %v4568 = vunpack.c.l.b16 %v800
        %v4569 = vunpack.c.l.b16 %v801
        %v4570 = vunpack.c.l.b16 %v802
        %v4571 = vunpack.c.l.b16 %v803
        %v4572 = vunpack.c.l.b16 %v804
        %v4573 = vunpack.c.l.b16 %v805
        %v4574 = vunpack.c.l.b16 %v806
        %v4575 = vunpack.c.l.b16 %v807
        %v4576 = vunpack.c.l.b16 %v808
        %v4577 = vunpack.c.l.b16 %v809
        %v4578 = vunpack.c.l.b16 %v810
        %v4579 = vunpack.c.l.b16 %v811
        %v4580 = vunpack.c.l.b16 %v812
        %v4581 = vunpack.c.l.b16 %v813
        %v4582 = vunpack.c.l.b16 %v814
        %v4583 = vunpack.c.l.b16 %v815
        %v4584 = vunpack.c.l.b16 %v816
        %v4585 = vunpack.c.l.b16 %v817
        %v4586 = vunpack.c.l.b16 %v818
        %v4587 = vunpack.c.l.b16 %v819
        %v4588 = vunpack.c.l.b16 %v820
        %v4589 = vunpack.c.l.b16 %v821
        %v4590 = vunpack.c.l.b16 %v822
        %v4591 = vunpack.c.l.b16 %v823
        %v4592 = vunpack.c.l.b16 %v824
        %v4593 = vunpack.c.l.b16 %v825
        %v4594 = vunpack.c.l.b16 %v826
        %v4595 = vunpack.c.l.b16 %v827
        %v4596 = vunpack.c.l.b16 %v828
        %v4597 = vunpack.c.l.b16 %v829
        %v4598 = vunpack.c.l.b16 %v830
        %v4599 = vunpack.c.l.b16 %v831
        %v4600 = vunpack.c.l.b16 %v832
        %v4601 = vunpack.c.l.b16 %v833
        %v4602 = vunpack.c.l.b16 %v834
        %v4603 = vunpack.c.l.b16 %v835
        %v4604 = vunpack.c.l.b16 %v836
        %v4605 = vunpack.c.l.b16 %v837
        %v4606 = vunpack.c.l.b16 %v838
        %v4607 = vunpack.c.l.b16 %v839
        %v4608 = vunpack.c.l.b16 %v840
        %v4609 = vunpack.c.l.b16 %v841
        %v4610 = vunpack.c.l.b16 %v842
        %v4611 = vunpack.c.l.b16 %v843
        %v4612 = vunpack.c.l.b16 %v844
        %v4613 = vunpack.c.l.b16 %v845
        %v4614 = vunpack.c.l.b16 %v846
        %v4615 = vunpack.c.l.b16 %v847
        %v4616 = vunpack.c.l.b16 %v848
        %v4617 = vunpack.c.l.b16 %v849
        %v4618 = vunpack.c.l.b16 %v850
        %v4619 = vunpack.c.l.b16 %v851
        %v4620 = vunpack.c.l.b16 %v852
        %v4621 = vunpack.c.l.b16 %v853
        %v4622 = vunpack.c.l.b16 %v854
        %v4623 = vunpack.c.l.b16 %v855
        %v4624 = vunpack.c.l.b16 %v856
        %v4625 = vunpack.c.l.b16 %v857
        %v4626 = vunpack.c.l.b16 %v858
        %v4627 = vunpack.c.l.b16 %v859
        %v4628 = vunpack.c.l.b16 %v860
        %v4629 = vunpack.c.l.b16 %v861
        %v4630 = vunpack.c.l.b16 %v862
        %v4631 = vunpack.c.l.b16 %v863
        %v4632 = vunpack.c.l.b16 %v864
        %v4633 = vunpack.c.l.b16 %v865
        %v4634 = vunpack.c.l.b16 %v866
        %v4635 = vunpack.c.l.b16 %v867
        %v4636 = vunpack.c.l.b16 %v868
        %v4637 = vunpack.c.l.b16 %v869
        %v4638 = vunpack.c.l.b16 %v870
        %v4639 = vunpack.c.l.b16 %v871
        %v4640 = vunpack.c.l.b16 %v872
        %v4641 = vunpack.c.l.b16 %v873
        %v4642 = vunpack.c.l.b16 %v874
        %v4643 = vunpack.c.l.b16 %v875
        %v4644 = vunpack.c.l.b16 %v876
        %v4645 = vunpack.c.l.b16 %v877
        %v4646 = vunpack.c.l.b16 %v878
        %v4647 = vunpack.c.l.b16 %v879
        %v4648 = vunpack.c.l.b16 %v880
        %v4649 = vunpack.c.l.b16 %v881
        %v4650 = vunpack.c.l.b16 %v882
        %v4651 = vunpack.c.l.b16 %v883
        %v4652 = vunpack.c.l.b16 %v884
        %v4653 = vunpack.c.l.b16 %v885
        %v4654 = vunpack.c.l.b16 %v886
        %v4655 = vunpack.c.l.b16 %v887
        %v4656 = vunpack.c.l.b16 %v888
        %v4657 = vunpack.c.l.b16 %v889
        %v4658 = vunpack.c.l.b16 %v890
        %v4659 = vunpack.c.l.b16 %v891
        %v4660 = vunpack.c.l.b16 %v892
        %v4661 = vunpack.c.l.b16 %v893
        %v4662 = vunpack.c.l.b16 %v894
        %v4663 = vunpack.c.l.b16 %v895
        %v4664 = vunpack.c.l.b16 %v896
        %v4665 = vunpack.c.l.b16 %v897
        %v4666 = vunpack.c.l.b16 %v898
        %v4667 = vunpack.c.l.b16 %v899
        %v4668 = vunpack.c.l.b16 %v900
        %v4669 = vunpack.c.l.b16 %v901
        %v4670 = vunpack.c.l.b16 %v902
        %v4671 = vunpack.c.l.b16 %v903
        %v4672 = vunpack.c.l.b16 %v904
        %v4673 = vunpack.c.l.b16 %v905
        %v4674 = vunpack.c.l.b16 %v906
        %v4675 = vunpack.c.l.b16 %v907
        %v4676 = vunpack.c.l.b16 %v908
        %v4677 = vunpack.c.l.b16 %v909
        %v4678 = vunpack.c.l.b16 %v910
        %v4679 = vunpack.c.l.b16 %v911
        %v4680 = vunpack.c.l.b16 %v912
        %v4681 = vunpack.c.l.b16 %v913
        %v4682 = vunpack.c.l.b16 %v914
        %v4683 = vunpack.c.l.b16 %v915
        %v4684 = vunpack.c.l.b16 %v916
        %v4685 = vunpack.c.l.b16 %v917
        %v4686 = vunpack.c.l.b16 %v918
        %v4687 = vunpack.c.l.b16 %v919
        %v4688 = vunpack.c.l.b16 %v920
        %v4689 = vunpack.c.l.b16 %v921
        %v4690 = vunpack.c.l.b16 %v922
        %v4691 = vunpack.c.l.b16 %v923
        %v4692 = vunpack.c.l.b16 %v924
        %v4693 = vunpack.c.l.b16 %v925
        %v4694 = vunpack.c.l.b16 %v926
        %v4695 = vunpack.c.l.b16 %v927
        %v4696 = vunpack.c.l.b16 %v928
        %v4697 = vunpack.c.l.b16 %v929
        %v4698 = vunpack.c.l.b16 %v930
        %v4699 = vunpack.c.l.b16 %v931
        %v4700 = vunpack.c.l.b16 %v932
        %v4701 = vunpack.c.l.b16 %v933
        %v4702 = vunpack.c.l.b16 %v934
        %v4703 = vunpack.c.l.b16 %v935
        %v4704 = vunpack.c.l.b16 %v936
        %v4705 = vunpack.c.l.b16 %v937
        %v4706 = vunpack.c.l.b16 %v938
        %v4707 = vunpack.c.l.b16 %v939
        %v4708 = vunpack.c.l.b16 %v940
        %v4709 = vunpack.c.l.b16 %v941
        %v4710 = vunpack.c.l.b16 %v942
        %v4711 = vunpack.c.l.b16 %v943
        %v4712 = vunpack.c.l.b16 %v944
        %v4713 = vunpack.c.l.b16 %v945
        %v4714 = vunpack.c.l.b16 %v946
        %v4715 = vunpack.c.l.b16 %v947
        %v4716 = vunpack.c.l.b16 %v948
        %v4717 = vunpack.c.l.b16 %v949
        %v4718 = vunpack.c.l.b16 %v950
        %v4719 = vunpack.c.l.b16 %v951
        %v4720 = vunpack.c.l.b16 %v952
        %v4721 = vunpack.c.l.b16 %v953
        %v4722 = vunpack.c.l.b16 %v954
        %v4723 = vunpack.c.l.b16 %v955
        %v4724 = vunpack.c.l.b16 %v956
        %v4725 = vunpack.c.l.b16 %v957
        %v4726 = vunpack.c.l.b16 %v958
        %v4727 = vunpack.c.l.b16 %v959
        %v4728 = vunpack.c.l.b16 %v960
        %v4729 = vunpack.c.l.b16 %v961
        %v4730 = vunpack.c.l.b16 %v962
        %v4731 = vunpack.c.l.b16 %v963
        %v4732 = vunpack.c.l.b16 %v964
        %v4733 = vunpack.c.l.b16 %v965
        %v4734 = vunpack.c.l.b16 %v966
        %v4735 = vunpack.c.l.b16 %v967
        %v4736 = vunpack.c.l.b16 %v968
        %v4737 = vunpack.c.l.b16 %v969
        %v4738 = vunpack.c.l.b16 %v970
        %v4739 = vunpack.c.l.b16 %v971
        %v4740 = vunpack.c.l.b16 %v972
        %v4741 = vunpack.c.l.b16 %v973
        %v4742 = vunpack.c.l.b16 %v974
        %v4743 = vunpack.c.l.b16 %v975
        %v4744 = vunpack.c.l.b16 %v976
        %v4745 = vunpack.c.l.b16 %v977
        %v4746 = vunpack.c.l.b16 %v978
        %v4747 = vunpack.c.l.b16 %v979
        %v4748 = vunpack.c.l.b16 %v980
        %v4749 = vunpack.c.l.b16 %v981
        %v4750 = vunpack.c.l.b16 %v982
        %v4751 = vunpack.c.l.b16 %v983
        %v4752 = vunpack.c.l.b16 %v984
        %v4753 = vunpack.c.l.b16 %v985
        %v4754 = vunpack.c.l.b16 %v986
        %v4755 = vunpack.c.l.b16 %v987
        %v4756 = vunpack.c.l.b16 %v988
        %v4757 = vunpack.c.l.b16 %v989
        %v4758 = vunpack.c.l.b16 %v990
        %v4759 = vunpack.c.l.b16 %v991
        %v4760 = vunpack.c.l.b16 %v992
        %v4761 = vunpack.c.l.b16 %v993
        %v4762 = vunpack.c.l.b16 %v994
        %v4763 = vunpack.c.l.b16 %v995
        %v4764 = vunpack.c.l.b16 %v996
        %v4765 = vunpack.c.l.b16 %v997
        %v4766 = vunpack.c.l.b16 %v998
        %v4767 = vunpack.c.l.b16 %v999
        %v4768 = vunpack.c.l.b16 %v1000
        %v4769 = vunpack.c.l.b16 %v1001
        %v4770 = vunpack.c.l.b16 %v1002
        %v4771 = vunpack.c.l.b16 %v1003
        %v4772 = vunpack.c.l.b16 %v1004
        %v4773 = vunpack.c.l.b16 %v1005
        %v4774 = vunpack.c.l.b16 %v1006
        %v4775 = vunpack.c.l.b16 %v1007
        %v4776 = vunpack.c.l.b16 %v1008
        %v4777 = vunpack.c.l.b16 %v1009
        %v4778 = vunpack.c.l.b16 %v1010
        %v4779 = vunpack.c.l.b16 %v1011
        %v4780 = vunpack.c.l.b16 %v1012
        %v4781 = vunpack.c.l.b16 %v1013
        %v4782 = vunpack.c.l.b16 %v1014
        %v4783 = vunpack.c.l.b16 %v1015
        %v4784 = vunpack.c.l.b16 %v1016
        %v4785 = vunpack.c.l.b16 %v1017
        %v4786 = vunpack.c.l.b16 %v1018
        %v4787 = vunpack.c.l.b16 %v1019
        %v4788 = vunpack.c.l.b16 %v1020
        %v4789 = vunpack.c.l.b16 %v1021
        %v4790 = vunpack.c.l.b16 %v1022
        %v4791 = vunpack.c.l.b16 %v1023
        %v4792 = vunpack.c.l.b16 %v1024
        %v4793 = vunpack.c.l.b16 %v1025
        %v4794 = vunpack.c.l.b16 %v1026
        %v4795 = vunpack.c.l.b16 %v1027
        %v4796 = vunpack.c.l.b16 %v1028
        %v4797 = vunpack.c.l.b16 %v1029
        %v4798 = vunpack.c.l.b16 %v1030
        %v4799 = vunpack.c.l.b16 %v1031
        %v4800 = vunpack.c.l.b16 %v1032
        %v4801 = vunpack.c.l.b16 %v1033
        %v4802 = vunpack.c.l.b16 %v1034
        %v4803 = vunpack.c.l.b16 %v1035
        %v4804 = vunpack.c.l.b16 %v1036
        %v4805 = vunpack.c.l.b16 %v1037
        %v4806 = vunpack.c.l.b16 %v1038
        %v4807 = vunpack.c.l.b16 %v1039
        %v4808 = vunpack.c.l.b16 %v1040
        %v4809 = vunpack.c.l.b16 %v1041
        %v4810 = vunpack.c.l.b16 %v1042
        %v4811 = vunpack.c.l.b16 %v1043
        %v4812 = vunpack.c.l.b16 %v1044
        %v4813 = vunpack.c.l.b16 %v1045
        %v4814 = vunpack.c.l.b16 %v1046
        %v4815 = vunpack.c.l.b16 %v1047
        %v4816 = vunpack.c.l.b16 %v1048
        %v4817 = vunpack.c.l.b16 %v1049
        %v4818 = vunpack.c.l.b16 %v1050
        %v4819 = vunpack.c.l.b16 %v1051
        %v4820 = vunpack.c.l.b16 %v1052
        %v4821 = vunpack.c.l.b16 %v1053
        %v4822 = vunpack.c.l.b16 %v1054
        %v4823 = vunpack.c.l.b16 %v1055
        %v4824 = vunpack.c.l.b16 %v1056
        %v4825 = vunpack.c.l.b16 %v1057
        %v4826 = vunpack.c.l.b16 %v1058
        %v4827 = vunpack.c.l.b16 %v1059
        %v4828 = vunpack.c.l.b16 %v1060
        %v4829 = vunpack.c.l.b16 %v1061
        %v4830 = vunpack.c.l.b16 %v1062
        %v4831 = vunpack.c.l.b16 %v1063
        %v4832 = vunpack.c.l.b16 %v1064
        %v4833 = vunpack.c.l.b16 %v1065
        %v4834 = vunpack.c.l.b16 %v1066
        %v4835 = vunpack.c.l.b16 %v1067
        %v4836 = vunpack.c.l.b16 %v1068
        %v4837 = vunpack.c.l.b16 %v1069
        %v4838 = vunpack.c.l.b16 %v1070
        %v4839 = vunpack.c.l.b16 %v1071
        %v4840 = vunpack.c.l.b16 %v1072
        %v4841 = vunpack.c.l.b16 %v1073
        %v4842 = vunpack.c.l.b16 %v1074
        %v4843 = vunpack.c.l.b16 %v1075
        %v4844 = vunpack.c.l.b16 %v1076
        %v4845 = vunpack.c.l.b16 %v1077
        %v4846 = vunpack.c.l.b16 %v1078
        %v4847 = vunpack.c.l.b16 %v1079
        %v4848 = vunpack.c.l.b16 %v1080
        %v4849 = vunpack.c.l.b16 %v1081
        %v4850 = vunpack.c.l.b16 %v1082
        %v4851 = vunpack.c.l.b16 %v1083
        %v4852 = vunpack.c.l.b16 %v1084
        %v4853 = vunpack.c.l.b16 %v1085
        %v4854 = vunpack.c.l.b16 %v1086
        %v4855 = vunpack.c.l.b16 %v1087
        %v4856 = vunpack.c.l.b16 %v1088
        %v4857 = vunpack.c.l.b16 %v1089
        %v4858 = vunpack.c.l.b16 %v1090
        %v4859 = vunpack.c.l.b16 %v1091
        %v4860 = vunpack.c.l.b16 %v1092
        %v4861 = vunpack.c.l.b16 %v1093
        %v4862 = vunpack.c.l.b16 %v1094
        %v4863 = vunpack.c.l.b16 %v1095
        %v4864 = vunpack.c.l.b16 %v1096
        %v4865 = vunpack.c.l.b16 %v1097
        %v4866 = vunpack.c.l.b16 %v1098
        %v4867 = vunpack.c.l.b16 %v1099
        %v4868 = vunpack.c.l.b16 %v1100
        %v4869 = vunpack.c.l.b16 %v1101
        %v4870 = vunpack.c.l.b16 %v1102
        %v4871 = vunpack.c.l.b16 %v1103
        %v4872 = vunpack.c.l.b16 %v1104
        %v4873 = vunpack.c.l.b16 %v1105
        %v4874 = vunpack.c.l.b16 %v1106
        %v4875 = vunpack.c.l.b16 %v1107
        %v4876 = vunpack.c.l.b16 %v1108
        %v4877 = vunpack.c.l.b16 %v1109
        %v4878 = vunpack.c.l.b16 %v1110
        %v4879 = vunpack.c.l.b16 %v1111
        %v4880 = vunpack.c.l.b16 %v1112
        %v4881 = vunpack.c.l.b16 %v1113
        %v4882 = vunpack.c.l.b16 %v1114
        %v4883 = vunpack.c.l.b16 %v1115
        %v4884 = vunpack.c.l.b16 %v1116
        %v4885 = vunpack.c.l.b16 %v1117
        %v4886 = vunpack.c.l.b16 %v1118
        %v4887 = vunpack.c.l.b16 %v1119
        %v4888 = vunpack.c.l.b16 %v1120
        %v4889 = vunpack.c.l.b16 %v1121
        %v4890 = vunpack.c.l.b16 %v1122
        %v4891 = vunpack.c.l.b16 %v1123
        %v4892 = vunpack.c.l.b16 %v1124
        %v4893 = vunpack.c.l.b16 %v1125
        %v4894 = vunpack.c.l.b16 %v1126
        %v4895 = vunpack.c.l.b16 %v1127
        %v4896 = vunpack.c.l.b16 %v1128
        %v4897 = vunpack.c.l.b16 %v1129
        %v4898 = vunpack.c.l.b16 %v1130
        %v4899 = vunpack.c.l.b16 %v1131
        %v4900 = vunpack.c.l.b16 %v1132
        %v4901 = vunpack.c.l.b16 %v1133
        %v4902 = vunpack.c.l.b16 %v1134
        %v4903 = vunpack.c.l.b16 %v1135
        %v4904 = vunpack.c.l.b16 %v1136
        %v4905 = vunpack.c.l.b16 %v1137
        %v4906 = vunpack.c.l.b16 %v1138
        %v4907 = vunpack.c.l.b16 %v1139
        %v4908 = vunpack.c.l.b16 %v1140
        %v4909 = vunpack.c.l.b16 %v1141
        %v4910 = vunpack.c.l.b16 %v1142
        %v4911 = vunpack.c.l.b16 %v1143
        %v4912 = vunpack.c.l.b16 %v1144
        %v4913 = vunpack.c.l.b16 %v1145
        %v4914 = vunpack.c.l.b16 %v1146
        %v4915 = vunpack.c.l.b16 %v1147
        %v4916 = vunpack.c.l.b16 %v1148
        %v4917 = vunpack.c.l.b16 %v1149
        %v4918 = vunpack.c.l.b16 %v1150
        %v4919 = vunpack.c.l.b16 %v1151
        %v4920 = vunpack.c.l.b16 %v1152
        %v4921 = vunpack.c.l.b16 %v1153
        %v4922 = vunpack.c.l.b16 %v1154
        %v4923 = vunpack.c.l.b16 %v1155
        %v4924 = vunpack.c.l.b16 %v1156
        %v4925 = vunpack.c.l.b16 %v1157
        %v4926 = vunpack.c.l.b16 %v1158
        %v4927 = vunpack.c.l.b16 %v1159
        %v4928 = vunpack.c.l.b16 %v1160
        %v4929 = vunpack.c.l.b16 %v1161
        %v4930 = vunpack.c.l.b16 %v1162
        %v4931 = vunpack.c.l.b16 %v1163
        %v4932 = vunpack.c.l.b16 %v1164
        %v4933 = vunpack.c.l.b16 %v1165
        %v4934 = vunpack.c.l.b16 %v1166
        %v4935 = vunpack.c.l.b16 %v1167
        %v4936 = vunpack.c.l.b16 %v1168
        %v4937 = vunpack.c.l.b16 %v1169
        %v4938 = vunpack.c.l.b16 %v1170
        %v4939 = vunpack.c.l.b16 %v1171
        %v4940 = vunpack.c.l.b16 %v1172
        %v4941 = vunpack.c.l.b16 %v1173
        %v4942 = vunpack.c.l.b16 %v1174
        %v4943 = vunpack.c.l.b16 %v1175
        %v4944 = vunpack.c.l.b16 %v1176
        %v4945 = vunpack.c.l.b16 %v1177
        %v4946 = vunpack.c.l.b16 %v1178
        %v4947 = vunpack.c.l.b16 %v1179
        %v4948 = vunpack.c.l.b16 %v1180
        %v4949 = vunpack.c.l.b16 %v1181
        %v4950 = vunpack.c.l.b16 %v1182
        %v4951 = vunpack.c.l.b16 %v1183
        %v4952 = vunpack.c.l.b16 %v1184
        %v4953 = vunpack.c.l.b16 %v1185
        %v4954 = vunpack.c.l.b16 %v1186
        %v4955 = vunpack.c.l.b16 %v1187
        %v4956 = vunpack.c.l.b16 %v1188
        %v4957 = vunpack.c.l.b16 %v1189
        %v4958 = vunpack.c.l.b16 %v1190
        %v4959 = vunpack.c.l.b16 %v1191
        %v4960 = vunpack.c.l.b16 %v1192
        %v4961 = vunpack.c.l.b16 %v1193
        %v4962 = vunpack.c.l.b16 %v1194
        %v4963 = vunpack.c.l.b16 %v1195
        %v4964 = vunpack.c.l.b16 %v1196
        %v4965 = vunpack.c.l.b16 %v1197
        %v4966 = vunpack.c.l.b16 %v1198
        %v4967 = vunpack.c.l.b16 %v1199
        %v4968 = vunpack.c.l.b16 %v1200
        %v4969 = vunpack.c.l.b16 %v1201
        %v4970 = vunpack.c.l.b16 %v1202
        %v4971 = vunpack.c.l.b16 %v1203
        %v4972 = vunpack.c.l.b16 %v1204
        %v4973 = vunpack.c.l.b16 %v1205
        %v4974 = vunpack.c.l.b16 %v1206
        %v4975 = vunpack.c.l.b16 %v1207
        %v4976 = vunpack.c.l.b16 %v1208
        %v4977 = vunpack.c.l.b16 %v1209
        %v4978 = vunpack.c.l.b16 %v1210
        %v4979 = vunpack.c.l.b16 %v1211
        %v4980 = vunpack.c.l.b16 %v1212
        %v4981 = vunpack.c.l.b16 %v1213
        %v4982 = vunpack.c.l.b16 %v1214
        %v4983 = vunpack.c.l.b16 %v1215
        %v4984 = vunpack.c.l.b16 %v1216
        %v4985 = vunpack.c.l.b16 %v1217
        %v4986 = vunpack.c.l.b16 %v1218
        %v4987 = vunpack.c.l.b16 %v1219
        %v4988 = vunpack.c.l.b16 %v1220
        %v4989 = vunpack.c.l.b16 %v1221
        %v4990 = vunpack.c.l.b16 %v1222
        %v4991 = vunpack.c.l.b16 %v1223
        %v4992 = vunpack.c.l.b16 %v1224
        %v4993 = vunpack.c.l.b16 %v1225
        %v4994 = vunpack.c.l.b16 %v1226
        %v4995 = vunpack.c.l.b16 %v1227
        %v4996 = vunpack.c.l.b16 %v1228
        %v4997 = vunpack.c.l.b16 %v1229
        %v4998 = vunpack.c.l.b16 %v1230
        %v4999 = vunpack.c.l.b16 %v1231
        %v5000 = vunpack.c.l.b16 %v1232
        %v5001 = vunpack.c.l.b16 %v1233
        %v5002 = vunpack.c.l.b16 %v1234
        %v5003 = vunpack.c.l.b16 %v1235
        %v5004 = vunpack.c.l.b16 %v1236
        %v5005 = vunpack.c.l.b16 %v1237
        %v5006 = vunpack.c.l.b16 %v1238
        %v5007 = vunpack.c.l.b16 %v1239
        %v5008 = vunpack.c.l.b16 %v1240
        %v5009 = vunpack.c.l.b16 %v1241
        %v5010 = vunpack.c.l.b16 %v1242
        %v5011 = vunpack.c.l.b16 %v1243
        %v5012 = vunpack.c.l.b16 %v1244
        %v5013 = vunpack.c.l.b16 %v1245
        %v5014 = vunpack.c.l.b16 %v1246
        %v5015 = vunpack.c.l.b16 %v1247
        %v5016 = vunpack.c.l.b16 %v1248
        %v5017 = vunpack.c.l.b16 %v1249
        %v5018 = vunpack.c.l.b16 %v1250
        %v5019 = vunpack.c.l.b16 %v1251
        %v5020 = vunpack.c.l.b16 %v1252
        %v5021 = vunpack.c.l.b16 %v1253
        %v5022 = vunpack.c.l.b16 %v1254
        %v5023 = vunpack.c.l.b16 %v1255
        %v5024 = vunpack.c.l.b16 %v1256
        %v5025 = vunpack.c.l.b16 %v1257
        %v5026 = vunpack.c.l.b16 %v1258
        %v5027 = vunpack.c.l.b16 %v1259
        %v5028 = vunpack.c.l.b16 %v1260
        %v5029 = vunpack.c.l.b16 %v1261
        %v5030 = vunpack.c.l.b16 %v1262
        %v5031 = vunpack.c.l.b16 %v1263
        %v5032 = vunpack.c.l.b16 %v1264
        %v5033 = vunpack.c.l.b16 %v1265
        %v5034 = vunpack.c.l.b16 %v1266
        %v5035 = vunpack.c.l.b16 %v1267
        %v5036 = vunpack.c.l.b16 %v1268
        %v5037 = vunpack.c.l.b16 %v1269
        %v5038 = vunpack.c.l.b16 %v1270
        %v5039 = vunpack.c.l.b16 %v1271
        %v5040 = vunpack.c.l.b16 %v1272
        %v5041 = vunpack.c.l.b16 %v1273
        %v5042 = vunpack.c.l.b16 %v1274
        %v5043 = vunpack.c.l.b16 %v1275
        %v5044 = vunpack.c.l.b16 %v1276
        %v5045 = vunpack.c.l.b16 %v1277
        %v5046 = vunpack.c.l.b16 %v1278
        %v5047 = vunpack.c.l.b16 %v1279
        %v5048 = vunpack.c.l.b16 %v1280
        %v5049 = vunpack.c.l.b16 %v1281
        %v5050 = vunpack.c.l.b16 %v1282
        %v5051 = vunpack.c.l.b16 %v1283
        %v5052 = vunpack.c.l.b16 %v1284
        %v5053 = vunpack.c.l.b16 %v1285
        %v5054 = vunpack.c.l.b16 %v1286
        %v5055 = vunpack.c.l.b16 %v1287
        %v5056 = vunpack.c.l.b16 %v1288
        %v5057 = vunpack.c.l.b16 %v1289
        %v5058 = vunpack.c.l.b16 %v1290
        %v5059 = vunpack.c.l.b16 %v1291
        %v5060 = vunpack.c.l.b16 %v1292
        %v5061 = vunpack.c.l.b16 %v1293
        %v5062 = vunpack.c.l.b16 %v1294
        %v5063 = vunpack.c.l.b16 %v1295
        %v5064 = vunpack.c.l.b16 %v1296
        %v5065 = vunpack.c.l.b16 %v1297
        %v5066 = vunpack.c.l.b16 %v1298
        %v5067 = vunpack.c.l.b16 %v1299
        %v5068 = vunpack.c.l.b16 %v1300
        %v5069 = vunpack.c.l.b16 %v1301
        %v5070 = vunpack.c.l.b16 %v1302
        %v5071 = vunpack.c.l.b16 %v1303
        %v5072 = vunpack.c.l.b16 %v1304
        %v5073 = vunpack.c.l.b16 %v1305
        %v5074 = vunpack.c.l.b16 %v1306
        %v5075 = vunpack.c.l.b16 %v1307
        %v5076 = vunpack.c.l.b16 %v1308
        %v5077 = vunpack.c.l.b16 %v1309
        %v5078 = vunpack.c.l.b16 %v1310
        %v5079 = vunpack.c.l.b16 %v1311
        %v5080 = vunpack.c.l.b16 %v1312
        %v5081 = vunpack.c.l.b16 %v1313
        %v5082 = vunpack.c.l.b16 %v1314
        %v5083 = vunpack.c.l.b16 %v1315
        %v5084 = vunpack.c.l.b16 %v1316
        %v5085 = vunpack.c.l.b16 %v1317
        %v5086 = vunpack.c.l.b16 %v1318
        %v5087 = vunpack.c.l.b16 %v1319
        %v5088 = vunpack.c.l.b16 %v1320
        %v5089 = vunpack.c.l.b16 %v1321
        %v5090 = vunpack.c.l.b16 %v1322
        %v5091 = vunpack.c.l.b16 %v1323
        %v5092 = vunpack.c.l.b16 %v1324
        %v5093 = vunpack.c.l.b16 %v1325
        %v5094 = vunpack.c.l.b16 %v1326
        %v5095 = vunpack.c.l.b16 %v1327
        %v5096 = vunpack.c.l.b16 %v1328
        %v5097 = vunpack.c.l.b16 %v1329
        %v5098 = vunpack.c.l.b16 %v1330
        %v5099 = vunpack.c.l.b16 %v1331
        %v5100 = vunpack.c.l.b16 %v1332
        %v5101 = vunpack.c.l.b16 %v1333
        %v5102 = vunpack.c.l.b16 %v1334
        %v5103 = vunpack.c.l.b16 %v1335
        %v5104 = vunpack.c.l.b16 %v1336
        %v5105 = vunpack.c.l.b16 %v1337
        %v5106 = vunpack.c.l.b16 %v1338
        %v5107 = vunpack.c.l.b16 %v1339
        %v5108 = vunpack.c.l.b16 %v1340
        %v5109 = vunpack.c.l.b16 %v1341
        %v5110 = vunpack.c.l.b16 %v1342
        %v5111 = vunpack.c.l.b16 %v1343
        %v5112 = vunpack.c.l.b16 %v1344
        %v5113 = vunpack.c.l.b16 %v1345
        %v5114 = vunpack.c.l.b16 %v1346
        %v5115 = vunpack.c.l.b16 %v1347
        %v5116 = vunpack.c.l.b16 %v1348
        %v5117 = vunpack.c.l.b16 %v1349
        %v5118 = vunpack.c.l.b16 %v1350
        %v5119 = vunpack.c.l.b16 %v1351
        %v5120 = vunpack.c.l.b16 %v1352
        %v5121 = vunpack.c.l.b16 %v1353
        %v5122 = vunpack.c.l.b16 %v1354
        %v5123 = vunpack.c.l.b16 %v1355
        %v5124 = vunpack.c.l.b16 %v1356
        %v5125 = vunpack.c.l.b16 %v1357
        %v5126 = vunpack.c.l.b16 %v1358
        %v5127 = vunpack.c.l.b16 %v1359
        %v5128 = vunpack.c.l.b16 %v1360
        %v5129 = vunpack.c.l.b16 %v1361
        %v5130 = vunpack.c.l.b16 %v1362
        %v5131 = vunpack.c.l.b16 %v1363
        %v5132 = vunpack.c.l.b16 %v1364
        %v5133 = vunpack.c.l.b16 %v1365
        %v5134 = vunpack.c.l.b16 %v1366
        %v5135 = vunpack.c.l.b16 %v1367
        %v5136 = vunpack.c.l.b16 %v1368
        %v5137 = vunpack.c.l.b16 %v1369
        %v5138 = vunpack.c.l.b16 %v1370
        %v5139 = vunpack.c.l.b16 %v1371
        %v5140 = vunpack.c.l.b16 %v1372
        %v5141 = vunpack.c.l.b16 %v1373
        %v5142 = vunpack.c.l.b16 %v1374
        %v5143 = vunpack.c.l.b16 %v1375
        %v5144 = vunpack.c.l.b16 %v1376
        %v5145 = vunpack.c.l.b16 %v1377
        %v5146 = vunpack.c.l.b16 %v1378
        %v5147 = vunpack.c.l.b16 %v1379
        %v5148 = vunpack.c.l.b16 %v1380
        %v5149 = vunpack.c.l.b16 %v1381
        %v5150 = vunpack.c.l.b16 %v1382
        %v5151 = vunpack.c.l.b16 %v1383
        %v5152 = vunpack.c.l.b16 %v1384
        %v5153 = vunpack.c.l.b16 %v1385
        %v5154 = vunpack.c.l.b16 %v1386
        %v5155 = vunpack.c.l.b16 %v1387
        %v5156 = vunpack.c.l.b16 %v1388
        %v5157 = vunpack.c.l.b16 %v1389
        %v5158 = vunpack.c.l.b16 %v1390
        %v5159 = vunpack.c.l.b16 %v1391
        %v5160 = vunpack.c.l.b16 %v1392
        %v5161 = vunpack.c.l.b16 %v1393
        %v5162 = vunpack.c.l.b16 %v1394
        %v5163 = vunpack.c.l.b16 %v1395
        %v5164 = vunpack.c.l.b16 %v1396
        %v5165 = vunpack.c.l.b16 %v1397
        %v5166 = vunpack.c.l.b16 %v1398
        %v5167 = vunpack.c.l.b16 %v1399
        %v5168 = vunpack.c.l.b16 %v1400
        %v5169 = vunpack.c.l.b16 %v1401
        %v5170 = vunpack.c.l.b16 %v1402
        %v5171 = vunpack.c.l.b16 %v1403
        %v5172 = vunpack.c.l.b16 %v1404
        %v5173 = vunpack.c.l.b16 %v1405
        %v5174 = vunpack.c.l.b16 %v1406
        %v5175 = vunpack.c.l.b16 %v1407
        %v5176 = vunpack.c.l.b16 %v1408
        %v5177 = vunpack.c.l.b16 %v1409
        %v5178 = vunpack.c.l.b16 %v1410
        %v5179 = vunpack.c.l.b16 %v1411
        %v5180 = vunpack.c.l.b16 %v1412
        %v5181 = vunpack.c.l.b16 %v1413
        %v5182 = vunpack.c.l.b16 %v1414
        %v5183 = vunpack.c.l.b16 %v1415
        %v5184 = vunpack.c.l.b16 %v1416
        %v5185 = vunpack.c.l.b16 %v1417
        %v5186 = vunpack.c.l.b16 %v1418
        %v5187 = vunpack.c.l.b16 %v1419
        %v5188 = vunpack.c.l.b16 %v1420
        %v5189 = vunpack.c.l.b16 %v1421
        %v5190 = vunpack.c.l.b16 %v1422
        %v5191 = vunpack.c.l.b16 %v1423
        %v5192 = vunpack.c.l.b16 %v1424
        %v5193 = vunpack.c.l.b16 %v1425
        %v5194 = vunpack.c.l.b16 %v1426
        %v5195 = vunpack.c.l.b16 %v1427
        %v5196 = vunpack.c.l.b16 %v1428
        %v5197 = vunpack.c.l.b16 %v1429
        %v5198 = vunpack.c.l.b16 %v1430
        %v5199 = vunpack.c.l.b16 %v1431
        %v5200 = vunpack.c.l.b16 %v1432
        %v5201 = vunpack.c.l.b16 %v1433
        %v5202 = vunpack.c.l.b16 %v1434
        %v5203 = vunpack.c.l.b16 %v1435
        %v5204 = vunpack.c.l.b16 %v1436
        %v5205 = vunpack.c.l.b16 %v1437
        %v5206 = vunpack.c.l.b16 %v1438
        %v5207 = vunpack.c.l.b16 %v1439
        %v5208 = vunpack.c.l.b16 %v1440
        %v5209 = vunpack.c.l.b16 %v1441
        %v5210 = vunpack.c.l.b16 %v1442
        %v5211 = vunpack.c.l.b16 %v1443
        %v5212 = vunpack.c.l.b16 %v1444
        %v5213 = vunpack.c.l.b16 %v1445
        %v5214 = vunpack.c.l.b16 %v1446
        %v5215 = vunpack.c.l.b16 %v1447
        %v5216 = vunpack.c.l.b16 %v1448
        %v5217 = vunpack.c.l.b16 %v1449
        %v5218 = vunpack.c.l.b16 %v1450
        %v5219 = vunpack.c.l.b16 %v1451
        %v5220 = vunpack.c.l.b16 %v1452
        %v5221 = vunpack.c.l.b16 %v1453
        %v5222 = vunpack.c.l.b16 %v1454
        %v5223 = vunpack.c.l.b16 %v1455
        %v5224 = vunpack.c.l.b16 %v1456
        %v5225 = vunpack.c.l.b16 %v1457
        %v5226 = vunpack.c.l.b16 %v1458
        %v5227 = vunpack.c.l.b16 %v1459
        %v5228 = vunpack.c.l.b16 %v1460
        %v5229 = vunpack.c.l.b16 %v1461
        %v5230 = vunpack.c.l.b16 %v1462
        %v5231 = vunpack.c.l.b16 %v1463
        %v5232 = vunpack.c.l.b16 %v1464
        %v5233 = vunpack.c.l.b16 %v1465
        %v5234 = vunpack.c.l.b16 %v1466
        %v5235 = vunpack.c.l.b16 %v1467
        %v5236 = vunpack.c.l.b16 %v1468
        %v5237 = vunpack.c.l.b16 %v1469
        %v5238 = vunpack.c.l.b16 %v1470
        %v5239 = vunpack.c.l.b16 %v1471
        %v5240 = vunpack.c.l.b16 %v1472
        %v5241 = vunpack.c.l.b16 %v1473
        %v5242 = vunpack.c.l.b16 %v1474
        %v5243 = vunpack.c.l.b16 %v1475
        %v5244 = vunpack.c.l.b16 %v1476
        %v5245 = vunpack.c.l.b16 %v1477
        %v5246 = vunpack.c.l.b16 %v1478
        %v5247 = vunpack.c.l.b16 %v1479
        %v5248 = vunpack.c.l.b16 %v1480
        %v5249 = vunpack.c.l.b16 %v1481
        %v5250 = vunpack.c.l.b16 %v1482
        %v5251 = vunpack.c.l.b16 %v1483
        %v5252 = vunpack.c.l.b16 %v1484
        %v5253 = vunpack.c.l.b16 %v1485
        %v5254 = vunpack.c.l.b16 %v1486
        %v5255 = vunpack.c.l.b16 %v1487
        %v5256 = vunpack.c.l.b16 %v1488
        %v5257 = vunpack.c.l.b16 %v1489
        %v5258 = vunpack.c.l.b16 %v1490
        %v5259 = vunpack.c.l.b16 %v1491
        %v5260 = vunpack.c.l.b16 %v1492
        %v5261 = vunpack.c.l.b16 %v1493
        %v5262 = vunpack.c.l.b16 %v1494
        %v5263 = vunpack.c.l.b16 %v1495
        %v5264 = vunpack.c.l.b16 %v1496
        %v5265 = vunpack.c.l.b16 %v1497
        %v5266 = vunpack.c.l.b16 %v1498
        %v5267 = vunpack.c.l.b16 %v1499
        %v5268 = vunpack.c.l.b16 %v1500
        %v5269 = vunpack.c.l.b16 %v1501
        %v5270 = vunpack.c.l.b16 %v1502
        %v5271 = vunpack.c.l.b16 %v1503
        %v5272 = vunpack.c.l.b16 %v1504
        %v5273 = vunpack.c.l.b16 %v1505
        %v5274 = vunpack.c.l.b16 %v1506
        %v5275 = vunpack.c.l.b16 %v1507
        %v5276 = vunpack.c.l.b16 %v1508
        %v5277 = vunpack.c.l.b16 %v1509
        %v5278 = vunpack.c.l.b16 %v1510
        %v5279 = vunpack.c.l.b16 %v1511
        %v5280 = vunpack.c.l.b16 %v1512
        %v5281 = vunpack.c.l.b16 %v1513
        %v5282 = vunpack.c.l.b16 %v1514
        %v5283 = vunpack.c.l.b16 %v1515
        %v5284 = vunpack.c.l.b16 %v1516
        %v5285 = vunpack.c.l.b16 %v1517
        %v5286 = vunpack.c.l.b16 %v1518
        %v5287 = vunpack.c.l.b16 %v1519
        %v5288 = vunpack.c.l.b16 %v1520
        %v5289 = vunpack.c.l.b16 %v1521
        %v5290 = vunpack.c.l.b16 %v1522
        %v5291 = vunpack.c.l.b16 %v1523
        %v5292 = vunpack.c.l.b16 %v1524
        %v5293 = vunpack.c.l.b16 %v1525
        %v5294 = vunpack.c.l.b16 %v1526
        %v5295 = vunpack.c.l.b16 %v1527
        %v5296 = vunpack.c.l.b16 %v1528
        %v5297 = vunpack.c.l.b16 %v1529
        %v5298 = vunpack.c.l.b16 %v1530
        %v5299 = vunpack.c.l.b16 %v1531
        %v5300 = vunpack.c.l.b16 %v1532
        %v5301 = vunpack.c.l.b16 %v1533
        %v5302 = vunpack.c.l.b16 %v1534
        %v5303 = vunpack.c.l.b16 %v1535
        %v5304 = vunpack.c.l.b16 %v1536
        %v5305 = vunpack.c.l.b16 %v1537
        %v5306 = vunpack.c.l.b16 %v1538
        %v5307 = vunpack.c.l.b16 %v1539
        %v5308 = vunpack.c.l.b16 %v1540
        %v5309 = vunpack.c.l.b16 %v1541
        %v5310 = vunpack.c.l.b16 %v1542
        %v5311 = vunpack.c.l.b16 %v1543
        %v5312 = vunpack.c.l.b16 %v1544
        %v5313 = vunpack.c.l.b16 %v1545
        %v5314 = vunpack.c.l.b16 %v1546
        %v5315 = vunpack.c.l.b16 %v1547
        %v5316 = vunpack.c.l.b16 %v1548
        %v5317 = vunpack.c.l.b16 %v1549
        %v5318 = vunpack.c.l.b16 %v1550
        %v5319 = vunpack.c.l.b16 %v1551
        %v5320 = vunpack.c.l.b16 %v1552
        %v5321 = vunpack.c.l.b16 %v1553
        %v5322 = vunpack.c.l.b16 %v1554
        %v5323 = vunpack.c.l.b16 %v1555
        %v5324 = vunpack.c.l.b16 %v1556
        %v5325 = vunpack.c.l.b16 %v1557
        %v5326 = vunpack.c.l.b16 %v1558
        %v5327 = vunpack.c.l.b16 %v1559
        %v5328 = vunpack.c.l.b16 %v1560
        %v5329 = vunpack.c.l.b16 %v1561
        %v5330 = vunpack.c.l.b16 %v1562
        %v5331 = vunpack.c.l.b16 %v1563
        %v5332 = vunpack.c.l.b16 %v1564
        %v5333 = vunpack.c.l.b16 %v1565
        %v5334 = vunpack.c.l.b16 %v1566
        %v5335 = vunpack.c.l.b16 %v1567
        %v5336 = vunpack.c.l.b16 %v1568
        %v5337 = vunpack.c.l.b16 %v1569
        %v5338 = vunpack.c.l.b16 %v1570
        %v5339 = vunpack.c.l.b16 %v1571
        %v5340 = vunpack.c.l.b16 %v1572
        %v5341 = vunpack.c.l.b16 %v1573
        %v5342 = vunpack.c.l.b16 %v1574
        %v5343 = vunpack.c.l.b16 %v1575
        %v5344 = vunpack.c.l.b16 %v1576
        %v5345 = vunpack.c.l.b16 %v1577
        %v5346 = vunpack.c.l.b16 %v1578
        %v5347 = vunpack.c.l.b16 %v1579
        %v5348 = vunpack.c.l.b16 %v1580
        %v5349 = vunpack.c.l.b16 %v1581
        %v5350 = vunpack.c.l.b16 %v1582
        %v5351 = vunpack.c.l.b16 %v1583
        %v5352 = vunpack.c.l.b16 %v1584
        %v5353 = vunpack.c.l.b16 %v1585
        %v5354 = vunpack.c.l.b16 %v1586
        %v5355 = vunpack.c.l.b16 %v1587
        %v5356 = vunpack.c.l.b16 %v1588
        %v5357 = vunpack.c.l.b16 %v1589
        %v5358 = vunpack.c.l.b16 %v1590
        %v5359 = vunpack.c.l.b16 %v1591
        %v5360 = vunpack.c.l.b16 %v1592
        %v5361 = vunpack.c.l.b16 %v1593
        %v5362 = vunpack.c.l.b16 %v1594
        %v5363 = vunpack.c.l.b16 %v1595
        %v5364 = vunpack.c.l.b16 %v1596
        %v5365 = vunpack.c.l.b16 %v1597
        %v5366 = vunpack.c.l.b16 %v1598
        %v5367 = vunpack.c.l.b16 %v1599
        %v5368 = vunpack.c.l.b16 %v1600
        %v5369 = vunpack.c.l.b16 %v1601
        %v5370 = vunpack.c.l.b16 %v1602
        %v5371 = vunpack.c.l.b16 %v1603
        %v5372 = vunpack.c.l.b16 %v1604
        %v5373 = vunpack.c.l.b16 %v1605
        %v5374 = vunpack.c.l.b16 %v1606
        %v5375 = vunpack.c.l.b16 %v1607
        %v5376 = vunpack.c.l.b16 %v1608
        %v5377 = vunpack.c.l.b16 %v1609
        %v5378 = vunpack.c.l.b16 %v1610
        %v5379 = vunpack.c.l.b16 %v1611
        %v5380 = vunpack.c.l.b16 %v1612
        %v5381 = vunpack.c.l.b16 %v1613
        %v5382 = vunpack.c.l.b16 %v1614
        %v5383 = vunpack.c.l.b16 %v1615
        %v5384 = vunpack.c.l.b16 %v1616
        %v5385 = vunpack.c.l.b16 %v1617
        %v5386 = vunpack.c.l.b16 %v1618
        %v5387 = vunpack.c.l.b16 %v1619
        %v5388 = vunpack.c.l.b16 %v1620
        %v5389 = vunpack.c.l.b16 %v1621
        %v5390 = vunpack.c.l.b16 %v1622
        %v5391 = vunpack.c.l.b16 %v1623
        %v5392 = vunpack.c.l.b16 %v1624
        %v5393 = vunpack.c.l.b16 %v1625
        %v5394 = vunpack.c.l.b16 %v1626
        %v5395 = vunpack.c.l.b16 %v1627
        %v5396 = vunpack.c.l.b16 %v1628
        %v5397 = vunpack.c.l.b16 %v1629
        %v5398 = vunpack.c.l.b16 %v1630
        %v5399 = vunpack.c.l.b16 %v1631
        %v5400 = vunpack.c.l.b16 %v1632
        %v5401 = vunpack.c.l.b16 %v1633
        %v5402 = vunpack.c.l.b16 %v1634
        %v5403 = vunpack.c.l.b16 %v1635
        %v5404 = vunpack.c.l.b16 %v1636
        %v5405 = vunpack.c.l.b16 %v1637
        %v5406 = vunpack.c.l.b16 %v1638
        %v5407 = vunpack.c.l.b16 %v1639
        %v5408 = vunpack.c.l.b16 %v1640
        %v5409 = vunpack.c.l.b16 %v1641
        %v5410 = vunpack.c.l.b16 %v1642
        %v5411 = vunpack.c.l.b16 %v1643
        %v5412 = vunpack.c.l.b16 %v1644
        %v5413 = vunpack.c.l.b16 %v1645
        %v5414 = vunpack.c.l.b16 %v1646
        %v5415 = vunpack.c.l.b16 %v1647
        %v5416 = vunpack.c.l.b16 %v1648
        %v5417 = vunpack.c.l.b16 %v1649
        %v5418 = vunpack.c.l.b16 %v1650
        %v5419 = vunpack.c.l.b16 %v1651
        %v5420 = vunpack.c.l.b16 %v1652
        %v5421 = vunpack.c.l.b16 %v1653
        %v5422 = vunpack.c.l.b16 %v1654
        %v5423 = vunpack.c.l.b16 %v1655
        %v5424 = vunpack.c.l.b16 %v1656
        %v5425 = vunpack.c.l.b16 %v1657
        %v5426 = vunpack.c.l.b16 %v1658
        %v5427 = vunpack.c.l.b16 %v1659
        %v5428 = vunpack.c.l.b16 %v1660
        %v5429 = vunpack.c.l.b16 %v1661
        %v5430 = vunpack.c.l.b16 %v1662
        %v5431 = vunpack.c.l.b16 %v1663
        %v5432 = vunpack.c.l.b16 %v1664
        %v5433 = vunpack.c.l.b16 %v1665
        %v5434 = vunpack.c.l.b16 %v1666
        %v5435 = vunpack.c.l.b16 %v1667
        %v5436 = vunpack.c.l.b16 %v1668
        %v5437 = vunpack.c.l.b16 %v1669
        %v5438 = vunpack.c.l.b16 %v1670
        %v5439 = vunpack.c.l.b16 %v1671
        %v5440 = vunpack.c.l.b16 %v1672
        %v5441 = vunpack.c.l.b16 %v1673
        %v5442 = vunpack.c.l.b16 %v1674
        %v5443 = vunpack.c.l.b16 %v1675
        %v5444 = vunpack.c.l.b16 %v1676
        %v5445 = vunpack.c.l.b16 %v1677
        %v5446 = vunpack.c.l.b16 %v1678
        %v5447 = vunpack.c.l.b16 %v1679
        %v5448 = vunpack.c.l.b16 %v1680
        %v5449 = vunpack.c.l.b16 %v1681
        %v5450 = vunpack.c.l.b16 %v1682
        %v5451 = vunpack.c.l.b16 %v1683
        %v5452 = vunpack.c.l.b16 %v1684
        %v5453 = vunpack.c.l.b16 %v1685
        %v5454 = vunpack.c.l.b16 %v1686
        %v5455 = vunpack.c.l.b16 %v1687
        %v5456 = vunpack.c.l.b16 %v1688
        %v5457 = vunpack.c.l.b16 %v1689
        %v5458 = vunpack.c.l.b16 %v1690
        %v5459 = vunpack.c.l.b16 %v1691
        %v5460 = vunpack.c.l.b16 %v1692
        %v5461 = vunpack.c.l.b16 %v1693
        %v5462 = vunpack.c.l.b16 %v1694
        %v5463 = vunpack.c.l.b16 %v1695
        %v5464 = vunpack.c.l.b16 %v1696
        %v5465 = vunpack.c.l.b16 %v1697
        %v5466 = vunpack.c.l.b16 %v1698
        %v5467 = vunpack.c.l.b16 %v1699
        %v5468 = vunpack.c.l.b16 %v1700
        %v5469 = vunpack.c.l.b16 %v1701
        %v5470 = vunpack.c.l.b16 %v1702
        %v5471 = vunpack.c.l.b16 %v1703
        %v5472 = vunpack.c.l.b16 %v1704
        %v5473 = vunpack.c.l.b16 %v1705
        %v5474 = vunpack.c.l.b16 %v1706
        %v5475 = vunpack.c.l.b16 %v1707
        %v5476 = vunpack.c.l.b16 %v1708
        %v5477 = vunpack.c.l.b16 %v1709
        %v5478 = vunpack.c.l.b16 %v1710
        %v5479 = vunpack.c.l.b16 %v1711
        %v5480 = vunpack.c.l.b16 %v1712
        %v5481 = vunpack.c.l.b16 %v1713
        %v5482 = vunpack.c.l.b16 %v1714
        %v5483 = vunpack.c.l.b16 %v1715
        %v5484 = vunpack.c.l.b16 %v1716
        %v5485 = vunpack.c.l.b16 %v1717
        %v5486 = vunpack.c.l.b16 %v1718
        %v5487 = vunpack.c.l.b16 %v1719
        %v5488 = vunpack.c.l.b16 %v1720
        %v5489 = vunpack.c.l.b16 %v1721
        %v5490 = vunpack.c.l.b16 %v1722
        %v5491 = vunpack.c.l.b16 %v1723
        %v5492 = vunpack.c.l.b16 %v1724
        %v5493 = vunpack.c.l.b16 %v1725
        %v5494 = vunpack.c.l.b16 %v1726
        %v5495 = vunpack.c.l.b16 %v1727
        %v5496 = vunpack.c.l.b16 %v1728
        %v5497 = vunpack.c.l.b16 %v1729
        %v5498 = vunpack.c.l.b16 %v1730
        %v5499 = vunpack.c.l.b16 %v1731
        %v5500 = vunpack.c.l.b16 %v1732
        %v5501 = vunpack.c.l.b16 %v1733
        %v5502 = vunpack.c.l.b16 %v1734
        %v5503 = vunpack.c.l.b16 %v1735
        %v5504 = vunpack.c.l.b16 %v1736
        %v5505 = vunpack.c.l.b16 %v1737
        %v5506 = vunpack.c.l.b16 %v1738
        %v5507 = vunpack.c.l.b16 %v1739
        %v5508 = vunpack.c.l.b16 %v1740
        %v5509 = vunpack.c.l.b16 %v1741
        %v5510 = vunpack.c.l.b16 %v1742
        %v5511 = vunpack.c.l.b16 %v1743
        %v5512 = vunpack.c.l.b16 %v1744
        %v5513 = vunpack.c.l.b16 %v1745
        %v5514 = vunpack.c.l.b16 %v1746
        %v5515 = vunpack.c.l.b16 %v1747
        %v5516 = vunpack.c.l.b16 %v1748
        %v5517 = vunpack.c.l.b16 %v1749
        %v5518 = vunpack.c.l.b16 %v1750
        %v5519 = vunpack.c.l.b16 %v1751
        %v5520 = vunpack.c.l.b16 %v1752
        %v5521 = vunpack.c.l.b16 %v1753
        %v5522 = vunpack.c.l.b16 %v1754
        %v5523 = vunpack.c.l.b16 %v1755
        %v5524 = vunpack.c.l.b16 %v1756
        %v5525 = vunpack.c.l.b16 %v1757
        %v5526 = vunpack.c.l.b16 %v1758
        %v5527 = vunpack.c.l.b16 %v1759
        %v5528 = vunpack.c.l.b16 %v1760
        %v5529 = vunpack.c.l.b16 %v1761
        %v5530 = vunpack.c.l.b16 %v1762
        %v5531 = vunpack.c.l.b16 %v1763
        %v5532 = vunpack.c.l.b16 %v1764
        %v5533 = vpack.c.b16 %v3998, %v3997
        %v5534 = vpack.c.b16 %v4000, %v3999
        %v5535 = vpack.c.b16 %v4002, %v4001
        %v5536 = vpack.c.b16 %v4004, %v4003
        %v5537 = vpack.c.b16 %v4006, %v4005
        %v5538 = vpack.c.b16 %v4008, %v4007
        %v5539 = vpack.c.b16 %v4010, %v4009
        %v5540 = vpack.c.b16 %v4012, %v4011
        %v5541 = vpack.c.b16 %v4014, %v4013
        %v5542 = vpack.c.b16 %v4016, %v4015
        %v5543 = vpack.c.b16 %v4018, %v4017
        %v5544 = vpack.c.b16 %v4020, %v4019
        %v5545 = vpack.c.b16 %v4022, %v4021
        %v5546 = vpack.c.b16 %v4024, %v4023
        %v5547 = vpack.c.b16 %v4026, %v4025
        %v5548 = vpack.c.b16 %v4028, %v4027
        %v5549 = vpack.c.b16 %v4030, %v4029
        %v5550 = vpack.c.b16 %v4032, %v4031
        %v5551 = vpack.c.b16 %v4034, %v4033
        %v5552 = vpack.c.b16 %v4036, %v4035
        %v5553 = vpack.c.b16 %v4038, %v4037
        %v5554 = vpack.c.b16 %v4040, %v4039
        %v5555 = vpack.c.b16 %v4042, %v4041
        %v5556 = vpack.c.b16 %v4044, %v4043
        %v5557 = vpack.c.b16 %v4046, %v4045
        %v5558 = vpack.c.b16 %v4048, %v4047
        %v5559 = vpack.c.b16 %v4050, %v4049
        %v5560 = vpack.c.b16 %v4052, %v4051
        %v5561 = vpack.c.b16 %v4054, %v4053
        %v5562 = vpack.c.b16 %v4056, %v4055
        %v5563 = vpack.c.b16 %v4058, %v4057
        %v5564 = vpack.c.b16 %v4060, %v4059
        %v5565 = vpack.c.b16 %v4062, %v4061
        %v5566 = vpack.c.b16 %v4064, %v4063
        %v5567 = vpack.c.b16 %v4066, %v4065
        %v5568 = vpack.c.b16 %v4068, %v4067
        %v5569 = vpack.c.b16 %v4070, %v4069
        %v5570 = vpack.c.b16 %v4072, %v4071
        %v5571 = vpack.c.b16 %v4074, %v4073
        %v5572 = vpack.c.b16 %v4076, %v4075
        %v5573 = vpack.c.b16 %v4078, %v4077
        %v5574 = vpack.c.b16 %v4080, %v4079
        %v5575 = vpack.c.b16 %v4082, %v4081
        %v5576 = vpack.c.b16 %v4084, %v4083
        %v5577 = vpack.c.b16 %v4086, %v4085
        %v5578 = vpack.c.b16 %v4088, %v4087
        %v5579 = vpack.c.b16 %v4090, %v4089
        %v5580 = vpack.c.b16 %v4092, %v4091
        %v5581 = vpack.c.b16 %v4094, %v4093
        %v5582 = vpack.c.b16 %v4096, %v4095
        %v5583 = vpack.c.b16 %v4098, %v4097
        %v5584 = vpack.c.b16 %v4100, %v4099
        %v5585 = vpack.c.b16 %v4102, %v4101
        %v5586 = vpack.c.b16 %v4104, %v4103
        %v5587 = vpack.c.b16 %v4106, %v4105
        %v5588 = vpack.c.b16 %v4108, %v4107
        %v5589 = vpack.c.b16 %v4110, %v4109
        %v5590 = vpack.c.b16 %v4112, %v4111
        %v5591 = vpack.c.b16 %v4114, %v4113
        %v5592 = vpack.c.b16 %v4116, %v4115
        %v5593 = vpack.c.b16 %v4118, %v4117
        %v5594 = vpack.c.b16 %v4120, %v4119
        %v5595 = vpack.c.b16 %v4122, %v4121
        %v5596 = vpack.c.b16 %v4124, %v4123
        %v5597 = vpack.c.b16 %v4126, %v4125
        %v5598 = vpack.c.b16 %v4128, %v4127
        %v5599 = vpack.c.b16 %v4130, %v4129
        %v5600 = vpack.c.b16 %v4132, %v4131
        %v5601 = vpack.c.b16 %v4134, %v4133
        %v5602 = vpack.c.b16 %v4136, %v4135
        %v5603 = vpack.c.b16 %v4138, %v4137
        %v5604 = vpack.c.b16 %v4140, %v4139
        %v5605 = vpack.c.b16 %v4142, %v4141
        %v5606 = vpack.c.b16 %v4144, %v4143
        %v5607 = vpack.c.b16 %v4146, %v4145
        %v5608 = vpack.c.b16 %v4148, %v4147
        %v5609 = vpack.c.b16 %v4150, %v4149
        %v5610 = vpack.c.b16 %v4152, %v4151
        %v5611 = vpack.c.b16 %v4154, %v4153
        %v5612 = vpack.c.b16 %v4156, %v4155
        %v5613 = vpack.c.b16 %v4158, %v4157
        %v5614 = vpack.c.b16 %v4160, %v4159
        %v5615 = vpack.c.b16 %v4162, %v4161
        %v5616 = vpack.c.b16 %v4164, %v4163
        %v5617 = vpack.c.b16 %v4166, %v4165
        %v5618 = vpack.c.b16 %v4168, %v4167
        %v5619 = vpack.c.b16 %v4170, %v4169
        %v5620 = vpack.c.b16 %v4172, %v4171
        %v5621 = vpack.c.b16 %v4174, %v4173
        %v5622 = vpack.c.b16 %v4176, %v4175
        %v5623 = vpack.c.b16 %v4178, %v4177
        %v5624 = vpack.c.b16 %v4180, %v4179
        %v5625 = vpack.c.b16 %v4182, %v4181
        %v5626 = vpack.c.b16 %v4184, %v4183
        %v5627 = vpack.c.b16 %v4186, %v4185
        %v5628 = vpack.c.b16 %v4188, %v4187
        %v5629 = vpack.c.b16 %v4190, %v4189
        %v5630 = vpack.c.b16 %v4192, %v4191
        %v5631 = vpack.c.b16 %v4194, %v4193
        %v5632 = vpack.c.b16 %v4196, %v4195
        %v5633 = vpack.c.b16 %v4198, %v4197
        %v5634 = vpack.c.b16 %v4200, %v4199
        %v5635 = vpack.c.b16 %v4202, %v4201
        %v5636 = vpack.c.b16 %v4204, %v4203
        %v5637 = vpack.c.b16 %v4206, %v4205
        %v5638 = vpack.c.b16 %v4208, %v4207
        %v5639 = vpack.c.b16 %v4210, %v4209
        %v5640 = vpack.c.b16 %v4212, %v4211
        %v5641 = vpack.c.b16 %v4214, %v4213
        %v5642 = vpack.c.b16 %v4216, %v4215
        %v5643 = vpack.c.b16 %v4218, %v4217
        %v5644 = vpack.c.b16 %v4220, %v4219
        %v5645 = vpack.c.b16 %v4222, %v4221
        %v5646 = vpack.c.b16 %v4224, %v4223
        %v5647 = vpack.c.b16 %v4226, %v4225
        %v5648 = vpack.c.b16 %v4228, %v4227
        %v5649 = vpack.c.b16 %v4230, %v4229
        %v5650 = vpack.c.b16 %v4232, %v4231
        %v5651 = vpack.c.b16 %v4234, %v4233
        %v5652 = vpack.c.b16 %v4236, %v4235
        %v5653 = vpack.c.b16 %v4238, %v4237
        %v5654 = vpack.c.b16 %v4240, %v4239
        %v5655 = vpack.c.b16 %v4242, %v4241
        %v5656 = vpack.c.b16 %v4244, %v4243
        %v5657 = vpack.c.b16 %v4246, %v4245
        %v5658 = vpack.c.b16 %v4248, %v4247
        %v5659 = vpack.c.b16 %v4250, %v4249
        %v5660 = vpack.c.b16 %v4252, %v4251
        %v5661 = vpack.c.b16 %v4254, %v4253
        %v5662 = vpack.c.b16 %v4256, %v4255
        %v5663 = vpack.c.b16 %v4258, %v4257
        %v5664 = vpack.c.b16 %v4260, %v4259
        %v5665 = vpack.c.b16 %v4262, %v4261
        %v5666 = vpack.c.b16 %v4264, %v4263
        %v5667 = vpack.c.b16 %v4266, %v4265
        %v5668 = vpack.c.b16 %v4268, %v4267
        %v5669 = vpack.c.b16 %v4270, %v4269
        %v5670 = vpack.c.b16 %v4272, %v4271
        %v5671 = vpack.c.b16 %v4274, %v4273
        %v5672 = vpack.c.b16 %v4276, %v4275
        %v5673 = vpack.c.b16 %v4278, %v4277
        %v5674 = vpack.c.b16 %v4280, %v4279
        %v5675 = vpack.c.b16 %v4282, %v4281
        %v5676 = vpack.c.b16 %v4284, %v4283
        %v5677 = vpack.c.b16 %v4286, %v4285
        %v5678 = vpack.c.b16 %v4288, %v4287
        %v5679 = vpack.c.b16 %v4290, %v4289
        %v5680 = vpack.c.b16 %v4292, %v4291
        %v5681 = vpack.c.b16 %v4294, %v4293
        %v5682 = vpack.c.b16 %v4296, %v4295
        %v5683 = vpack.c.b16 %v4298, %v4297
        %v5684 = vpack.c.b16 %v4300, %v4299
        %v5685 = vpack.c.b16 %v4302, %v4301
        %v5686 = vpack.c.b16 %v4304, %v4303
        %v5687 = vpack.c.b16 %v4306, %v4305
        %v5688 = vpack.c.b16 %v4308, %v4307
        %v5689 = vpack.c.b16 %v4310, %v4309
        %v5690 = vpack.c.b16 %v4312, %v4311
        %v5691 = vpack.c.b16 %v4314, %v4313
        %v5692 = vpack.c.b16 %v4316, %v4315
        %v5693 = vpack.c.b16 %v4318, %v4317
        %v5694 = vpack.c.b16 %v4320, %v4319
        %v5695 = vpack.c.b16 %v4322, %v4321
        %v5696 = vpack.c.b16 %v4324, %v4323
        %v5697 = vpack.c.b16 %v4326, %v4325
        %v5698 = vpack.c.b16 %v4328, %v4327
        %v5699 = vpack.c.b16 %v4330, %v4329
        %v5700 = vpack.c.b16 %v4332, %v4331
        %v5701 = vpack.c.b16 %v4334, %v4333
        %v5702 = vpack.c.b16 %v4336, %v4335
        %v5703 = vpack.c.b16 %v4338, %v4337
        %v5704 = vpack.c.b16 %v4340, %v4339
        %v5705 = vpack.c.b16 %v4342, %v4341
        %v5706 = vpack.c.b16 %v4344, %v4343
        %v5707 = vpack.c.b16 %v4346, %v4345
        %v5708 = vpack.c.b16 %v4348, %v4347
        %v5709 = vpack.c.b16 %v4350, %v4349
        %v5710 = vpack.c.b16 %v4352, %v4351
        %v5711 = vpack.c.b16 %v4354, %v4353
        %v5712 = vpack.c.b16 %v4356, %v4355
        %v5713 = vpack.c.b16 %v4358, %v4357
        %v5714 = vpack.c.b16 %v4360, %v4359
        %v5715 = vpack.c.b16 %v4362, %v4361
        %v5716 = vpack.c.b16 %v4364, %v4363
        %v5717 = vpack.c.b16 %v4366, %v4365
        %v5718 = vpack.c.b16 %v4368, %v4367
        %v5719 = vpack.c.b16 %v4370, %v4369
        %v5720 = vpack.c.b16 %v4372, %v4371
        %v5721 = vpack.c.b16 %v4374, %v4373
        %v5722 = vpack.c.b16 %v4376, %v4375
        %v5723 = vpack.c.b16 %v4378, %v4377
        %v5724 = vpack.c.b16 %v4380, %v4379
        %v5725 = vpack.c.b16 %v4382, %v4381
        %v5726 = vpack.c.b16 %v4384, %v4383
        %v5727 = vpack.c.b16 %v4386, %v4385
        %v5728 = vpack.c.b16 %v4388, %v4387
        %v5729 = vpack.c.b16 %v4390, %v4389
        %v5730 = vpack.c.b16 %v4392, %v4391
        %v5731 = vpack.c.b16 %v4394, %v4393
        %v5732 = vpack.c.b16 %v4396, %v4395
        %v5733 = vpack.c.b16 %v4398, %v4397
        %v5734 = vpack.c.b16 %v4400, %v4399
        %v5735 = vpack.c.b16 %v4402, %v4401
        %v5736 = vpack.c.b16 %v4404, %v4403
        %v5737 = vpack.c.b16 %v4406, %v4405
        %v5738 = vpack.c.b16 %v4408, %v4407
        %v5739 = vpack.c.b16 %v4410, %v4409
        %v5740 = vpack.c.b16 %v4412, %v4411
        %v5741 = vpack.c.b16 %v4414, %v4413
        %v5742 = vpack.c.b16 %v4416, %v4415
        %v5743 = vpack.c.b16 %v4418, %v4417
        %v5744 = vpack.c.b16 %v4420, %v4419
        %v5745 = vpack.c.b16 %v4422, %v4421
        %v5746 = vpack.c.b16 %v4424, %v4423
        %v5747 = vpack.c.b16 %v4426, %v4425
        %v5748 = vpack.c.b16 %v4428, %v4427
        %v5749 = vpack.c.b16 %v4430, %v4429
        %v5750 = vpack.c.b16 %v4432, %v4431
        %v5751 = vpack.c.b16 %v4434, %v4433
        %v5752 = vpack.c.b16 %v4436, %v4435
        %v5753 = vpack.c.b16 %v4438, %v4437
        %v5754 = vpack.c.b16 %v4440, %v4439
        %v5755 = vpack.c.b16 %v4442, %v4441
        %v5756 = vpack.c.b16 %v4444, %v4443
        %v5757 = vpack.c.b16 %v4446, %v4445
        %v5758 = vpack.c.b16 %v4448, %v4447
        %v5759 = vpack.c.b16 %v4450, %v4449
        %v5760 = vpack.c.b16 %v4452, %v4451
        %v5761 = vpack.c.b16 %v4454, %v4453
        %v5762 = vpack.c.b16 %v4456, %v4455
        %v5763 = vpack.c.b16 %v4458, %v4457
        %v5764 = vpack.c.b16 %v4460, %v4459
        %v5765 = vpack.c.b16 %v4462, %v4461
        %v5766 = vpack.c.b16 %v4464, %v4463
        %v5767 = vpack.c.b16 %v4466, %v4465
        %v5768 = vpack.c.b16 %v4468, %v4467
        %v5769 = vpack.c.b16 %v4470, %v4469
        %v5770 = vpack.c.b16 %v4472, %v4471
        %v5771 = vpack.c.b16 %v4474, %v4473
        %v5772 = vpack.c.b16 %v4476, %v4475
        %v5773 = vpack.c.b16 %v4478, %v4477
        %v5774 = vpack.c.b16 %v4480, %v4479
        %v5775 = vpack.c.b16 %v4482, %v4481
        %v5776 = vpack.c.b16 %v4484, %v4483
        %v5777 = vpack.c.b16 %v4486, %v4485
        %v5778 = vpack.c.b16 %v4488, %v4487
        %v5779 = vpack.c.b16 %v4490, %v4489
        %v5780 = vpack.c.b16 %v4492, %v4491
        %v5781 = vpack.c.b16 %v4494, %v4493
        %v5782 = vpack.c.b16 %v4496, %v4495
        %v5783 = vpack.c.b16 %v4498, %v4497
        %v5784 = vpack.c.b16 %v4500, %v4499
        %v5785 = vpack.c.b16 %v4502, %v4501
        %v5786 = vpack.c.b16 %v4504, %v4503
        %v5787 = vpack.c.b16 %v4506, %v4505
        %v5788 = vpack.c.b16 %v4508, %v4507
        %v5789 = vpack.c.b16 %v4510, %v4509
        %v5790 = vpack.c.b16 %v4512, %v4511
        %v5791 = vpack.c.b16 %v4514, %v4513
        %v5792 = vpack.c.b16 %v4516, %v4515
        %v5793 = vpack.c.b16 %v4518, %v4517
        %v5794 = vpack.c.b16 %v4520, %v4519
        %v5795 = vpack.c.b16 %v4522, %v4521
        %v5796 = vpack.c.b16 %v4524, %v4523
        %v5797 = vpack.c.b16 %v4526, %v4525
        %v5798 = vpack.c.b16 %v4528, %v4527
        %v5799 = vpack.c.b16 %v4530, %v4529
        %v5800 = vpack.c.b16 %v4532, %v4531
        %v5801 = vpack.c.b16 %v4534, %v4533
        %v5802 = vpack.c.b16 %v4536, %v4535
        %v5803 = vpack.c.b16 %v4538, %v4537
        %v5804 = vpack.c.b16 %v4540, %v4539
        %v5805 = vpack.c.b16 %v4542, %v4541
        %v5806 = vpack.c.b16 %v4544, %v4543
        %v5807 = vpack.c.b16 %v4546, %v4545
        %v5808 = vpack.c.b16 %v4548, %v4547
        %v5809 = vpack.c.b16 %v4550, %v4549
        %v5810 = vpack.c.b16 %v4552, %v4551
        %v5811 = vpack.c.b16 %v4554, %v4553
        %v5812 = vpack.c.b16 %v4556, %v4555
        %v5813 = vpack.c.b16 %v4558, %v4557
        %v5814 = vpack.c.b16 %v4560, %v4559
        %v5815 = vpack.c.b16 %v4562, %v4561
        %v5816 = vpack.c.b16 %v4564, %v4563
        %v5817 = vpack.c.b16 %v4566, %v4565
        %v5818 = vpack.c.b16 %v4568, %v4567
        %v5819 = vpack.c.b16 %v4570, %v4569
        %v5820 = vpack.c.b16 %v4572, %v4571
        %v5821 = vpack.c.b16 %v4574, %v4573
        %v5822 = vpack.c.b16 %v4576, %v4575
        %v5823 = vpack.c.b16 %v4578, %v4577
        %v5824 = vpack.c.b16 %v4580, %v4579
        %v5825 = vpack.c.b16 %v4582, %v4581
        %v5826 = vpack.c.b16 %v4584, %v4583
        %v5827 = vpack.c.b16 %v4586, %v4585
        %v5828 = vpack.c.b16 %v4588, %v4587
        %v5829 = vpack.c.b16 %v4590, %v4589
        %v5830 = vpack.c.b16 %v4592, %v4591
        %v5831 = vpack.c.b16 %v4594, %v4593
        %v5832 = vpack.c.b16 %v4596, %v4595
        %v5833 = vpack.c.b16 %v4598, %v4597
        %v5834 = vpack.c.b16 %v4600, %v4599
        %v5835 = vpack.c.b16 %v4602, %v4601
        %v5836 = vpack.c.b16 %v4604, %v4603
        %v5837 = vpack.c.b16 %v4606, %v4605
        %v5838 = vpack.c.b16 %v4608, %v4607
        %v5839 = vpack.c.b16 %v4610, %v4609
        %v5840 = vpack.c.b16 %v4612, %v4611
        %v5841 = vpack.c.b16 %v4614, %v4613
        %v5842 = vpack.c.b16 %v4616, %v4615
        %v5843 = vpack.c.b16 %v4618, %v4617
        %v5844 = vpack.c.b16 %v4620, %v4619
        %v5845 = vpack.c.b16 %v4622, %v4621
        %v5846 = vpack.c.b16 %v4624, %v4623
        %v5847 = vpack.c.b16 %v4626, %v4625
        %v5848 = vpack.c.b16 %v4628, %v4627
        %v5849 = vpack.c.b16 %v4630, %v4629
        %v5850 = vpack.c.b16 %v4632, %v4631
        %v5851 = vpack.c.b16 %v4634, %v4633
        %v5852 = vpack.c.b16 %v4636, %v4635
        %v5853 = vpack.c.b16 %v4638, %v4637
        %v5854 = vpack.c.b16 %v4640, %v4639
        %v5855 = vpack.c.b16 %v4642, %v4641
        %v5856 = vpack.c.b16 %v4644, %v4643
        %v5857 = vpack.c.b16 %v4646, %v4645
        %v5858 = vpack.c.b16 %v4648, %v4647
        %v5859 = vpack.c.b16 %v4650, %v4649
        %v5860 = vpack.c.b16 %v4652, %v4651
        %v5861 = vpack.c.b16 %v4654, %v4653
        %v5862 = vpack.c.b16 %v4656, %v4655
        %v5863 = vpack.c.b16 %v4658, %v4657
        %v5864 = vpack.c.b16 %v4660, %v4659
        %v5865 = vpack.c.b16 %v4662, %v4661
        %v5866 = vpack.c.b16 %v4664, %v4663
        %v5867 = vpack.c.b16 %v4666, %v4665
        %v5868 = vpack.c.b16 %v4668, %v4667
        %v5869 = vpack.c.b16 %v4670, %v4669
        %v5870 = vpack.c.b16 %v4672, %v4671
        %v5871 = vpack.c.b16 %v4674, %v4673
        %v5872 = vpack.c.b16 %v4676, %v4675
        %v5873 = vpack.c.b16 %v4678, %v4677
        %v5874 = vpack.c.b16 %v4680, %v4679
        %v5875 = vpack.c.b16 %v4682, %v4681
        %v5876 = vpack.c.b16 %v4684, %v4683
        %v5877 = vpack.c.b16 %v4686, %v4685
        %v5878 = vpack.c.b16 %v4688, %v4687
        %v5879 = vpack.c.b16 %v4690, %v4689
        %v5880 = vpack.c.b16 %v4692, %v4691
        %v5881 = vpack.c.b16 %v4694, %v4693
        %v5882 = vpack.c.b16 %v4696, %v4695
        %v5883 = vpack.c.b16 %v4698, %v4697
        %v5884 = vpack.c.b16 %v4700, %v4699
        %v5885 = vpack.c.b16 %v4702, %v4701
        %v5886 = vpack.c.b16 %v4704, %v4703
        %v5887 = vpack.c.b16 %v4706, %v4705
        %v5888 = vpack.c.b16 %v4708, %v4707
        %v5889 = vpack.c.b16 %v4710, %v4709
        %v5890 = vpack.c.b16 %v4712, %v4711
        %v5891 = vpack.c.b16 %v4714, %v4713
        %v5892 = vpack.c.b16 %v4716, %v4715
        %v5893 = vpack.c.b16 %v4718, %v4717
        %v5894 = vpack.c.b16 %v4720, %v4719
        %v5895 = vpack.c.b16 %v4722, %v4721
        %v5896 = vpack.c.b16 %v4724, %v4723
        %v5897 = vpack.c.b16 %v4726, %v4725
        %v5898 = vpack.c.b16 %v4728, %v4727
        %v5899 = vpack.c.b16 %v4730, %v4729
        %v5900 = vpack.c.b16 %v4732, %v4731
        %v5901 = vpack.c.b16 %v4734, %v4733
        %v5902 = vpack.c.b16 %v4736, %v4735
        %v5903 = vpack.c.b16 %v4738, %v4737
        %v5904 = vpack.c.b16 %v4740, %v4739
        %v5905 = vpack.c.b16 %v4742, %v4741
        %v5906 = vpack.c.b16 %v4744, %v4743
        %v5907 = vpack.c.b16 %v4746, %v4745
        %v5908 = vpack.c.b16 %v4748, %v4747
        %v5909 = vpack.c.b16 %v4750, %v4749
        %v5910 = vpack.c.b16 %v4752, %v4751
        %v5911 = vpack.c.b16 %v4754, %v4753
        %v5912 = vpack.c.b16 %v4756, %v4755
        %v5913 = vpack.c.b16 %v4758, %v4757
        %v5914 = vpack.c.b16 %v4760, %v4759
        %v5915 = vpack.c.b16 %v4762, %v4761
        %v5916 = vpack.c.b16 %v4764, %v4763
        %v5917 = vpack.c.b16 %v4766, %v4765
        %v5918 = vpack.c.b16 %v4768, %v4767
        %v5919 = vpack.c.b16 %v4770, %v4769
        %v5920 = vpack.c.b16 %v4772, %v4771
        %v5921 = vpack.c.b16 %v4774, %v4773
        %v5922 = vpack.c.b16 %v4776, %v4775
        %v5923 = vpack.c.b16 %v4778, %v4777
        %v5924 = vpack.c.b16 %v4780, %v4779
        %v5925 = vpack.c.b16 %v4782, %v4781
        %v5926 = vpack.c.b16 %v4784, %v4783
        %v5927 = vpack.c.b16 %v4786, %v4785
        %v5928 = vpack.c.b16 %v4788, %v4787
        %v5929 = vpack.c.b16 %v4790, %v4789
        %v5930 = vpack.c.b16 %v4792, %v4791
        %v5931 = vpack.c.b16 %v4794, %v4793
        %v5932 = vpack.c.b16 %v4796, %v4795
        %v5933 = vpack.c.b16 %v4798, %v4797
        %v5934 = vpack.c.b16 %v4800, %v4799
        %v5935 = vpack.c.b16 %v4802, %v4801
        %v5936 = vpack.c.b16 %v4804, %v4803
        %v5937 = vpack.c.b16 %v4806, %v4805
        %v5938 = vpack.c.b16 %v4808, %v4807
        %v5939 = vpack.c.b16 %v4810, %v4809
        %v5940 = vpack.c.b16 %v4812, %v4811
        %v5941 = vpack.c.b16 %v4814, %v4813
        %v5942 = vpack.c.b16 %v4816, %v4815
        %v5943 = vpack.c.b16 %v4818, %v4817
        %v5944 = vpack.c.b16 %v4820, %v4819
        %v5945 = vpack.c.b16 %v4822, %v4821
        %v5946 = vpack.c.b16 %v4824, %v4823
        %v5947 = vpack.c.b16 %v4826, %v4825
        %v5948 = vpack.c.b16 %v4828, %v4827
        %v5949 = vpack.c.b16 %v4830, %v4829
        %v5950 = vpack.c.b16 %v4832, %v4831
        %v5951 = vpack.c.b16 %v4834, %v4833
        %v5952 = vpack.c.b16 %v4836, %v4835
        %v5953 = vpack.c.b16 %v4838, %v4837
        %v5954 = vpack.c.b16 %v4840, %v4839
        %v5955 = vpack.c.b16 %v4842, %v4841
        %v5956 = vpack.c.b16 %v4844, %v4843
        %v5957 = vpack.c.b16 %v4846, %v4845
        %v5958 = vpack.c.b16 %v4848, %v4847
        %v5959 = vpack.c.b16 %v4850, %v4849
        %v5960 = vpack.c.b16 %v4852, %v4851
        %v5961 = vpack.c.b16 %v4854, %v4853
        %v5962 = vpack.c.b16 %v4856, %v4855
        %v5963 = vpack.c.b16 %v4858, %v4857
        %v5964 = vpack.c.b16 %v4860, %v4859
        %v5965 = vpack.c.b16 %v4862, %v4861
        %v5966 = vpack.c.b16 %v4864, %v4863
        %v5967 = vpack.c.b16 %v4866, %v4865
        %v5968 = vpack.c.b16 %v4868, %v4867
        %v5969 = vpack.c.b16 %v4870, %v4869
        %v5970 = vpack.c.b16 %v4872, %v4871
        %v5971 = vpack.c.b16 %v4874, %v4873
        %v5972 = vpack.c.b16 %v4876, %v4875
        %v5973 = vpack.c.b16 %v4878, %v4877
        %v5974 = vpack.c.b16 %v4880, %v4879
        %v5975 = vpack.c.b16 %v4882, %v4881
        %v5976 = vpack.c.b16 %v4884, %v4883
        %v5977 = vpack.c.b16 %v4886, %v4885
        %v5978 = vpack.c.b16 %v4888, %v4887
        %v5979 = vpack.c.b16 %v4890, %v4889
        %v5980 = vpack.c.b16 %v4892, %v4891
        %v5981 = vpack.c.b16 %v4894, %v4893
        %v5982 = vpack.c.b16 %v4896, %v4895
        %v5983 = vpack.c.b16 %v4898, %v4897
        %v5984 = vpack.c.b16 %v4900, %v4899
        %v5985 = vpack.c.b16 %v4902, %v4901
        %v5986 = vpack.c.b16 %v4904, %v4903
        %v5987 = vpack.c.b16 %v4906, %v4905
        %v5988 = vpack.c.b16 %v4908, %v4907
        %v5989 = vpack.c.b16 %v4910, %v4909
        %v5990 = vpack.c.b16 %v4912, %v4911
        %v5991 = vpack.c.b16 %v4914, %v4913
        %v5992 = vpack.c.b16 %v4916, %v4915
        %v5993 = vpack.c.b16 %v4918, %v4917
        %v5994 = vpack.c.b16 %v4920, %v4919
        %v5995 = vpack.c.b16 %v4922, %v4921
        %v5996 = vpack.c.b16 %v4924, %v4923
        %v5997 = vpack.c.b16 %v4926, %v4925
        %v5998 = vpack.c.b16 %v4928, %v4927
        %v5999 = vpack.c.b16 %v4930, %v4929
        %v6000 = vpack.c.b16 %v4932, %v4931
        %v6001 = vpack.c.b16 %v4934, %v4933
        %v6002 = vpack.c.b16 %v4936, %v4935
        %v6003 = vpack.c.b16 %v4938, %v4937
        %v6004 = vpack.c.b16 %v4940, %v4939
        %v6005 = vpack.c.b16 %v4942, %v4941
        %v6006 = vpack.c.b16 %v4944, %v4943
        %v6007 = vpack.c.b16 %v4946, %v4945
        %v6008 = vpack.c.b16 %v4948, %v4947
        %v6009 = vpack.c.b16 %v4950, %v4949
        %v6010 = vpack.c.b16 %v4952, %v4951
        %v6011 = vpack.c.b16 %v4954, %v4953
        %v6012 = vpack.c.b16 %v4956, %v4955
        %v6013 = vpack.c.b16 %v4958, %v4957
        %v6014 = vpack.c.b16 %v4960, %v4959
        %v6015 = vpack.c.b16 %v4962, %v4961
        %v6016 = vpack.c.b16 %v4964, %v4963
        %v6017 = vpack.c.b16 %v4966, %v4965
        %v6018 = vpack.c.b16 %v4968, %v4967
        %v6019 = vpack.c.b16 %v4970, %v4969
        %v6020 = vpack.c.b16 %v4972, %v4971
        %v6021 = vpack.c.b16 %v4974, %v4973
        %v6022 = vpack.c.b16 %v4976, %v4975
        %v6023 = vpack.c.b16 %v4978, %v4977
        %v6024 = vpack.c.b16 %v4980, %v4979
        %v6025 = vpack.c.b16 %v4982, %v4981
        %v6026 = vpack.c.b16 %v4984, %v4983
        %v6027 = vpack.c.b16 %v4986, %v4985
        %v6028 = vpack.c.b16 %v4988, %v4987
        %v6029 = vpack.c.b16 %v4990, %v4989
        %v6030 = vpack.c.b16 %v4992, %v4991
        %v6031 = vpack.c.b16 %v4994, %v4993
        %v6032 = vpack.c.b16 %v4996, %v4995
        %v6033 = vpack.c.b16 %v4998, %v4997
        %v6034 = vpack.c.b16 %v5000, %v4999
        %v6035 = vpack.c.b16 %v5002, %v5001
        %v6036 = vpack.c.b16 %v5004, %v5003
        %v6037 = vpack.c.b16 %v5006, %v5005
        %v6038 = vpack.c.b16 %v5008, %v5007
        %v6039 = vpack.c.b16 %v5010, %v5009
        %v6040 = vpack.c.b16 %v5012, %v5011
        %v6041 = vpack.c.b16 %v5014, %v5013
        %v6042 = vpack.c.b16 %v5016, %v5015
        %v6043 = vpack.c.b16 %v5018, %v5017
        %v6044 = vpack.c.b16 %v5020, %v5019
        %v6045 = vpack.c.b16 %v5022, %v5021
        %v6046 = vpack.c.b16 %v5024, %v5023
        %v6047 = vpack.c.b16 %v5026, %v5025
        %v6048 = vpack.c.b16 %v5028, %v5027
        %v6049 = vpack.c.b16 %v5030, %v5029
        %v6050 = vpack.c.b16 %v5032, %v5031
        %v6051 = vpack.c.b16 %v5034, %v5033
        %v6052 = vpack.c.b16 %v5036, %v5035
        %v6053 = vpack.c.b16 %v5038, %v5037
        %v6054 = vpack.c.b16 %v5040, %v5039
        %v6055 = vpack.c.b16 %v5042, %v5041
        %v6056 = vpack.c.b16 %v5044, %v5043
        %v6057 = vpack.c.b16 %v5046, %v5045
        %v6058 = vpack.c.b16 %v5048, %v5047
        %v6059 = vpack.c.b16 %v5050, %v5049
        %v6060 = vpack.c.b16 %v5052, %v5051
        %v6061 = vpack.c.b16 %v5054, %v5053
        %v6062 = vpack.c.b16 %v5056, %v5055
        %v6063 = vpack.c.b16 %v5058, %v5057
        %v6064 = vpack.c.b16 %v5060, %v5059
        %v6065 = vpack.c.b16 %v5062, %v5061
        %v6066 = vpack.c.b16 %v5064, %v5063
        %v6067 = vpack.c.b16 %v5066, %v5065
        %v6068 = vpack.c.b16 %v5068, %v5067
        %v6069 = vpack.c.b16 %v5070, %v5069
        %v6070 = vpack.c.b16 %v5072, %v5071
        %v6071 = vpack.c.b16 %v5074, %v5073
        %v6072 = vpack.c.b16 %v5076, %v5075
        %v6073 = vpack.c.b16 %v5078, %v5077
        %v6074 = vpack.c.b16 %v5080, %v5079
        %v6075 = vpack.c.b16 %v5082, %v5081
        %v6076 = vpack.c.b16 %v5084, %v5083
        %v6077 = vpack.c.b16 %v5086, %v5085
        %v6078 = vpack.c.b16 %v5088, %v5087
        %v6079 = vpack.c.b16 %v5090, %v5089
        %v6080 = vpack.c.b16 %v5092, %v5091
        %v6081 = vpack.c.b16 %v5094, %v5093
        %v6082 = vpack.c.b16 %v5096, %v5095
        %v6083 = vpack.c.b16 %v5098, %v5097
        %v6084 = vpack.c.b16 %v5100, %v5099
        %v6085 = vpack.c.b16 %v5102, %v5101
        %v6086 = vpack.c.b16 %v5104, %v5103
        %v6087 = vpack.c.b16 %v5106, %v5105
        %v6088 = vpack.c.b16 %v5108, %v5107
        %v6089 = vpack.c.b16 %v5110, %v5109
        %v6090 = vpack.c.b16 %v5112, %v5111
        %v6091 = vpack.c.b16 %v5114, %v5113
        %v6092 = vpack.c.b16 %v5116, %v5115
        %v6093 = vpack.c.b16 %v5118, %v5117
        %v6094 = vpack.c.b16 %v5120, %v5119
        %v6095 = vpack.c.b16 %v5122, %v5121
        %v6096 = vpack.c.b16 %v5124, %v5123
        %v6097 = vpack.c.b16 %v5126, %v5125
        %v6098 = vpack.c.b16 %v5128, %v5127
        %v6099 = vpack.c.b16 %v5130, %v5129
        %v6100 = vpack.c.b16 %v5132, %v5131
        %v6101 = vpack.c.b16 %v5134, %v5133
        %v6102 = vpack.c.b16 %v5136, %v5135
        %v6103 = vpack.c.b16 %v5138, %v5137
        %v6104 = vpack.c.b16 %v5140, %v5139
        %v6105 = vpack.c.b16 %v5142, %v5141
        %v6106 = vpack.c.b16 %v5144, %v5143
        %v6107 = vpack.c.b16 %v5146, %v5145
        %v6108 = vpack.c.b16 %v5148, %v5147
        %v6109 = vpack.c.b16 %v5150, %v5149
        %v6110 = vpack.c.b16 %v5152, %v5151
        %v6111 = vpack.c.b16 %v5154, %v5153
        %v6112 = vpack.c.b16 %v5156, %v5155
        %v6113 = vpack.c.b16 %v5158, %v5157
        %v6114 = vpack.c.b16 %v5160, %v5159
        %v6115 = vpack.c.b16 %v5162, %v5161
        %v6116 = vpack.c.b16 %v5164, %v5163
        %v6117 = vpack.c.b16 %v5166, %v5165
        %v6118 = vpack.c.b16 %v5168, %v5167
        %v6119 = vpack.c.b16 %v5170, %v5169
        %v6120 = vpack.c.b16 %v5172, %v5171
        %v6121 = vpack.c.b16 %v5174, %v5173
        %v6122 = vpack.c.b16 %v5176, %v5175
        %v6123 = vpack.c.b16 %v5178, %v5177
        %v6124 = vpack.c.b16 %v5180, %v5179
        %v6125 = vpack.c.b16 %v5182, %v5181
        %v6126 = vpack.c.b16 %v5184, %v5183
        %v6127 = vpack.c.b16 %v5186, %v5185
        %v6128 = vpack.c.b16 %v5188, %v5187
        %v6129 = vpack.c.b16 %v5190, %v5189
        %v6130 = vpack.c.b16 %v5192, %v5191
        %v6131 = vpack.c.b16 %v5194, %v5193
        %v6132 = vpack.c.b16 %v5196, %v5195
        %v6133 = vpack.c.b16 %v5198, %v5197
        %v6134 = vpack.c.b16 %v5200, %v5199
        %v6135 = vpack.c.b16 %v5202, %v5201
        %v6136 = vpack.c.b16 %v5204, %v5203
        %v6137 = vpack.c.b16 %v5206, %v5205
        %v6138 = vpack.c.b16 %v5208, %v5207
        %v6139 = vpack.c.b16 %v5210, %v5209
        %v6140 = vpack.c.b16 %v5212, %v5211
        %v6141 = vpack.c.b16 %v5214, %v5213
        %v6142 = vpack.c.b16 %v5216, %v5215
        %v6143 = vpack.c.b16 %v5218, %v5217
        %v6144 = vpack.c.b16 %v5220, %v5219
        %v6145 = vpack.c.b16 %v5222, %v5221
        %v6146 = vpack.c.b16 %v5224, %v5223
        %v6147 = vpack.c.b16 %v5226, %v5225
        %v6148 = vpack.c.b16 %v5228, %v5227
        %v6149 = vpack.c.b16 %v5230, %v5229
        %v6150 = vpack.c.b16 %v5232, %v5231
        %v6151 = vpack.c.b16 %v5234, %v5233
        %v6152 = vpack.c.b16 %v5236, %v5235
        %v6153 = vpack.c.b16 %v5238, %v5237
        %v6154 = vpack.c.b16 %v5240, %v5239
        %v6155 = vpack.c.b16 %v5242, %v5241
        %v6156 = vpack.c.b16 %v5244, %v5243
        %v6157 = vpack.c.b16 %v5246, %v5245
        %v6158 = vpack.c.b16 %v5248, %v5247
        %v6159 = vpack.c.b16 %v5250, %v5249
        %v6160 = vpack.c.b16 %v5252, %v5251
        %v6161 = vpack.c.b16 %v5254, %v5253
        %v6162 = vpack.c.b16 %v5256, %v5255
        %v6163 = vpack.c.b16 %v5258, %v5257
        %v6164 = vpack.c.b16 %v5260, %v5259
        %v6165 = vpack.c.b16 %v5262, %v5261
        %v6166 = vpack.c.b16 %v5264, %v5263
        %v6167 = vpack.c.b16 %v5266, %v5265
        %v6168 = vpack.c.b16 %v5268, %v5267
        %v6169 = vpack.c.b16 %v5270, %v5269
        %v6170 = vpack.c.b16 %v5272, %v5271
        %v6171 = vpack.c.b16 %v5274, %v5273
        %v6172 = vpack.c.b16 %v5276, %v5275
        %v6173 = vpack.c.b16 %v5278, %v5277
        %v6174 = vpack.c.b16 %v5280, %v5279
        %v6175 = vpack.c.b16 %v5282, %v5281
        %v6176 = vpack.c.b16 %v5284, %v5283
        %v6177 = vpack.c.b16 %v5286, %v5285
        %v6178 = vpack.c.b16 %v5288, %v5287
        %v6179 = vpack.c.b16 %v5290, %v5289
        %v6180 = vpack.c.b16 %v5292, %v5291
        %v6181 = vpack.c.b16 %v5294, %v5293
        %v6182 = vpack.c.b16 %v5296, %v5295
        %v6183 = vpack.c.b16 %v5298, %v5297
        %v6184 = vpack.c.b16 %v5300, %v5299
        %v6185 = vpack.c.b16 %v5302, %v5301
        %v6186 = vpack.c.b16 %v5304, %v5303
        %v6187 = vpack.c.b16 %v5306, %v5305
        %v6188 = vpack.c.b16 %v5308, %v5307
        %v6189 = vpack.c.b16 %v5310, %v5309
        %v6190 = vpack.c.b16 %v5312, %v5311
        %v6191 = vpack.c.b16 %v5314, %v5313
        %v6192 = vpack.c.b16 %v5316, %v5315
        %v6193 = vpack.c.b16 %v5318, %v5317
        %v6194 = vpack.c.b16 %v5320, %v5319
        %v6195 = vpack.c.b16 %v5322, %v5321
        %v6196 = vpack.c.b16 %v5324, %v5323
        %v6197 = vpack.c.b16 %v5326, %v5325
        %v6198 = vpack.c.b16 %v5328, %v5327
        %v6199 = vpack.c.b16 %v5330, %v5329
        %v6200 = vpack.c.b16 %v5332, %v5331
        %v6201 = vpack.c.b16 %v5334, %v5333
        %v6202 = vpack.c.b16 %v5336, %v5335
        %v6203 = vpack.c.b16 %v5338, %v5337
        %v6204 = vpack.c.b16 %v5340, %v5339
        %v6205 = vpack.c.b16 %v5342, %v5341
        %v6206 = vpack.c.b16 %v5344, %v5343
        %v6207 = vpack.c.b16 %v5346, %v5345
        %v6208 = vpack.c.b16 %v5348, %v5347
        %v6209 = vpack.c.b16 %v5350, %v5349
        %v6210 = vpack.c.b16 %v5352, %v5351
        %v6211 = vpack.c.b16 %v5354, %v5353
        %v6212 = vpack.c.b16 %v5356, %v5355
        %v6213 = vpack.c.b16 %v5358, %v5357
        %v6214 = vpack.c.b16 %v5360, %v5359
        %v6215 = vpack.c.b16 %v5362, %v5361
        %v6216 = vpack.c.b16 %v5364, %v5363
        %v6217 = vpack.c.b16 %v5366, %v5365
        %v6218 = vpack.c.b16 %v5368, %v5367
        %v6219 = vpack.c.b16 %v5370, %v5369
        %v6220 = vpack.c.b16 %v5372, %v5371
        %v6221 = vpack.c.b16 %v5374, %v5373
        %v6222 = vpack.c.b16 %v5376, %v5375
        %v6223 = vpack.c.b16 %v5378, %v5377
        %v6224 = vpack.c.b16 %v5380, %v5379
        %v6225 = vpack.c.b16 %v5382, %v5381
        %v6226 = vpack.c.b16 %v5384, %v5383
        %v6227 = vpack.c.b16 %v5386, %v5385
        %v6228 = vpack.c.b16 %v5388, %v5387
        %v6229 = vpack.c.b16 %v5390, %v5389
        %v6230 = vpack.c.b16 %v5392, %v5391
        %v6231 = vpack.c.b16 %v5394, %v5393
        %v6232 = vpack.c.b16 %v5396, %v5395
        %v6233 = vpack.c.b16 %v5398, %v5397
        %v6234 = vpack.c.b16 %v5400, %v5399
        %v6235 = vpack.c.b16 %v5402, %v5401
        %v6236 = vpack.c.b16 %v5404, %v5403
        %v6237 = vpack.c.b16 %v5406, %v5405
        %v6238 = vpack.c.b16 %v5408, %v5407
        %v6239 = vpack.c.b16 %v5410, %v5409
        %v6240 = vpack.c.b16 %v5412, %v5411
        %v6241 = vpack.c.b16 %v5414, %v5413
        %v6242 = vpack.c.b16 %v5416, %v5415
        %v6243 = vpack.c.b16 %v5418, %v5417
        %v6244 = vpack.c.b16 %v5420, %v5419
        %v6245 = vpack.c.b16 %v5422, %v5421
        %v6246 = vpack.c.b16 %v5424, %v5423
        %v6247 = vpack.c.b16 %v5426, %v5425
        %v6248 = vpack.c.b16 %v5428, %v5427
        %v6249 = vpack.c.b16 %v5430, %v5429
        %v6250 = vpack.c.b16 %v5432, %v5431
        %v6251 = vpack.c.b16 %v5434, %v5433
        %v6252 = vpack.c.b16 %v5436, %v5435
        %v6253 = vpack.c.b16 %v5438, %v5437
        %v6254 = vpack.c.b16 %v5440, %v5439
        %v6255 = vpack.c.b16 %v5442, %v5441
        %v6256 = vpack.c.b16 %v5444, %v5443
        %v6257 = vpack.c.b16 %v5446, %v5445
        %v6258 = vpack.c.b16 %v5448, %v5447
        %v6259 = vpack.c.b16 %v5450, %v5449
        %v6260 = vpack.c.b16 %v5452, %v5451
        %v6261 = vpack.c.b16 %v5454, %v5453
        %v6262 = vpack.c.b16 %v5456, %v5455
        %v6263 = vpack.c.b16 %v5458, %v5457
        %v6264 = vpack.c.b16 %v5460, %v5459
        %v6265 = vpack.c.b16 %v5462, %v5461
        %v6266 = vpack.c.b16 %v5464, %v5463
        %v6267 = vpack.c.b16 %v5466, %v5465
        %v6268 = vpack.c.b16 %v5468, %v5467
        %v6269 = vpack.c.b16 %v5470, %v5469
        %v6270 = vpack.c.b16 %v5472, %v5471
        %v6271 = vpack.c.b16 %v5474, %v5473
        %v6272 = vpack.c.b16 %v5476, %v5475
        %v6273 = vpack.c.b16 %v5478, %v5477
        %v6274 = vpack.c.b16 %v5480, %v5479
        %v6275 = vpack.c.b16 %v5482, %v5481
        %v6276 = vpack.c.b16 %v5484, %v5483
        %v6277 = vpack.c.b16 %v5486, %v5485
        %v6278 = vpack.c.b16 %v5488, %v5487
        %v6279 = vpack.c.b16 %v5490, %v5489
        %v6280 = vpack.c.b16 %v5492, %v5491
        %v6281 = vpack.c.b16 %v5494, %v5493
        %v6282 = vpack.c.b16 %v5496, %v5495
        %v6283 = vpack.c.b16 %v5498, %v5497
        %v6284 = vpack.c.b16 %v5500, %v5499
        %v6285 = vpack.c.b16 %v5502, %v5501
        %v6286 = vpack.c.b16 %v5504, %v5503
        %v6287 = vpack.c.b16 %v5506, %v5505
        %v6288 = vpack.c.b16 %v5508, %v5507
        %v6289 = vpack.c.b16 %v5510, %v5509
        %v6290 = vpack.c.b16 %v5512, %v5511
        %v6291 = vpack.c.b16 %v5514, %v5513
        %v6292 = vpack.c.b16 %v5516, %v5515
        %v6293 = vpack.c.b16 %v5518, %v5517
        %v6294 = vpack.c.b16 %v5520, %v5519
        %v6295 = vpack.c.b16 %v5522, %v5521
        %v6296 = vpack.c.b16 %v5524, %v5523
        %v6297 = vpack.c.b16 %v5526, %v5525
        %v6298 = vpack.c.b16 %v5528, %v5527
        %v6299 = vpack.c.b16 %v5530, %v5529
        %v6300 = vpack.c.b16 %v5532, %v5531
        %7069 = vmatprep.subr.bf16.mxu0 0
        %7070 = vmatpush1.bf16.msra.mxu0 %v5540
        %7071 = vmatprep.subr.bf16.mxu0 0
        %7072 = vmatpush1.bf16.msra.mxu0 %v5539
        %7073 = vmatprep.subr.bf16.mxu0 0
        %7074 = vmatpush1.bf16.msra.mxu0 %v5538
        %7075 = vmatprep.subr.bf16.mxu0 0
        %7076 = vmatpush1.bf16.msra.mxu0 %v5537
        %7077 = vmatprep.subr.bf16.mxu0 0
        %7078 = vmatpush1.bf16.msra.mxu0 %v5536
        %7079 = vmatprep.subr.bf16.mxu0 0
        %7080 = vmatpush1.bf16.msra.mxu0 %v5535
        %7081 = vmatprep.subr.bf16.mxu0 0
        %7082 = vmatpush1.bf16.msra.mxu0 %v5534
        %7083 = vmatprep.subr.bf16.mxu0 0
        %7084 = vmatpush1.bf16.msra.mxu0 %v5533
        %7085 = vmatprep.subr.bf16.mxu0 0
        %7086 = vmatpush2.bf16.msra.mxu0 %v5548
        %7087 = vmatprep.subr.bf16.mxu0 0
        %7088 = vmatpush2.bf16.msra.mxu0 %v5547
        %7089 = vmatprep.subr.bf16.mxu0 0
        %7090 = vmatpush2.bf16.msra.mxu0 %v5546
        %7091 = vmatprep.subr.bf16.mxu0 0
        %7092 = vmatpush2.bf16.msra.mxu0 %v5545
        %7093 = vmatprep.subr.bf16.mxu0 0
        %7094 = vmatpush2.bf16.msra.mxu0 %v5544
        %7095 = vmatprep.subr.bf16.mxu0 0
        %7096 = vmatpush2.bf16.msra.mxu0 %v5543
        %7097 = vmatprep.subr.bf16.mxu0 0
        %7098 = vmatpush2.bf16.msra.mxu0 %v5542
        %7099 = vmatprep.subr.bf16.mxu0 0
        %7100 = vmatpush2.bf16.msra.mxu0 %v5541
        %7101 = vmatprep.mubr.bf16.mxu0 %v1814
        %7102 = vmatmul.mubr.bf16.gmra.mxu0 %v1800
        %v7103 = vpop.f32.mrf.mxu0
        %v7104 = vadd.f32 0.0, %v7103
        %v7105 = vpop.f32.mrf.mxu0
        %v7106 = vpop.f32.mrf.mxu0
        %v7107 = vpop.f32.mrf.mxu0
        %7108 = vdwg.mxu0
        %7109 = vmatprep.subr.bf16.mxu0 0
        %7110 = vmatpush1.bf16.msra.mxu0 %v5556
        %7111 = vmatprep.subr.bf16.mxu0 0
        %7112 = vmatpush1.bf16.msra.mxu0 %v5555
        %7113 = vmatprep.subr.bf16.mxu0 0
        %7114 = vmatpush1.bf16.msra.mxu0 %v5554
        %7115 = vmatprep.subr.bf16.mxu0 0
        %7116 = vmatpush1.bf16.msra.mxu0 %v5553
        %7117 = vmatprep.subr.bf16.mxu0 0
        %7118 = vmatpush1.bf16.msra.mxu0 %v5552
        %7119 = vmatprep.subr.bf16.mxu0 0
        %7120 = vmatpush1.bf16.msra.mxu0 %v5551
        %7121 = vmatprep.subr.bf16.mxu0 0
        %7122 = vmatpush1.bf16.msra.mxu0 %v5550
        %7123 = vmatprep.subr.bf16.mxu0 0
        %7124 = vmatpush1.bf16.msra.mxu0 %v5549
        %7125 = vmatprep.subr.bf16.mxu0 0
        %7126 = vmatpush2.bf16.msra.mxu0 %v5564
        %7127 = vmatprep.subr.bf16.mxu0 0
        %7128 = vmatpush2.bf16.msra.mxu0 %v5563
        %7129 = vmatprep.subr.bf16.mxu0 0
        %7130 = vmatpush2.bf16.msra.mxu0 %v5562
        %7131 = vmatprep.subr.bf16.mxu0 0
        %7132 = vmatpush2.bf16.msra.mxu0 %v5561
        %7133 = vmatprep.subr.bf16.mxu0 0
        %7134 = vmatpush2.bf16.msra.mxu0 %v5560
        %7135 = vmatprep.subr.bf16.mxu0 0
        %7136 = vmatpush2.bf16.msra.mxu0 %v5559
        %7137 = vmatprep.subr.bf16.mxu0 0
        %7138 = vmatpush2.bf16.msra.mxu0 %v5558
        %7139 = vmatprep.subr.bf16.mxu0 0
        %7140 = vmatpush2.bf16.msra.mxu0 %v5557
        %7141 = vmatprep.mubr.bf16.mxu0 %v1824
        %7142 = vmatmul.mubr.bf16.gmra.mxu0 %v1822
        %v7143 = vpop.f32.mrf.mxu0
        %v7144 = vadd.f32 %v7104, %v7143
        %v7145 = vpop.f32.mrf.mxu0
        %v7146 = vpop.f32.mrf.mxu0
        %v7147 = vpop.f32.mrf.mxu0
        %7148 = vdwg.mxu0
        %7149 = vmatprep.subr.bf16.mxu0 0
        %7150 = vmatpush1.bf16.msra.mxu0 %v5572
        %7151 = vmatprep.subr.bf16.mxu0 0
        %7152 = vmatpush1.bf16.msra.mxu0 %v5571
        %7153 = vmatprep.subr.bf16.mxu0 0
        %7154 = vmatpush1.bf16.msra.mxu0 %v5570
        %7155 = vmatprep.subr.bf16.mxu0 0
        %7156 = vmatpush1.bf16.msra.mxu0 %v5569
        %7157 = vmatprep.subr.bf16.mxu0 0
        %7158 = vmatpush1.bf16.msra.mxu0 %v5568
        %7159 = vmatprep.subr.bf16.mxu0 0
        %7160 = vmatpush1.bf16.msra.mxu0 %v5567
        %7161 = vmatprep.subr.bf16.mxu0 0
        %7162 = vmatpush1.bf16.msra.mxu0 %v5566
        %7163 = vmatprep.subr.bf16.mxu0 0
        %7164 = vmatpush1.bf16.msra.mxu0 %v5565
        %7165 = vmatprep.subr.bf16.mxu0 0
        %7166 = vmatpush2.bf16.msra.mxu0 %v5580
        %7167 = vmatprep.subr.bf16.mxu0 0
        %7168 = vmatpush2.bf16.msra.mxu0 %v5579
        %7169 = vmatprep.subr.bf16.mxu0 0
        %7170 = vmatpush2.bf16.msra.mxu0 %v5578
        %7171 = vmatprep.subr.bf16.mxu0 0
        %7172 = vmatpush2.bf16.msra.mxu0 %v5577
        %7173 = vmatprep.subr.bf16.mxu0 0
        %7174 = vmatpush2.bf16.msra.mxu0 %v5576
        %7175 = vmatprep.subr.bf16.mxu0 0
        %7176 = vmatpush2.bf16.msra.mxu0 %v5575
        %7177 = vmatprep.subr.bf16.mxu0 0
        %7178 = vmatpush2.bf16.msra.mxu0 %v5574
        %7179 = vmatprep.subr.bf16.mxu0 0
        %7180 = vmatpush2.bf16.msra.mxu0 %v5573
        %7181 = vmatprep.mubr.bf16.mxu0 %v1821
        %7182 = vmatmul.mubr.bf16.gmra.mxu0 %v1807
        %v7183 = vpop.f32.mrf.mxu0
        %v7184 = vadd.f32 %v7144, %v7183
        %v7185 = vpop.f32.mrf.mxu0
        %v7186 = vpop.f32.mrf.mxu0
        %v7187 = vpop.f32.mrf.mxu0
        %7188 = vdwg.mxu0
        %7189 = vmatprep.subr.bf16.mxu0 0
        %7190 = vmatpush1.bf16.msra.mxu0 %v5588
        %7191 = vmatprep.subr.bf16.mxu0 0
        %7192 = vmatpush1.bf16.msra.mxu0 %v5587
        %7193 = vmatprep.subr.bf16.mxu0 0
        %7194 = vmatpush1.bf16.msra.mxu0 %v5586
        %7195 = vmatprep.subr.bf16.mxu0 0
        %7196 = vmatpush1.bf16.msra.mxu0 %v5585
        %7197 = vmatprep.subr.bf16.mxu0 0
        %7198 = vmatpush1.bf16.msra.mxu0 %v5584
        %7199 = vmatprep.subr.bf16.mxu0 0
        %7200 = vmatpush1.bf16.msra.mxu0 %v5583
        %7201 = vmatprep.subr.bf16.mxu0 0
        %7202 = vmatpush1.bf16.msra.mxu0 %v5582
        %7203 = vmatprep.subr.bf16.mxu0 0
        %7204 = vmatpush1.bf16.msra.mxu0 %v5581
        %7205 = vmatprep.subr.bf16.mxu0 0
        %7206 = vmatpush2.bf16.msra.mxu0 %v5596
        %7207 = vmatprep.subr.bf16.mxu0 0
        %7208 = vmatpush2.bf16.msra.mxu0 %v5595
        %7209 = vmatprep.subr.bf16.mxu0 0
        %7210 = vmatpush2.bf16.msra.mxu0 %v5594
        %7211 = vmatprep.subr.bf16.mxu0 0
        %7212 = vmatpush2.bf16.msra.mxu0 %v5593
        %7213 = vmatprep.subr.bf16.mxu0 0
        %7214 = vmatpush2.bf16.msra.mxu0 %v5592
        %7215 = vmatprep.subr.bf16.mxu0 0
        %7216 = vmatpush2.bf16.msra.mxu0 %v5591
        %7217 = vmatprep.subr.bf16.mxu0 0
        %7218 = vmatpush2.bf16.msra.mxu0 %v5590
        %7219 = vmatprep.subr.bf16.mxu0 0
        %7220 = vmatpush2.bf16.msra.mxu0 %v5589
        %7221 = vmatprep.mubr.bf16.mxu0 %v1825
        %7222 = vmatmul.mubr.bf16.gmra.mxu0 %v1823
        %v7223 = vpop.f32.mrf.mxu0
        %v7224 = vadd.f32 %v7184, %v7223
        %v7225 = vpop.f32.mrf.mxu0
        %v7226 = vpop.f32.mrf.mxu0
        %v7227 = vpop.f32.mrf.mxu0
        %7228 = vdwg.mxu0
        %7229 = vmatprep.subr.bf16.mxu0 0
        %7230 = vmatpush1.bf16.msra.mxu0 %v5604
        %7231 = vmatprep.subr.bf16.mxu0 0
        %7232 = vmatpush1.bf16.msra.mxu0 %v5603
        %7233 = vmatprep.subr.bf16.mxu0 0
        %7234 = vmatpush1.bf16.msra.mxu0 %v5602
        %7235 = vmatprep.subr.bf16.mxu0 0
        %7236 = vmatpush1.bf16.msra.mxu0 %v5601
        %7237 = vmatprep.subr.bf16.mxu0 0
        %7238 = vmatpush1.bf16.msra.mxu0 %v5600
        %7239 = vmatprep.subr.bf16.mxu0 0
        %7240 = vmatpush1.bf16.msra.mxu0 %v5599
        %7241 = vmatprep.subr.bf16.mxu0 0
        %7242 = vmatpush1.bf16.msra.mxu0 %v5598
        %7243 = vmatprep.subr.bf16.mxu0 0
        %7244 = vmatpush1.bf16.msra.mxu0 %v5597
        %7245 = vmatprep.subr.bf16.mxu0 0
        %7246 = vmatpush2.bf16.msra.mxu0 %v5612
        %7247 = vmatprep.subr.bf16.mxu0 0
        %7248 = vmatpush2.bf16.msra.mxu0 %v5611
        %7249 = vmatprep.subr.bf16.mxu0 0
        %7250 = vmatpush2.bf16.msra.mxu0 %v5610
        %7251 = vmatprep.subr.bf16.mxu0 0
        %7252 = vmatpush2.bf16.msra.mxu0 %v5609
        %7253 = vmatprep.subr.bf16.mxu0 0
        %7254 = vmatpush2.bf16.msra.mxu0 %v5608
        %7255 = vmatprep.subr.bf16.mxu0 0
        %7256 = vmatpush2.bf16.msra.mxu0 %v5607
        %7257 = vmatprep.subr.bf16.mxu0 0
        %7258 = vmatpush2.bf16.msra.mxu0 %v5606
        %7259 = vmatprep.subr.bf16.mxu0 0
        %7260 = vmatpush2.bf16.msra.mxu0 %v5605
        %7261 = vmatprep.mubr.bf16.mxu0 %v1863
        %7262 = vmatmul.mubr.bf16.gmra.mxu0 %v1849
        %v7263 = vpop.f32.mrf.mxu0
        %v7264 = vadd.f32 %v7224, %v7263
        %v7265 = vpop.f32.mrf.mxu0
        %v7266 = vpop.f32.mrf.mxu0
        %v7267 = vpop.f32.mrf.mxu0
        %7268 = vdwg.mxu0
        %7269 = vmatprep.subr.bf16.mxu0 0
        %7270 = vmatpush1.bf16.msra.mxu0 %v5620
        %7271 = vmatprep.subr.bf16.mxu0 0
        %7272 = vmatpush1.bf16.msra.mxu0 %v5619
        %7273 = vmatprep.subr.bf16.mxu0 0
        %7274 = vmatpush1.bf16.msra.mxu0 %v5618
        %7275 = vmatprep.subr.bf16.mxu0 0
        %7276 = vmatpush1.bf16.msra.mxu0 %v5617
        %7277 = vmatprep.subr.bf16.mxu0 0
        %7278 = vmatpush1.bf16.msra.mxu0 %v5616
        %7279 = vmatprep.subr.bf16.mxu0 0
        %7280 = vmatpush1.bf16.msra.mxu0 %v5615
        %7281 = vmatprep.subr.bf16.mxu0 0
        %7282 = vmatpush1.bf16.msra.mxu0 %v5614
        %7283 = vmatprep.subr.bf16.mxu0 0
        %7284 = vmatpush1.bf16.msra.mxu0 %v5613
        %7285 = vmatprep.subr.bf16.mxu0 0
        %7286 = vmatpush2.bf16.msra.mxu0 %v5628
        %7287 = vmatprep.subr.bf16.mxu0 0
        %7288 = vmatpush2.bf16.msra.mxu0 %v5627
        %7289 = vmatprep.subr.bf16.mxu0 0
        %7290 = vmatpush2.bf16.msra.mxu0 %v5626
        %7291 = vmatprep.subr.bf16.mxu0 0
        %7292 = vmatpush2.bf16.msra.mxu0 %v5625
        %7293 = vmatprep.subr.bf16.mxu0 0
        %7294 = vmatpush2.bf16.msra.mxu0 %v5624
        %7295 = vmatprep.subr.bf16.mxu0 0
        %7296 = vmatpush2.bf16.msra.mxu0 %v5623
        %7297 = vmatprep.subr.bf16.mxu0 0
        %7298 = vmatpush2.bf16.msra.mxu0 %v5622
        %7299 = vmatprep.subr.bf16.mxu0 0
        %7300 = vmatpush2.bf16.msra.mxu0 %v5621
        %7301 = vmatprep.mubr.bf16.mxu0 %v1873
        %7302 = vmatmul.mubr.bf16.gmra.mxu0 %v1871
        %v7303 = vpop.f32.mrf.mxu0
        %v7304 = vadd.f32 %v7264, %v7303
        %v7305 = vpop.f32.mrf.mxu0
        %v7306 = vpop.f32.mrf.mxu0
        %v7307 = vpop.f32.mrf.mxu0
        %7308 = vdwg.mxu0
        %7309 = vmatprep.subr.bf16.mxu0 0
        %7310 = vmatpush1.bf16.msra.mxu0 %v5636
        %7311 = vmatprep.subr.bf16.mxu0 0
        %7312 = vmatpush1.bf16.msra.mxu0 %v5635
        %7313 = vmatprep.subr.bf16.mxu0 0
        %7314 = vmatpush1.bf16.msra.mxu0 %v5634
        %7315 = vmatprep.subr.bf16.mxu0 0
        %7316 = vmatpush1.bf16.msra.mxu0 %v5633
        %7317 = vmatprep.subr.bf16.mxu0 0
        %7318 = vmatpush1.bf16.msra.mxu0 %v5632
        %7319 = vmatprep.subr.bf16.mxu0 0
        %7320 = vmatpush1.bf16.msra.mxu0 %v5631
        %7321 = vmatprep.subr.bf16.mxu0 0
        %7322 = vmatpush1.bf16.msra.mxu0 %v5630
        %7323 = vmatprep.subr.bf16.mxu0 0
        %7324 = vmatpush1.bf16.msra.mxu0 %v5629
        %7325 = vmatprep.subr.bf16.mxu0 0
        %7326 = vmatpush2.bf16.msra.mxu0 %v5644
        %7327 = vmatprep.subr.bf16.mxu0 0
        %7328 = vmatpush2.bf16.msra.mxu0 %v5643
        %7329 = vmatprep.subr.bf16.mxu0 0
        %7330 = vmatpush2.bf16.msra.mxu0 %v5642
        %7331 = vmatprep.subr.bf16.mxu0 0
        %7332 = vmatpush2.bf16.msra.mxu0 %v5641
        %7333 = vmatprep.subr.bf16.mxu0 0
        %7334 = vmatpush2.bf16.msra.mxu0 %v5640
        %7335 = vmatprep.subr.bf16.mxu0 0
        %7336 = vmatpush2.bf16.msra.mxu0 %v5639
        %7337 = vmatprep.subr.bf16.mxu0 0
        %7338 = vmatpush2.bf16.msra.mxu0 %v5638
        %7339 = vmatprep.subr.bf16.mxu0 0
        %7340 = vmatpush2.bf16.msra.mxu0 %v5637
        %7341 = vmatprep.mubr.bf16.mxu0 %v1870
        %7342 = vmatmul.mubr.bf16.gmra.mxu0 %v1856
        %v7343 = vpop.f32.mrf.mxu0
        %v7344 = vadd.f32 %v7304, %v7343
        %v7345 = vpop.f32.mrf.mxu0
        %v7346 = vpop.f32.mrf.mxu0
        %v7347 = vpop.f32.mrf.mxu0
        %7348 = vdwg.mxu0
        %7349 = vmatprep.subr.bf16.mxu0 0
        %7350 = vmatpush1.bf16.msra.mxu0 %v5652
        %7351 = vmatprep.subr.bf16.mxu0 0
        %7352 = vmatpush1.bf16.msra.mxu0 %v5651
        %7353 = vmatprep.subr.bf16.mxu0 0
        %7354 = vmatpush1.bf16.msra.mxu0 %v5650
        %7355 = vmatprep.subr.bf16.mxu0 0
        %7356 = vmatpush1.bf16.msra.mxu0 %v5649
        %7357 = vmatprep.subr.bf16.mxu0 0
        %7358 = vmatpush1.bf16.msra.mxu0 %v5648
        %7359 = vmatprep.subr.bf16.mxu0 0
        %7360 = vmatpush1.bf16.msra.mxu0 %v5647
        %7361 = vmatprep.subr.bf16.mxu0 0
        %7362 = vmatpush1.bf16.msra.mxu0 %v5646
        %7363 = vmatprep.subr.bf16.mxu0 0
        %7364 = vmatpush1.bf16.msra.mxu0 %v5645
        %7365 = vmatprep.subr.bf16.mxu0 0
        %7366 = vmatpush2.bf16.msra.mxu0 %v5660
        %7367 = vmatprep.subr.bf16.mxu0 0
        %7368 = vmatpush2.bf16.msra.mxu0 %v5659
        %7369 = vmatprep.subr.bf16.mxu0 0
        %7370 = vmatpush2.bf16.msra.mxu0 %v5658
        %7371 = vmatprep.subr.bf16.mxu0 0
        %7372 = vmatpush2.bf16.msra.mxu0 %v5657
        %7373 = vmatprep.subr.bf16.mxu0 0
        %7374 = vmatpush2.bf16.msra.mxu0 %v5656
        %7375 = vmatprep.subr.bf16.mxu0 0
        %7376 = vmatpush2.bf16.msra.mxu0 %v5655
        %7377 = vmatprep.subr.bf16.mxu0 0
        %7378 = vmatpush2.bf16.msra.mxu0 %v5654
        %7379 = vmatprep.subr.bf16.mxu0 0
        %7380 = vmatpush2.bf16.msra.mxu0 %v5653
        %7381 = vmatprep.mubr.bf16.mxu0 %v1874
        %7382 = vmatmul.mubr.bf16.gmra.mxu0 %v1872
        %v7383 = vpop.f32.mrf.mxu0
        %v7384 = vadd.f32 %v7344, %v7383
        %v7385 = vpop.f32.mrf.mxu0
        %v7386 = vpop.f32.mrf.mxu0
        %v7387 = vpop.f32.mrf.mxu0
        %7388 = vdwg.mxu0
        %7389 = vmatprep.subr.bf16.mxu0 0
        %7390 = vmatpush1.bf16.msra.mxu0 %v5668
        %7391 = vmatprep.subr.bf16.mxu0 0
        %7392 = vmatpush1.bf16.msra.mxu0 %v5667
        %7393 = vmatprep.subr.bf16.mxu0 0
        %7394 = vmatpush1.bf16.msra.mxu0 %v5666
        %7395 = vmatprep.subr.bf16.mxu0 0
        %7396 = vmatpush1.bf16.msra.mxu0 %v5665
        %7397 = vmatprep.subr.bf16.mxu0 0
        %7398 = vmatpush1.bf16.msra.mxu0 %v5664
        %7399 = vmatprep.subr.bf16.mxu0 0
        %7400 = vmatpush1.bf16.msra.mxu0 %v5663
        %7401 = vmatprep.subr.bf16.mxu0 0
        %7402 = vmatpush1.bf16.msra.mxu0 %v5662
        %7403 = vmatprep.subr.bf16.mxu0 0
        %7404 = vmatpush1.bf16.msra.mxu0 %v5661
        %7405 = vmatprep.subr.bf16.mxu0 0
        %7406 = vmatpush2.bf16.msra.mxu0 %v5676
        %7407 = vmatprep.subr.bf16.mxu0 0
        %7408 = vmatpush2.bf16.msra.mxu0 %v5675
        %7409 = vmatprep.subr.bf16.mxu0 0
        %7410 = vmatpush2.bf16.msra.mxu0 %v5674
        %7411 = vmatprep.subr.bf16.mxu0 0
        %7412 = vmatpush2.bf16.msra.mxu0 %v5673
        %7413 = vmatprep.subr.bf16.mxu0 0
        %7414 = vmatpush2.bf16.msra.mxu0 %v5672
        %7415 = vmatprep.subr.bf16.mxu0 0
        %7416 = vmatpush2.bf16.msra.mxu0 %v5671
        %7417 = vmatprep.subr.bf16.mxu0 0
        %7418 = vmatpush2.bf16.msra.mxu0 %v5670
        %7419 = vmatprep.subr.bf16.mxu0 0
        %7420 = vmatpush2.bf16.msra.mxu0 %v5669
        %7421 = vmatprep.mubr.bf16.mxu0 %v1912
        %7422 = vmatmul.mubr.bf16.gmra.mxu0 %v1898
        %v7423 = vpop.f32.mrf.mxu0
        %v7424 = vadd.f32 %v7384, %v7423
        %v7425 = vpop.f32.mrf.mxu0
        %v7426 = vpop.f32.mrf.mxu0
        %v7427 = vpop.f32.mrf.mxu0
        %7428 = vdwg.mxu0
        %7429 = vmatprep.subr.bf16.mxu0 0
        %7430 = vmatpush1.bf16.msra.mxu0 %v5684
        %7431 = vmatprep.subr.bf16.mxu0 0
        %7432 = vmatpush1.bf16.msra.mxu0 %v5683
        %7433 = vmatprep.subr.bf16.mxu0 0
        %7434 = vmatpush1.bf16.msra.mxu0 %v5682
        %7435 = vmatprep.subr.bf16.mxu0 0
        %7436 = vmatpush1.bf16.msra.mxu0 %v5681
        %7437 = vmatprep.subr.bf16.mxu0 0
        %7438 = vmatpush1.bf16.msra.mxu0 %v5680
        %7439 = vmatprep.subr.bf16.mxu0 0
        %7440 = vmatpush1.bf16.msra.mxu0 %v5679
        %7441 = vmatprep.subr.bf16.mxu0 0
        %7442 = vmatpush1.bf16.msra.mxu0 %v5678
        %7443 = vmatprep.subr.bf16.mxu0 0
        %7444 = vmatpush1.bf16.msra.mxu0 %v5677
        %7445 = vmatprep.subr.bf16.mxu0 0
        %7446 = vmatpush2.bf16.msra.mxu0 %v5692
        %7447 = vmatprep.subr.bf16.mxu0 0
        %7448 = vmatpush2.bf16.msra.mxu0 %v5691
        %7449 = vmatprep.subr.bf16.mxu0 0
        %7450 = vmatpush2.bf16.msra.mxu0 %v5690
        %7451 = vmatprep.subr.bf16.mxu0 0
        %7452 = vmatpush2.bf16.msra.mxu0 %v5689
        %7453 = vmatprep.subr.bf16.mxu0 0
        %7454 = vmatpush2.bf16.msra.mxu0 %v5688
        %7455 = vmatprep.subr.bf16.mxu0 0
        %7456 = vmatpush2.bf16.msra.mxu0 %v5687
        %7457 = vmatprep.subr.bf16.mxu0 0
        %7458 = vmatpush2.bf16.msra.mxu0 %v5686
        %7459 = vmatprep.subr.bf16.mxu0 0
        %7460 = vmatpush2.bf16.msra.mxu0 %v5685
        %7461 = vmatprep.mubr.bf16.mxu0 %v1922
        %7462 = vmatmul.mubr.bf16.gmra.mxu0 %v1920
        %v7463 = vpop.f32.mrf.mxu0
        %v7464 = vadd.f32 %v7424, %v7463
        %v7465 = vpop.f32.mrf.mxu0
        %v7466 = vpop.f32.mrf.mxu0
        %v7467 = vpop.f32.mrf.mxu0
        %7468 = vdwg.mxu0
        %7469 = vmatprep.subr.bf16.mxu0 0
        %7470 = vmatpush1.bf16.msra.mxu0 %v5700
        %7471 = vmatprep.subr.bf16.mxu0 0
        %7472 = vmatpush1.bf16.msra.mxu0 %v5699
        %7473 = vmatprep.subr.bf16.mxu0 0
        %7474 = vmatpush1.bf16.msra.mxu0 %v5698
        %7475 = vmatprep.subr.bf16.mxu0 0
        %7476 = vmatpush1.bf16.msra.mxu0 %v5697
        %7477 = vmatprep.subr.bf16.mxu0 0
        %7478 = vmatpush1.bf16.msra.mxu0 %v5696
        %7479 = vmatprep.subr.bf16.mxu0 0
        %7480 = vmatpush1.bf16.msra.mxu0 %v5695
        %7481 = vmatprep.subr.bf16.mxu0 0
        %7482 = vmatpush1.bf16.msra.mxu0 %v5694
        %7483 = vmatprep.subr.bf16.mxu0 0
        %7484 = vmatpush1.bf16.msra.mxu0 %v5693
        %7485 = vmatprep.subr.bf16.mxu0 0
        %7486 = vmatpush2.bf16.msra.mxu0 %v5708
        %7487 = vmatprep.subr.bf16.mxu0 0
        %7488 = vmatpush2.bf16.msra.mxu0 %v5707
        %7489 = vmatprep.subr.bf16.mxu0 0
        %7490 = vmatpush2.bf16.msra.mxu0 %v5706
        %7491 = vmatprep.subr.bf16.mxu0 0
        %7492 = vmatpush2.bf16.msra.mxu0 %v5705
        %7493 = vmatprep.subr.bf16.mxu0 0
        %7494 = vmatpush2.bf16.msra.mxu0 %v5704
        %7495 = vmatprep.subr.bf16.mxu0 0
        %7496 = vmatpush2.bf16.msra.mxu0 %v5703
        %7497 = vmatprep.subr.bf16.mxu0 0
        %7498 = vmatpush2.bf16.msra.mxu0 %v5702
        %7499 = vmatprep.subr.bf16.mxu0 0
        %7500 = vmatpush2.bf16.msra.mxu0 %v5701
        %7501 = vmatprep.mubr.bf16.mxu0 %v1919
        %7502 = vmatmul.mubr.bf16.gmra.mxu0 %v1905
        %v7503 = vpop.f32.mrf.mxu0
        %v7504 = vadd.f32 %v7464, %v7503
        %v7505 = vpop.f32.mrf.mxu0
        %v7506 = vpop.f32.mrf.mxu0
        %v7507 = vpop.f32.mrf.mxu0
        %7508 = vdwg.mxu0
        %7509 = vmatprep.subr.bf16.mxu0 0
        %7510 = vmatpush1.bf16.msra.mxu0 %v5716
        %7511 = vmatprep.subr.bf16.mxu0 0
        %7512 = vmatpush1.bf16.msra.mxu0 %v5715
        %7513 = vmatprep.subr.bf16.mxu0 0
        %7514 = vmatpush1.bf16.msra.mxu0 %v5714
        %7515 = vmatprep.subr.bf16.mxu0 0
        %7516 = vmatpush1.bf16.msra.mxu0 %v5713
        %7517 = vmatprep.subr.bf16.mxu0 0
        %7518 = vmatpush1.bf16.msra.mxu0 %v5712
        %7519 = vmatprep.subr.bf16.mxu0 0
        %7520 = vmatpush1.bf16.msra.mxu0 %v5711
        %7521 = vmatprep.subr.bf16.mxu0 0
        %7522 = vmatpush1.bf16.msra.mxu0 %v5710
        %7523 = vmatprep.subr.bf16.mxu0 0
        %7524 = vmatpush1.bf16.msra.mxu0 %v5709
        %7525 = vmatprep.subr.bf16.mxu0 0
        %7526 = vmatpush2.bf16.msra.mxu0 %v5724
        %7527 = vmatprep.subr.bf16.mxu0 0
        %7528 = vmatpush2.bf16.msra.mxu0 %v5723
        %7529 = vmatprep.subr.bf16.mxu0 0
        %7530 = vmatpush2.bf16.msra.mxu0 %v5722
        %7531 = vmatprep.subr.bf16.mxu0 0
        %7532 = vmatpush2.bf16.msra.mxu0 %v5721
        %7533 = vmatprep.subr.bf16.mxu0 0
        %7534 = vmatpush2.bf16.msra.mxu0 %v5720
        %7535 = vmatprep.subr.bf16.mxu0 0
        %7536 = vmatpush2.bf16.msra.mxu0 %v5719
        %7537 = vmatprep.subr.bf16.mxu0 0
        %7538 = vmatpush2.bf16.msra.mxu0 %v5718
        %7539 = vmatprep.subr.bf16.mxu0 0
        %7540 = vmatpush2.bf16.msra.mxu0 %v5717
        %7541 = vmatprep.mubr.bf16.mxu0 %v1923
        %7542 = vmatmul.mubr.bf16.gmra.mxu0 %v1921
        %v7543 = vpop.f32.mrf.mxu0
        %v7544 = vadd.f32 %v7504, %v7543
        %v7545 = vpop.f32.mrf.mxu0
        %v7546 = vpop.f32.mrf.mxu0
        %v7547 = vpop.f32.mrf.mxu0
        %7548 = vdwg.mxu0
        %7549 = vmatprep.subr.bf16.mxu0 0
        %7550 = vmatpush1.bf16.msra.mxu0 %v5732
        %7551 = vmatprep.subr.bf16.mxu0 0
        %7552 = vmatpush1.bf16.msra.mxu0 %v5731
        %7553 = vmatprep.subr.bf16.mxu0 0
        %7554 = vmatpush1.bf16.msra.mxu0 %v5730
        %7555 = vmatprep.subr.bf16.mxu0 0
        %7556 = vmatpush1.bf16.msra.mxu0 %v5729
        %7557 = vmatprep.subr.bf16.mxu0 0
        %7558 = vmatpush1.bf16.msra.mxu0 %v5728
        %7559 = vmatprep.subr.bf16.mxu0 0
        %7560 = vmatpush1.bf16.msra.mxu0 %v5727
        %7561 = vmatprep.subr.bf16.mxu0 0
        %7562 = vmatpush1.bf16.msra.mxu0 %v5726
        %7563 = vmatprep.subr.bf16.mxu0 0
        %7564 = vmatpush1.bf16.msra.mxu0 %v5725
        %7565 = vmatprep.subr.bf16.mxu0 0
        %7566 = vmatpush2.bf16.msra.mxu0 %v5740
        %7567 = vmatprep.subr.bf16.mxu0 0
        %7568 = vmatpush2.bf16.msra.mxu0 %v5739
        %7569 = vmatprep.subr.bf16.mxu0 0
        %7570 = vmatpush2.bf16.msra.mxu0 %v5738
        %7571 = vmatprep.subr.bf16.mxu0 0
        %7572 = vmatpush2.bf16.msra.mxu0 %v5737
        %7573 = vmatprep.subr.bf16.mxu0 0
        %7574 = vmatpush2.bf16.msra.mxu0 %v5736
        %7575 = vmatprep.subr.bf16.mxu0 0
        %7576 = vmatpush2.bf16.msra.mxu0 %v5735
        %7577 = vmatprep.subr.bf16.mxu0 0
        %7578 = vmatpush2.bf16.msra.mxu0 %v5734
        %7579 = vmatprep.subr.bf16.mxu0 0
        %7580 = vmatpush2.bf16.msra.mxu0 %v5733
        %7581 = vmatprep.mubr.bf16.mxu0 %v1961
        %7582 = vmatmul.mubr.bf16.gmra.mxu0 %v1947
        %v7583 = vpop.f32.mrf.mxu0
        %v7584 = vadd.f32 %v7544, %v7583
        %v7585 = vpop.f32.mrf.mxu0
        %v7586 = vpop.f32.mrf.mxu0
        %v7587 = vpop.f32.mrf.mxu0
        %7588 = vdwg.mxu0
        %7589 = vmatprep.subr.bf16.mxu0 0
        %7590 = vmatpush1.bf16.msra.mxu0 %v5748
        %7591 = vmatprep.subr.bf16.mxu0 0
        %7592 = vmatpush1.bf16.msra.mxu0 %v5747
        %7593 = vmatprep.subr.bf16.mxu0 0
        %7594 = vmatpush1.bf16.msra.mxu0 %v5746
        %7595 = vmatprep.subr.bf16.mxu0 0
        %7596 = vmatpush1.bf16.msra.mxu0 %v5745
        %7597 = vmatprep.subr.bf16.mxu0 0
        %7598 = vmatpush1.bf16.msra.mxu0 %v5744
        %7599 = vmatprep.subr.bf16.mxu0 0
        %7600 = vmatpush1.bf16.msra.mxu0 %v5743
        %7601 = vmatprep.subr.bf16.mxu0 0
        %7602 = vmatpush1.bf16.msra.mxu0 %v5742
        %7603 = vmatprep.subr.bf16.mxu0 0
        %7604 = vmatpush1.bf16.msra.mxu0 %v5741
        %7605 = vmatprep.subr.bf16.mxu0 0
        %7606 = vmatpush2.bf16.msra.mxu0 %v5756
        %7607 = vmatprep.subr.bf16.mxu0 0
        %7608 = vmatpush2.bf16.msra.mxu0 %v5755
        %7609 = vmatprep.subr.bf16.mxu0 0
        %7610 = vmatpush2.bf16.msra.mxu0 %v5754
        %7611 = vmatprep.subr.bf16.mxu0 0
        %7612 = vmatpush2.bf16.msra.mxu0 %v5753
        %7613 = vmatprep.subr.bf16.mxu0 0
        %7614 = vmatpush2.bf16.msra.mxu0 %v5752
        %7615 = vmatprep.subr.bf16.mxu0 0
        %7616 = vmatpush2.bf16.msra.mxu0 %v5751
        %7617 = vmatprep.subr.bf16.mxu0 0
        %7618 = vmatpush2.bf16.msra.mxu0 %v5750
        %7619 = vmatprep.subr.bf16.mxu0 0
        %7620 = vmatpush2.bf16.msra.mxu0 %v5749
        %7621 = vmatprep.mubr.bf16.mxu0 %v1971
        %7622 = vmatmul.mubr.bf16.gmra.mxu0 %v1969
        %v7623 = vpop.f32.mrf.mxu0
        %v7624 = vadd.f32 %v7584, %v7623
        %v7625 = vpop.f32.mrf.mxu0
        %v7626 = vpop.f32.mrf.mxu0
        %v7627 = vpop.f32.mrf.mxu0
        %7628 = vdwg.mxu0
        %7629 = vmatprep.subr.bf16.mxu0 0
        %7630 = vmatpush1.bf16.msra.mxu0 %v5764
        %7631 = vmatprep.subr.bf16.mxu0 0
        %7632 = vmatpush1.bf16.msra.mxu0 %v5763
        %7633 = vmatprep.subr.bf16.mxu0 0
        %7634 = vmatpush1.bf16.msra.mxu0 %v5762
        %7635 = vmatprep.subr.bf16.mxu0 0
        %7636 = vmatpush1.bf16.msra.mxu0 %v5761
        %7637 = vmatprep.subr.bf16.mxu0 0
        %7638 = vmatpush1.bf16.msra.mxu0 %v5760
        %7639 = vmatprep.subr.bf16.mxu0 0
        %7640 = vmatpush1.bf16.msra.mxu0 %v5759
        %7641 = vmatprep.subr.bf16.mxu0 0
        %7642 = vmatpush1.bf16.msra.mxu0 %v5758
        %7643 = vmatprep.subr.bf16.mxu0 0
        %7644 = vmatpush1.bf16.msra.mxu0 %v5757
        %7645 = vmatprep.subr.bf16.mxu0 0
        %7646 = vmatpush2.bf16.msra.mxu0 %v5772
        %7647 = vmatprep.subr.bf16.mxu0 0
        %7648 = vmatpush2.bf16.msra.mxu0 %v5771
        %7649 = vmatprep.subr.bf16.mxu0 0
        %7650 = vmatpush2.bf16.msra.mxu0 %v5770
        %7651 = vmatprep.subr.bf16.mxu0 0
        %7652 = vmatpush2.bf16.msra.mxu0 %v5769
        %7653 = vmatprep.subr.bf16.mxu0 0
        %7654 = vmatpush2.bf16.msra.mxu0 %v5768
        %7655 = vmatprep.subr.bf16.mxu0 0
        %7656 = vmatpush2.bf16.msra.mxu0 %v5767
        %7657 = vmatprep.subr.bf16.mxu0 0
        %7658 = vmatpush2.bf16.msra.mxu0 %v5766
        %7659 = vmatprep.subr.bf16.mxu0 0
        %7660 = vmatpush2.bf16.msra.mxu0 %v5765
        %7661 = vmatprep.mubr.bf16.mxu0 %v1968
        %7662 = vmatmul.mubr.bf16.gmra.mxu0 %v1954
        %v7663 = vpop.f32.mrf.mxu0
        %v7664 = vadd.f32 %v7624, %v7663
        %v7665 = vpop.f32.mrf.mxu0
        %v7666 = vpop.f32.mrf.mxu0
        %v7667 = vpop.f32.mrf.mxu0
        %7668 = vdwg.mxu0
        %7669 = vmatprep.subr.bf16.mxu0 0
        %7670 = vmatpush1.bf16.msra.mxu0 %v5780
        %7671 = vmatprep.subr.bf16.mxu0 0
        %7672 = vmatpush1.bf16.msra.mxu0 %v5779
        %7673 = vmatprep.subr.bf16.mxu0 0
        %7674 = vmatpush1.bf16.msra.mxu0 %v5778
        %7675 = vmatprep.subr.bf16.mxu0 0
        %7676 = vmatpush1.bf16.msra.mxu0 %v5777
        %7677 = vmatprep.subr.bf16.mxu0 0
        %7678 = vmatpush1.bf16.msra.mxu0 %v5776
        %7679 = vmatprep.subr.bf16.mxu0 0
        %7680 = vmatpush1.bf16.msra.mxu0 %v5775
        %7681 = vmatprep.subr.bf16.mxu0 0
        %7682 = vmatpush1.bf16.msra.mxu0 %v5774
        %7683 = vmatprep.subr.bf16.mxu0 0
        %7684 = vmatpush1.bf16.msra.mxu0 %v5773
        %7685 = vmatprep.subr.bf16.mxu0 0
        %7686 = vmatpush2.bf16.msra.mxu0 %v5788
        %7687 = vmatprep.subr.bf16.mxu0 0
        %7688 = vmatpush2.bf16.msra.mxu0 %v5787
        %7689 = vmatprep.subr.bf16.mxu0 0
        %7690 = vmatpush2.bf16.msra.mxu0 %v5786
        %7691 = vmatprep.subr.bf16.mxu0 0
        %7692 = vmatpush2.bf16.msra.mxu0 %v5785
        %7693 = vmatprep.subr.bf16.mxu0 0
        %7694 = vmatpush2.bf16.msra.mxu0 %v5784
        %7695 = vmatprep.subr.bf16.mxu0 0
        %7696 = vmatpush2.bf16.msra.mxu0 %v5783
        %7697 = vmatprep.subr.bf16.mxu0 0
        %7698 = vmatpush2.bf16.msra.mxu0 %v5782
        %7699 = vmatprep.subr.bf16.mxu0 0
        %7700 = vmatpush2.bf16.msra.mxu0 %v5781
        %7701 = vmatprep.mubr.bf16.mxu0 %v1972
        %7702 = vmatmul.mubr.bf16.gmra.mxu0 %v1970
        %v7703 = vpop.f32.mrf.mxu0
        %v7704 = vadd.f32 %v7664, %v7703
        %v7705 = vpop.f32.mrf.mxu0
        %v7706 = vpop.f32.mrf.mxu0
        %v7707 = vpop.f32.mrf.mxu0
        %7708 = vdwg.mxu0
        %7709 = vmatprep.subr.bf16.mxu0 0
        %7710 = vmatpush1.bf16.msra.mxu0 %v5796
        %7711 = vmatprep.subr.bf16.mxu0 0
        %7712 = vmatpush1.bf16.msra.mxu0 %v5795
        %7713 = vmatprep.subr.bf16.mxu0 0
        %7714 = vmatpush1.bf16.msra.mxu0 %v5794
        %7715 = vmatprep.subr.bf16.mxu0 0
        %7716 = vmatpush1.bf16.msra.mxu0 %v5793
        %7717 = vmatprep.subr.bf16.mxu0 0
        %7718 = vmatpush1.bf16.msra.mxu0 %v5792
        %7719 = vmatprep.subr.bf16.mxu0 0
        %7720 = vmatpush1.bf16.msra.mxu0 %v5791
        %7721 = vmatprep.subr.bf16.mxu0 0
        %7722 = vmatpush1.bf16.msra.mxu0 %v5790
        %7723 = vmatprep.subr.bf16.mxu0 0
        %7724 = vmatpush1.bf16.msra.mxu0 %v5789
        %7725 = vmatprep.subr.bf16.mxu0 0
        %7726 = vmatpush2.bf16.msra.mxu0 %v5804
        %7727 = vmatprep.subr.bf16.mxu0 0
        %7728 = vmatpush2.bf16.msra.mxu0 %v5803
        %7729 = vmatprep.subr.bf16.mxu0 0
        %7730 = vmatpush2.bf16.msra.mxu0 %v5802
        %7731 = vmatprep.subr.bf16.mxu0 0
        %7732 = vmatpush2.bf16.msra.mxu0 %v5801
        %7733 = vmatprep.subr.bf16.mxu0 0
        %7734 = vmatpush2.bf16.msra.mxu0 %v5800
        %7735 = vmatprep.subr.bf16.mxu0 0
        %7736 = vmatpush2.bf16.msra.mxu0 %v5799
        %7737 = vmatprep.subr.bf16.mxu0 0
        %7738 = vmatpush2.bf16.msra.mxu0 %v5798
        %7739 = vmatprep.subr.bf16.mxu0 0
        %7740 = vmatpush2.bf16.msra.mxu0 %v5797
        %7741 = vmatprep.mubr.bf16.mxu0 %v2010
        %7742 = vmatmul.mubr.bf16.gmra.mxu0 %v1996
        %v7743 = vpop.f32.mrf.mxu0
        %v7744 = vadd.f32 %v7704, %v7743
        %v7745 = vpop.f32.mrf.mxu0
        %v7746 = vpop.f32.mrf.mxu0
        %v7747 = vpop.f32.mrf.mxu0
        %7748 = vdwg.mxu0
        %7749 = vmatprep.subr.bf16.mxu0 0
        %7750 = vmatpush1.bf16.msra.mxu0 %v5812
        %7751 = vmatprep.subr.bf16.mxu0 0
        %7752 = vmatpush1.bf16.msra.mxu0 %v5811
        %7753 = vmatprep.subr.bf16.mxu0 0
        %7754 = vmatpush1.bf16.msra.mxu0 %v5810
        %7755 = vmatprep.subr.bf16.mxu0 0
        %7756 = vmatpush1.bf16.msra.mxu0 %v5809
        %7757 = vmatprep.subr.bf16.mxu0 0
        %7758 = vmatpush1.bf16.msra.mxu0 %v5808
        %7759 = vmatprep.subr.bf16.mxu0 0
        %7760 = vmatpush1.bf16.msra.mxu0 %v5807
        %7761 = vmatprep.subr.bf16.mxu0 0
        %7762 = vmatpush1.bf16.msra.mxu0 %v5806
        %7763 = vmatprep.subr.bf16.mxu0 0
        %7764 = vmatpush1.bf16.msra.mxu0 %v5805
        %7765 = vmatprep.subr.bf16.mxu0 0
        %7766 = vmatpush2.bf16.msra.mxu0 %v5820
        %7767 = vmatprep.subr.bf16.mxu0 0
        %7768 = vmatpush2.bf16.msra.mxu0 %v5819
        %7769 = vmatprep.subr.bf16.mxu0 0
        %7770 = vmatpush2.bf16.msra.mxu0 %v5818
        %7771 = vmatprep.subr.bf16.mxu0 0
        %7772 = vmatpush2.bf16.msra.mxu0 %v5817
        %7773 = vmatprep.subr.bf16.mxu0 0
        %7774 = vmatpush2.bf16.msra.mxu0 %v5816
        %7775 = vmatprep.subr.bf16.mxu0 0
        %7776 = vmatpush2.bf16.msra.mxu0 %v5815
        %7777 = vmatprep.subr.bf16.mxu0 0
        %7778 = vmatpush2.bf16.msra.mxu0 %v5814
        %7779 = vmatprep.subr.bf16.mxu0 0
        %7780 = vmatpush2.bf16.msra.mxu0 %v5813
        %7781 = vmatprep.mubr.bf16.mxu0 %v2020
        %7782 = vmatmul.mubr.bf16.gmra.mxu0 %v2018
        %v7783 = vpop.f32.mrf.mxu0
        %v7784 = vadd.f32 %v7744, %v7783
        %v7785 = vpop.f32.mrf.mxu0
        %v7786 = vpop.f32.mrf.mxu0
        %v7787 = vpop.f32.mrf.mxu0
        %7788 = vdwg.mxu0
        %7789 = vmatprep.subr.bf16.mxu0 0
        %7790 = vmatpush1.bf16.msra.mxu0 %v5828
        %7791 = vmatprep.subr.bf16.mxu0 0
        %7792 = vmatpush1.bf16.msra.mxu0 %v5827
        %7793 = vmatprep.subr.bf16.mxu0 0
        %7794 = vmatpush1.bf16.msra.mxu0 %v5826
        %7795 = vmatprep.subr.bf16.mxu0 0
        %7796 = vmatpush1.bf16.msra.mxu0 %v5825
        %7797 = vmatprep.subr.bf16.mxu0 0
        %7798 = vmatpush1.bf16.msra.mxu0 %v5824
        %7799 = vmatprep.subr.bf16.mxu0 0
        %7800 = vmatpush1.bf16.msra.mxu0 %v5823
        %7801 = vmatprep.subr.bf16.mxu0 0
        %7802 = vmatpush1.bf16.msra.mxu0 %v5822
        %7803 = vmatprep.subr.bf16.mxu0 0
        %7804 = vmatpush1.bf16.msra.mxu0 %v5821
        %7805 = vmatprep.subr.bf16.mxu0 0
        %7806 = vmatpush2.bf16.msra.mxu0 %v5836
        %7807 = vmatprep.subr.bf16.mxu0 0
        %7808 = vmatpush2.bf16.msra.mxu0 %v5835
        %7809 = vmatprep.subr.bf16.mxu0 0
        %7810 = vmatpush2.bf16.msra.mxu0 %v5834
        %7811 = vmatprep.subr.bf16.mxu0 0
        %7812 = vmatpush2.bf16.msra.mxu0 %v5833
        %7813 = vmatprep.subr.bf16.mxu0 0
        %7814 = vmatpush2.bf16.msra.mxu0 %v5832
        %7815 = vmatprep.subr.bf16.mxu0 0
        %7816 = vmatpush2.bf16.msra.mxu0 %v5831
        %7817 = vmatprep.subr.bf16.mxu0 0
        %7818 = vmatpush2.bf16.msra.mxu0 %v5830
        %7819 = vmatprep.subr.bf16.mxu0 0
        %7820 = vmatpush2.bf16.msra.mxu0 %v5829
        %7821 = vmatprep.mubr.bf16.mxu0 %v2017
        %7822 = vmatmul.mubr.bf16.gmra.mxu0 %v2003
        %v7823 = vpop.f32.mrf.mxu0
        %v7824 = vadd.f32 %v7784, %v7823
        %v7825 = vpop.f32.mrf.mxu0
        %v7826 = vpop.f32.mrf.mxu0
        %v7827 = vpop.f32.mrf.mxu0
        %7828 = vdwg.mxu0
        %7829 = vmatprep.subr.bf16.mxu0 0
        %7830 = vmatpush1.bf16.msra.mxu0 %v5844
        %7831 = vmatprep.subr.bf16.mxu0 0
        %7832 = vmatpush1.bf16.msra.mxu0 %v5843
        %7833 = vmatprep.subr.bf16.mxu0 0
        %7834 = vmatpush1.bf16.msra.mxu0 %v5842
        %7835 = vmatprep.subr.bf16.mxu0 0
        %7836 = vmatpush1.bf16.msra.mxu0 %v5841
        %7837 = vmatprep.subr.bf16.mxu0 0
        %7838 = vmatpush1.bf16.msra.mxu0 %v5840
        %7839 = vmatprep.subr.bf16.mxu0 0
        %7840 = vmatpush1.bf16.msra.mxu0 %v5839
        %7841 = vmatprep.subr.bf16.mxu0 0
        %7842 = vmatpush1.bf16.msra.mxu0 %v5838
        %7843 = vmatprep.subr.bf16.mxu0 0
        %7844 = vmatpush1.bf16.msra.mxu0 %v5837
        %7845 = vmatprep.subr.bf16.mxu0 0
        %7846 = vmatpush2.bf16.msra.mxu0 %v5852
        %7847 = vmatprep.subr.bf16.mxu0 0
        %7848 = vmatpush2.bf16.msra.mxu0 %v5851
        %7849 = vmatprep.subr.bf16.mxu0 0
        %7850 = vmatpush2.bf16.msra.mxu0 %v5850
        %7851 = vmatprep.subr.bf16.mxu0 0
        %7852 = vmatpush2.bf16.msra.mxu0 %v5849
        %7853 = vmatprep.subr.bf16.mxu0 0
        %7854 = vmatpush2.bf16.msra.mxu0 %v5848
        %7855 = vmatprep.subr.bf16.mxu0 0
        %7856 = vmatpush2.bf16.msra.mxu0 %v5847
        %7857 = vmatprep.subr.bf16.mxu0 0
        %7858 = vmatpush2.bf16.msra.mxu0 %v5846
        %7859 = vmatprep.subr.bf16.mxu0 0
        %7860 = vmatpush2.bf16.msra.mxu0 %v5845
        %7861 = vmatprep.mubr.bf16.mxu0 %v2021
        %7862 = vmatmul.mubr.bf16.gmra.mxu0 %v2019
        %v7863 = vpop.f32.mrf.mxu0
        %v7864 = vadd.f32 %v7824, %v7863
        %v7865 = vpop.f32.mrf.mxu0
        %v7866 = vpop.f32.mrf.mxu0
        %v7867 = vpop.f32.mrf.mxu0
        %7868 = vdwg.mxu0
        %7869 = vmatprep.subr.bf16.mxu0 0
        %7870 = vmatpush1.bf16.msra.mxu0 %v5860
        %7871 = vmatprep.subr.bf16.mxu0 0
        %7872 = vmatpush1.bf16.msra.mxu0 %v5859
        %7873 = vmatprep.subr.bf16.mxu0 0
        %7874 = vmatpush1.bf16.msra.mxu0 %v5858
        %7875 = vmatprep.subr.bf16.mxu0 0
        %7876 = vmatpush1.bf16.msra.mxu0 %v5857
        %7877 = vmatprep.subr.bf16.mxu0 0
        %7878 = vmatpush1.bf16.msra.mxu0 %v5856
        %7879 = vmatprep.subr.bf16.mxu0 0
        %7880 = vmatpush1.bf16.msra.mxu0 %v5855
        %7881 = vmatprep.subr.bf16.mxu0 0
        %7882 = vmatpush1.bf16.msra.mxu0 %v5854
        %7883 = vmatprep.subr.bf16.mxu0 0
        %7884 = vmatpush1.bf16.msra.mxu0 %v5853
        %7885 = vmatprep.subr.bf16.mxu0 0
        %7886 = vmatpush2.bf16.msra.mxu0 %v5868
        %7887 = vmatprep.subr.bf16.mxu0 0
        %7888 = vmatpush2.bf16.msra.mxu0 %v5867
        %7889 = vmatprep.subr.bf16.mxu0 0
        %7890 = vmatpush2.bf16.msra.mxu0 %v5866
        %7891 = vmatprep.subr.bf16.mxu0 0
        %7892 = vmatpush2.bf16.msra.mxu0 %v5865
        %7893 = vmatprep.subr.bf16.mxu0 0
        %7894 = vmatpush2.bf16.msra.mxu0 %v5864
        %7895 = vmatprep.subr.bf16.mxu0 0
        %7896 = vmatpush2.bf16.msra.mxu0 %v5863
        %7897 = vmatprep.subr.bf16.mxu0 0
        %7898 = vmatpush2.bf16.msra.mxu0 %v5862
        %7899 = vmatprep.subr.bf16.mxu0 0
        %7900 = vmatpush2.bf16.msra.mxu0 %v5861
        %7901 = vmatprep.mubr.bf16.mxu0 %v2059
        %7902 = vmatmul.mubr.bf16.gmra.mxu0 %v2045
        %v7903 = vpop.f32.mrf.mxu0
        %v7904 = vadd.f32 %v7864, %v7903
        %v7905 = vpop.f32.mrf.mxu0
        %v7906 = vpop.f32.mrf.mxu0
        %v7907 = vpop.f32.mrf.mxu0
        %7908 = vdwg.mxu0
        %7909 = vmatprep.subr.bf16.mxu0 0
        %7910 = vmatpush1.bf16.msra.mxu0 %v5876
        %7911 = vmatprep.subr.bf16.mxu0 0
        %7912 = vmatpush1.bf16.msra.mxu0 %v5875
        %7913 = vmatprep.subr.bf16.mxu0 0
        %7914 = vmatpush1.bf16.msra.mxu0 %v5874
        %7915 = vmatprep.subr.bf16.mxu0 0
        %7916 = vmatpush1.bf16.msra.mxu0 %v5873
        %7917 = vmatprep.subr.bf16.mxu0 0
        %7918 = vmatpush1.bf16.msra.mxu0 %v5872
        %7919 = vmatprep.subr.bf16.mxu0 0
        %7920 = vmatpush1.bf16.msra.mxu0 %v5871
        %7921 = vmatprep.subr.bf16.mxu0 0
        %7922 = vmatpush1.bf16.msra.mxu0 %v5870
        %7923 = vmatprep.subr.bf16.mxu0 0
        %7924 = vmatpush1.bf16.msra.mxu0 %v5869
        %7925 = vmatprep.subr.bf16.mxu0 0
        %7926 = vmatpush2.bf16.msra.mxu0 %v5884
        %7927 = vmatprep.subr.bf16.mxu0 0
        %7928 = vmatpush2.bf16.msra.mxu0 %v5883
        %7929 = vmatprep.subr.bf16.mxu0 0
        %7930 = vmatpush2.bf16.msra.mxu0 %v5882
        %7931 = vmatprep.subr.bf16.mxu0 0
        %7932 = vmatpush2.bf16.msra.mxu0 %v5881
        %7933 = vmatprep.subr.bf16.mxu0 0
        %7934 = vmatpush2.bf16.msra.mxu0 %v5880
        %7935 = vmatprep.subr.bf16.mxu0 0
        %7936 = vmatpush2.bf16.msra.mxu0 %v5879
        %7937 = vmatprep.subr.bf16.mxu0 0
        %7938 = vmatpush2.bf16.msra.mxu0 %v5878
        %7939 = vmatprep.subr.bf16.mxu0 0
        %7940 = vmatpush2.bf16.msra.mxu0 %v5877
        %7941 = vmatprep.mubr.bf16.mxu0 %v2069
        %7942 = vmatmul.mubr.bf16.gmra.mxu0 %v2067
        %v7943 = vpop.f32.mrf.mxu0
        %v7944 = vadd.f32 %v7904, %v7943
        %v7945 = vpop.f32.mrf.mxu0
        %v7946 = vpop.f32.mrf.mxu0
        %v7947 = vpop.f32.mrf.mxu0
        %7948 = vdwg.mxu0
        %7949 = vmatprep.subr.bf16.mxu0 0
        %7950 = vmatpush1.bf16.msra.mxu0 %v5892
        %7951 = vmatprep.subr.bf16.mxu0 0
        %7952 = vmatpush1.bf16.msra.mxu0 %v5891
        %7953 = vmatprep.subr.bf16.mxu0 0
        %7954 = vmatpush1.bf16.msra.mxu0 %v5890
        %7955 = vmatprep.subr.bf16.mxu0 0
        %7956 = vmatpush1.bf16.msra.mxu0 %v5889
        %7957 = vmatprep.subr.bf16.mxu0 0
        %7958 = vmatpush1.bf16.msra.mxu0 %v5888
        %7959 = vmatprep.subr.bf16.mxu0 0
        %7960 = vmatpush1.bf16.msra.mxu0 %v5887
        %7961 = vmatprep.subr.bf16.mxu0 0
        %7962 = vmatpush1.bf16.msra.mxu0 %v5886
        %7963 = vmatprep.subr.bf16.mxu0 0
        %7964 = vmatpush1.bf16.msra.mxu0 %v5885
        %7965 = vmatprep.subr.bf16.mxu0 0
        %7966 = vmatpush2.bf16.msra.mxu0 %v5900
        %7967 = vmatprep.subr.bf16.mxu0 0
        %7968 = vmatpush2.bf16.msra.mxu0 %v5899
        %7969 = vmatprep.subr.bf16.mxu0 0
        %7970 = vmatpush2.bf16.msra.mxu0 %v5898
        %7971 = vmatprep.subr.bf16.mxu0 0
        %7972 = vmatpush2.bf16.msra.mxu0 %v5897
        %7973 = vmatprep.subr.bf16.mxu0 0
        %7974 = vmatpush2.bf16.msra.mxu0 %v5896
        %7975 = vmatprep.subr.bf16.mxu0 0
        %7976 = vmatpush2.bf16.msra.mxu0 %v5895
        %7977 = vmatprep.subr.bf16.mxu0 0
        %7978 = vmatpush2.bf16.msra.mxu0 %v5894
        %7979 = vmatprep.subr.bf16.mxu0 0
        %7980 = vmatpush2.bf16.msra.mxu0 %v5893
        %7981 = vmatprep.mubr.bf16.mxu0 %v2066
        %7982 = vmatmul.mubr.bf16.gmra.mxu0 %v2052
        %v7983 = vpop.f32.mrf.mxu0
        %v7984 = vadd.f32 %v7944, %v7983
        %v7985 = vpop.f32.mrf.mxu0
        %v7986 = vpop.f32.mrf.mxu0
        %v7987 = vpop.f32.mrf.mxu0
        %7988 = vdwg.mxu0
        %7989 = vmatprep.subr.bf16.mxu0 0
        %7990 = vmatpush1.bf16.msra.mxu0 %v5908
        %7991 = vmatprep.subr.bf16.mxu0 0
        %7992 = vmatpush1.bf16.msra.mxu0 %v5907
        %7993 = vmatprep.subr.bf16.mxu0 0
        %7994 = vmatpush1.bf16.msra.mxu0 %v5906
        %7995 = vmatprep.subr.bf16.mxu0 0
        %7996 = vmatpush1.bf16.msra.mxu0 %v5905
        %7997 = vmatprep.subr.bf16.mxu0 0
        %7998 = vmatpush1.bf16.msra.mxu0 %v5904
        %7999 = vmatprep.subr.bf16.mxu0 0
        %8000 = vmatpush1.bf16.msra.mxu0 %v5903
        %8001 = vmatprep.subr.bf16.mxu0 0
        %8002 = vmatpush1.bf16.msra.mxu0 %v5902
        %8003 = vmatprep.subr.bf16.mxu0 0
        %8004 = vmatpush1.bf16.msra.mxu0 %v5901
        %8005 = vmatprep.subr.bf16.mxu0 0
        %8006 = vmatpush2.bf16.msra.mxu0 %v5916
        %8007 = vmatprep.subr.bf16.mxu0 0
        %8008 = vmatpush2.bf16.msra.mxu0 %v5915
        %8009 = vmatprep.subr.bf16.mxu0 0
        %8010 = vmatpush2.bf16.msra.mxu0 %v5914
        %8011 = vmatprep.subr.bf16.mxu0 0
        %8012 = vmatpush2.bf16.msra.mxu0 %v5913
        %8013 = vmatprep.subr.bf16.mxu0 0
        %8014 = vmatpush2.bf16.msra.mxu0 %v5912
        %8015 = vmatprep.subr.bf16.mxu0 0
        %8016 = vmatpush2.bf16.msra.mxu0 %v5911
        %8017 = vmatprep.subr.bf16.mxu0 0
        %8018 = vmatpush2.bf16.msra.mxu0 %v5910
        %8019 = vmatprep.subr.bf16.mxu0 0
        %8020 = vmatpush2.bf16.msra.mxu0 %v5909
        %8021 = vmatprep.mubr.bf16.mxu0 %v2070
        %8022 = vmatmul.mubr.bf16.gmra.mxu0 %v2068
        %v8023 = vpop.f32.mrf.mxu0
        %v8024 = vadd.f32 %v7984, %v8023
        %v8025 = vpop.f32.mrf.mxu0
        %v8026 = vpop.f32.mrf.mxu0
        %v8027 = vpop.f32.mrf.mxu0
        %8028 = vdwg.mxu0
        %8029 = vmatprep.subr.bf16.mxu0 0
        %8030 = vmatpush1.bf16.msra.mxu0 %v5924
        %8031 = vmatprep.subr.bf16.mxu0 0
        %8032 = vmatpush1.bf16.msra.mxu0 %v5923
        %8033 = vmatprep.subr.bf16.mxu0 0
        %8034 = vmatpush1.bf16.msra.mxu0 %v5922
        %8035 = vmatprep.subr.bf16.mxu0 0
        %8036 = vmatpush1.bf16.msra.mxu0 %v5921
        %8037 = vmatprep.subr.bf16.mxu0 0
        %8038 = vmatpush1.bf16.msra.mxu0 %v5920
        %8039 = vmatprep.subr.bf16.mxu0 0
        %8040 = vmatpush1.bf16.msra.mxu0 %v5919
        %8041 = vmatprep.subr.bf16.mxu0 0
        %8042 = vmatpush1.bf16.msra.mxu0 %v5918
        %8043 = vmatprep.subr.bf16.mxu0 0
        %8044 = vmatpush1.bf16.msra.mxu0 %v5917
        %8045 = vmatprep.subr.bf16.mxu0 0
        %8046 = vmatpush2.bf16.msra.mxu0 %v5932
        %8047 = vmatprep.subr.bf16.mxu0 0
        %8048 = vmatpush2.bf16.msra.mxu0 %v5931
        %8049 = vmatprep.subr.bf16.mxu0 0
        %8050 = vmatpush2.bf16.msra.mxu0 %v5930
        %8051 = vmatprep.subr.bf16.mxu0 0
        %8052 = vmatpush2.bf16.msra.mxu0 %v5929
        %8053 = vmatprep.subr.bf16.mxu0 0
        %8054 = vmatpush2.bf16.msra.mxu0 %v5928
        %8055 = vmatprep.subr.bf16.mxu0 0
        %8056 = vmatpush2.bf16.msra.mxu0 %v5927
        %8057 = vmatprep.subr.bf16.mxu0 0
        %8058 = vmatpush2.bf16.msra.mxu0 %v5926
        %8059 = vmatprep.subr.bf16.mxu0 0
        %8060 = vmatpush2.bf16.msra.mxu0 %v5925
        %8061 = vmatprep.mubr.bf16.mxu0 %v2108
        %8062 = vmatmul.mubr.bf16.gmra.mxu0 %v2094
        %v8063 = vpop.f32.mrf.mxu0
        %v8064 = vadd.f32 %v8024, %v8063
        %v8065 = vpop.f32.mrf.mxu0
        %v8066 = vpop.f32.mrf.mxu0
        %v8067 = vpop.f32.mrf.mxu0
        %8068 = vdwg.mxu0
        %8069 = vmatprep.subr.bf16.mxu0 0
        %8070 = vmatpush1.bf16.msra.mxu0 %v5940
        %8071 = vmatprep.subr.bf16.mxu0 0
        %8072 = vmatpush1.bf16.msra.mxu0 %v5939
        %8073 = vmatprep.subr.bf16.mxu0 0
        %8074 = vmatpush1.bf16.msra.mxu0 %v5938
        %8075 = vmatprep.subr.bf16.mxu0 0
        %8076 = vmatpush1.bf16.msra.mxu0 %v5937
        %8077 = vmatprep.subr.bf16.mxu0 0
        %8078 = vmatpush1.bf16.msra.mxu0 %v5936
        %8079 = vmatprep.subr.bf16.mxu0 0
        %8080 = vmatpush1.bf16.msra.mxu0 %v5935
        %8081 = vmatprep.subr.bf16.mxu0 0
        %8082 = vmatpush1.bf16.msra.mxu0 %v5934
        %8083 = vmatprep.subr.bf16.mxu0 0
        %8084 = vmatpush1.bf16.msra.mxu0 %v5933
        %8085 = vmatprep.subr.bf16.mxu0 0
        %8086 = vmatpush2.bf16.msra.mxu0 %v5948
        %8087 = vmatprep.subr.bf16.mxu0 0
        %8088 = vmatpush2.bf16.msra.mxu0 %v5947
        %8089 = vmatprep.subr.bf16.mxu0 0
        %8090 = vmatpush2.bf16.msra.mxu0 %v5946
        %8091 = vmatprep.subr.bf16.mxu0 0
        %8092 = vmatpush2.bf16.msra.mxu0 %v5945
        %8093 = vmatprep.subr.bf16.mxu0 0
        %8094 = vmatpush2.bf16.msra.mxu0 %v5944
        %8095 = vmatprep.subr.bf16.mxu0 0
        %8096 = vmatpush2.bf16.msra.mxu0 %v5943
        %8097 = vmatprep.subr.bf16.mxu0 0
        %8098 = vmatpush2.bf16.msra.mxu0 %v5942
        %8099 = vmatprep.subr.bf16.mxu0 0
        %8100 = vmatpush2.bf16.msra.mxu0 %v5941
        %8101 = vmatprep.mubr.bf16.mxu0 %v2118
        %8102 = vmatmul.mubr.bf16.gmra.mxu0 %v2116
        %v8103 = vpop.f32.mrf.mxu0
        %v8104 = vadd.f32 %v8064, %v8103
        %v8105 = vpop.f32.mrf.mxu0
        %v8106 = vpop.f32.mrf.mxu0
        %v8107 = vpop.f32.mrf.mxu0
        %8108 = vdwg.mxu0
        %8109 = vmatprep.subr.bf16.mxu0 0
        %8110 = vmatpush1.bf16.msra.mxu0 %v5956
        %8111 = vmatprep.subr.bf16.mxu0 0
        %8112 = vmatpush1.bf16.msra.mxu0 %v5955
        %8113 = vmatprep.subr.bf16.mxu0 0
        %8114 = vmatpush1.bf16.msra.mxu0 %v5954
        %8115 = vmatprep.subr.bf16.mxu0 0
        %8116 = vmatpush1.bf16.msra.mxu0 %v5953
        %8117 = vmatprep.subr.bf16.mxu0 0
        %8118 = vmatpush1.bf16.msra.mxu0 %v5952
        %8119 = vmatprep.subr.bf16.mxu0 0
        %8120 = vmatpush1.bf16.msra.mxu0 %v5951
        %8121 = vmatprep.subr.bf16.mxu0 0
        %8122 = vmatpush1.bf16.msra.mxu0 %v5950
        %8123 = vmatprep.subr.bf16.mxu0 0
        %8124 = vmatpush1.bf16.msra.mxu0 %v5949
        %8125 = vmatprep.subr.bf16.mxu0 0
        %8126 = vmatpush2.bf16.msra.mxu0 %v5964
        %8127 = vmatprep.subr.bf16.mxu0 0
        %8128 = vmatpush2.bf16.msra.mxu0 %v5963
        %8129 = vmatprep.subr.bf16.mxu0 0
        %8130 = vmatpush2.bf16.msra.mxu0 %v5962
        %8131 = vmatprep.subr.bf16.mxu0 0
        %8132 = vmatpush2.bf16.msra.mxu0 %v5961
        %8133 = vmatprep.subr.bf16.mxu0 0
        %8134 = vmatpush2.bf16.msra.mxu0 %v5960
        %8135 = vmatprep.subr.bf16.mxu0 0
        %8136 = vmatpush2.bf16.msra.mxu0 %v5959
        %8137 = vmatprep.subr.bf16.mxu0 0
        %8138 = vmatpush2.bf16.msra.mxu0 %v5958
        %8139 = vmatprep.subr.bf16.mxu0 0
        %8140 = vmatpush2.bf16.msra.mxu0 %v5957
        %8141 = vmatprep.mubr.bf16.mxu0 %v2115
        %8142 = vmatmul.mubr.bf16.gmra.mxu0 %v2101
        %v8143 = vpop.f32.mrf.mxu0
        %v8144 = vadd.f32 %v8104, %v8143
        %v8145 = vpop.f32.mrf.mxu0
        %v8146 = vpop.f32.mrf.mxu0
        %v8147 = vpop.f32.mrf.mxu0
        %8148 = vdwg.mxu0
        %8149 = vmatprep.subr.bf16.mxu0 0
        %8150 = vmatpush1.bf16.msra.mxu0 %v5972
        %8151 = vmatprep.subr.bf16.mxu0 0
        %8152 = vmatpush1.bf16.msra.mxu0 %v5971
        %8153 = vmatprep.subr.bf16.mxu0 0
        %8154 = vmatpush1.bf16.msra.mxu0 %v5970
        %8155 = vmatprep.subr.bf16.mxu0 0
        %8156 = vmatpush1.bf16.msra.mxu0 %v5969
        %8157 = vmatprep.subr.bf16.mxu0 0
        %8158 = vmatpush1.bf16.msra.mxu0 %v5968
        %8159 = vmatprep.subr.bf16.mxu0 0
        %8160 = vmatpush1.bf16.msra.mxu0 %v5967
        %8161 = vmatprep.subr.bf16.mxu0 0
        %8162 = vmatpush1.bf16.msra.mxu0 %v5966
        %8163 = vmatprep.subr.bf16.mxu0 0
        %8164 = vmatpush1.bf16.msra.mxu0 %v5965
        %8165 = vmatprep.subr.bf16.mxu0 0
        %8166 = vmatpush2.bf16.msra.mxu0 %v5980
        %8167 = vmatprep.subr.bf16.mxu0 0
        %8168 = vmatpush2.bf16.msra.mxu0 %v5979
        %8169 = vmatprep.subr.bf16.mxu0 0
        %8170 = vmatpush2.bf16.msra.mxu0 %v5978
        %8171 = vmatprep.subr.bf16.mxu0 0
        %8172 = vmatpush2.bf16.msra.mxu0 %v5977
        %8173 = vmatprep.subr.bf16.mxu0 0
        %8174 = vmatpush2.bf16.msra.mxu0 %v5976
        %8175 = vmatprep.subr.bf16.mxu0 0
        %8176 = vmatpush2.bf16.msra.mxu0 %v5975
        %8177 = vmatprep.subr.bf16.mxu0 0
        %8178 = vmatpush2.bf16.msra.mxu0 %v5974
        %8179 = vmatprep.subr.bf16.mxu0 0
        %8180 = vmatpush2.bf16.msra.mxu0 %v5973
        %8181 = vmatprep.mubr.bf16.mxu0 %v2119
        %8182 = vmatmul.mubr.bf16.gmra.mxu0 %v2117
        %v8183 = vpop.f32.mrf.mxu0
        %v8184 = vadd.f32 %v8144, %v8183
        %v8185 = vpop.f32.mrf.mxu0
        %v8186 = vpop.f32.mrf.mxu0
        %v8187 = vpop.f32.mrf.mxu0
        %8188 = vdwg.mxu0
        %8189 = vmatprep.subr.bf16.mxu0 0
        %8190 = vmatpush1.bf16.msra.mxu0 %v5988
        %8191 = vmatprep.subr.bf16.mxu0 0
        %8192 = vmatpush1.bf16.msra.mxu0 %v5987
        %8193 = vmatprep.subr.bf16.mxu0 0
        %8194 = vmatpush1.bf16.msra.mxu0 %v5986
        %8195 = vmatprep.subr.bf16.mxu0 0
        %8196 = vmatpush1.bf16.msra.mxu0 %v5985
        %8197 = vmatprep.subr.bf16.mxu0 0
        %8198 = vmatpush1.bf16.msra.mxu0 %v5984
        %8199 = vmatprep.subr.bf16.mxu0 0
        %8200 = vmatpush1.bf16.msra.mxu0 %v5983
        %8201 = vmatprep.subr.bf16.mxu0 0
        %8202 = vmatpush1.bf16.msra.mxu0 %v5982
        %8203 = vmatprep.subr.bf16.mxu0 0
        %8204 = vmatpush1.bf16.msra.mxu0 %v5981
        %8205 = vmatprep.subr.bf16.mxu0 0
        %8206 = vmatpush2.bf16.msra.mxu0 %v5996
        %8207 = vmatprep.subr.bf16.mxu0 0
        %8208 = vmatpush2.bf16.msra.mxu0 %v5995
        %8209 = vmatprep.subr.bf16.mxu0 0
        %8210 = vmatpush2.bf16.msra.mxu0 %v5994
        %8211 = vmatprep.subr.bf16.mxu0 0
        %8212 = vmatpush2.bf16.msra.mxu0 %v5993
        %8213 = vmatprep.subr.bf16.mxu0 0
        %8214 = vmatpush2.bf16.msra.mxu0 %v5992
        %8215 = vmatprep.subr.bf16.mxu0 0
        %8216 = vmatpush2.bf16.msra.mxu0 %v5991
        %8217 = vmatprep.subr.bf16.mxu0 0
        %8218 = vmatpush2.bf16.msra.mxu0 %v5990
        %8219 = vmatprep.subr.bf16.mxu0 0
        %8220 = vmatpush2.bf16.msra.mxu0 %v5989
        %8221 = vmatprep.mubr.bf16.mxu0 %v2157
        %8222 = vmatmul.mubr.bf16.gmra.mxu0 %v2143
        %v8223 = vpop.f32.mrf.mxu0
        %v8224 = vadd.f32 %v8184, %v8223
        %v8225 = vpop.f32.mrf.mxu0
        %v8226 = vpop.f32.mrf.mxu0
        %v8227 = vpop.f32.mrf.mxu0
        %8228 = vdwg.mxu0
        %8229 = vmatprep.subr.bf16.mxu0 0
        %8230 = vmatpush1.bf16.msra.mxu0 %v6004
        %8231 = vmatprep.subr.bf16.mxu0 0
        %8232 = vmatpush1.bf16.msra.mxu0 %v6003
        %8233 = vmatprep.subr.bf16.mxu0 0
        %8234 = vmatpush1.bf16.msra.mxu0 %v6002
        %8235 = vmatprep.subr.bf16.mxu0 0
        %8236 = vmatpush1.bf16.msra.mxu0 %v6001
        %8237 = vmatprep.subr.bf16.mxu0 0
        %8238 = vmatpush1.bf16.msra.mxu0 %v6000
        %8239 = vmatprep.subr.bf16.mxu0 0
        %8240 = vmatpush1.bf16.msra.mxu0 %v5999
        %8241 = vmatprep.subr.bf16.mxu0 0
        %8242 = vmatpush1.bf16.msra.mxu0 %v5998
        %8243 = vmatprep.subr.bf16.mxu0 0
        %8244 = vmatpush1.bf16.msra.mxu0 %v5997
        %8245 = vmatprep.subr.bf16.mxu0 0
        %8246 = vmatpush2.bf16.msra.mxu0 %v6012
        %8247 = vmatprep.subr.bf16.mxu0 0
        %8248 = vmatpush2.bf16.msra.mxu0 %v6011
        %8249 = vmatprep.subr.bf16.mxu0 0
        %8250 = vmatpush2.bf16.msra.mxu0 %v6010
        %8251 = vmatprep.subr.bf16.mxu0 0
        %8252 = vmatpush2.bf16.msra.mxu0 %v6009
        %8253 = vmatprep.subr.bf16.mxu0 0
        %8254 = vmatpush2.bf16.msra.mxu0 %v6008
        %8255 = vmatprep.subr.bf16.mxu0 0
        %8256 = vmatpush2.bf16.msra.mxu0 %v6007
        %8257 = vmatprep.subr.bf16.mxu0 0
        %8258 = vmatpush2.bf16.msra.mxu0 %v6006
        %8259 = vmatprep.subr.bf16.mxu0 0
        %8260 = vmatpush2.bf16.msra.mxu0 %v6005
        %8261 = vmatprep.mubr.bf16.mxu0 %v2167
        %8262 = vmatmul.mubr.bf16.gmra.mxu0 %v2165
        %v8263 = vpop.f32.mrf.mxu0
        %v8264 = vadd.f32 %v8224, %v8263
        %v8265 = vpop.f32.mrf.mxu0
        %v8266 = vpop.f32.mrf.mxu0
        %v8267 = vpop.f32.mrf.mxu0
        %8268 = vdwg.mxu0
        %8269 = vmatprep.subr.bf16.mxu0 0
        %8270 = vmatpush1.bf16.msra.mxu0 %v6020
        %8271 = vmatprep.subr.bf16.mxu0 0
        %8272 = vmatpush1.bf16.msra.mxu0 %v6019
        %8273 = vmatprep.subr.bf16.mxu0 0
        %8274 = vmatpush1.bf16.msra.mxu0 %v6018
        %8275 = vmatprep.subr.bf16.mxu0 0
        %8276 = vmatpush1.bf16.msra.mxu0 %v6017
        %8277 = vmatprep.subr.bf16.mxu0 0
        %8278 = vmatpush1.bf16.msra.mxu0 %v6016
        %8279 = vmatprep.subr.bf16.mxu0 0
        %8280 = vmatpush1.bf16.msra.mxu0 %v6015
        %8281 = vmatprep.subr.bf16.mxu0 0
        %8282 = vmatpush1.bf16.msra.mxu0 %v6014
        %8283 = vmatprep.subr.bf16.mxu0 0
        %8284 = vmatpush1.bf16.msra.mxu0 %v6013
        %8285 = vmatprep.subr.bf16.mxu0 0
        %8286 = vmatpush2.bf16.msra.mxu0 %v6028
        %8287 = vmatprep.subr.bf16.mxu0 0
        %8288 = vmatpush2.bf16.msra.mxu0 %v6027
        %8289 = vmatprep.subr.bf16.mxu0 0
        %8290 = vmatpush2.bf16.msra.mxu0 %v6026
        %8291 = vmatprep.subr.bf16.mxu0 0
        %8292 = vmatpush2.bf16.msra.mxu0 %v6025
        %8293 = vmatprep.subr.bf16.mxu0 0
        %8294 = vmatpush2.bf16.msra.mxu0 %v6024
        %8295 = vmatprep.subr.bf16.mxu0 0
        %8296 = vmatpush2.bf16.msra.mxu0 %v6023
        %8297 = vmatprep.subr.bf16.mxu0 0
        %8298 = vmatpush2.bf16.msra.mxu0 %v6022
        %8299 = vmatprep.subr.bf16.mxu0 0
        %8300 = vmatpush2.bf16.msra.mxu0 %v6021
        %8301 = vmatprep.mubr.bf16.mxu0 %v2164
        %8302 = vmatmul.mubr.bf16.gmra.mxu0 %v2150
        %v8303 = vpop.f32.mrf.mxu0
        %v8304 = vadd.f32 %v8264, %v8303
        %v8305 = vpop.f32.mrf.mxu0
        %v8306 = vpop.f32.mrf.mxu0
        %v8307 = vpop.f32.mrf.mxu0
        %8308 = vdwg.mxu0
        %8309 = vmatprep.subr.bf16.mxu0 0
        %8310 = vmatpush1.bf16.msra.mxu0 %v6036
        %8311 = vmatprep.subr.bf16.mxu0 0
        %8312 = vmatpush1.bf16.msra.mxu0 %v6035
        %8313 = vmatprep.subr.bf16.mxu0 0
        %8314 = vmatpush1.bf16.msra.mxu0 %v6034
        %8315 = vmatprep.subr.bf16.mxu0 0
        %8316 = vmatpush1.bf16.msra.mxu0 %v6033
        %8317 = vmatprep.subr.bf16.mxu0 0
        %8318 = vmatpush1.bf16.msra.mxu0 %v6032
        %8319 = vmatprep.subr.bf16.mxu0 0
        %8320 = vmatpush1.bf16.msra.mxu0 %v6031
        %8321 = vmatprep.subr.bf16.mxu0 0
        %8322 = vmatpush1.bf16.msra.mxu0 %v6030
        %8323 = vmatprep.subr.bf16.mxu0 0
        %8324 = vmatpush1.bf16.msra.mxu0 %v6029
        %8325 = vmatprep.subr.bf16.mxu0 0
        %8326 = vmatpush2.bf16.msra.mxu0 %v6044
        %8327 = vmatprep.subr.bf16.mxu0 0
        %8328 = vmatpush2.bf16.msra.mxu0 %v6043
        %8329 = vmatprep.subr.bf16.mxu0 0
        %8330 = vmatpush2.bf16.msra.mxu0 %v6042
        %8331 = vmatprep.subr.bf16.mxu0 0
        %8332 = vmatpush2.bf16.msra.mxu0 %v6041
        %8333 = vmatprep.subr.bf16.mxu0 0
        %8334 = vmatpush2.bf16.msra.mxu0 %v6040
        %8335 = vmatprep.subr.bf16.mxu0 0
        %8336 = vmatpush2.bf16.msra.mxu0 %v6039
        %8337 = vmatprep.subr.bf16.mxu0 0
        %8338 = vmatpush2.bf16.msra.mxu0 %v6038
        %8339 = vmatprep.subr.bf16.mxu0 0
        %8340 = vmatpush2.bf16.msra.mxu0 %v6037
        %8341 = vmatprep.mubr.bf16.mxu0 %v2168
        %8342 = vmatmul.mubr.bf16.gmra.mxu0 %v2166
        %v8343 = vpop.f32.mrf.mxu0
        %v8344 = vadd.f32 %v8304, %v8343
        %v8345 = vpop.f32.mrf.mxu0
        %v8346 = vpop.f32.mrf.mxu0
        %v8347 = vpop.f32.mrf.mxu0
        %8348 = vdwg.mxu0
        %8349 = vmatprep.subr.bf16.mxu0 0
        %8350 = vmatpush1.bf16.msra.mxu0 %v6052
        %8351 = vmatprep.subr.bf16.mxu0 0
        %8352 = vmatpush1.bf16.msra.mxu0 %v6051
        %8353 = vmatprep.subr.bf16.mxu0 0
        %8354 = vmatpush1.bf16.msra.mxu0 %v6050
        %8355 = vmatprep.subr.bf16.mxu0 0
        %8356 = vmatpush1.bf16.msra.mxu0 %v6049
        %8357 = vmatprep.subr.bf16.mxu0 0
        %8358 = vmatpush1.bf16.msra.mxu0 %v6048
        %8359 = vmatprep.subr.bf16.mxu0 0
        %8360 = vmatpush1.bf16.msra.mxu0 %v6047
        %8361 = vmatprep.subr.bf16.mxu0 0
        %8362 = vmatpush1.bf16.msra.mxu0 %v6046
        %8363 = vmatprep.subr.bf16.mxu0 0
        %8364 = vmatpush1.bf16.msra.mxu0 %v6045
        %8365 = vmatprep.subr.bf16.mxu0 0
        %8366 = vmatpush2.bf16.msra.mxu0 %v6060
        %8367 = vmatprep.subr.bf16.mxu0 0
        %8368 = vmatpush2.bf16.msra.mxu0 %v6059
        %8369 = vmatprep.subr.bf16.mxu0 0
        %8370 = vmatpush2.bf16.msra.mxu0 %v6058
        %8371 = vmatprep.subr.bf16.mxu0 0
        %8372 = vmatpush2.bf16.msra.mxu0 %v6057
        %8373 = vmatprep.subr.bf16.mxu0 0
        %8374 = vmatpush2.bf16.msra.mxu0 %v6056
        %8375 = vmatprep.subr.bf16.mxu0 0
        %8376 = vmatpush2.bf16.msra.mxu0 %v6055
        %8377 = vmatprep.subr.bf16.mxu0 0
        %8378 = vmatpush2.bf16.msra.mxu0 %v6054
        %8379 = vmatprep.subr.bf16.mxu0 0
        %8380 = vmatpush2.bf16.msra.mxu0 %v6053
        %8381 = vmatprep.mubr.bf16.mxu0 %v2206
        %8382 = vmatmul.mubr.bf16.gmra.mxu0 %v2192
        %v8383 = vpop.f32.mrf.mxu0
        %v8384 = vadd.f32 %v8344, %v8383
        %v8385 = vpop.f32.mrf.mxu0
        %v8386 = vpop.f32.mrf.mxu0
        %v8387 = vpop.f32.mrf.mxu0
        %8388 = vdwg.mxu0
        %8389 = vmatprep.subr.bf16.mxu0 0
        %8390 = vmatpush1.bf16.msra.mxu0 %v6068
        %8391 = vmatprep.subr.bf16.mxu0 0
        %8392 = vmatpush1.bf16.msra.mxu0 %v6067
        %8393 = vmatprep.subr.bf16.mxu0 0
        %8394 = vmatpush1.bf16.msra.mxu0 %v6066
        %8395 = vmatprep.subr.bf16.mxu0 0
        %8396 = vmatpush1.bf16.msra.mxu0 %v6065
        %8397 = vmatprep.subr.bf16.mxu0 0
        %8398 = vmatpush1.bf16.msra.mxu0 %v6064
        %8399 = vmatprep.subr.bf16.mxu0 0
        %8400 = vmatpush1.bf16.msra.mxu0 %v6063
        %8401 = vmatprep.subr.bf16.mxu0 0
        %8402 = vmatpush1.bf16.msra.mxu0 %v6062
        %8403 = vmatprep.subr.bf16.mxu0 0
        %8404 = vmatpush1.bf16.msra.mxu0 %v6061
        %8405 = vmatprep.subr.bf16.mxu0 0
        %8406 = vmatpush2.bf16.msra.mxu0 %v6076
        %8407 = vmatprep.subr.bf16.mxu0 0
        %8408 = vmatpush2.bf16.msra.mxu0 %v6075
        %8409 = vmatprep.subr.bf16.mxu0 0
        %8410 = vmatpush2.bf16.msra.mxu0 %v6074
        %8411 = vmatprep.subr.bf16.mxu0 0
        %8412 = vmatpush2.bf16.msra.mxu0 %v6073
        %8413 = vmatprep.subr.bf16.mxu0 0
        %8414 = vmatpush2.bf16.msra.mxu0 %v6072
        %8415 = vmatprep.subr.bf16.mxu0 0
        %8416 = vmatpush2.bf16.msra.mxu0 %v6071
        %8417 = vmatprep.subr.bf16.mxu0 0
        %8418 = vmatpush2.bf16.msra.mxu0 %v6070
        %8419 = vmatprep.subr.bf16.mxu0 0
        %8420 = vmatpush2.bf16.msra.mxu0 %v6069
        %8421 = vmatprep.mubr.bf16.mxu0 %v2216
        %8422 = vmatmul.mubr.bf16.gmra.mxu0 %v2214
        %v8423 = vpop.f32.mrf.mxu0
        %v8424 = vadd.f32 %v8384, %v8423
        %v8425 = vpop.f32.mrf.mxu0
        %v8426 = vpop.f32.mrf.mxu0
        %v8427 = vpop.f32.mrf.mxu0
        %8428 = vdwg.mxu0
        %8429 = vmatprep.subr.bf16.mxu0 0
        %8430 = vmatpush1.bf16.msra.mxu0 %v6084
        %8431 = vmatprep.subr.bf16.mxu0 0
        %8432 = vmatpush1.bf16.msra.mxu0 %v6083
        %8433 = vmatprep.subr.bf16.mxu0 0
        %8434 = vmatpush1.bf16.msra.mxu0 %v6082
        %8435 = vmatprep.subr.bf16.mxu0 0
        %8436 = vmatpush1.bf16.msra.mxu0 %v6081
        %8437 = vmatprep.subr.bf16.mxu0 0
        %8438 = vmatpush1.bf16.msra.mxu0 %v6080
        %8439 = vmatprep.subr.bf16.mxu0 0
        %8440 = vmatpush1.bf16.msra.mxu0 %v6079
        %8441 = vmatprep.subr.bf16.mxu0 0
        %8442 = vmatpush1.bf16.msra.mxu0 %v6078
        %8443 = vmatprep.subr.bf16.mxu0 0
        %8444 = vmatpush1.bf16.msra.mxu0 %v6077
        %8445 = vmatprep.subr.bf16.mxu0 0
        %8446 = vmatpush2.bf16.msra.mxu0 %v6092
        %8447 = vmatprep.subr.bf16.mxu0 0
        %8448 = vmatpush2.bf16.msra.mxu0 %v6091
        %8449 = vmatprep.subr.bf16.mxu0 0
        %8450 = vmatpush2.bf16.msra.mxu0 %v6090
        %8451 = vmatprep.subr.bf16.mxu0 0
        %8452 = vmatpush2.bf16.msra.mxu0 %v6089
        %8453 = vmatprep.subr.bf16.mxu0 0
        %8454 = vmatpush2.bf16.msra.mxu0 %v6088
        %8455 = vmatprep.subr.bf16.mxu0 0
        %8456 = vmatpush2.bf16.msra.mxu0 %v6087
        %8457 = vmatprep.subr.bf16.mxu0 0
        %8458 = vmatpush2.bf16.msra.mxu0 %v6086
        %8459 = vmatprep.subr.bf16.mxu0 0
        %8460 = vmatpush2.bf16.msra.mxu0 %v6085
        %8461 = vmatprep.mubr.bf16.mxu0 %v2213
        %8462 = vmatmul.mubr.bf16.gmra.mxu0 %v2199
        %v8463 = vpop.f32.mrf.mxu0
        %v8464 = vadd.f32 %v8424, %v8463
        %v8465 = vpop.f32.mrf.mxu0
        %v8466 = vpop.f32.mrf.mxu0
        %v8467 = vpop.f32.mrf.mxu0
        %8468 = vdwg.mxu0
        %8469 = vmatprep.subr.bf16.mxu0 0
        %8470 = vmatpush1.bf16.msra.mxu0 %v6100
        %8471 = vmatprep.subr.bf16.mxu0 0
        %8472 = vmatpush1.bf16.msra.mxu0 %v6099
        %8473 = vmatprep.subr.bf16.mxu0 0
        %8474 = vmatpush1.bf16.msra.mxu0 %v6098
        %8475 = vmatprep.subr.bf16.mxu0 0
        %8476 = vmatpush1.bf16.msra.mxu0 %v6097
        %8477 = vmatprep.subr.bf16.mxu0 0
        %8478 = vmatpush1.bf16.msra.mxu0 %v6096
        %8479 = vmatprep.subr.bf16.mxu0 0
        %8480 = vmatpush1.bf16.msra.mxu0 %v6095
        %8481 = vmatprep.subr.bf16.mxu0 0
        %8482 = vmatpush1.bf16.msra.mxu0 %v6094
        %8483 = vmatprep.subr.bf16.mxu0 0
        %8484 = vmatpush1.bf16.msra.mxu0 %v6093
        %8485 = vmatprep.subr.bf16.mxu0 0
        %8486 = vmatpush2.bf16.msra.mxu0 %v6108
        %8487 = vmatprep.subr.bf16.mxu0 0
        %8488 = vmatpush2.bf16.msra.mxu0 %v6107
        %8489 = vmatprep.subr.bf16.mxu0 0
        %8490 = vmatpush2.bf16.msra.mxu0 %v6106
        %8491 = vmatprep.subr.bf16.mxu0 0
        %8492 = vmatpush2.bf16.msra.mxu0 %v6105
        %8493 = vmatprep.subr.bf16.mxu0 0
        %8494 = vmatpush2.bf16.msra.mxu0 %v6104
        %8495 = vmatprep.subr.bf16.mxu0 0
        %8496 = vmatpush2.bf16.msra.mxu0 %v6103
        %8497 = vmatprep.subr.bf16.mxu0 0
        %8498 = vmatpush2.bf16.msra.mxu0 %v6102
        %8499 = vmatprep.subr.bf16.mxu0 0
        %8500 = vmatpush2.bf16.msra.mxu0 %v6101
        %8501 = vmatprep.mubr.bf16.mxu0 %v2217
        %8502 = vmatmul.mubr.bf16.gmra.mxu0 %v2215
        %v8503 = vpop.f32.mrf.mxu0
        %v8504 = vadd.f32 %v8464, %v8503
        %v8505 = vpop.f32.mrf.mxu0
        %v8506 = vpop.f32.mrf.mxu0
        %v8507 = vpop.f32.mrf.mxu0
        %8508 = vdwg.mxu0
        %8509 = vmatprep.subr.bf16.mxu0 0
        %8510 = vmatpush1.bf16.msra.mxu0 %v6116
        %8511 = vmatprep.subr.bf16.mxu0 0
        %8512 = vmatpush1.bf16.msra.mxu0 %v6115
        %8513 = vmatprep.subr.bf16.mxu0 0
        %8514 = vmatpush1.bf16.msra.mxu0 %v6114
        %8515 = vmatprep.subr.bf16.mxu0 0
        %8516 = vmatpush1.bf16.msra.mxu0 %v6113
        %8517 = vmatprep.subr.bf16.mxu0 0
        %8518 = vmatpush1.bf16.msra.mxu0 %v6112
        %8519 = vmatprep.subr.bf16.mxu0 0
        %8520 = vmatpush1.bf16.msra.mxu0 %v6111
        %8521 = vmatprep.subr.bf16.mxu0 0
        %8522 = vmatpush1.bf16.msra.mxu0 %v6110
        %8523 = vmatprep.subr.bf16.mxu0 0
        %8524 = vmatpush1.bf16.msra.mxu0 %v6109
        %8525 = vmatprep.subr.bf16.mxu0 0
        %8526 = vmatpush2.bf16.msra.mxu0 %v6124
        %8527 = vmatprep.subr.bf16.mxu0 0
        %8528 = vmatpush2.bf16.msra.mxu0 %v6123
        %8529 = vmatprep.subr.bf16.mxu0 0
        %8530 = vmatpush2.bf16.msra.mxu0 %v6122
        %8531 = vmatprep.subr.bf16.mxu0 0
        %8532 = vmatpush2.bf16.msra.mxu0 %v6121
        %8533 = vmatprep.subr.bf16.mxu0 0
        %8534 = vmatpush2.bf16.msra.mxu0 %v6120
        %8535 = vmatprep.subr.bf16.mxu0 0
        %8536 = vmatpush2.bf16.msra.mxu0 %v6119
        %8537 = vmatprep.subr.bf16.mxu0 0
        %8538 = vmatpush2.bf16.msra.mxu0 %v6118
        %8539 = vmatprep.subr.bf16.mxu0 0
        %8540 = vmatpush2.bf16.msra.mxu0 %v6117
        %8541 = vmatprep.mubr.bf16.mxu0 %v2255
        %8542 = vmatmul.mubr.bf16.gmra.mxu0 %v2241
        %v8543 = vpop.f32.mrf.mxu0
        %v8544 = vadd.f32 %v8504, %v8543
        %v8545 = vpop.f32.mrf.mxu0
        %v8546 = vpop.f32.mrf.mxu0
        %v8547 = vpop.f32.mrf.mxu0
        %8548 = vdwg.mxu0
        %8549 = vmatprep.subr.bf16.mxu0 0
        %8550 = vmatpush1.bf16.msra.mxu0 %v6132
        %8551 = vmatprep.subr.bf16.mxu0 0
        %8552 = vmatpush1.bf16.msra.mxu0 %v6131
        %8553 = vmatprep.subr.bf16.mxu0 0
        %8554 = vmatpush1.bf16.msra.mxu0 %v6130
        %8555 = vmatprep.subr.bf16.mxu0 0
        %8556 = vmatpush1.bf16.msra.mxu0 %v6129
        %8557 = vmatprep.subr.bf16.mxu0 0
        %8558 = vmatpush1.bf16.msra.mxu0 %v6128
        %8559 = vmatprep.subr.bf16.mxu0 0
        %8560 = vmatpush1.bf16.msra.mxu0 %v6127
        %8561 = vmatprep.subr.bf16.mxu0 0
        %8562 = vmatpush1.bf16.msra.mxu0 %v6126
        %8563 = vmatprep.subr.bf16.mxu0 0
        %8564 = vmatpush1.bf16.msra.mxu0 %v6125
        %8565 = vmatprep.subr.bf16.mxu0 0
        %8566 = vmatpush2.bf16.msra.mxu0 %v6140
        %8567 = vmatprep.subr.bf16.mxu0 0
        %8568 = vmatpush2.bf16.msra.mxu0 %v6139
        %8569 = vmatprep.subr.bf16.mxu0 0
        %8570 = vmatpush2.bf16.msra.mxu0 %v6138
        %8571 = vmatprep.subr.bf16.mxu0 0
        %8572 = vmatpush2.bf16.msra.mxu0 %v6137
        %8573 = vmatprep.subr.bf16.mxu0 0
        %8574 = vmatpush2.bf16.msra.mxu0 %v6136
        %8575 = vmatprep.subr.bf16.mxu0 0
        %8576 = vmatpush2.bf16.msra.mxu0 %v6135
        %8577 = vmatprep.subr.bf16.mxu0 0
        %8578 = vmatpush2.bf16.msra.mxu0 %v6134
        %8579 = vmatprep.subr.bf16.mxu0 0
        %8580 = vmatpush2.bf16.msra.mxu0 %v6133
        %8581 = vmatprep.mubr.bf16.mxu0 %v2265
        %8582 = vmatmul.mubr.bf16.gmra.mxu0 %v2263
        %v8583 = vpop.f32.mrf.mxu0
        %v8584 = vadd.f32 %v8544, %v8583
        %v8585 = vpop.f32.mrf.mxu0
        %v8586 = vpop.f32.mrf.mxu0
        %v8587 = vpop.f32.mrf.mxu0
        %8588 = vdwg.mxu0
        %8589 = vmatprep.subr.bf16.mxu0 0
        %8590 = vmatpush1.bf16.msra.mxu0 %v6148
        %8591 = vmatprep.subr.bf16.mxu0 0
        %8592 = vmatpush1.bf16.msra.mxu0 %v6147
        %8593 = vmatprep.subr.bf16.mxu0 0
        %8594 = vmatpush1.bf16.msra.mxu0 %v6146
        %8595 = vmatprep.subr.bf16.mxu0 0
        %8596 = vmatpush1.bf16.msra.mxu0 %v6145
        %8597 = vmatprep.subr.bf16.mxu0 0
        %8598 = vmatpush1.bf16.msra.mxu0 %v6144
        %8599 = vmatprep.subr.bf16.mxu0 0
        %8600 = vmatpush1.bf16.msra.mxu0 %v6143
        %8601 = vmatprep.subr.bf16.mxu0 0
        %8602 = vmatpush1.bf16.msra.mxu0 %v6142
        %8603 = vmatprep.subr.bf16.mxu0 0
        %8604 = vmatpush1.bf16.msra.mxu0 %v6141
        %8605 = vmatprep.subr.bf16.mxu0 0
        %8606 = vmatpush2.bf16.msra.mxu0 %v6156
        %8607 = vmatprep.subr.bf16.mxu0 0
        %8608 = vmatpush2.bf16.msra.mxu0 %v6155
        %8609 = vmatprep.subr.bf16.mxu0 0
        %8610 = vmatpush2.bf16.msra.mxu0 %v6154
        %8611 = vmatprep.subr.bf16.mxu0 0
        %8612 = vmatpush2.bf16.msra.mxu0 %v6153
        %8613 = vmatprep.subr.bf16.mxu0 0
        %8614 = vmatpush2.bf16.msra.mxu0 %v6152
        %8615 = vmatprep.subr.bf16.mxu0 0
        %8616 = vmatpush2.bf16.msra.mxu0 %v6151
        %8617 = vmatprep.subr.bf16.mxu0 0
        %8618 = vmatpush2.bf16.msra.mxu0 %v6150
        %8619 = vmatprep.subr.bf16.mxu0 0
        %8620 = vmatpush2.bf16.msra.mxu0 %v6149
        %8621 = vmatprep.mubr.bf16.mxu0 %v2262
        %8622 = vmatmul.mubr.bf16.gmra.mxu0 %v2248
        %v8623 = vpop.f32.mrf.mxu0
        %v8624 = vadd.f32 %v8584, %v8623
        %v8625 = vpop.f32.mrf.mxu0
        %v8626 = vpop.f32.mrf.mxu0
        %v8627 = vpop.f32.mrf.mxu0
        %8628 = vdwg.mxu0
        %8629 = vmatprep.subr.bf16.mxu0 0
        %8630 = vmatpush1.bf16.msra.mxu0 %v6164
        %8631 = vmatprep.subr.bf16.mxu0 0
        %8632 = vmatpush1.bf16.msra.mxu0 %v6163
        %8633 = vmatprep.subr.bf16.mxu0 0
        %8634 = vmatpush1.bf16.msra.mxu0 %v6162
        %8635 = vmatprep.subr.bf16.mxu0 0
        %8636 = vmatpush1.bf16.msra.mxu0 %v6161
        %8637 = vmatprep.subr.bf16.mxu0 0
        %8638 = vmatpush1.bf16.msra.mxu0 %v6160
        %8639 = vmatprep.subr.bf16.mxu0 0
        %8640 = vmatpush1.bf16.msra.mxu0 %v6159
        %8641 = vmatprep.subr.bf16.mxu0 0
        %8642 = vmatpush1.bf16.msra.mxu0 %v6158
        %8643 = vmatprep.subr.bf16.mxu0 0
        %8644 = vmatpush1.bf16.msra.mxu0 %v6157
        %8645 = vmatprep.subr.bf16.mxu0 0
        %8646 = vmatpush2.bf16.msra.mxu0 %v6172
        %8647 = vmatprep.subr.bf16.mxu0 0
        %8648 = vmatpush2.bf16.msra.mxu0 %v6171
        %8649 = vmatprep.subr.bf16.mxu0 0
        %8650 = vmatpush2.bf16.msra.mxu0 %v6170
        %8651 = vmatprep.subr.bf16.mxu0 0
        %8652 = vmatpush2.bf16.msra.mxu0 %v6169
        %8653 = vmatprep.subr.bf16.mxu0 0
        %8654 = vmatpush2.bf16.msra.mxu0 %v6168
        %8655 = vmatprep.subr.bf16.mxu0 0
        %8656 = vmatpush2.bf16.msra.mxu0 %v6167
        %8657 = vmatprep.subr.bf16.mxu0 0
        %8658 = vmatpush2.bf16.msra.mxu0 %v6166
        %8659 = vmatprep.subr.bf16.mxu0 0
        %8660 = vmatpush2.bf16.msra.mxu0 %v6165
        %8661 = vmatprep.mubr.bf16.mxu0 %v2266
        %8662 = vmatmul.mubr.bf16.gmra.mxu0 %v2264
        %v8663 = vpop.f32.mrf.mxu0
        %v8664 = vadd.f32 %v8624, %v8663
        %v8665 = vpop.f32.mrf.mxu0
        %v8666 = vpop.f32.mrf.mxu0
        %v8667 = vpop.f32.mrf.mxu0
        %8668 = vdwg.mxu0
        %8669 = vmatprep.subr.bf16.mxu0 0
        %8670 = vmatpush1.bf16.msra.mxu0 %v6180
        %8671 = vmatprep.subr.bf16.mxu0 0
        %8672 = vmatpush1.bf16.msra.mxu0 %v6179
        %8673 = vmatprep.subr.bf16.mxu0 0
        %8674 = vmatpush1.bf16.msra.mxu0 %v6178
        %8675 = vmatprep.subr.bf16.mxu0 0
        %8676 = vmatpush1.bf16.msra.mxu0 %v6177
        %8677 = vmatprep.subr.bf16.mxu0 0
        %8678 = vmatpush1.bf16.msra.mxu0 %v6176
        %8679 = vmatprep.subr.bf16.mxu0 0
        %8680 = vmatpush1.bf16.msra.mxu0 %v6175
        %8681 = vmatprep.subr.bf16.mxu0 0
        %8682 = vmatpush1.bf16.msra.mxu0 %v6174
        %8683 = vmatprep.subr.bf16.mxu0 0
        %8684 = vmatpush1.bf16.msra.mxu0 %v6173
        %8685 = vmatprep.subr.bf16.mxu0 0
        %8686 = vmatpush2.bf16.msra.mxu0 %v6188
        %8687 = vmatprep.subr.bf16.mxu0 0
        %8688 = vmatpush2.bf16.msra.mxu0 %v6187
        %8689 = vmatprep.subr.bf16.mxu0 0
        %8690 = vmatpush2.bf16.msra.mxu0 %v6186
        %8691 = vmatprep.subr.bf16.mxu0 0
        %8692 = vmatpush2.bf16.msra.mxu0 %v6185
        %8693 = vmatprep.subr.bf16.mxu0 0
        %8694 = vmatpush2.bf16.msra.mxu0 %v6184
        %8695 = vmatprep.subr.bf16.mxu0 0
        %8696 = vmatpush2.bf16.msra.mxu0 %v6183
        %8697 = vmatprep.subr.bf16.mxu0 0
        %8698 = vmatpush2.bf16.msra.mxu0 %v6182
        %8699 = vmatprep.subr.bf16.mxu0 0
        %8700 = vmatpush2.bf16.msra.mxu0 %v6181
        %8701 = vmatprep.mubr.bf16.mxu0 %v2304
        %8702 = vmatmul.mubr.bf16.gmra.mxu0 %v2290
        %v8703 = vpop.f32.mrf.mxu0
        %v8704 = vadd.f32 %v8664, %v8703
        %v8705 = vpop.f32.mrf.mxu0
        %v8706 = vpop.f32.mrf.mxu0
        %v8707 = vpop.f32.mrf.mxu0
        %8708 = vdwg.mxu0
        %8709 = vmatprep.subr.bf16.mxu0 0
        %8710 = vmatpush1.bf16.msra.mxu0 %v6196
        %8711 = vmatprep.subr.bf16.mxu0 0
        %8712 = vmatpush1.bf16.msra.mxu0 %v6195
        %8713 = vmatprep.subr.bf16.mxu0 0
        %8714 = vmatpush1.bf16.msra.mxu0 %v6194
        %8715 = vmatprep.subr.bf16.mxu0 0
        %8716 = vmatpush1.bf16.msra.mxu0 %v6193
        %8717 = vmatprep.subr.bf16.mxu0 0
        %8718 = vmatpush1.bf16.msra.mxu0 %v6192
        %8719 = vmatprep.subr.bf16.mxu0 0
        %8720 = vmatpush1.bf16.msra.mxu0 %v6191
        %8721 = vmatprep.subr.bf16.mxu0 0
        %8722 = vmatpush1.bf16.msra.mxu0 %v6190
        %8723 = vmatprep.subr.bf16.mxu0 0
        %8724 = vmatpush1.bf16.msra.mxu0 %v6189
        %8725 = vmatprep.subr.bf16.mxu0 0
        %8726 = vmatpush2.bf16.msra.mxu0 %v6204
        %8727 = vmatprep.subr.bf16.mxu0 0
        %8728 = vmatpush2.bf16.msra.mxu0 %v6203
        %8729 = vmatprep.subr.bf16.mxu0 0
        %8730 = vmatpush2.bf16.msra.mxu0 %v6202
        %8731 = vmatprep.subr.bf16.mxu0 0
        %8732 = vmatpush2.bf16.msra.mxu0 %v6201
        %8733 = vmatprep.subr.bf16.mxu0 0
        %8734 = vmatpush2.bf16.msra.mxu0 %v6200
        %8735 = vmatprep.subr.bf16.mxu0 0
        %8736 = vmatpush2.bf16.msra.mxu0 %v6199
        %8737 = vmatprep.subr.bf16.mxu0 0
        %8738 = vmatpush2.bf16.msra.mxu0 %v6198
        %8739 = vmatprep.subr.bf16.mxu0 0
        %8740 = vmatpush2.bf16.msra.mxu0 %v6197
        %8741 = vmatprep.mubr.bf16.mxu0 %v2314
        %8742 = vmatmul.mubr.bf16.gmra.mxu0 %v2312
        %v8743 = vpop.f32.mrf.mxu0
        %v8744 = vadd.f32 %v8704, %v8743
        %v8745 = vpop.f32.mrf.mxu0
        %v8746 = vpop.f32.mrf.mxu0
        %v8747 = vpop.f32.mrf.mxu0
        %8748 = vdwg.mxu0
        %8749 = vmatprep.subr.bf16.mxu0 0
        %8750 = vmatpush1.bf16.msra.mxu0 %v6212
        %8751 = vmatprep.subr.bf16.mxu0 0
        %8752 = vmatpush1.bf16.msra.mxu0 %v6211
        %8753 = vmatprep.subr.bf16.mxu0 0
        %8754 = vmatpush1.bf16.msra.mxu0 %v6210
        %8755 = vmatprep.subr.bf16.mxu0 0
        %8756 = vmatpush1.bf16.msra.mxu0 %v6209
        %8757 = vmatprep.subr.bf16.mxu0 0
        %8758 = vmatpush1.bf16.msra.mxu0 %v6208
        %8759 = vmatprep.subr.bf16.mxu0 0
        %8760 = vmatpush1.bf16.msra.mxu0 %v6207
        %8761 = vmatprep.subr.bf16.mxu0 0
        %8762 = vmatpush1.bf16.msra.mxu0 %v6206
        %8763 = vmatprep.subr.bf16.mxu0 0
        %8764 = vmatpush1.bf16.msra.mxu0 %v6205
        %8765 = vmatprep.subr.bf16.mxu0 0
        %8766 = vmatpush2.bf16.msra.mxu0 %v6220
        %8767 = vmatprep.subr.bf16.mxu0 0
        %8768 = vmatpush2.bf16.msra.mxu0 %v6219
        %8769 = vmatprep.subr.bf16.mxu0 0
        %8770 = vmatpush2.bf16.msra.mxu0 %v6218
        %8771 = vmatprep.subr.bf16.mxu0 0
        %8772 = vmatpush2.bf16.msra.mxu0 %v6217
        %8773 = vmatprep.subr.bf16.mxu0 0
        %8774 = vmatpush2.bf16.msra.mxu0 %v6216
        %8775 = vmatprep.subr.bf16.mxu0 0
        %8776 = vmatpush2.bf16.msra.mxu0 %v6215
        %8777 = vmatprep.subr.bf16.mxu0 0
        %8778 = vmatpush2.bf16.msra.mxu0 %v6214
        %8779 = vmatprep.subr.bf16.mxu0 0
        %8780 = vmatpush2.bf16.msra.mxu0 %v6213
        %8781 = vmatprep.mubr.bf16.mxu0 %v2311
        %8782 = vmatmul.mubr.bf16.gmra.mxu0 %v2297
        %v8783 = vpop.f32.mrf.mxu0
        %v8784 = vadd.f32 %v8744, %v8783
        %v8785 = vpop.f32.mrf.mxu0
        %v8786 = vpop.f32.mrf.mxu0
        %v8787 = vpop.f32.mrf.mxu0
        %8788 = vdwg.mxu0
        %8789 = vmatprep.subr.bf16.mxu0 0
        %8790 = vmatpush1.bf16.msra.mxu0 %v6228
        %8791 = vmatprep.subr.bf16.mxu0 0
        %8792 = vmatpush1.bf16.msra.mxu0 %v6227
        %8793 = vmatprep.subr.bf16.mxu0 0
        %8794 = vmatpush1.bf16.msra.mxu0 %v6226
        %8795 = vmatprep.subr.bf16.mxu0 0
        %8796 = vmatpush1.bf16.msra.mxu0 %v6225
        %8797 = vmatprep.subr.bf16.mxu0 0
        %8798 = vmatpush1.bf16.msra.mxu0 %v6224
        %8799 = vmatprep.subr.bf16.mxu0 0
        %8800 = vmatpush1.bf16.msra.mxu0 %v6223
        %8801 = vmatprep.subr.bf16.mxu0 0
        %8802 = vmatpush1.bf16.msra.mxu0 %v6222
        %8803 = vmatprep.subr.bf16.mxu0 0
        %8804 = vmatpush1.bf16.msra.mxu0 %v6221
        %8805 = vmatprep.subr.bf16.mxu0 0
        %8806 = vmatpush2.bf16.msra.mxu0 %v6236
        %8807 = vmatprep.subr.bf16.mxu0 0
        %8808 = vmatpush2.bf16.msra.mxu0 %v6235
        %8809 = vmatprep.subr.bf16.mxu0 0
        %8810 = vmatpush2.bf16.msra.mxu0 %v6234
        %8811 = vmatprep.subr.bf16.mxu0 0
        %8812 = vmatpush2.bf16.msra.mxu0 %v6233
        %8813 = vmatprep.subr.bf16.mxu0 0
        %8814 = vmatpush2.bf16.msra.mxu0 %v6232
        %8815 = vmatprep.subr.bf16.mxu0 0
        %8816 = vmatpush2.bf16.msra.mxu0 %v6231
        %8817 = vmatprep.subr.bf16.mxu0 0
        %8818 = vmatpush2.bf16.msra.mxu0 %v6230
        %8819 = vmatprep.subr.bf16.mxu0 0
        %8820 = vmatpush2.bf16.msra.mxu0 %v6229
        %8821 = vmatprep.mubr.bf16.mxu0 %v2315
        %8822 = vmatmul.mubr.bf16.gmra.mxu0 %v2313
        %v8823 = vpop.f32.mrf.mxu0
        %v8824 = vadd.f32 %v8784, %v8823
        %v8825 = vpop.f32.mrf.mxu0
        %v8826 = vpop.f32.mrf.mxu0
        %v8827 = vpop.f32.mrf.mxu0
        %8828 = vdwg.mxu0
        %8829 = vmatprep.subr.bf16.mxu0 0
        %8830 = vmatpush1.bf16.msra.mxu0 %v6244
        %8831 = vmatprep.subr.bf16.mxu0 0
        %8832 = vmatpush1.bf16.msra.mxu0 %v6243
        %8833 = vmatprep.subr.bf16.mxu0 0
        %8834 = vmatpush1.bf16.msra.mxu0 %v6242
        %8835 = vmatprep.subr.bf16.mxu0 0
        %8836 = vmatpush1.bf16.msra.mxu0 %v6241
        %8837 = vmatprep.subr.bf16.mxu0 0
        %8838 = vmatpush1.bf16.msra.mxu0 %v6240
        %8839 = vmatprep.subr.bf16.mxu0 0
        %8840 = vmatpush1.bf16.msra.mxu0 %v6239
        %8841 = vmatprep.subr.bf16.mxu0 0
        %8842 = vmatpush1.bf16.msra.mxu0 %v6238
        %8843 = vmatprep.subr.bf16.mxu0 0
        %8844 = vmatpush1.bf16.msra.mxu0 %v6237
        %8845 = vmatprep.subr.bf16.mxu0 0
        %8846 = vmatpush2.bf16.msra.mxu0 %v6252
        %8847 = vmatprep.subr.bf16.mxu0 0
        %8848 = vmatpush2.bf16.msra.mxu0 %v6251
        %8849 = vmatprep.subr.bf16.mxu0 0
        %8850 = vmatpush2.bf16.msra.mxu0 %v6250
        %8851 = vmatprep.subr.bf16.mxu0 0
        %8852 = vmatpush2.bf16.msra.mxu0 %v6249
        %8853 = vmatprep.subr.bf16.mxu0 0
        %8854 = vmatpush2.bf16.msra.mxu0 %v6248
        %8855 = vmatprep.subr.bf16.mxu0 0
        %8856 = vmatpush2.bf16.msra.mxu0 %v6247
        %8857 = vmatprep.subr.bf16.mxu0 0
        %8858 = vmatpush2.bf16.msra.mxu0 %v6246
        %8859 = vmatprep.subr.bf16.mxu0 0
        %8860 = vmatpush2.bf16.msra.mxu0 %v6245
        %8861 = vmatprep.mubr.bf16.mxu0 %v2353
        %8862 = vmatmul.mubr.bf16.gmra.mxu0 %v2339
        %v8863 = vpop.f32.mrf.mxu0
        %v8864 = vadd.f32 %v8824, %v8863
        %v8865 = vpop.f32.mrf.mxu0
        %v8866 = vpop.f32.mrf.mxu0
        %v8867 = vpop.f32.mrf.mxu0
        %8868 = vdwg.mxu0
        %8869 = vmatprep.subr.bf16.mxu0 0
        %8870 = vmatpush1.bf16.msra.mxu0 %v6260
        %8871 = vmatprep.subr.bf16.mxu0 0
        %8872 = vmatpush1.bf16.msra.mxu0 %v6259
        %8873 = vmatprep.subr.bf16.mxu0 0
        %8874 = vmatpush1.bf16.msra.mxu0 %v6258
        %8875 = vmatprep.subr.bf16.mxu0 0
        %8876 = vmatpush1.bf16.msra.mxu0 %v6257
        %8877 = vmatprep.subr.bf16.mxu0 0
        %8878 = vmatpush1.bf16.msra.mxu0 %v6256
        %8879 = vmatprep.subr.bf16.mxu0 0
        %8880 = vmatpush1.bf16.msra.mxu0 %v6255
        %8881 = vmatprep.subr.bf16.mxu0 0
        %8882 = vmatpush1.bf16.msra.mxu0 %v6254
        %8883 = vmatprep.subr.bf16.mxu0 0
        %8884 = vmatpush1.bf16.msra.mxu0 %v6253
        %8885 = vmatprep.subr.bf16.mxu0 0
        %8886 = vmatpush2.bf16.msra.mxu0 %v6268
        %8887 = vmatprep.subr.bf16.mxu0 0
        %8888 = vmatpush2.bf16.msra.mxu0 %v6267
        %8889 = vmatprep.subr.bf16.mxu0 0
        %8890 = vmatpush2.bf16.msra.mxu0 %v6266
        %8891 = vmatprep.subr.bf16.mxu0 0
        %8892 = vmatpush2.bf16.msra.mxu0 %v6265
        %8893 = vmatprep.subr.bf16.mxu0 0
        %8894 = vmatpush2.bf16.msra.mxu0 %v6264
        %8895 = vmatprep.subr.bf16.mxu0 0
        %8896 = vmatpush2.bf16.msra.mxu0 %v6263
        %8897 = vmatprep.subr.bf16.mxu0 0
        %8898 = vmatpush2.bf16.msra.mxu0 %v6262
        %8899 = vmatprep.subr.bf16.mxu0 0
        %8900 = vmatpush2.bf16.msra.mxu0 %v6261
        %8901 = vmatprep.mubr.bf16.mxu0 %v2363
        %8902 = vmatmul.mubr.bf16.gmra.mxu0 %v2361
        %v8903 = vpop.f32.mrf.mxu0
        %v8904 = vadd.f32 %v8864, %v8903
        %v8905 = vpop.f32.mrf.mxu0
        %v8906 = vpop.f32.mrf.mxu0
        %v8907 = vpop.f32.mrf.mxu0
        %8908 = vdwg.mxu0
        %8909 = vmatprep.subr.bf16.mxu0 0
        %8910 = vmatpush1.bf16.msra.mxu0 %v6276
        %8911 = vmatprep.subr.bf16.mxu0 0
        %8912 = vmatpush1.bf16.msra.mxu0 %v6275
        %8913 = vmatprep.subr.bf16.mxu0 0
        %8914 = vmatpush1.bf16.msra.mxu0 %v6274
        %8915 = vmatprep.subr.bf16.mxu0 0
        %8916 = vmatpush1.bf16.msra.mxu0 %v6273
        %8917 = vmatprep.subr.bf16.mxu0 0
        %8918 = vmatpush1.bf16.msra.mxu0 %v6272
        %8919 = vmatprep.subr.bf16.mxu0 0
        %8920 = vmatpush1.bf16.msra.mxu0 %v6271
        %8921 = vmatprep.subr.bf16.mxu0 0
        %8922 = vmatpush1.bf16.msra.mxu0 %v6270
        %8923 = vmatprep.subr.bf16.mxu0 0
        %8924 = vmatpush1.bf16.msra.mxu0 %v6269
        %8925 = vmatprep.subr.bf16.mxu0 0
        %8926 = vmatpush2.bf16.msra.mxu0 %v6284
        %8927 = vmatprep.subr.bf16.mxu0 0
        %8928 = vmatpush2.bf16.msra.mxu0 %v6283
        %8929 = vmatprep.subr.bf16.mxu0 0
        %8930 = vmatpush2.bf16.msra.mxu0 %v6282
        %8931 = vmatprep.subr.bf16.mxu0 0
        %8932 = vmatpush2.bf16.msra.mxu0 %v6281
        %8933 = vmatprep.subr.bf16.mxu0 0
        %8934 = vmatpush2.bf16.msra.mxu0 %v6280
        %8935 = vmatprep.subr.bf16.mxu0 0
        %8936 = vmatpush2.bf16.msra.mxu0 %v6279
        %8937 = vmatprep.subr.bf16.mxu0 0
        %8938 = vmatpush2.bf16.msra.mxu0 %v6278
        %8939 = vmatprep.subr.bf16.mxu0 0
        %8940 = vmatpush2.bf16.msra.mxu0 %v6277
        %8941 = vmatprep.mubr.bf16.mxu0 %v2360
        %8942 = vmatmul.mubr.bf16.gmra.mxu0 %v2346
        %v8943 = vpop.f32.mrf.mxu0
        %v8944 = vadd.f32 %v8904, %v8943
        %v8945 = vpop.f32.mrf.mxu0
        %v8946 = vpop.f32.mrf.mxu0
        %v8947 = vpop.f32.mrf.mxu0
        %8948 = vdwg.mxu0
        %8949 = vmatprep.subr.bf16.mxu0 0
        %8950 = vmatpush1.bf16.msra.mxu0 %v6292
        %8951 = vmatprep.subr.bf16.mxu0 0
        %8952 = vmatpush1.bf16.msra.mxu0 %v6291
        %8953 = vmatprep.subr.bf16.mxu0 0
        %8954 = vmatpush1.bf16.msra.mxu0 %v6290
        %8955 = vmatprep.subr.bf16.mxu0 0
        %8956 = vmatpush1.bf16.msra.mxu0 %v6289
        %8957 = vmatprep.subr.bf16.mxu0 0
        %8958 = vmatpush1.bf16.msra.mxu0 %v6288
        %8959 = vmatprep.subr.bf16.mxu0 0
        %8960 = vmatpush1.bf16.msra.mxu0 %v6287
        %8961 = vmatprep.subr.bf16.mxu0 0
        %8962 = vmatpush1.bf16.msra.mxu0 %v6286
        %8963 = vmatprep.subr.bf16.mxu0 0
        %8964 = vmatpush1.bf16.msra.mxu0 %v6285
        %8965 = vmatprep.subr.bf16.mxu0 0
        %8966 = vmatpush2.bf16.msra.mxu0 %v6300
        %8967 = vmatprep.subr.bf16.mxu0 0
        %8968 = vmatpush2.bf16.msra.mxu0 %v6299
        %8969 = vmatprep.subr.bf16.mxu0 0
        %8970 = vmatpush2.bf16.msra.mxu0 %v6298
        %8971 = vmatprep.subr.bf16.mxu0 0
        %8972 = vmatpush2.bf16.msra.mxu0 %v6297
        %8973 = vmatprep.subr.bf16.mxu0 0
        %8974 = vmatpush2.bf16.msra.mxu0 %v6296
        %8975 = vmatprep.subr.bf16.mxu0 0
        %8976 = vmatpush2.bf16.msra.mxu0 %v6295
        %8977 = vmatprep.subr.bf16.mxu0 0
        %8978 = vmatpush2.bf16.msra.mxu0 %v6294
        %8979 = vmatprep.subr.bf16.mxu0 0
        %8980 = vmatpush2.bf16.msra.mxu0 %v6293
        %8981 = vmatprep.mubr.bf16.mxu0 %v2364
        %8982 = vmatmul.mubr.bf16.gmra.mxu0 %v2362
        %v8983 = vpop.f32.mrf.mxu0
        %v8984 = vadd.f32 %v8944, %v8983
        %v8985 = vpop.f32.mrf.mxu0
        %v8986 = vpop.f32.mrf.mxu0
        %v8987 = vpop.f32.mrf.mxu0
        %8988 = vdwg.mxu0
        %p8989 = scmp.eq.s32.totalorder %s21, 0
        // Predicated region
        $region33: #{discriminator_forward.1} parent=27 // pred_check
          %p8990 = pneg %p8989
        $region34: #{discriminator_forward.1} parent=27 // pred_check_branch
          %8992 = sbr.rel (%p8990) target = $region36
        $region35: #{discriminator_forward.1} parent=27 // pred_region
          %8993 = vst [vmem:[%s215] sm:$0x3] %v8984
        $region36: #{discriminator_forward.1} parent=27 // pred_fallthru
          _
        %p8994 = scmp.gt.s32.totalorder %s21, 0
        // Predicated region
        $region37: #{discriminator_forward.1} parent=27 // pred_check
          %p8995 = pneg %p8994
        $region38: #{discriminator_forward.1} parent=27 // pred_check_branch
          %8997 = sbr.rel (%p8995) target = $region40
        $region39: #{discriminator_forward.1} parent=27 // pred_region
          %v8998 = vld [vmem:[%s215] sm:$0x3]
          %v8999 = vadd.f32 %v8998, %v8984
          %9000 = vst [vmem:[%s215] sm:$0x3] %v8999
        $region40: #{discriminator_forward.1} parent=27 // pred_fallthru
          _
        %p9001 = scmp.lt.s32.totalorder %s20, 0
        %s9002 = scalar_select %p9001, %s20, 0
        %s9003 = smul.addr %s9002, 2
        %s9004 = scalar_lea.vmem %s2, %s9003
        // Predicated region
        $region41: #{discriminator_forward.1} parent=27 // pred_check
          %p9005 = pneg %p106
        $region42: #{discriminator_forward.1} parent=27 // pred_check_branch
          %9007 = sbr.rel (%p9005) target = $region44
        $region43: #{discriminator_forward.1} parent=27 // pred_region
          _
        $region44: #{discriminator_forward.1} parent=27 // pred_fallthru
          _
        // Predicated region
        $region45: #{discriminator_forward.1} parent=27 // pred_check
          %p9008 = pneg %p106
        $region46: #{discriminator_forward.1} parent=27 // pred_check_branch
          %9010 = sbr.rel (%p9008) target = $region48
        $region47: #{discriminator_forward.1} parent=27 // pred_region
          %p9011 = scmp.lt.s32.totalorder %s20, 0
          %s9012 = scalar_select %p9011, %s20, 0
          %s9013 = smul.addr %s9012, 2
          %s9014 = scalar_lea.vmem %s2, %s9013
        $region48: #{discriminator_forward.1} parent=27 // pred_fallthru
          _
      $region28: #{discriminator_forward.1} parent=5 // pred_fallthru
        _
      %p9015 = scmp.le.s32.totalorder 2, %s11
      // Predicated region
      $region49: #{discriminator_forward.1} parent=5 // pred_check
        %p9016 = pneg %p9015
      $region50: #{discriminator_forward.1} parent=5 // pred_check_branch
        %9018 = sbr.rel (%p9016) target = $region52
      $region51: #{discriminator_forward.1} parent=5 // pred_region
        %s9019 = ssub.s32 %s11, 2
      $region52: #{discriminator_forward.1} parent=5 // pred_fallthru
        _
    $region6: #{discriminator_forward.1} parent=1 // loop_footer
      %s15 = sadd.s32 1, %s11
    $region7: #{discriminator_forward.1} parent=1 // loop_footer_branch
      %10 = sbr.rel target = $region3
    $region8: #{discriminator_forward.1} parent=1 // loop_exit
      _
    %9020 = vsyncpa [#allocation3], 1
    %s9021 = scalar_lea.sflag [#allocation3], 1
    %9022 = vsyncpa %s9021, 1

</llo_original>
